<compile_context>
chip_gen: v6e
topology: v6e:2x2x1
jax: 0.10.0
libtpu: 0.0.40
codegen_flags: <defaults>
</compile_context>

<pallas_src>
import functools
import math

import jax
import jax.numpy as jnp
from jax.experimental import pallas as pl
from jax.experimental.pallas import tpu as pltpu


# ---------------------------------------------------------------------------
# Helpers
# ---------------------------------------------------------------------------
def _pool_out_dim(d):
    """PyTorch MaxPool2d(kernel=3, stride=2, ceil_mode=True) output size."""
    o = -(-(d - 3) // 2) + 1
    if (o - 1) * 2 >= d:  # last window must start inside the input
        o -= 1
    return o


def _round_up(n, m=128):
    return -(-n // m) * m


def _spec(shape):
    nd = len(shape)
    return pl.BlockSpec(shape, lambda i, _nd=nd: (0,) * _nd)


# ---------------------------------------------------------------------------
# In-kernel ceil-mode 3x3/s2 max pool on a (H*W*N, C) matrix, rows ordered
# (h, w, n).  Uses only static row-slice loads, jnp.maximum and masked row
# stores into a VMEM scratch ref (no reshapes, no concats).
# ---------------------------------------------------------------------------
def _maxpool_to_scratch(src, H, W, N, out_sc):
    OH, OW = _pool_out_dim(H), _pool_out_dim(W)
    blk = W * N
    for oh in range(OH):
        h0 = 2 * oh
        h1 = min(h0 + 3, H)
        rowblk = src[h0 * blk:(h0 + 1) * blk]           # (W*N, C)
        for hh in range(h0 + 1, h1):
            rowblk = jnp.maximum(rowblk, src[hh * blk:(hh + 1) * blk])
        for ow in range(OW):
            w0 = 2 * ow
            w1 = min(w0 + 3, W)
            m = rowblk[w0 * N:(w0 + 1) * N]             # (N, C)
            for ww in range(w0 + 1, w1):
                m = jnp.maximum(m, rowblk[ww * N:(ww + 1) * N])
            r0 = (oh * OW + ow) * N
            out_sc[r0:r0 + N, :] = m
    return OH, OW


# ---------------------------------------------------------------------------
# Fused kernel: conv1 epilogue + pools + fire2..fire9 + classifier head.
# ---------------------------------------------------------------------------
def _tail_kernel(H1, W1, N, x_ref, c1b_ref, *refs):
    pool_a, pool_b, pool_c = refs[-3], refs[-2], refs[-1]
    o_ref = refs[-4]
    wref = refs[:-4]
    assert len(wref) == 34  # 8 fires * 4 + classifier (w, b)

    # conv1 epilogue: ceil-mode maxpool first (bias + ReLU commute with max),
    # then bias add + ReLU on the pooled (fewer) rows.
    H, W = _maxpool_to_scratch(x_ref, H1, W1, N, pool_a)
    h = jnp.maximum(pool_a[...] + c1b_ref[...], 0.0)

    def fire1x1(x, i):
        sw, sb, ew, eb = wref[4 * i], wref[4 * i + 1], wref[4 * i + 2], wref[4 * i + 3]
        s = jnp.dot(x.astype(jnp.bfloat16), sw[...],
                    preferred_element_type=jnp.float32)
        s = jnp.maximum(s + sb[...], 0.0)
        e = jnp.dot(s.astype(jnp.bfloat16), ew[...],
                    preferred_element_type=jnp.float32)
        return jnp.maximum(e + eb[...], 0.0)

    h = fire1x1(h, 0)                                   # fire2
    h = h + fire1x1(h, 1)                               # fire3 + residual
    h = fire1x1(h, 2)                                   # fire4
    H, W = _maxpool_to_scratch(h, H, W, N, pool_b)      # pool1
    h = pool_b[...]
    h = h + fire1x1(h, 3)                               # fire5 + residual
    h = fire1x1(h, 4)                                   # fire6
    h = h + fire1x1(h, 5)                               # fire7 + residual
    h = fire1x1(h, 6)                                   # fire8
    H, W = _maxpool_to_scratch(h, H, W, N, pool_c)      # pool2
    h = pool_c[...]
    h = h + fire1x1(h, 7)                               # fire9 + residual

    # classifier: Dropout -> Conv1x1(512, nc) -> ReLU -> AdaptiveAvgPool(1,1)
    # TODO(synk): Dropout(p=0.5) is treated as eval-mode identity (training
    # RNG drop not reproduced).
    fw, fb = wref[32], wref[33]
    logits = jnp.dot(h.astype(jnp.bfloat16), fw[...],
                     preferred_element_type=jnp.float32)
    logits = jnp.maximum(logits + fb[...], 0.0)         # (H*W*N, ncp)
    hw = H * W
    if hw == 1:
        o_ref[...] = logits
    else:
        acc = logits[0:N]
        for s in range(1, hw):
            acc = acc + logits[s * N:(s + 1) * N]
        o_ref[...] = acc * (1.0 / hw)


# ---------------------------------------------------------------------------
# Forward pass
# ---------------------------------------------------------------------------
def squeezenet_1x1lmp_forward(x_nchw, params, num_classes):
    N = x_nchw.shape[0]

    # conv1 (7x7, stride 2, VALID) on XLA's native conv path (tiny 3-channel
    # op, per perf review); bias/ReLU/maxpool are done in the Pallas kernel.
    conv = jax.lax.conv_general_dilated(
        x_nchw, params["conv1_w"], window_strides=(2, 2), padding="VALID",
        dimension_numbers=("NCHW", "HWIO", "NHWC"))
    _, H1, W1, Cp = conv.shape
    x_flat = jnp.transpose(conv, (1, 2, 0, 3)).reshape(H1 * W1 * N, Cp)

    args = [x_flat, params["conv1_b"]]
    for idx in range(2, 10):
        p = params[f"fire{idx}"]
        args += [p["sq_w"], p["sq_b"], p["ex_w"], p["ex_b"]]
    args += [params["final_w"], params["final_b"]]

    # scratch buffers for the three in-kernel ceil-mode maxpools
    H2, W2 = _pool_out_dim(H1), _pool_out_dim(W1)
    H3, W3 = _pool_out_dim(H2), _pool_out_dim(W2)
    H4, W4 = _pool_out_dim(H3), _pool_out_dim(W3)
    c4 = params["fire4"]["ex_w"].shape[1]
    c8 = params["fire8"]["ex_w"].shape[1]
    ncp = params["final_w"].shape[1]

    out = pl.pallas_call(
        functools.partial(_tail_kernel, H1, W1, N),
        out_shape=jax.ShapeDtypeStruct((N, ncp), jnp.float32),
        grid=(1,),
        in_specs=[_spec(a.shape) for a in args],
        out_specs=_spec((N, ncp)),
        scratch_shapes=[
            pltpu.VMEM((H2 * W2 * N, Cp), jnp.float32),
            pltpu.VMEM((H3 * W3 * N, c4), jnp.float32),
            pltpu.VMEM((H4 * W4 * N, c8), jnp.float32),
        ],
        compiler_params=pltpu.CompilerParams(
            dimension_semantics=("arbitrary",),
            vmem_limit_bytes=32 * 1024 * 1024),
    )(*args)
    return out[:, :num_classes]


# ---------------------------------------------------------------------------
# Parameters (PyTorch init distributions, prepped to padded bf16 matmul layout)
# ---------------------------------------------------------------------------
_FIRE_CFG = [
    # (idx, inplanes, squeeze_1x1, expand1x1, expand3x3) for layer == 1
    (2, 96, 16, 64, 64),
    (3, 128, 16, 64, 64),
    (4, 128, 32, 128, 128),
    (5, 256, 32, 128, 128),
    (6, 256, 150, 192, 192),
    (7, 384, 130, 192, 192),
    (8, 384, 200, 256, 256),
    (9, 512, 180, 256, 256),
]


def _kaiming_uniform(key, shape_oihw):
    fan_in = shape_oihw[1] * shape_oihw[2] * shape_oihw[3]
    bound = math.sqrt(6.0 / fan_in)
    return jax.random.uniform(key, shape_oihw, jnp.float32, -bound, bound)


def init_params(key, num_classes, layer=1):
    if layer != 1:
        # TODO(synk): only the all-Fire_1x1 variant (layer == 1, the "1x1LMP"
        # configuration) is implemented in the fused kernel; layer > 1 uses
        # full Fire modules with 3x3 expand convolutions.
        raise NotImplementedError("fused kernel implements layer == 1 only")

    keys = iter(jax.random.split(key, 32))
    P = {}

    # conv1: 3 -> 96, 7x7/s2, kaiming-uniform weight, zero bias; output
    # channels zero-padded 96 -> 128 so the activation is lane-dense.
    w = _kaiming_uniform(next(keys), (96, 3, 7, 7))
    w_hwio = jnp.transpose(w, (2, 3, 1, 0))                   # (7,7,3,96)
    P["conv1_w"] = jnp.pad(w_hwio, ((0, 0), (0, 0), (0, 0), (0, 32)))
    P["conv1_b"] = jnp.zeros((1, 128), jnp.float32)

    cin_pad = {2: 128}  # fire2 consumes the padded conv1 output
    for idx, cin, sq, e1, e3 in _FIRE_CFG:
        cex = e1 + e3
        cin_p = cin_pad.get(idx, cin)
        csq_p = _round_up(sq)
        sq_w = _kaiming_uniform(next(keys), (sq, cin, 1, 1))
        ex_w = _kaiming_uniform(next(keys), (cex, sq, 1, 1))
        sq_m = jnp.transpose(sq_w[:, :, 0, 0], (1, 0))         # (cin, sq)
        ex_m = jnp.transpose(ex_w[:, :, 0, 0], (1, 0))         # (sq, cex)
        P[f"fire{idx}"] = dict(
            sq_w=jnp.pad(sq_m, ((0, cin_p - cin), (0, csq_p - sq))
                         ).astype(jnp.bfloat16),
            sq_b=jnp.zeros((1, csq_p), jnp.float32),
            ex_w=jnp.pad(ex_m, ((0, csq_p - sq), (0, 0))).astype(jnp.bfloat16),
            ex_b=jnp.zeros((1, cex), jnp.float32),
        )

    ncp = _round_up(num_classes)
    fw = 0.01 * jax.random.normal(next(keys), (num_classes, 512, 1, 1),
                                  jnp.float32)
    f_m = jnp.transpose(fw[:, :, 0, 0], (1, 0))                # (512, nc)
    P["final_w"] = jnp.pad(f_m, ((0, 0), (0, ncp - num_classes))
                           ).astype(jnp.bfloat16)
    P["final_b"] = jnp.zeros((1, ncp), jnp.float32)
    return P


# ---------------------------------------------------------------------------
if __name__ == "__main__":
    num_classes = 10
    layer = 1  # all Fire_1x1 blocks -> the "1x1LMP" variant

    key = jax.random.PRNGKey(0)
    pkey, xkey = jax.random.split(key)
    params = init_params(pkey, num_classes, layer)

    # CIFAR-sized input, NCHW like the PyTorch module
    x = jax.random.normal(xkey, (2, 3, 32, 32), jnp.float32)

    fwd = jax.jit(functools.partial(squeezenet_1x1lmp_forward,
                                    num_classes=num_classes))
    out = jax.block_until_ready(fwd(x, params))
    assert out.shape == (2, num_classes)
    assert bool(jnp.all(jnp.isfinite(out)))
    print("KERNEL_OK")
</pallas_src>

<mosaic_0001>
module attributes {stable_mosaic.version = 11 : i64} {
  func.func @_tail_kernel(%arg0: i32, %arg1: memref<338x128xf32, #tpu.memory_space<vmem>>, %arg2: memref<1x128xf32, #tpu.memory_space<vmem>>, %arg3: memref<128x128xbf16, #tpu.memory_space<vmem>>, %arg4: memref<1x128xf32, #tpu.memory_space<vmem>>, %arg5: memref<128x128xbf16, #tpu.memory_space<vmem>>, %arg6: memref<1x128xf32, #tpu.memory_space<vmem>>, %arg7: memref<128x128xbf16, #tpu.memory_space<vmem>>, %arg8: memref<1x128xf32, #tpu.memory_space<vmem>>, %arg9: memref<128x128xbf16, #tpu.memory_space<vmem>>, %arg10: memref<1x128xf32, #tpu.memory_space<vmem>>, %arg11: memref<128x128xbf16, #tpu.memory_space<vmem>>, %arg12: memref<1x128xf32, #tpu.memory_space<vmem>>, %arg13: memref<128x256xbf16, #tpu.memory_space<vmem>>, %arg14: memref<1x256xf32, #tpu.memory_space<vmem>>, %arg15: memref<256x128xbf16, #tpu.memory_space<vmem>>, %arg16: memref<1x128xf32, #tpu.memory_space<vmem>>, %arg17: memref<128x256xbf16, #tpu.memory_space<vmem>>, %arg18: memref<1x256xf32, #tpu.memory_space<vmem>>, %arg19: memref<256x256xbf16, #tpu.memory_space<vmem>>, %arg20: memref<1x256xf32, #tpu.memory_space<vmem>>, %arg21: memref<256x384xbf16, #tpu.memory_space<vmem>>, %arg22: memref<1x384xf32, #tpu.memory_space<vmem>>, %arg23: memref<384x256xbf16, #tpu.memory_space<vmem>>, %arg24: memref<1x256xf32, #tpu.memory_space<vmem>>, %arg25: memref<256x384xbf16, #tpu.memory_space<vmem>>, %arg26: memref<1x384xf32, #tpu.memory_space<vmem>>, %arg27: memref<384x256xbf16, #tpu.memory_space<vmem>>, %arg28: memref<1x256xf32, #tpu.memory_space<vmem>>, %arg29: memref<256x512xbf16, #tpu.memory_space<vmem>>, %arg30: memref<1x512xf32, #tpu.memory_space<vmem>>, %arg31: memref<512x256xbf16, #tpu.memory_space<vmem>>, %arg32: memref<1x256xf32, #tpu.memory_space<vmem>>, %arg33: memref<256x512xbf16, #tpu.memory_space<vmem>>, %arg34: memref<1x512xf32, #tpu.memory_space<vmem>>, %arg35: memref<512x128xbf16, #tpu.memory_space<vmem>>, %arg36: memref<1x128xf32, #tpu.memory_space<vmem>>, %arg37: memref<2x128xf32, #tpu.memory_space<vmem>>, %arg38: memref<72x128xf32, #tpu.memory_space<vmem>>, %arg39: memref<18x256xf32, #tpu.memory_space<vmem>>, %arg40: memref<2x512xf32, #tpu.memory_space<vmem>>) attributes {dimension_semantics = [#tpu.dimension_semantics<arbitrary>], iteration_bounds = array<i64: 1>, scalar_prefetch = 0 : i64, scratch_operands = 3 : i64, tpu.core_type = #tpu.core_type<tc>, window_params = [{pipeline_mode = #tpu.pipeline_mode<synchronous>, transform_indices = @transform_0, window_bounds = array<i64: 338, 128>}, {pipeline_mode = #tpu.pipeline_mode<synchronous>, transform_indices = @transform_1, window_bounds = array<i64: 1, 128>}, {pipeline_mode = #tpu.pipeline_mode<synchronous>, transform_indices = @transform_2, window_bounds = array<i64: 128, 128>}, {pipeline_mode = #tpu.pipeline_mode<synchronous>, transform_indices = @transform_3, window_bounds = array<i64: 1, 128>}, {pipeline_mode = #tpu.pipeline_mode<synchronous>, transform_indices = @transform_4, window_bounds = array<i64: 128, 128>}, {pipeline_mode = #tpu.pipeline_mode<synchronous>, transform_indices = @transform_5, window_bounds = array<i64: 1, 128>}, {pipeline_mode = #tpu.pipeline_mode<synchronous>, transform_indices = @transform_6, window_bounds = array<i64: 128, 128>}, {pipeline_mode = #tpu.pipeline_mode<synchronous>, transform_indices = @transform_7, window_bounds = array<i64: 1, 128>}, {pipeline_mode = #tpu.pipeline_mode<synchronous>, transform_indices = @transform_8, window_bounds = array<i64: 128, 128>}, {pipeline_mode = #tpu.pipeline_mode<synchronous>, transform_indices = @transform_9, window_bounds = array<i64: 1, 128>}, {pipeline_mode = #tpu.pipeline_mode<synchronous>, transform_indices = @transform_10, window_bounds = array<i64: 128, 128>}, {pipeline_mode = #tpu.pipeline_mode<synchronous>, transform_indices = @transform_11, window_bounds = array<i64: 1, 128>}, {pipeline_mode = #tpu.pipeline_mode<synchronous>, transform_indices = @transform_12, window_bounds = array<i64: 128, 256>}, {pipeline_mode = #tpu.pipeline_mode<synchronous>, transform_indices = @transform_13, window_bounds = array<i64: 1, 256>}, {pipeline_mode = #tpu.pipeline_mode<synchronous>, transform_indices = @transform_14, window_bounds = array<i64: 256, 128>}, {pipeline_mode = #tpu.pipeline_mode<synchronous>, transform_indices = @transform_15, window_bounds = array<i64: 1, 128>}, {pipeline_mode = #tpu.pipeline_mode<synchronous>, transform_indices = @transform_16, window_bounds = array<i64: 128, 256>}, {pipeline_mode = #tpu.pipeline_mode<synchronous>, transform_indices = @transform_17, window_bounds = array<i64: 1, 256>}, {pipeline_mode = #tpu.pipeline_mode<synchronous>, transform_indices = @transform_18, window_bounds = array<i64: 256, 256>}, {pipeline_mode = #tpu.pipeline_mode<synchronous>, transform_indices = @transform_19, window_bounds = array<i64: 1, 256>}, {pipeline_mode = #tpu.pipeline_mode<synchronous>, transform_indices = @transform_20, window_bounds = array<i64: 256, 384>}, {pipeline_mode = #tpu.pipeline_mode<synchronous>, transform_indices = @transform_21, window_bounds = array<i64: 1, 384>}, {pipeline_mode = #tpu.pipeline_mode<synchronous>, transform_indices = @transform_22, window_bounds = array<i64: 384, 256>}, {pipeline_mode = #tpu.pipeline_mode<synchronous>, transform_indices = @transform_23, window_bounds = array<i64: 1, 256>}, {pipeline_mode = #tpu.pipeline_mode<synchronous>, transform_indices = @transform_24, window_bounds = array<i64: 256, 384>}, {pipeline_mode = #tpu.pipeline_mode<synchronous>, transform_indices = @transform_25, window_bounds = array<i64: 1, 384>}, {pipeline_mode = #tpu.pipeline_mode<synchronous>, transform_indices = @transform_26, window_bounds = array<i64: 384, 256>}, {pipeline_mode = #tpu.pipeline_mode<synchronous>, transform_indices = @transform_27, window_bounds = array<i64: 1, 256>}, {pipeline_mode = #tpu.pipeline_mode<synchronous>, transform_indices = @transform_28, window_bounds = array<i64: 256, 512>}, {pipeline_mode = #tpu.pipeline_mode<synchronous>, transform_indices = @transform_29, window_bounds = array<i64: 1, 512>}, {pipeline_mode = #tpu.pipeline_mode<synchronous>, transform_indices = @transform_30, window_bounds = array<i64: 512, 256>}, {pipeline_mode = #tpu.pipeline_mode<synchronous>, transform_indices = @transform_31, window_bounds = array<i64: 1, 256>}, {pipeline_mode = #tpu.pipeline_mode<synchronous>, transform_indices = @transform_32, window_bounds = array<i64: 256, 512>}, {pipeline_mode = #tpu.pipeline_mode<synchronous>, transform_indices = @transform_33, window_bounds = array<i64: 1, 512>}, {pipeline_mode = #tpu.pipeline_mode<synchronous>, transform_indices = @transform_34, window_bounds = array<i64: 512, 128>}, {pipeline_mode = #tpu.pipeline_mode<synchronous>, transform_indices = @transform_35, window_bounds = array<i64: 1, 128>}, {pipeline_mode = #tpu.pipeline_mode<synchronous>, transform_indices = @transform_36, window_bounds = array<i64: 2, 128>}]} {
    %c0 = arith.constant 0 : index
    %c0_0 = arith.constant 0 : index
    %0 = vector.load %arg1[%c0, %c0_0] : memref<338x128xf32, #tpu.memory_space<vmem>>, vector<26x128xf32>
    %c26 = arith.constant 26 : index
    %c0_1 = arith.constant 0 : index
    %1 = vector.load %arg1[%c26, %c0_1] : memref<338x128xf32, #tpu.memory_space<vmem>>, vector<26x128xf32>
    %2 = arith.maximumf %0, %1 : vector<26x128xf32>
    %c52 = arith.constant 52 : index
    %c0_2 = arith.constant 0 : index
    %3 = vector.load %arg1[%c52, %c0_2] : memref<338x128xf32, #tpu.memory_space<vmem>>, vector<26x128xf32>
    %4 = arith.maximumf %2, %3 : vector<26x128xf32>
    %5 = vector.extract_strided_slice %4 {offsets = [0, 0], sizes = [2, 128], strides = [1, 1]} : vector<26x128xf32> to vector<2x128xf32>
    %6 = vector.extract_strided_slice %4 {offsets = [2, 0], sizes = [2, 128], strides = [1, 1]} : vector<26x128xf32> to vector<2x128xf32>
    %7 = arith.maximumf %5, %6 : vector<2x128xf32>
    %8 = vector.extract_strided_slice %4 {offsets = [4, 0], sizes = [2, 128], strides = [1, 1]} : vector<26x128xf32> to vector<2x128xf32>
    %9 = arith.maximumf %7, %8 : vector<2x128xf32>
    %c0_3 = arith.constant 0 : index
    %c0_4 = arith.constant 0 : index
    %10 = vector.load %arg38[%c0_3, %c0_4] : memref<72x128xf32, #tpu.memory_space<vmem>>, vector<2x128xf32>
    tpu.vector_store %arg38[%c0_3, %c0_4], %9 {strides = array<i32>} : memref<72x128xf32, #tpu.memory_space<vmem>>, vector<2x128xf32>,
    %11 = vector.extract_strided_slice %4 {offsets = [4, 0], sizes = [2, 128], strides = [1, 1]} : vector<26x128xf32> to vector<2x128xf32>
    %12 = vector.extract_strided_slice %4 {offsets = [6, 0], sizes = [2, 128], strides = [1, 1]} : vector<26x128xf32> to vector<2x128xf32>
    %13 = arith.maximumf %11, %12 : vector<2x128xf32>
    %14 = vector.extract_strided_slice %4 {offsets = [8, 0], sizes = [2, 128], strides = [1, 1]} : vector<26x128xf32> to vector<2x128xf32>
    %15 = arith.maximumf %13, %14 : vector<2x128xf32>
    %c2 = arith.constant 2 : index
    %c0_5 = arith.constant 0 : index
    %16 = vector.load %arg38[%c2, %c0_5] : memref<72x128xf32, #tpu.memory_space<vmem>>, vector<2x128xf32>
    tpu.vector_store %arg38[%c2, %c0_5], %15 {strides = array<i32>} : memref<72x128xf32, #tpu.memory_space<vmem>>, vector<2x128xf32>,
    %17 = vector.extract_strided_slice %4 {offsets = [8, 0], sizes = [2, 128], strides = [1, 1]} : vector<26x128xf32> to vector<2x128xf32>
    %18 = vector.extract_strided_slice %4 {offsets = [10, 0], sizes = [2, 128], strides = [1, 1]} : vector<26x128xf32> to vector<2x128xf32>
    %19 = arith.maximumf %17, %18 : vector<2x128xf32>
    %20 = vector.extract_strided_slice %4 {offsets = [12, 0], sizes = [2, 128], strides = [1, 1]} : vector<26x128xf32> to vector<2x128xf32>
    %21 = arith.maximumf %19, %20 : vector<2x128xf32>
    %c4 = arith.constant 4 : index
    %c0_6 = arith.constant 0 : index
    %22 = vector.load %arg38[%c4, %c0_6] : memref<72x128xf32, #tpu.memory_space<vmem>>, vector<2x128xf32>
    tpu.vector_store %arg38[%c4, %c0_6], %21 {strides = array<i32>} : memref<72x128xf32, #tpu.memory_space<vmem>>, vector<2x128xf32>,
    %23 = vector.extract_strided_slice %4 {offsets = [12, 0], sizes = [2, 128], strides = [1, 1]} : vector<26x128xf32> to vector<2x128xf32>
    %24 = vector.extract_strided_slice %4 {offsets = [14, 0], sizes = [2, 128], strides = [1, 1]} : vector<26x128xf32> to vector<2x128xf32>
    %25 = arith.maximumf %23, %24 : vector<2x128xf32>
    %26 = vector.extract_strided_slice %4 {offsets = [16, 0], sizes = [2, 128], strides = [1, 1]} : vector<26x128xf32> to vector<2x128xf32>
    %27 = arith.maximumf %25, %26 : vector<2x128xf32>
    %c6 = arith.constant 6 : index
    %c0_7 = arith.constant 0 : index
    %28 = vector.load %arg38[%c6, %c0_7] : memref<72x128xf32, #tpu.memory_space<vmem>>, vector<2x128xf32>
    tpu.vector_store %arg38[%c6, %c0_7], %27 {strides = array<i32>} : memref<72x128xf32, #tpu.memory_space<vmem>>, vector<2x128xf32>,
    %29 = vector.extract_strided_slice %4 {offsets = [16, 0], sizes = [2, 128], strides = [1, 1]} : vector<26x128xf32> to vector<2x128xf32>
    %30 = vector.extract_strided_slice %4 {offsets = [18, 0], sizes = [2, 128], strides = [1, 1]} : vector<26x128xf32> to vector<2x128xf32>
    %31 = arith.maximumf %29, %30 : vector<2x128xf32>
    %32 = vector.extract_strided_slice %4 {offsets = [20, 0], sizes = [2, 128], strides = [1, 1]} : vector<26x128xf32> to vector<2x128xf32>
    %33 = arith.maximumf %31, %32 : vector<2x128xf32>
    %c8 = arith.constant 8 : index
    %c0_8 = arith.constant 0 : index
    %34 = vector.load %arg38[%c8, %c0_8] : memref<72x128xf32, #tpu.memory_space<vmem>>, vector<2x128xf32>
    tpu.vector_store %arg38[%c8, %c0_8], %33 {strides = array<i32>} : memref<72x128xf32, #tpu.memory_space<vmem>>, vector<2x128xf32>,
    %35 = vector.extract_strided_slice %4 {offsets = [20, 0], sizes = [2, 128], strides = [1, 1]} : vector<26x128xf32> to vector<2x128xf32>
    %36 = vector.extract_strided_slice %4 {offsets = [22, 0], sizes = [2, 128], strides = [1, 1]} : vector<26x128xf32> to vector<2x128xf32>
    %37 = arith.maximumf %35, %36 : vector<2x128xf32>
    %38 = vector.extract_strided_slice %4 {offsets = [24, 0], sizes = [2, 128], strides = [1, 1]} : vector<26x128xf32> to vector<2x128xf32>
    %39 = arith.maximumf %37, %38 : vector<2x128xf32>
    %c10 = arith.constant 10 : index
    %c0_9 = arith.constant 0 : index
    %40 = vector.load %arg38[%c10, %c0_9] : memref<72x128xf32, #tpu.memory_space<vmem>>, vector<2x128xf32>
    tpu.vector_store %arg38[%c10, %c0_9], %39 {strides = array<i32>} : memref<72x128xf32, #tpu.memory_space<vmem>>, vector<2x128xf32>,
    %c52_10 = arith.constant 52 : index
    %c0_11 = arith.constant 0 : index
    %41 = vector.load %arg1[%c52_10, %c0_11] : memref<338x128xf32, #tpu.memory_space<vmem>>, vector<26x128xf32>
    %c78 = arith.constant 78 : index
    %c0_12 = arith.constant 0 : index
    %42 = vector.load %arg1[%c78, %c0_12] : memref<338x128xf32, #tpu.memory_space<vmem>>, vector<26x128xf32>
    %43 = arith.maximumf %41, %42 : vector<26x128xf32>
    %c104 = arith.constant 104 : index
    %c0_13 = arith.constant 0 : index
    %44 = vector.load %arg1[%c104, %c0_13] : memref<338x128xf32, #tpu.memory_space<vmem>>, vector<26x128xf32>
    %45 = arith.maximumf %43, %44 : vector<26x128xf32>
    %46 = vector.extract_strided_slice %45 {offsets = [0, 0], sizes = [2, 128], strides = [1, 1]} : vector<26x128xf32> to vector<2x128xf32>
    %47 = vector.extract_strided_slice %45 {offsets = [2, 0], sizes = [2, 128], strides = [1, 1]} : vector<26x128xf32> to vector<2x128xf32>
    %48 = arith.maximumf %46, %47 : vector<2x128xf32>
    %49 = vector.extract_strided_slice %45 {offsets = [4, 0], sizes = [2, 128], strides = [1, 1]} : vector<26x128xf32> to vector<2x128xf32>
    %50 = arith.maximumf %48, %49 : vector<2x128xf32>
    %c12 = arith.constant 12 : index
    %c0_14 = arith.constant 0 : index
    %51 = vector.load %arg38[%c12, %c0_14] : memref<72x128xf32, #tpu.memory_space<vmem>>, vector<2x128xf32>
    tpu.vector_store %arg38[%c12, %c0_14], %50 {strides = array<i32>} : memref<72x128xf32, #tpu.memory_space<vmem>>, vector<2x128xf32>,
    %52 = vector.extract_strided_slice %45 {offsets = [4, 0], sizes = [2, 128], strides = [1, 1]} : vector<26x128xf32> to vector<2x128xf32>
    %53 = vector.extract_strided_slice %45 {offsets = [6, 0], sizes = [2, 128], strides = [1, 1]} : vector<26x128xf32> to vector<2x128xf32>
    %54 = arith.maximumf %52, %53 : vector<2x128xf32>
    %55 = vector.extract_strided_slice %45 {offsets = [8, 0], sizes = [2, 128], strides = [1, 1]} : vector<26x128xf32> to vector<2x128xf32>
    %56 = arith.maximumf %54, %55 : vector<2x128xf32>
    %c14 = arith.constant 14 : index
    %c0_15 = arith.constant 0 : index
    %57 = vector.load %arg38[%c14, %c0_15] : memref<72x128xf32, #tpu.memory_space<vmem>>, vector<2x128xf32>
    tpu.vector_store %arg38[%c14, %c0_15], %56 {strides = array<i32>} : memref<72x128xf32, #tpu.memory_space<vmem>>, vector<2x128xf32>,
    %58 = vector.extract_strided_slice %45 {offsets = [8, 0], sizes = [2, 128], strides = [1, 1]} : vector<26x128xf32> to vector<2x128xf32>
    %59 = vector.extract_strided_slice %45 {offsets = [10, 0], sizes = [2, 128], strides = [1, 1]} : vector<26x128xf32> to vector<2x128xf32>
    %60 = arith.maximumf %58, %59 : vector<2x128xf32>
    %61 = vector.extract_strided_slice %45 {offsets = [12, 0], sizes = [2, 128], strides = [1, 1]} : vector<26x128xf32> to vector<2x128xf32>
    %62 = arith.maximumf %60, %61 : vector<2x128xf32>
    %c16 = arith.constant 16 : index
    %c0_16 = arith.constant 0 : index
    %63 = vector.load %arg38[%c16, %c0_16] : memref<72x128xf32, #tpu.memory_space<vmem>>, vector<2x128xf32>
    tpu.vector_store %arg38[%c16, %c0_16], %62 {strides = array<i32>} : memref<72x128xf32, #tpu.memory_space<vmem>>, vector<2x128xf32>,
    %64 = vector.extract_strided_slice %45 {offsets = [12, 0], sizes = [2, 128], strides = [1, 1]} : vector<26x128xf32> to vector<2x128xf32>
    %65 = vector.extract_strided_slice %45 {offsets = [14, 0], sizes = [2, 128], strides = [1, 1]} : vector<26x128xf32> to vector<2x128xf32>
    %66 = arith.maximumf %64, %65 : vector<2x128xf32>
    %67 = vector.extract_strided_slice %45 {offsets = [16, 0], sizes = [2, 128], strides = [1, 1]} : vector<26x128xf32> to vector<2x128xf32>
    %68 = arith.maximumf %66, %67 : vector<2x128xf32>
    %c18 = arith.constant 18 : index
    %c0_17 = arith.constant 0 : index
    %69 = vector.load %arg38[%c18, %c0_17] : memref<72x128xf32, #tpu.memory_space<vmem>>, vector<2x128xf32>
    tpu.vector_store %arg38[%c18, %c0_17], %68 {strides = array<i32>} : memref<72x128xf32, #tpu.memory_space<vmem>>, vector<2x128xf32>,
    %70 = vector.extract_strided_slice %45 {offsets = [16, 0], sizes = [2, 128], strides = [1, 1]} : vector<26x128xf32> to vector<2x128xf32>
    %71 = vector.extract_strided_slice %45 {offsets = [18, 0], sizes = [2, 128], strides = [1, 1]} : vector<26x128xf32> to vector<2x128xf32>
    %72 = arith.maximumf %70, %71 : vector<2x128xf32>
    %73 = vector.extract_strided_slice %45 {offsets = [20, 0], sizes = [2, 128], strides = [1, 1]} : vector<26x128xf32> to vector<2x128xf32>
    %74 = arith.maximumf %72, %73 : vector<2x128xf32>
    %c20 = arith.constant 20 : index
    %c0_18 = arith.constant 0 : index
    %75 = vector.load %arg38[%c20, %c0_18] : memref<72x128xf32, #tpu.memory_space<vmem>>, vector<2x128xf32>
    tpu.vector_store %arg38[%c20, %c0_18], %74 {strides = array<i32>} : memref<72x128xf32, #tpu.memory_space<vmem>>, vector<2x128xf32>,
    %76 = vector.extract_strided_slice %45 {offsets = [20, 0], sizes = [2, 128], strides = [1, 1]} : vector<26x128xf32> to vector<2x128xf32>
    %77 = vector.extract_strided_slice %45 {offsets = [22, 0], sizes = [2, 128], strides = [1, 1]} : vector<26x128xf32> to vector<2x128xf32>
    %78 = arith.maximumf %76, %77 : vector<2x128xf32>
    %79 = vector.extract_strided_slice %45 {offsets = [24, 0], sizes = [2, 128], strides = [1, 1]} : vector<26x128xf32> to vector<2x128xf32>
    %80 = arith.maximumf %78, %79 : vector<2x128xf32>
    %c22 = arith.constant 22 : index
    %c0_19 = arith.constant 0 : index
    %81 = vector.load %arg38[%c22, %c0_19] : memref<72x128xf32, #tpu.memory_space<vmem>>, vector<2x128xf32>
    tpu.vector_store %arg38[%c22, %c0_19], %80 {strides = array<i32>} : memref<72x128xf32, #tpu.memory_space<vmem>>, vector<2x128xf32>,
    %c104_20 = arith.constant 104 : index
    %c0_21 = arith.constant 0 : index
    %82 = vector.load %arg1[%c104_20, %c0_21] : memref<338x128xf32, #tpu.memory_space<vmem>>, vector<26x128xf32>
    %c130 = arith.constant 130 : index
    %c0_22 = arith.constant 0 : index
    %83 = vector.load %arg1[%c130, %c0_22] : memref<338x128xf32, #tpu.memory_space<vmem>>, vector<26x128xf32>
    %84 = arith.maximumf %82, %83 : vector<26x128xf32>
    %c156 = arith.constant 156 : index
    %c0_23 = arith.constant 0 : index
    %85 = vector.load %arg1[%c156, %c0_23] : memref<338x128xf32, #tpu.memory_space<vmem>>, vector<26x128xf32>
    %86 = arith.maximumf %84, %85 : vector<26x128xf32>
    %87 = vector.extract_strided_slice %86 {offsets = [0, 0], sizes = [2, 128], strides = [1, 1]} : vector<26x128xf32> to vector<2x128xf32>
    %88 = vector.extract_strided_slice %86 {offsets = [2, 0], sizes = [2, 128], strides = [1, 1]} : vector<26x128xf32> to vector<2x128xf32>
    %89 = arith.maximumf %87, %88 : vector<2x128xf32>
    %90 = vector.extract_strided_slice %86 {offsets = [4, 0], sizes = [2, 128], strides = [1, 1]} : vector<26x128xf32> to vector<2x128xf32>
    %91 = arith.maximumf %89, %90 : vector<2x128xf32>
    %c24 = arith.constant 24 : index
    %c0_24 = arith.constant 0 : index
    %92 = vector.load %arg38[%c24, %c0_24] : memref<72x128xf32, #tpu.memory_space<vmem>>, vector<2x128xf32>
    tpu.vector_store %arg38[%c24, %c0_24], %91 {strides = array<i32>} : memref<72x128xf32, #tpu.memory_space<vmem>>, vector<2x128xf32>,
    %93 = vector.extract_strided_slice %86 {offsets = [4, 0], sizes = [2, 128], strides = [1, 1]} : vector<26x128xf32> to vector<2x128xf32>
    %94 = vector.extract_strided_slice %86 {offsets = [6, 0], sizes = [2, 128], strides = [1, 1]} : vector<26x128xf32> to vector<2x128xf32>
    %95 = arith.maximumf %93, %94 : vector<2x128xf32>
    %96 = vector.extract_strided_slice %86 {offsets = [8, 0], sizes = [2, 128], strides = [1, 1]} : vector<26x128xf32> to vector<2x128xf32>
    %97 = arith.maximumf %95, %96 : vector<2x128xf32>
    %c26_25 = arith.constant 26 : index
    %c0_26 = arith.constant 0 : index
    %98 = vector.load %arg38[%c26_25, %c0_26] : memref<72x128xf32, #tpu.memory_space<vmem>>, vector<2x128xf32>
    tpu.vector_store %arg38[%c26_25, %c0_26], %97 {strides = array<i32>} : memref<72x128xf32, #tpu.memory_space<vmem>>, vector<2x128xf32>,
    %99 = vector.extract_strided_slice %86 {offsets = [8, 0], sizes = [2, 128], strides = [1, 1]} : vector<26x128xf32> to vector<2x128xf32>
    %100 = vector.extract_strided_slice %86 {offsets = [10, 0], sizes = [2, 128], strides = [1, 1]} : vector<26x128xf32> to vector<2x128xf32>
    %101 = arith.maximumf %99, %100 : vector<2x128xf32>
    %102 = vector.extract_strided_slice %86 {offsets = [12, 0], sizes = [2, 128], strides = [1, 1]} : vector<26x128xf32> to vector<2x128xf32>
    %103 = arith.maximumf %101, %102 : vector<2x128xf32>
    %c28 = arith.constant 28 : index
    %c0_27 = arith.constant 0 : index
    %104 = vector.load %arg38[%c28, %c0_27] : memref<72x128xf32, #tpu.memory_space<vmem>>, vector<2x128xf32>
    tpu.vector_store %arg38[%c28, %c0_27], %103 {strides = array<i32>} : memref<72x128xf32, #tpu.memory_space<vmem>>, vector<2x128xf32>,
    %105 = vector.extract_strided_slice %86 {offsets = [12, 0], sizes = [2, 128], strides = [1, 1]} : vector<26x128xf32> to vector<2x128xf32>
    %106 = vector.extract_strided_slice %86 {offsets = [14, 0], sizes = [2, 128], strides = [1, 1]} : vector<26x128xf32> to vector<2x128xf32>
    %107 = arith.maximumf %105, %106 : vector<2x128xf32>
    %108 = vector.extract_strided_slice %86 {offsets = [16, 0], sizes = [2, 128], strides = [1, 1]} : vector<26x128xf32> to vector<2x128xf32>
    %109 = arith.maximumf %107, %108 : vector<2x128xf32>
    %c30 = arith.constant 30 : index
    %c0_28 = arith.constant 0 : index
    %110 = vector.load %arg38[%c30, %c0_28] : memref<72x128xf32, #tpu.memory_space<vmem>>, vector<2x128xf32>
    tpu.vector_store %arg38[%c30, %c0_28], %109 {strides = array<i32>} : memref<72x128xf32, #tpu.memory_space<vmem>>, vector<2x128xf32>,
    %111 = vector.extract_strided_slice %86 {offsets = [16, 0], sizes = [2, 128], strides = [1, 1]} : vector<26x128xf32> to vector<2x128xf32>
    %112 = vector.extract_strided_slice %86 {offsets = [18, 0], sizes = [2, 128], strides = [1, 1]} : vector<26x128xf32> to vector<2x128xf32>
    %113 = arith.maximumf %111, %112 : vector<2x128xf32>
    %114 = vector.extract_strided_slice %86 {offsets = [20, 0], sizes = [2, 128], strides = [1, 1]} : vector<26x128xf32> to vector<2x128xf32>
    %115 = arith.maximumf %113, %114 : vector<2x128xf32>
    %c32 = arith.constant 32 : index
    %c0_29 = arith.constant 0 : index
    %116 = vector.load %arg38[%c32, %c0_29] : memref<72x128xf32, #tpu.memory_space<vmem>>, vector<2x128xf32>
    tpu.vector_store %arg38[%c32, %c0_29], %115 {strides = array<i32>} : memref<72x128xf32, #tpu.memory_space<vmem>>, vector<2x128xf32>,
    %117 = vector.extract_strided_slice %86 {offsets = [20, 0], sizes = [2, 128], strides = [1, 1]} : vector<26x128xf32> to vector<2x128xf32>
    %118 = vector.extract_strided_slice %86 {offsets = [22, 0], sizes = [2, 128], strides = [1, 1]} : vector<26x128xf32> to vector<2x128xf32>
    %119 = arith.maximumf %117, %118 : vector<2x128xf32>
    %120 = vector.extract_strided_slice %86 {offsets = [24, 0], sizes = [2, 128], strides = [1, 1]} : vector<26x128xf32> to vector<2x128xf32>
    %121 = arith.maximumf %119, %120 : vector<2x128xf32>
    %c34 = arith.constant 34 : index
    %c0_30 = arith.constant 0 : index
    %122 = vector.load %arg38[%c34, %c0_30] : memref<72x128xf32, #tpu.memory_space<vmem>>, vector<2x128xf32>
    tpu.vector_store %arg38[%c34, %c0_30], %121 {strides = array<i32>} : memref<72x128xf32, #tpu.memory_space<vmem>>, vector<2x128xf32>,
    %c156_31 = arith.constant 156 : index
    %c0_32 = arith.constant 0 : index
    %123 = vector.load %arg1[%c156_31, %c0_32] : memref<338x128xf32, #tpu.memory_space<vmem>>, vector<26x128xf32>
    %c182 = arith.constant 182 : index
    %c0_33 = arith.constant 0 : index
    %124 = vector.load %arg1[%c182, %c0_33] : memref<338x128xf32, #tpu.memory_space<vmem>>, vector<26x128xf32>
    %125 = arith.maximumf %123, %124 : vector<26x128xf32>
    %c208 = arith.constant 208 : index
    %c0_34 = arith.constant 0 : index
    %126 = vector.load %arg1[%c208, %c0_34] : memref<338x128xf32, #tpu.memory_space<vmem>>, vector<26x128xf32>
    %127 = arith.maximumf %125, %126 : vector<26x128xf32>
    %128 = vector.extract_strided_slice %127 {offsets = [0, 0], sizes = [2, 128], strides = [1, 1]} : vector<26x128xf32> to vector<2x128xf32>
    %129 = vector.extract_strided_slice %127 {offsets = [2, 0], sizes = [2, 128], strides = [1, 1]} : vector<26x128xf32> to vector<2x128xf32>
    %130 = arith.maximumf %128, %129 : vector<2x128xf32>
    %131 = vector.extract_strided_slice %127 {offsets = [4, 0], sizes = [2, 128], strides = [1, 1]} : vector<26x128xf32> to vector<2x128xf32>
    %132 = arith.maximumf %130, %131 : vector<2x128xf32>
    %c36 = arith.constant 36 : index
    %c0_35 = arith.constant 0 : index
    %133 = vector.load %arg38[%c36, %c0_35] : memref<72x128xf32, #tpu.memory_space<vmem>>, vector<2x128xf32>
    tpu.vector_store %arg38[%c36, %c0_35], %132 {strides = array<i32>} : memref<72x128xf32, #tpu.memory_space<vmem>>, vector<2x128xf32>,
    %134 = vector.extract_strided_slice %127 {offsets = [4, 0], sizes = [2, 128], strides = [1, 1]} : vector<26x128xf32> to vector<2x128xf32>
    %135 = vector.extract_strided_slice %127 {offsets = [6, 0], sizes = [2, 128], strides = [1, 1]} : vector<26x128xf32> to vector<2x128xf32>
    %136 = arith.maximumf %134, %135 : vector<2x128xf32>
    %137 = vector.extract_strided_slice %127 {offsets = [8, 0], sizes = [2, 128], strides = [1, 1]} : vector<26x128xf32> to vector<2x128xf32>
    %138 = arith.maximumf %136, %137 : vector<2x128xf32>
    %c38 = arith.constant 38 : index
    %c0_36 = arith.constant 0 : index
    %139 = vector.load %arg38[%c38, %c0_36] : memref<72x128xf32, #tpu.memory_space<vmem>>, vector<2x128xf32>
    tpu.vector_store %arg38[%c38, %c0_36], %138 {strides = array<i32>} : memref<72x128xf32, #tpu.memory_space<vmem>>, vector<2x128xf32>,
    %140 = vector.extract_strided_slice %127 {offsets = [8, 0], sizes = [2, 128], strides = [1, 1]} : vector<26x128xf32> to vector<2x128xf32>
    %141 = vector.extract_strided_slice %127 {offsets = [10, 0], sizes = [2, 128], strides = [1, 1]} : vector<26x128xf32> to vector<2x128xf32>
    %142 = arith.maximumf %140, %141 : vector<2x128xf32>
    %143 = vector.extract_strided_slice %127 {offsets = [12, 0], sizes = [2, 128], strides = [1, 1]} : vector<26x128xf32> to vector<2x128xf32>
    %144 = arith.maximumf %142, %143 : vector<2x128xf32>
    %c40 = arith.constant 40 : index
    %c0_37 = arith.constant 0 : index
    %145 = vector.load %arg38[%c40, %c0_37] : memref<72x128xf32, #tpu.memory_space<vmem>>, vector<2x128xf32>
    tpu.vector_store %arg38[%c40, %c0_37], %144 {strides = array<i32>} : memref<72x128xf32, #tpu.memory_space<vmem>>, vector<2x128xf32>,
    %146 = vector.extract_strided_slice %127 {offsets = [12, 0], sizes = [2, 128], strides = [1, 1]} : vector<26x128xf32> to vector<2x128xf32>
    %147 = vector.extract_strided_slice %127 {offsets = [14, 0], sizes = [2, 128], strides = [1, 1]} : vector<26x128xf32> to vector<2x128xf32>
    %148 = arith.maximumf %146, %147 : vector<2x128xf32>
    %149 = vector.extract_strided_slice %127 {offsets = [16, 0], sizes = [2, 128], strides = [1, 1]} : vector<26x128xf32> to vector<2x128xf32>
    %150 = arith.maximumf %148, %149 : vector<2x128xf32>
    %c42 = arith.constant 42 : index
    %c0_38 = arith.constant 0 : index
    %151 = vector.load %arg38[%c42, %c0_38] : memref<72x128xf32, #tpu.memory_space<vmem>>, vector<2x128xf32>
    tpu.vector_store %arg38[%c42, %c0_38], %150 {strides = array<i32>} : memref<72x128xf32, #tpu.memory_space<vmem>>, vector<2x128xf32>,
    %152 = vector.extract_strided_slice %127 {offsets = [16, 0], sizes = [2, 128], strides = [1, 1]} : vector<26x128xf32> to vector<2x128xf32>
    %153 = vector.extract_strided_slice %127 {offsets = [18, 0], sizes = [2, 128], strides = [1, 1]} : vector<26x128xf32> to vector<2x128xf32>
    %154 = arith.maximumf %152, %153 : vector<2x128xf32>
    %155 = vector.extract_strided_slice %127 {offsets = [20, 0], sizes = [2, 128], strides = [1, 1]} : vector<26x128xf32> to vector<2x128xf32>
    %156 = arith.maximumf %154, %155 : vector<2x128xf32>
    %c44 = arith.constant 44 : index
    %c0_39 = arith.constant 0 : index
    %157 = vector.load %arg38[%c44, %c0_39] : memref<72x128xf32, #tpu.memory_space<vmem>>, vector<2x128xf32>
    tpu.vector_store %arg38[%c44, %c0_39], %156 {strides = array<i32>} : memref<72x128xf32, #tpu.memory_space<vmem>>, vector<2x128xf32>,
    %158 = vector.extract_strided_slice %127 {offsets = [20, 0], sizes = [2, 128], strides = [1, 1]} : vector<26x128xf32> to vector<2x128xf32>
    %159 = vector.extract_strided_slice %127 {offsets = [22, 0], sizes = [2, 128], strides = [1, 1]} : vector<26x128xf32> to vector<2x128xf32>
    %160 = arith.maximumf %158, %159 : vector<2x128xf32>
    %161 = vector.extract_strided_slice %127 {offsets = [24, 0], sizes = [2, 128], strides = [1, 1]} : vector<26x128xf32> to vector<2x128xf32>
    %162 = arith.maximumf %160, %161 : vector<2x128xf32>
    %c46 = arith.constant 46 : index
    %c0_40 = arith.constant 0 : index
    %163 = vector.load %arg38[%c46, %c0_40] : memref<72x128xf32, #tpu.memory_space<vmem>>, vector<2x128xf32>
    tpu.vector_store %arg38[%c46, %c0_40], %162 {strides = array<i32>} : memref<72x128xf32, #tpu.memory_space<vmem>>, vector<2x128xf32>,
    %c208_41 = arith.constant 208 : index
    %c0_42 = arith.constant 0 : index
    %164 = vector.load %arg1[%c208_41, %c0_42] : memref<338x128xf32, #tpu.memory_space<vmem>>, vector<26x128xf32>
    %c234 = arith.constant 234 : index
    %c0_43 = arith.constant 0 : index
    %165 = vector.load %arg1[%c234, %c0_43] : memref<338x128xf32, #tpu.memory_space<vmem>>, vector<26x128xf32>
    %166 = arith.maximumf %164, %165 : vector<26x128xf32>
    %c260 = arith.constant 260 : index
    %c0_44 = arith.constant 0 : index
    %167 = vector.load %arg1[%c260, %c0_44] : memref<338x128xf32, #tpu.memory_space<vmem>>, vector<26x128xf32>
    %168 = arith.maximumf %166, %167 : vector<26x128xf32>
    %169 = vector.extract_strided_slice %168 {offsets = [0, 0], sizes = [2, 128], strides = [1, 1]} : vector<26x128xf32> to vector<2x128xf32>
    %170 = vector.extract_strided_slice %168 {offsets = [2, 0], sizes = [2, 128], strides = [1, 1]} : vector<26x128xf32> to vector<2x128xf32>
    %171 = arith.maximumf %169, %170 : vector<2x128xf32>
    %172 = vector.extract_strided_slice %168 {offsets = [4, 0], sizes = [2, 128], strides = [1, 1]} : vector<26x128xf32> to vector<2x128xf32>
    %173 = arith.maximumf %171, %172 : vector<2x128xf32>
    %c48 = arith.constant 48 : index
    %c0_45 = arith.constant 0 : index
    %174 = vector.load %arg38[%c48, %c0_45] : memref<72x128xf32, #tpu.memory_space<vmem>>, vector<2x128xf32>
    tpu.vector_store %arg38[%c48, %c0_45], %173 {strides = array<i32>} : memref<72x128xf32, #tpu.memory_space<vmem>>, vector<2x128xf32>,
    %175 = vector.extract_strided_slice %168 {offsets = [4, 0], sizes = [2, 128], strides = [1, 1]} : vector<26x128xf32> to vector<2x128xf32>
    %176 = vector.extract_strided_slice %168 {offsets = [6, 0], sizes = [2, 128], strides = [1, 1]} : vector<26x128xf32> to vector<2x128xf32>
    %177 = arith.maximumf %175, %176 : vector<2x128xf32>
    %178 = vector.extract_strided_slice %168 {offsets = [8, 0], sizes = [2, 128], strides = [1, 1]} : vector<26x128xf32> to vector<2x128xf32>
    %179 = arith.maximumf %177, %178 : vector<2x128xf32>
    %c50 = arith.constant 50 : index
    %c0_46 = arith.constant 0 : index
    %180 = vector.load %arg38[%c50, %c0_46] : memref<72x128xf32, #tpu.memory_space<vmem>>, vector<2x128xf32>
    tpu.vector_store %arg38[%c50, %c0_46], %179 {strides = array<i32>} : memref<72x128xf32, #tpu.memory_space<vmem>>, vector<2x128xf32>,
    %181 = vector.extract_strided_slice %168 {offsets = [8, 0], sizes = [2, 128], strides = [1, 1]} : vector<26x128xf32> to vector<2x128xf32>
    %182 = vector.extract_strided_slice %168 {offsets = [10, 0], sizes = [2, 128], strides = [1, 1]} : vector<26x128xf32> to vector<2x128xf32>
    %183 = arith.maximumf %181, %182 : vector<2x128xf32>
    %184 = vector.extract_strided_slice %168 {offsets = [12, 0], sizes = [2, 128], strides = [1, 1]} : vector<26x128xf32> to vector<2x128xf32>
    %185 = arith.maximumf %183, %184 : vector<2x128xf32>
    %c52_47 = arith.constant 52 : index
    %c0_48 = arith.constant 0 : index
    %186 = vector.load %arg38[%c52_47, %c0_48] : memref<72x128xf32, #tpu.memory_space<vmem>>, vector<2x128xf32>
    tpu.vector_store %arg38[%c52_47, %c0_48], %185 {strides = array<i32>} : memref<72x128xf32, #tpu.memory_space<vmem>>, vector<2x128xf32>,
    %187 = vector.extract_strided_slice %168 {offsets = [12, 0], sizes = [2, 128], strides = [1, 1]} : vector<26x128xf32> to vector<2x128xf32>
    %188 = vector.extract_strided_slice %168 {offsets = [14, 0], sizes = [2, 128], strides = [1, 1]} : vector<26x128xf32> to vector<2x128xf32>
    %189 = arith.maximumf %187, %188 : vector<2x128xf32>
    %190 = vector.extract_strided_slice %168 {offsets = [16, 0], sizes = [2, 128], strides = [1, 1]} : vector<26x128xf32> to vector<2x128xf32>
    %191 = arith.maximumf %189, %190 : vector<2x128xf32>
    %c54 = arith.constant 54 : index
    %c0_49 = arith.constant 0 : index
    %192 = vector.load %arg38[%c54, %c0_49] : memref<72x128xf32, #tpu.memory_space<vmem>>, vector<2x128xf32>
    tpu.vector_store %arg38[%c54, %c0_49], %191 {strides = array<i32>} : memref<72x128xf32, #tpu.memory_space<vmem>>, vector<2x128xf32>,
    %193 = vector.extract_strided_slice %168 {offsets = [16, 0], sizes = [2, 128], strides = [1, 1]} : vector<26x128xf32> to vector<2x128xf32>
    %194 = vector.extract_strided_slice %168 {offsets = [18, 0], sizes = [2, 128], strides = [1, 1]} : vector<26x128xf32> to vector<2x128xf32>
    %195 = arith.maximumf %193, %194 : vector<2x128xf32>
    %196 = vector.extract_strided_slice %168 {offsets = [20, 0], sizes = [2, 128], strides = [1, 1]} : vector<26x128xf32> to vector<2x128xf32>
    %197 = arith.maximumf %195, %196 : vector<2x128xf32>
    %c56 = arith.constant 56 : index
    %c0_50 = arith.constant 0 : index
    %198 = vector.load %arg38[%c56, %c0_50] : memref<72x128xf32, #tpu.memory_space<vmem>>, vector<2x128xf32>
    tpu.vector_store %arg38[%c56, %c0_50], %197 {strides = array<i32>} : memref<72x128xf32, #tpu.memory_space<vmem>>, vector<2x128xf32>,
    %199 = vector.extract_strided_slice %168 {offsets = [20, 0], sizes = [2, 128], strides = [1, 1]} : vector<26x128xf32> to vector<2x128xf32>
    %200 = vector.extract_strided_slice %168 {offsets = [22, 0], sizes = [2, 128], strides = [1, 1]} : vector<26x128xf32> to vector<2x128xf32>
    %201 = arith.maximumf %199, %200 : vector<2x128xf32>
    %202 = vector.extract_strided_slice %168 {offsets = [24, 0], sizes = [2, 128], strides = [1, 1]} : vector<26x128xf32> to vector<2x128xf32>
    %203 = arith.maximumf %201, %202 : vector<2x128xf32>
    %c58 = arith.constant 58 : index
    %c0_51 = arith.constant 0 : index
    %204 = vector.load %arg38[%c58, %c0_51] : memref<72x128xf32, #tpu.memory_space<vmem>>, vector<2x128xf32>
    tpu.vector_store %arg38[%c58, %c0_51], %203 {strides = array<i32>} : memref<72x128xf32, #tpu.memory_space<vmem>>, vector<2x128xf32>,
    %c260_52 = arith.constant 260 : index
    %c0_53 = arith.constant 0 : index
    %205 = vector.load %arg1[%c260_52, %c0_53] : memref<338x128xf32, #tpu.memory_space<vmem>>, vector<26x128xf32>
    %c286 = arith.constant 286 : index
    %c0_54 = arith.constant 0 : index
    %206 = vector.load %arg1[%c286, %c0_54] : memref<338x128xf32, #tpu.memory_space<vmem>>, vector<26x128xf32>
    %207 = arith.maximumf %205, %206 : vector<26x128xf32>
    %c312 = arith.constant 312 : index
    %c0_55 = arith.constant 0 : index
    %208 = vector.load %arg1[%c312, %c0_55] : memref<338x128xf32, #tpu.memory_space<vmem>>, vector<26x128xf32>
    %209 = arith.maximumf %207, %208 : vector<26x128xf32>
    %210 = vector.extract_strided_slice %209 {offsets = [0, 0], sizes = [2, 128], strides = [1, 1]} : vector<26x128xf32> to vector<2x128xf32>
    %211 = vector.extract_strided_slice %209 {offsets = [2, 0], sizes = [2, 128], strides = [1, 1]} : vector<26x128xf32> to vector<2x128xf32>
    %212 = arith.maximumf %210, %211 : vector<2x128xf32>
    %213 = vector.extract_strided_slice %209 {offsets = [4, 0], sizes = [2, 128], strides = [1, 1]} : vector<26x128xf32> to vector<2x128xf32>
    %214 = arith.maximumf %212, %213 : vector<2x128xf32>
    %c60 = arith.constant 60 : index
    %c0_56 = arith.constant 0 : index
    %215 = vector.load %arg38[%c60, %c0_56] : memref<72x128xf32, #tpu.memory_space<vmem>>, vector<2x128xf32>
    tpu.vector_store %arg38[%c60, %c0_56], %214 {strides = array<i32>} : memref<72x128xf32, #tpu.memory_space<vmem>>, vector<2x128xf32>,
    %216 = vector.extract_strided_slice %209 {offsets = [4, 0], sizes = [2, 128], strides = [1, 1]} : vector<26x128xf32> to vector<2x128xf32>
    %217 = vector.extract_strided_slice %209 {offsets = [6, 0], sizes = [2, 128], strides = [1, 1]} : vector<26x128xf32> to vector<2x128xf32>
    %218 = arith.maximumf %216, %217 : vector<2x128xf32>
    %219 = vector.extract_strided_slice %209 {offsets = [8, 0], sizes = [2, 128], strides = [1, 1]} : vector<26x128xf32> to vector<2x128xf32>
    %220 = arith.maximumf %218, %219 : vector<2x128xf32>
    %c62 = arith.constant 62 : index
    %c0_57 = arith.constant 0 : index
    %221 = vector.load %arg38[%c62, %c0_57] : memref<72x128xf32, #tpu.memory_space<vmem>>, vector<2x128xf32>
    tpu.vector_store %arg38[%c62, %c0_57], %220 {strides = array<i32>} : memref<72x128xf32, #tpu.memory_space<vmem>>, vector<2x128xf32>,
    %222 = vector.extract_strided_slice %209 {offsets = [8, 0], sizes = [2, 128], strides = [1, 1]} : vector<26x128xf32> to vector<2x128xf32>
    %223 = vector.extract_strided_slice %209 {offsets = [10, 0], sizes = [2, 128], strides = [1, 1]} : vector<26x128xf32> to vector<2x128xf32>
    %224 = arith.maximumf %222, %223 : vector<2x128xf32>
    %225 = vector.extract_strided_slice %209 {offsets = [12, 0], sizes = [2, 128], strides = [1, 1]} : vector<26x128xf32> to vector<2x128xf32>
    %226 = arith.maximumf %224, %225 : vector<2x128xf32>
    %c64 = arith.constant 64 : index
    %c0_58 = arith.constant 0 : index
    %227 = vector.load %arg38[%c64, %c0_58] : memref<72x128xf32, #tpu.memory_space<vmem>>, vector<2x128xf32>
    tpu.vector_store %arg38[%c64, %c0_58], %226 {strides = array<i32>} : memref<72x128xf32, #tpu.memory_space<vmem>>, vector<2x128xf32>,
    %228 = vector.extract_strided_slice %209 {offsets = [12, 0], sizes = [2, 128], strides = [1, 1]} : vector<26x128xf32> to vector<2x128xf32>
    %229 = vector.extract_strided_slice %209 {offsets = [14, 0], sizes = [2, 128], strides = [1, 1]} : vector<26x128xf32> to vector<2x128xf32>
    %230 = arith.maximumf %228, %229 : vector<2x128xf32>
    %231 = vector.extract_strided_slice %209 {offsets = [16, 0], sizes = [2, 128], strides = [1, 1]} : vector<26x128xf32> to vector<2x128xf32>
    %232 = arith.maximumf %230, %231 : vector<2x128xf32>
    %c66 = arith.constant 66 : index
    %c0_59 = arith.constant 0 : index
    %233 = vector.load %arg38[%c66, %c0_59] : memref<72x128xf32, #tpu.memory_space<vmem>>, vector<2x128xf32>
    tpu.vector_store %arg38[%c66, %c0_59], %232 {strides = array<i32>} : memref<72x128xf32, #tpu.memory_space<vmem>>, vector<2x128xf32>,
    %234 = vector.extract_strided_slice %209 {offsets = [16, 0], sizes = [2, 128], strides = [1, 1]} : vector<26x128xf32> to vector<2x128xf32>
    %235 = vector.extract_strided_slice %209 {offsets = [18, 0], sizes = [2, 128], strides = [1, 1]} : vector<26x128xf32> to vector<2x128xf32>
    %236 = arith.maximumf %234, %235 : vector<2x128xf32>
    %237 = vector.extract_strided_slice %209 {offsets = [20, 0], sizes = [2, 128], strides = [1, 1]} : vector<26x128xf32> to vector<2x128xf32>
    %238 = arith.maximumf %236, %237 : vector<2x128xf32>
    %c68 = arith.constant 68 : index
    %c0_60 = arith.constant 0 : index
    %239 = vector.load %arg38[%c68, %c0_60] : memref<72x128xf32, #tpu.memory_space<vmem>>, vector<2x128xf32>
    tpu.vector_store %arg38[%c68, %c0_60], %238 {strides = array<i32>} : memref<72x128xf32, #tpu.memory_space<vmem>>, vector<2x128xf32>,
    %240 = vector.extract_strided_slice %209 {offsets = [20, 0], sizes = [2, 128], strides = [1, 1]} : vector<26x128xf32> to vector<2x128xf32>
    %241 = vector.extract_strided_slice %209 {offsets = [22, 0], sizes = [2, 128], strides = [1, 1]} : vector<26x128xf32> to vector<2x128xf32>
    %242 = arith.maximumf %240, %241 : vector<2x128xf32>
    %243 = vector.extract_strided_slice %209 {offsets = [24, 0], sizes = [2, 128], strides = [1, 1]} : vector<26x128xf32> to vector<2x128xf32>
    %244 = arith.maximumf %242, %243 : vector<2x128xf32>
    %c70 = arith.constant 70 : index
    %c0_61 = arith.constant 0 : index
    %245 = vector.load %arg38[%c70, %c0_61] : memref<72x128xf32, #tpu.memory_space<vmem>>, vector<2x128xf32>
    tpu.vector_store %arg38[%c70, %c0_61], %244 {strides = array<i32>} : memref<72x128xf32, #tpu.memory_space<vmem>>, vector<2x128xf32>,
    %c0_62 = arith.constant 0 : index
    %c0_63 = arith.constant 0 : index
    %246 = vector.load %arg38[%c0_62, %c0_63] : memref<72x128xf32, #tpu.memory_space<vmem>>, vector<72x128xf32>
    %c0_64 = arith.constant 0 : index
    %c0_65 = arith.constant 0 : index
    %247 = vector.load %arg2[%c0_64, %c0_65] : memref<1x128xf32, #tpu.memory_space<vmem>>, vector<1x128xf32>
    %248 = vector.broadcast %247 : vector<1x128xf32> to vector<72x128xf32>
    %249 = arith.addf %246, %248 : vector<72x128xf32>
    %cst = arith.constant 0.000000e+00 : f32
    %250 = vector.broadcast %cst : f32 to vector<72x128xf32>
    %251 = arith.maximumf %249, %250 : vector<72x128xf32>
    %252 = arith.truncf %251 : vector<72x128xf32> to vector<72x128xbf16>
    %c0_66 = arith.constant 0 : index
    %c0_67 = arith.constant 0 : index
    %253 = vector.load %arg3[%c0_66, %c0_67] : memref<128x128xbf16, #tpu.memory_space<vmem>>, vector<128x128xbf16>
    %cst_68 = arith.constant dense<0.000000e+00> : vector<72x128xf32>
    %254 = tpu.matmul %252, %253, %cst_68 {dimension_numbers = #tpu.dot_dimension_numbers<[1], [0], [0], [1], [0, 0, 1, 1], [], []>} : vector<72x128xbf16>, vector<128x128xbf16>, vector<72x128xf32> -> vector<72x128xf32>
    %c0_69 = arith.constant 0 : index
    %c0_70 = arith.constant 0 : index
    %255 = vector.load %arg4[%c0_69, %c0_70] : memref<1x128xf32, #tpu.memory_space<vmem>>, vector<1x128xf32>
    %256 = vector.broadcast %255 : vector<1x128xf32> to vector<72x128xf32>
    %257 = arith.addf %254, %256 : vector<72x128xf32>
    %cst_71 = arith.constant 0.000000e+00 : f32
    %258 = vector.broadcast %cst_71 : f32 to vector<72x128xf32>
    %259 = arith.maximumf %257, %258 : vector<72x128xf32>
    %260 = arith.truncf %259 : vector<72x128xf32> to vector<72x128xbf16>
    %c0_72 = arith.constant 0 : index
    %c0_73 = arith.constant 0 : index
    %261 = vector.load %arg5[%c0_72, %c0_73] : memref<128x128xbf16, #tpu.memory_space<vmem>>, vector<128x128xbf16>
    %cst_74 = arith.constant dense<0.000000e+00> : vector<72x128xf32>
    %262 = tpu.matmul %260, %261, %cst_74 {dimension_numbers = #tpu.dot_dimension_numbers<[1], [0], [0], [1], [0, 0, 1, 1], [], []>} : vector<72x128xbf16>, vector<128x128xbf16>, vector<72x128xf32> -> vector<72x128xf32>
    %c0_75 = arith.constant 0 : index
    %c0_76 = arith.constant 0 : index
    %263 = vector.load %arg6[%c0_75, %c0_76] : memref<1x128xf32, #tpu.memory_space<vmem>>, vector<1x128xf32>
    %264 = vector.broadcast %263 : vector<1x128xf32> to vector<72x128xf32>
    %265 = arith.addf %262, %264 : vector<72x128xf32>
    %cst_77 = arith.constant 0.000000e+00 : f32
    %266 = vector.broadcast %cst_77 : f32 to vector<72x128xf32>
    %267 = arith.maximumf %265, %266 : vector<72x128xf32>
    %268 = arith.truncf %267 : vector<72x128xf32> to vector<72x128xbf16>
    %c0_78 = arith.constant 0 : index
    %c0_79 = arith.constant 0 : index
    %269 = vector.load %arg7[%c0_78, %c0_79] : memref<128x128xbf16, #tpu.memory_space<vmem>>, vector<128x128xbf16>
    %cst_80 = arith.constant dense<0.000000e+00> : vector<72x128xf32>
    %270 = tpu.matmul %268, %269, %cst_80 {dimension_numbers = #tpu.dot_dimension_numbers<[1], [0], [0], [1], [0, 0, 1, 1], [], []>} : vector<72x128xbf16>, vector<128x128xbf16>, vector<72x128xf32> -> vector<72x128xf32>
    %c0_81 = arith.constant 0 : index
    %c0_82 = arith.constant 0 : index
    %271 = vector.load %arg8[%c0_81, %c0_82] : memref<1x128xf32, #tpu.memory_space<vmem>>, vector<1x128xf32>
    %272 = vector.broadcast %271 : vector<1x128xf32> to vector<72x128xf32>
    %273 = arith.addf %270, %272 : vector<72x128xf32>
    %cst_83 = arith.constant 0.000000e+00 : f32
    %274 = vector.broadcast %cst_83 : f32 to vector<72x128xf32>
    %275 = arith.maximumf %273, %274 : vector<72x128xf32>
    %276 = arith.truncf %275 : vector<72x128xf32> to vector<72x128xbf16>
    %c0_84 = arith.constant 0 : index
    %c0_85 = arith.constant 0 : index
    %277 = vector.load %arg9[%c0_84, %c0_85] : memref<128x128xbf16, #tpu.memory_space<vmem>>, vector<128x128xbf16>
    %cst_86 = arith.constant dense<0.000000e+00> : vector<72x128xf32>
    %278 = tpu.matmul %276, %277, %cst_86 {dimension_numbers = #tpu.dot_dimension_numbers<[1], [0], [0], [1], [0, 0, 1, 1], [], []>} : vector<72x128xbf16>, vector<128x128xbf16>, vector<72x128xf32> -> vector<72x128xf32>
    %c0_87 = arith.constant 0 : index
    %c0_88 = arith.constant 0 : index
    %279 = vector.load %arg10[%c0_87, %c0_88] : memref<1x128xf32, #tpu.memory_space<vmem>>, vector<1x128xf32>
    %280 = vector.broadcast %279 : vector<1x128xf32> to vector<72x128xf32>
    %281 = arith.addf %278, %280 : vector<72x128xf32>
    %cst_89 = arith.constant 0.000000e+00 : f32
    %282 = vector.broadcast %cst_89 : f32 to vector<72x128xf32>
    %283 = arith.maximumf %281, %282 : vector<72x128xf32>
    %284 = arith.addf %267, %283 : vector<72x128xf32>
    %285 = arith.truncf %284 : vector<72x128xf32> to vector<72x128xbf16>
    %c0_90 = arith.constant 0 : index
    %c0_91 = arith.constant 0 : index
    %286 = vector.load %arg11[%c0_90, %c0_91] : memref<128x128xbf16, #tpu.memory_space<vmem>>, vector<128x128xbf16>
    %cst_92 = arith.constant dense<0.000000e+00> : vector<72x128xf32>
    %287 = tpu.matmul %285, %286, %cst_92 {dimension_numbers = #tpu.dot_dimension_numbers<[1], [0], [0], [1], [0, 0, 1, 1], [], []>} : vector<72x128xbf16>, vector<128x128xbf16>, vector<72x128xf32> -> vector<72x128xf32>
    %c0_93 = arith.constant 0 : index
    %c0_94 = arith.constant 0 : index
    %288 = vector.load %arg12[%c0_93, %c0_94] : memref<1x128xf32, #tpu.memory_space<vmem>>, vector<1x128xf32>
    %289 = vector.broadcast %288 : vector<1x128xf32> to vector<72x128xf32>
    %290 = arith.addf %287, %289 : vector<72x128xf32>
    %cst_95 = arith.constant 0.000000e+00 : f32
    %291 = vector.broadcast %cst_95 : f32 to vector<72x128xf32>
    %292 = arith.maximumf %290, %291 : vector<72x128xf32>
    %293 = arith.truncf %292 : vector<72x128xf32> to vector<72x128xbf16>
    %c0_96 = arith.constant 0 : index
    %c0_97 = arith.constant 0 : index
    %294 = vector.load %arg13[%c0_96, %c0_97] : memref<128x256xbf16, #tpu.memory_space<vmem>>, vector<128x256xbf16>
    %cst_98 = arith.constant dense<0.000000e+00> : vector<72x256xf32>
    %295 = tpu.matmul %293, %294, %cst_98 {dimension_numbers = #tpu.dot_dimension_numbers<[1], [0], [0], [1], [0, 0, 1, 1], [], []>} : vector<72x128xbf16>, vector<128x256xbf16>, vector<72x256xf32> -> vector<72x256xf32>
    %c0_99 = arith.constant 0 : index
    %c0_100 = arith.constant 0 : index
    %296 = vector.load %arg14[%c0_99, %c0_100] : memref<1x256xf32, #tpu.memory_space<vmem>>, vector<1x256xf32>
    %297 = vector.broadcast %296 : vector<1x256xf32> to vector<72x256xf32>
    %298 = arith.addf %295, %297 : vector<72x256xf32>
    %cst_101 = arith.constant 0.000000e+00 : f32
    %299 = vector.broadcast %cst_101 : f32 to vector<72x256xf32>
    %300 = arith.maximumf %298, %299 : vector<72x256xf32>
    %301 = vector.extract_strided_slice %300 {offsets = [0, 0], sizes = [12, 256], strides = [1, 1]} : vector<72x256xf32> to vector<12x256xf32>
    %302 = vector.extract_strided_slice %300 {offsets = [12, 0], sizes = [12, 256], strides = [1, 1]} : vector<72x256xf32> to vector<12x256xf32>
    %303 = arith.maximumf %301, %302 : vector<12x256xf32>
    %304 = vector.extract_strided_slice %300 {offsets = [24, 0], sizes = [12, 256], strides = [1, 1]} : vector<72x256xf32> to vector<12x256xf32>
    %305 = arith.maximumf %303, %304 : vector<12x256xf32>
    %306 = vector.extract_strided_slice %305 {offsets = [0, 0], sizes = [2, 256], strides = [1, 1]} : vector<12x256xf32> to vector<2x256xf32>
    %307 = vector.extract_strided_slice %305 {offsets = [2, 0], sizes = [2, 256], strides = [1, 1]} : vector<12x256xf32> to vector<2x256xf32>
    %308 = arith.maximumf %306, %307 : vector<2x256xf32>
    %309 = vector.extract_strided_slice %305 {offsets = [4, 0], sizes = [2, 256], strides = [1, 1]} : vector<12x256xf32> to vector<2x256xf32>
    %310 = arith.maximumf %308, %309 : vector<2x256xf32>
    %c0_102 = arith.constant 0 : index
    %c0_103 = arith.constant 0 : index
    %311 = vector.load %arg39[%c0_102, %c0_103] : memref<18x256xf32, #tpu.memory_space<vmem>>, vector<2x256xf32>
    tpu.vector_store %arg39[%c0_102, %c0_103], %310 {strides = array<i32>} : memref<18x256xf32, #tpu.memory_space<vmem>>, vector<2x256xf32>,
    %312 = vector.extract_strided_slice %305 {offsets = [4, 0], sizes = [2, 256], strides = [1, 1]} : vector<12x256xf32> to vector<2x256xf32>
    %313 = vector.extract_strided_slice %305 {offsets = [6, 0], sizes = [2, 256], strides = [1, 1]} : vector<12x256xf32> to vector<2x256xf32>
    %314 = arith.maximumf %312, %313 : vector<2x256xf32>
    %315 = vector.extract_strided_slice %305 {offsets = [8, 0], sizes = [2, 256], strides = [1, 1]} : vector<12x256xf32> to vector<2x256xf32>
    %316 = arith.maximumf %314, %315 : vector<2x256xf32>
    %c2_104 = arith.constant 2 : index
    %c0_105 = arith.constant 0 : index
    %317 = vector.load %arg39[%c2_104, %c0_105] : memref<18x256xf32, #tpu.memory_space<vmem>>, vector<2x256xf32>
    tpu.vector_store %arg39[%c2_104, %c0_105], %316 {strides = array<i32>} : memref<18x256xf32, #tpu.memory_space<vmem>>, vector<2x256xf32>,
    %318 = vector.extract_strided_slice %305 {offsets = [8, 0], sizes = [2, 256], strides = [1, 1]} : vector<12x256xf32> to vector<2x256xf32>
    %319 = vector.extract_strided_slice %305 {offsets = [10, 0], sizes = [2, 256], strides = [1, 1]} : vector<12x256xf32> to vector<2x256xf32>
    %320 = arith.maximumf %318, %319 : vector<2x256xf32>
    %c4_106 = arith.constant 4 : index
    %c0_107 = arith.constant 0 : index
    %321 = vector.load %arg39[%c4_106, %c0_107] : memref<18x256xf32, #tpu.memory_space<vmem>>, vector<2x256xf32>
    tpu.vector_store %arg39[%c4_106, %c0_107], %320 {strides = array<i32>} : memref<18x256xf32, #tpu.memory_space<vmem>>, vector<2x256xf32>,
    %322 = vector.extract_strided_slice %300 {offsets = [24, 0], sizes = [12, 256], strides = [1, 1]} : vector<72x256xf32> to vector<12x256xf32>
    %323 = vector.extract_strided_slice %300 {offsets = [36, 0], sizes = [12, 256], strides = [1, 1]} : vector<72x256xf32> to vector<12x256xf32>
    %324 = arith.maximumf %322, %323 : vector<12x256xf32>
    %325 = vector.extract_strided_slice %300 {offsets = [48, 0], sizes = [12, 256], strides = [1, 1]} : vector<72x256xf32> to vector<12x256xf32>
    %326 = arith.maximumf %324, %325 : vector<12x256xf32>
    %327 = vector.extract_strided_slice %326 {offsets = [0, 0], sizes = [2, 256], strides = [1, 1]} : vector<12x256xf32> to vector<2x256xf32>
    %328 = vector.extract_strided_slice %326 {offsets = [2, 0], sizes = [2, 256], strides = [1, 1]} : vector<12x256xf32> to vector<2x256xf32>
    %329 = arith.maximumf %327, %328 : vector<2x256xf32>
    %330 = vector.extract_strided_slice %326 {offsets = [4, 0], sizes = [2, 256], strides = [1, 1]} : vector<12x256xf32> to vector<2x256xf32>
    %331 = arith.maximumf %329, %330 : vector<2x256xf32>
    %c6_108 = arith.constant 6 : index
    %c0_109 = arith.constant 0 : index
    %332 = vector.load %arg39[%c6_108, %c0_109] : memref<18x256xf32, #tpu.memory_space<vmem>>, vector<2x256xf32>
    tpu.vector_store %arg39[%c6_108, %c0_109], %331 {strides = array<i32>} : memref<18x256xf32, #tpu.memory_space<vmem>>, vector<2x256xf32>,
    %333 = vector.extract_strided_slice %326 {offsets = [4, 0], sizes = [2, 256], strides = [1, 1]} : vector<12x256xf32> to vector<2x256xf32>
    %334 = vector.extract_strided_slice %326 {offsets = [6, 0], sizes = [2, 256], strides = [1, 1]} : vector<12x256xf32> to vector<2x256xf32>
    %335 = arith.maximumf %333, %334 : vector<2x256xf32>
    %336 = vector.extract_strided_slice %326 {offsets = [8, 0], sizes = [2, 256], strides = [1, 1]} : vector<12x256xf32> to vector<2x256xf32>
    %337 = arith.maximumf %335, %336 : vector<2x256xf32>
    %c8_110 = arith.constant 8 : index
    %c0_111 = arith.constant 0 : index
    %338 = vector.load %arg39[%c8_110, %c0_111] : memref<18x256xf32, #tpu.memory_space<vmem>>, vector<2x256xf32>
    tpu.vector_store %arg39[%c8_110, %c0_111], %337 {strides = array<i32>} : memref<18x256xf32, #tpu.memory_space<vmem>>, vector<2x256xf32>,
    %339 = vector.extract_strided_slice %326 {offsets = [8, 0], sizes = [2, 256], strides = [1, 1]} : vector<12x256xf32> to vector<2x256xf32>
    %340 = vector.extract_strided_slice %326 {offsets = [10, 0], sizes = [2, 256], strides = [1, 1]} : vector<12x256xf32> to vector<2x256xf32>
    %341 = arith.maximumf %339, %340 : vector<2x256xf32>
    %c10_112 = arith.constant 10 : index
    %c0_113 = arith.constant 0 : index
    %342 = vector.load %arg39[%c10_112, %c0_113] : memref<18x256xf32, #tpu.memory_space<vmem>>, vector<2x256xf32>
    tpu.vector_store %arg39[%c10_112, %c0_113], %341 {strides = array<i32>} : memref<18x256xf32, #tpu.memory_space<vmem>>, vector<2x256xf32>,
    %343 = vector.extract_strided_slice %300 {offsets = [48, 0], sizes = [12, 256], strides = [1, 1]} : vector<72x256xf32> to vector<12x256xf32>
    %344 = vector.extract_strided_slice %300 {offsets = [60, 0], sizes = [12, 256], strides = [1, 1]} : vector<72x256xf32> to vector<12x256xf32>
    %345 = arith.maximumf %343, %344 : vector<12x256xf32>
    %346 = vector.extract_strided_slice %345 {offsets = [0, 0], sizes = [2, 256], strides = [1, 1]} : vector<12x256xf32> to vector<2x256xf32>
    %347 = vector.extract_strided_slice %345 {offsets = [2, 0], sizes = [2, 256], strides = [1, 1]} : vector<12x256xf32> to vector<2x256xf32>
    %348 = arith.maximumf %346, %347 : vector<2x256xf32>
    %349 = vector.extract_strided_slice %345 {offsets = [4, 0], sizes = [2, 256], strides = [1, 1]} : vector<12x256xf32> to vector<2x256xf32>
    %350 = arith.maximumf %348, %349 : vector<2x256xf32>
    %c12_114 = arith.constant 12 : index
    %c0_115 = arith.constant 0 : index
    %351 = vector.load %arg39[%c12_114, %c0_115] : memref<18x256xf32, #tpu.memory_space<vmem>>, vector<2x256xf32>
    tpu.vector_store %arg39[%c12_114, %c0_115], %350 {strides = array<i32>} : memref<18x256xf32, #tpu.memory_space<vmem>>, vector<2x256xf32>,
    %352 = vector.extract_strided_slice %345 {offsets = [4, 0], sizes = [2, 256], strides = [1, 1]} : vector<12x256xf32> to vector<2x256xf32>
    %353 = vector.extract_strided_slice %345 {offsets = [6, 0], sizes = [2, 256], strides = [1, 1]} : vector<12x256xf32> to vector<2x256xf32>
    %354 = arith.maximumf %352, %353 : vector<2x256xf32>
    %355 = vector.extract_strided_slice %345 {offsets = [8, 0], sizes = [2, 256], strides = [1, 1]} : vector<12x256xf32> to vector<2x256xf32>
    %356 = arith.maximumf %354, %355 : vector<2x256xf32>
    %c14_116 = arith.constant 14 : index
    %c0_117 = arith.constant 0 : index
    %357 = vector.load %arg39[%c14_116, %c0_117] : memref<18x256xf32, #tpu.memory_space<vmem>>, vector<2x256xf32>
    tpu.vector_store %arg39[%c14_116, %c0_117], %356 {strides = array<i32>} : memref<18x256xf32, #tpu.memory_space<vmem>>, vector<2x256xf32>,
    %358 = vector.extract_strided_slice %345 {offsets = [8, 0], sizes = [2, 256], strides = [1, 1]} : vector<12x256xf32> to vector<2x256xf32>
    %359 = vector.extract_strided_slice %345 {offsets = [10, 0], sizes = [2, 256], strides = [1, 1]} : vector<12x256xf32> to vector<2x256xf32>
    %360 = arith.maximumf %358, %359 : vector<2x256xf32>
    %c16_118 = arith.constant 16 : index
    %c0_119 = arith.constant 0 : index
    %361 = vector.load %arg39[%c16_118, %c0_119] : memref<18x256xf32, #tpu.memory_space<vmem>>, vector<2x256xf32>
    tpu.vector_store %arg39[%c16_118, %c0_119], %360 {strides = array<i32>} : memref<18x256xf32, #tpu.memory_space<vmem>>, vector<2x256xf32>,
    %c0_120 = arith.constant 0 : index
    %c0_121 = arith.constant 0 : index
    %362 = vector.load %arg39[%c0_120, %c0_121] : memref<18x256xf32, #tpu.memory_space<vmem>>, vector<18x256xf32>
    %363 = arith.truncf %362 : vector<18x256xf32> to vector<18x256xbf16>
    %c0_122 = arith.constant 0 : index
    %c0_123 = arith.constant 0 : index
    %364 = vector.load %arg15[%c0_122, %c0_123] : memref<256x128xbf16, #tpu.memory_space<vmem>>, vector<256x128xbf16>
    %cst_124 = arith.constant dense<0.000000e+00> : vector<18x128xf32>
    %365 = tpu.matmul %363, %364, %cst_124 {dimension_numbers = #tpu.dot_dimension_numbers<[1], [0], [0], [1], [0, 0, 1, 1], [], []>} : vector<18x256xbf16>, vector<256x128xbf16>, vector<18x128xf32> -> vector<18x128xf32>
    %c0_125 = arith.constant 0 : index
    %c0_126 = arith.constant 0 : index
    %366 = vector.load %arg16[%c0_125, %c0_126] : memref<1x128xf32, #tpu.memory_space<vmem>>, vector<1x128xf32>
    %367 = vector.broadcast %366 : vector<1x128xf32> to vector<18x128xf32>
    %368 = arith.addf %365, %367 : vector<18x128xf32>
    %cst_127 = arith.constant 0.000000e+00 : f32
    %369 = vector.broadcast %cst_127 : f32 to vector<18x128xf32>
    %370 = arith.maximumf %368, %369 : vector<18x128xf32>
    %371 = arith.truncf %370 : vector<18x128xf32> to vector<18x128xbf16>
    %c0_128 = arith.constant 0 : index
    %c0_129 = arith.constant 0 : index
    %372 = vector.load %arg17[%c0_128, %c0_129] : memref<128x256xbf16, #tpu.memory_space<vmem>>, vector<128x256xbf16>
    %cst_130 = arith.constant dense<0.000000e+00> : vector<18x256xf32>
    %373 = tpu.matmul %371, %372, %cst_130 {dimension_numbers = #tpu.dot_dimension_numbers<[1], [0], [0], [1], [0, 0, 1, 1], [], []>} : vector<18x128xbf16>, vector<128x256xbf16>, vector<18x256xf32> -> vector<18x256xf32>
    %c0_131 = arith.constant 0 : index
    %c0_132 = arith.constant 0 : index
    %374 = vector.load %arg18[%c0_131, %c0_132] : memref<1x256xf32, #tpu.memory_space<vmem>>, vector<1x256xf32>
    %375 = vector.broadcast %374 : vector<1x256xf32> to vector<18x256xf32>
    %376 = arith.addf %373, %375 : vector<18x256xf32>
    %cst_133 = arith.constant 0.000000e+00 : f32
    %377 = vector.broadcast %cst_133 : f32 to vector<18x256xf32>
    %378 = arith.maximumf %376, %377 : vector<18x256xf32>
    %379 = arith.addf %362, %378 : vector<18x256xf32>
    %380 = arith.truncf %379 : vector<18x256xf32> to vector<18x256xbf16>
    %c0_134 = arith.constant 0 : index
    %c0_135 = arith.constant 0 : index
    %381 = vector.load %arg19[%c0_134, %c0_135] : memref<256x256xbf16, #tpu.memory_space<vmem>>, vector<256x256xbf16>
    %cst_136 = arith.constant dense<0.000000e+00> : vector<18x256xf32>
    %382 = tpu.matmul %380, %381, %cst_136 {dimension_numbers = #tpu.dot_dimension_numbers<[1], [0], [0], [1], [0, 0, 1, 1], [], []>} : vector<18x256xbf16>, vector<256x256xbf16>, vector<18x256xf32> -> vector<18x256xf32>
    %c0_137 = arith.constant 0 : index
    %c0_138 = arith.constant 0 : index
    %383 = vector.load %arg20[%c0_137, %c0_138] : memref<1x256xf32, #tpu.memory_space<vmem>>, vector<1x256xf32>
    %384 = vector.broadcast %383 : vector<1x256xf32> to vector<18x256xf32>
    %385 = arith.addf %382, %384 : vector<18x256xf32>
    %cst_139 = arith.constant 0.000000e+00 : f32
    %386 = vector.broadcast %cst_139 : f32 to vector<18x256xf32>
    %387 = arith.maximumf %385, %386 : vector<18x256xf32>
    %388 = arith.truncf %387 : vector<18x256xf32> to vector<18x256xbf16>
    %c0_140 = arith.constant 0 : index
    %c0_141 = arith.constant 0 : index
    %389 = vector.load %arg21[%c0_140, %c0_141] : memref<256x384xbf16, #tpu.memory_space<vmem>>, vector<256x384xbf16>
    %cst_142 = arith.constant dense<0.000000e+00> : vector<18x384xf32>
    %390 = tpu.matmul %388, %389, %cst_142 {dimension_numbers = #tpu.dot_dimension_numbers<[1], [0], [0], [1], [0, 0, 1, 1], [], []>} : vector<18x256xbf16>, vector<256x384xbf16>, vector<18x384xf32> -> vector<18x384xf32>
    %c0_143 = arith.constant 0 : index
    %c0_144 = arith.constant 0 : index
    %391 = vector.load %arg22[%c0_143, %c0_144] : memref<1x384xf32, #tpu.memory_space<vmem>>, vector<1x384xf32>
    %392 = vector.broadcast %391 : vector<1x384xf32> to vector<18x384xf32>
    %393 = arith.addf %390, %392 : vector<18x384xf32>
    %cst_145 = arith.constant 0.000000e+00 : f32
    %394 = vector.broadcast %cst_145 : f32 to vector<18x384xf32>
    %395 = arith.maximumf %393, %394 : vector<18x384xf32>
    %396 = arith.truncf %395 : vector<18x384xf32> to vector<18x384xbf16>
    %c0_146 = arith.constant 0 : index
    %c0_147 = arith.constant 0 : index
    %397 = vector.load %arg23[%c0_146, %c0_147] : memref<384x256xbf16, #tpu.memory_space<vmem>>, vector<384x256xbf16>
    %cst_148 = arith.constant dense<0.000000e+00> : vector<18x256xf32>
    %398 = tpu.matmul %396, %397, %cst_148 {dimension_numbers = #tpu.dot_dimension_numbers<[1], [0], [0], [1], [0, 0, 1, 1], [], []>} : vector<18x384xbf16>, vector<384x256xbf16>, vector<18x256xf32> -> vector<18x256xf32>
    %c0_149 = arith.constant 0 : index
    %c0_150 = arith.constant 0 : index
    %399 = vector.load %arg24[%c0_149, %c0_150] : memref<1x256xf32, #tpu.memory_space<vmem>>, vector<1x256xf32>
    %400 = vector.broadcast %399 : vector<1x256xf32> to vector<18x256xf32>
    %401 = arith.addf %398, %400 : vector<18x256xf32>
    %cst_151 = arith.constant 0.000000e+00 : f32
    %402 = vector.broadcast %cst_151 : f32 to vector<18x256xf32>
    %403 = arith.maximumf %401, %402 : vector<18x256xf32>
    %404 = arith.truncf %403 : vector<18x256xf32> to vector<18x256xbf16>
    %c0_152 = arith.constant 0 : index
    %c0_153 = arith.constant 0 : index
    %405 = vector.load %arg25[%c0_152, %c0_153] : memref<256x384xbf16, #tpu.memory_space<vmem>>, vector<256x384xbf16>
    %cst_154 = arith.constant dense<0.000000e+00> : vector<18x384xf32>
    %406 = tpu.matmul %404, %405, %cst_154 {dimension_numbers = #tpu.dot_dimension_numbers<[1], [0], [0], [1], [0, 0, 1, 1], [], []>} : vector<18x256xbf16>, vector<256x384xbf16>, vector<18x384xf32> -> vector<18x384xf32>
    %c0_155 = arith.constant 0 : index
    %c0_156 = arith.constant 0 : index
    %407 = vector.load %arg26[%c0_155, %c0_156] : memref<1x384xf32, #tpu.memory_space<vmem>>, vector<1x384xf32>
    %408 = vector.broadcast %407 : vector<1x384xf32> to vector<18x384xf32>
    %409 = arith.addf %406, %408 : vector<18x384xf32>
    %cst_157 = arith.constant 0.000000e+00 : f32
    %410 = vector.broadcast %cst_157 : f32 to vector<18x384xf32>
    %411 = arith.maximumf %409, %410 : vector<18x384xf32>
    %412 = arith.addf %395, %411 : vector<18x384xf32>
    %413 = arith.truncf %412 : vector<18x384xf32> to vector<18x384xbf16>
    %c0_158 = arith.constant 0 : index
    %c0_159 = arith.constant 0 : index
    %414 = vector.load %arg27[%c0_158, %c0_159] : memref<384x256xbf16, #tpu.memory_space<vmem>>, vector<384x256xbf16>
    %cst_160 = arith.constant dense<0.000000e+00> : vector<18x256xf32>
    %415 = tpu.matmul %413, %414, %cst_160 {dimension_numbers = #tpu.dot_dimension_numbers<[1], [0], [0], [1], [0, 0, 1, 1], [], []>} : vector<18x384xbf16>, vector<384x256xbf16>, vector<18x256xf32> -> vector<18x256xf32>
    %c0_161 = arith.constant 0 : index
    %c0_162 = arith.constant 0 : index
    %416 = vector.load %arg28[%c0_161, %c0_162] : memref<1x256xf32, #tpu.memory_space<vmem>>, vector<1x256xf32>
    %417 = vector.broadcast %416 : vector<1x256xf32> to vector<18x256xf32>
    %418 = arith.addf %415, %417 : vector<18x256xf32>
    %cst_163 = arith.constant 0.000000e+00 : f32
    %419 = vector.broadcast %cst_163 : f32 to vector<18x256xf32>
    %420 = arith.maximumf %418, %419 : vector<18x256xf32>
    %421 = arith.truncf %420 : vector<18x256xf32> to vector<18x256xbf16>
    %c0_164 = arith.constant 0 : index
    %c0_165 = arith.constant 0 : index
    %422 = vector.load %arg29[%c0_164, %c0_165] : memref<256x512xbf16, #tpu.memory_space<vmem>>, vector<256x512xbf16>
    %cst_166 = arith.constant dense<0.000000e+00> : vector<18x512xf32>
    %423 = tpu.matmul %421, %422, %cst_166 {dimension_numbers = #tpu.dot_dimension_numbers<[1], [0], [0], [1], [0, 0, 1, 1], [], []>} : vector<18x256xbf16>, vector<256x512xbf16>, vector<18x512xf32> -> vector<18x512xf32>
    %c0_167 = arith.constant 0 : index
    %c0_168 = arith.constant 0 : index
    %424 = vector.load %arg30[%c0_167, %c0_168] : memref<1x512xf32, #tpu.memory_space<vmem>>, vector<1x512xf32>
    %425 = vector.broadcast %424 : vector<1x512xf32> to vector<18x512xf32>
    %426 = arith.addf %423, %425 : vector<18x512xf32>
    %cst_169 = arith.constant 0.000000e+00 : f32
    %427 = vector.broadcast %cst_169 : f32 to vector<18x512xf32>
    %428 = arith.maximumf %426, %427 : vector<18x512xf32>
    %429 = vector.extract_strided_slice %428 {offsets = [0, 0], sizes = [6, 512], strides = [1, 1]} : vector<18x512xf32> to vector<6x512xf32>
    %430 = vector.extract_strided_slice %428 {offsets = [6, 0], sizes = [6, 512], strides = [1, 1]} : vector<18x512xf32> to vector<6x512xf32>
    %431 = arith.maximumf %429, %430 : vector<6x512xf32>
    %432 = vector.extract_strided_slice %428 {offsets = [12, 0], sizes = [6, 512], strides = [1, 1]} : vector<18x512xf32> to vector<6x512xf32>
    %433 = arith.maximumf %431, %432 : vector<6x512xf32>
    %434 = vector.extract_strided_slice %433 {offsets = [0, 0], sizes = [2, 512], strides = [1, 1]} : vector<6x512xf32> to vector<2x512xf32>
    %435 = vector.extract_strided_slice %433 {offsets = [2, 0], sizes = [2, 512], strides = [1, 1]} : vector<6x512xf32> to vector<2x512xf32>
    %436 = arith.maximumf %434, %435 : vector<2x512xf32>
    %437 = vector.extract_strided_slice %433 {offsets = [4, 0], sizes = [2, 512], strides = [1, 1]} : vector<6x512xf32> to vector<2x512xf32>
    %438 = arith.maximumf %436, %437 : vector<2x512xf32>
    %c0_170 = arith.constant 0 : index
    %c0_171 = arith.constant 0 : index
    %439 = vector.load %arg40[%c0_170, %c0_171] : memref<2x512xf32, #tpu.memory_space<vmem>>, vector<2x512xf32>
    tpu.vector_store %arg40[%c0_170, %c0_171], %438 {strides = array<i32>} : memref<2x512xf32, #tpu.memory_space<vmem>>, vector<2x512xf32>,
    %c0_172 = arith.constant 0 : index
    %c0_173 = arith.constant 0 : index
    %440 = vector.load %arg40[%c0_172, %c0_173] : memref<2x512xf32, #tpu.memory_space<vmem>>, vector<2x512xf32>
    %441 = arith.truncf %440 : vector<2x512xf32> to vector<2x512xbf16>
    %c0_174 = arith.constant 0 : index
    %c0_175 = arith.constant 0 : index
    %442 = vector.load %arg31[%c0_174, %c0_175] : memref<512x256xbf16, #tpu.memory_space<vmem>>, vector<512x256xbf16>
    %cst_176 = arith.constant dense<0.000000e+00> : vector<2x256xf32>
    %443 = tpu.matmul %441, %442, %cst_176 {dimension_numbers = #tpu.dot_dimension_numbers<[1], [0], [0], [1], [0, 0, 1, 1], [], []>} : vector<2x512xbf16>, vector<512x256xbf16>, vector<2x256xf32> -> vector<2x256xf32>
    %c0_177 = arith.constant 0 : index
    %c0_178 = arith.constant 0 : index
    %444 = vector.load %arg32[%c0_177, %c0_178] : memref<1x256xf32, #tpu.memory_space<vmem>>, vector<1x256xf32>
    %445 = vector.broadcast %444 : vector<1x256xf32> to vector<2x256xf32>
    %446 = arith.addf %443, %445 : vector<2x256xf32>
    %cst_179 = arith.constant 0.000000e+00 : f32
    %447 = vector.broadcast %cst_179 : f32 to vector<2x256xf32>
    %448 = arith.maximumf %446, %447 : vector<2x256xf32>
    %449 = arith.truncf %448 : vector<2x256xf32> to vector<2x256xbf16>
    %c0_180 = arith.constant 0 : index
    %c0_181 = arith.constant 0 : index
    %450 = vector.load %arg33[%c0_180, %c0_181] : memref<256x512xbf16, #tpu.memory_space<vmem>>, vector<256x512xbf16>
    %cst_182 = arith.constant dense<0.000000e+00> : vector<2x512xf32>
    %451 = tpu.matmul %449, %450, %cst_182 {dimension_numbers = #tpu.dot_dimension_numbers<[1], [0], [0], [1], [0, 0, 1, 1], [], []>} : vector<2x256xbf16>, vector<256x512xbf16>, vector<2x512xf32> -> vector<2x512xf32>
    %c0_183 = arith.constant 0 : index
    %c0_184 = arith.constant 0 : index
    %452 = vector.load %arg34[%c0_183, %c0_184] : memref<1x512xf32, #tpu.memory_space<vmem>>, vector<1x512xf32>
    %453 = vector.broadcast %452 : vector<1x512xf32> to vector<2x512xf32>
    %454 = arith.addf %451, %453 : vector<2x512xf32>
    %cst_185 = arith.constant 0.000000e+00 : f32
    %455 = vector.broadcast %cst_185 : f32 to vector<2x512xf32>
    %456 = arith.maximumf %454, %455 : vector<2x512xf32>
    %457 = arith.addf %440, %456 : vector<2x512xf32>
    %458 = arith.truncf %457 : vector<2x512xf32> to vector<2x512xbf16>
    %c0_186 = arith.constant 0 : index
    %c0_187 = arith.constant 0 : index
    %459 = vector.load %arg35[%c0_186, %c0_187] : memref<512x128xbf16, #tpu.memory_space<vmem>>, vector<512x128xbf16>
    %cst_188 = arith.constant dense<0.000000e+00> : vector<2x128xf32>
    %460 = tpu.matmul %458, %459, %cst_188 {dimension_numbers = #tpu.dot_dimension_numbers<[1], [0], [0], [1], [0, 0, 1, 1], [], []>} : vector<2x512xbf16>, vector<512x128xbf16>, vector<2x128xf32> -> vector<2x128xf32>
    %c0_189 = arith.constant 0 : index
    %c0_190 = arith.constant 0 : index
    %461 = vector.load %arg36[%c0_189, %c0_190] : memref<1x128xf32, #tpu.memory_space<vmem>>, vector<1x128xf32>
    %462 = vector.broadcast %461 : vector<1x128xf32> to vector<2x128xf32>
    %463 = arith.addf %460, %462 : vector<2x128xf32>
    %cst_191 = arith.constant 0.000000e+00 : f32
    %464 = vector.broadcast %cst_191 : f32 to vector<2x128xf32>
    %465 = arith.maximumf %463, %464 : vector<2x128xf32>
    %c0_192 = arith.constant 0 : index
    %c0_193 = arith.constant 0 : index
    %466 = vector.load %arg37[%c0_192, %c0_193] : memref<2x128xf32, #tpu.memory_space<vmem>>, vector<2x128xf32>
    tpu.vector_store %arg37[%c0_192, %c0_193], %465 {strides = array<i32>} : memref<2x128xf32, #tpu.memory_space<vmem>>, vector<2x128xf32>,
    return
  }
  func.func @transform_0(%arg0: i32) -> (i32, i32) {
    %c0_i32 = arith.constant 0 : i32
    %c0_i32_0 = arith.constant 0 : i32
    %c0_i32_1 = arith.constant 0 : i32
    return %c0_i32, %c0_i32_0 : i32, i32
  }
  func.func @transform_1(%arg0: i32) -> (i32, i32) {
    %c0_i32 = arith.constant 0 : i32
    %c0_i32_0 = arith.constant 0 : i32
    %c0_i32_1 = arith.constant 0 : i32
    return %c0_i32, %c0_i32_0 : i32, i32
  }
  func.func @transform_2(%arg0: i32) -> (i32, i32) {
    %c0_i32 = arith.constant 0 : i32
    %c0_i32_0 = arith.constant 0 : i32
    %c0_i32_1 = arith.constant 0 : i32
    return %c0_i32, %c0_i32_0 : i32, i32
  }
  func.func @transform_3(%arg0: i32) -> (i32, i32) {
    %c0_i32 = arith.constant 0 : i32
    %c0_i32_0 = arith.constant 0 : i32
    %c0_i32_1 = arith.constant 0 : i32
    return %c0_i32, %c0_i32_0 : i32, i32
  }
  func.func @transform_4(%arg0: i32) -> (i32, i32) {
    %c0_i32 = arith.constant 0 : i32
    %c0_i32_0 = arith.constant 0 : i32
    %c0_i32_1 = arith.constant 0 : i32
    return %c0_i32, %c0_i32_0 : i32, i32
  }
  func.func @transform_5(%arg0: i32) -> (i32, i32) {
    %c0_i32 = arith.constant 0 : i32
    %c0_i32_0 = arith.constant 0 : i32
    %c0_i32_1 = arith.constant 0 : i32
    return %c0_i32, %c0_i32_0 : i32, i32
  }
  func.func @transform_6(%arg0: i32) -> (i32, i32) {
    %c0_i32 = arith.constant 0 : i32
    %c0_i32_0 = arith.constant 0 : i32
    %c0_i32_1 = arith.constant 0 : i32
    return %c0_i32, %c0_i32_0 : i32, i32
  }
  func.func @transform_7(%arg0: i32) -> (i32, i32) {
    %c0_i32 = arith.constant 0 : i32
    %c0_i32_0 = arith.constant 0 : i32
    %c0_i32_1 = arith.constant 0 : i32
    return %c0_i32, %c0_i32_0 : i32, i32
  }
  func.func @transform_8(%arg0: i32) -> (i32, i32) {
    %c0_i32 = arith.constant 0 : i32
    %c0_i32_0 = arith.constant 0 : i32
    %c0_i32_1 = arith.constant 0 : i32
    return %c0_i32, %c0_i32_0 : i32, i32
  }
  func.func @transform_9(%arg0: i32) -> (i32, i32) {
    %c0_i32 = arith.constant 0 : i32
    %c0_i32_0 = arith.constant 0 : i32
    %c0_i32_1 = arith.constant 0 : i32
    return %c0_i32, %c0_i32_0 : i32, i32
  }
  func.func @transform_10(%arg0: i32) -> (i32, i32) {
    %c0_i32 = arith.constant 0 : i32
    %c0_i32_0 = arith.constant 0 : i32
    %c0_i32_1 = arith.constant 0 : i32
    return %c0_i32, %c0_i32_0 : i32, i32
  }
  func.func @transform_11(%arg0: i32) -> (i32, i32) {
    %c0_i32 = arith.constant 0 : i32
    %c0_i32_0 = arith.constant 0 : i32
    %c0_i32_1 = arith.constant 0 : i32
    return %c0_i32, %c0_i32_0 : i32, i32
  }
  func.func @transform_12(%arg0: i32) -> (i32, i32) {
    %c0_i32 = arith.constant 0 : i32
    %c0_i32_0 = arith.constant 0 : i32
    %c0_i32_1 = arith.constant 0 : i32
    return %c0_i32, %c0_i32_0 : i32, i32
  }
  func.func @transform_13(%arg0: i32) -> (i32, i32) {
    %c0_i32 = arith.constant 0 : i32
    %c0_i32_0 = arith.constant 0 : i32
    %c0_i32_1 = arith.constant 0 : i32
    return %c0_i32, %c0_i32_0 : i32, i32
  }
  func.func @transform_14(%arg0: i32) -> (i32, i32) {
    %c0_i32 = arith.constant 0 : i32
    %c0_i32_0 = arith.constant 0 : i32
    %c0_i32_1 = arith.constant 0 : i32
    return %c0_i32, %c0_i32_0 : i32, i32
  }
  func.func @transform_15(%arg0: i32) -> (i32, i32) {
    %c0_i32 = arith.constant 0 : i32
    %c0_i32_0 = arith.constant 0 : i32
    %c0_i32_1 = arith.constant 0 : i32
    return %c0_i32, %c0_i32_0 : i32, i32
  }
  func.func @transform_16(%arg0: i32) -> (i32, i32) {
    %c0_i32 = arith.constant 0 : i32
    %c0_i32_0 = arith.constant 0 : i32
    %c0_i32_1 = arith.constant 0 : i32
    return %c0_i32, %c0_i32_0 : i32, i32
  }
  func.func @transform_17(%arg0: i32) -> (i32, i32) {
    %c0_i32 = arith.constant 0 : i32
    %c0_i32_0 = arith.constant 0 : i32
    %c0_i32_1 = arith.constant 0 : i32
    return %c0_i32, %c0_i32_0 : i32, i32
  }
  func.func @transform_18(%arg0: i32) -> (i32, i32) {
    %c0_i32 = arith.constant 0 : i32
    %c0_i32_0 = arith.constant 0 : i32
    %c0_i32_1 = arith.constant 0 : i32
    return %c0_i32, %c0_i32_0 : i32, i32
  }
  func.func @transform_19(%arg0: i32) -> (i32, i32) {
    %c0_i32 = arith.constant 0 : i32
    %c0_i32_0 = arith.constant 0 : i32
    %c0_i32_1 = arith.constant 0 : i32
    return %c0_i32, %c0_i32_0 : i32, i32
  }
  func.func @transform_20(%arg0: i32) -> (i32, i32) {
    %c0_i32 = arith.constant 0 : i32
    %c0_i32_0 = arith.constant 0 : i32
    %c0_i32_1 = arith.constant 0 : i32
    return %c0_i32, %c0_i32_0 : i32, i32
  }
  func.func @transform_21(%arg0: i32) -> (i32, i32) {
    %c0_i32 = arith.constant 0 : i32
    %c0_i32_0 = arith.constant 0 : i32
    %c0_i32_1 = arith.constant 0 : i32
    return %c0_i32, %c0_i32_0 : i32, i32
  }
  func.func @transform_22(%arg0: i32) -> (i32, i32) {
    %c0_i32 = arith.constant 0 : i32
    %c0_i32_0 = arith.constant 0 : i32
    %c0_i32_1 = arith.constant 0 : i32
    return %c0_i32, %c0_i32_0 : i32, i32
  }
  func.func @transform_23(%arg0: i32) -> (i32, i32) {
    %c0_i32 = arith.constant 0 : i32
    %c0_i32_0 = arith.constant 0 : i32
    %c0_i32_1 = arith.constant 0 : i32
    return %c0_i32, %c0_i32_0 : i32, i32
  }
  func.func @transform_24(%arg0: i32) -> (i32, i32) {
    %c0_i32 = arith.constant 0 : i32
    %c0_i32_0 = arith.constant 0 : i32
    %c0_i32_1 = arith.constant 0 : i32
    return %c0_i32, %c0_i32_0 : i32, i32
  }
  func.func @transform_25(%arg0: i32) -> (i32, i32) {
    %c0_i32 = arith.constant 0 : i32
    %c0_i32_0 = arith.constant 0 : i32
    %c0_i32_1 = arith.constant 0 : i32
    return %c0_i32, %c0_i32_0 : i32, i32
  }
  func.func @transform_26(%arg0: i32) -> (i32, i32) {
    %c0_i32 = arith.constant 0 : i32
    %c0_i32_0 = arith.constant 0 : i32
    %c0_i32_1 = arith.constant 0 : i32
    return %c0_i32, %c0_i32_0 : i32, i32
  }
  func.func @transform_27(%arg0: i32) -> (i32, i32) {
    %c0_i32 = arith.constant 0 : i32
    %c0_i32_0 = arith.constant 0 : i32
    %c0_i32_1 = arith.constant 0 : i32
    return %c0_i32, %c0_i32_0 : i32, i32
  }
  func.func @transform_28(%arg0: i32) -> (i32, i32) {
    %c0_i32 = arith.constant 0 : i32
    %c0_i32_0 = arith.constant 0 : i32
    %c0_i32_1 = arith.constant 0 : i32
    return %c0_i32, %c0_i32_0 : i32, i32
  }
  func.func @transform_29(%arg0: i32) -> (i32, i32) {
    %c0_i32 = arith.constant 0 : i32
    %c0_i32_0 = arith.constant 0 : i32
    %c0_i32_1 = arith.constant 0 : i32
    return %c0_i32, %c0_i32_0 : i32, i32
  }
  func.func @transform_30(%arg0: i32) -> (i32, i32) {
    %c0_i32 = arith.constant 0 : i32
    %c0_i32_0 = arith.constant 0 : i32
    %c0_i32_1 = arith.constant 0 : i32
    return %c0_i32, %c0_i32_0 : i32, i32
  }
  func.func @transform_31(%arg0: i32) -> (i32, i32) {
    %c0_i32 = arith.constant 0 : i32
    %c0_i32_0 = arith.constant 0 : i32
    %c0_i32_1 = arith.constant 0 : i32
    return %c0_i32, %c0_i32_0 : i32, i32
  }
  func.func @transform_32(%arg0: i32) -> (i32, i32) {
    %c0_i32 = arith.constant 0 : i32
    %c0_i32_0 = arith.constant 0 : i32
    %c0_i32_1 = arith.constant 0 : i32
    return %c0_i32, %c0_i32_0 : i32, i32
  }
  func.func @transform_33(%arg0: i32) -> (i32, i32) {
    %c0_i32 = arith.constant 0 : i32
    %c0_i32_0 = arith.constant 0 : i32
    %c0_i32_1 = arith.constant 0 : i32
    return %c0_i32, %c0_i32_0 : i32, i32
  }
  func.func @transform_34(%arg0: i32) -> (i32, i32) {
    %c0_i32 = arith.constant 0 : i32
    %c0_i32_0 = arith.constant 0 : i32
    %c0_i32_1 = arith.constant 0 : i32
    return %c0_i32, %c0_i32_0 : i32, i32
  }
  func.func @transform_35(%arg0: i32) -> (i32, i32) {
    %c0_i32 = arith.constant 0 : i32
    %c0_i32_0 = arith.constant 0 : i32
    %c0_i32_1 = arith.constant 0 : i32
    return %c0_i32, %c0_i32_0 : i32, i32
  }
  func.func @transform_36(%arg0: i32) -> (i32, i32) {
    %c0_i32 = arith.constant 0 : i32
    %c0_i32_0 = arith.constant 0 : i32
    %c0_i32_1 = arith.constant 0 : i32
    return %c0_i32, %c0_i32_0 : i32, i32
  }
}

</mosaic_0001>

<llo_original>
// kernel: squeezenet_1x1lmp_forward.1
$region0: #{squeezenet_1x1lmp_forward.1}
  #allocation0 [shape = 'u32[]', space=smem, size = 0x4, offset = 0x4, fixed_abs, tag = 'smem constant byte address 0x4 - core index']
  #allocation1 [shape = 'u32[144,128]{1,0:T(1,128)}', space=vmem, size = 0x12000, scoped, tag = 'internal scratch']
  #allocation2 [shape = 'f32[72,128]{1,0:T(8,128)}', space=vmem, size = 0x9000, scoped, tag = 'scratch operand']
  #allocation3 [shape = 'f32[18,256]{1,0:T(8,128)}', space=vmem, size = 0x6000, scoped, tag = 'scratch operand']
  #allocation4 [shape = 'f32[2,512]{1,0:T(2,128)}', space=vmem, size = 0x1000, scoped, tag = 'scratch operand']
  %s0 = inlined_call_operand.smem [shape: u32[37], index: -1, kind: input, shape index: {}]
  %s1 = sld [smem:[%s0]]
  %s2 = scalar_lea.smem %s0, 1
  %s3 = sld [smem:[%s2]]
  %s4 = scalar_lea.smem %s0, 2
  %s5 = sld [smem:[%s4]]
  %s6 = scalar_lea.smem %s0, 3
  %s7 = sld [smem:[%s6]]
  %s8 = scalar_lea.smem %s0, 4
  %s9 = sld [smem:[%s8]]
  %s10 = scalar_lea.smem %s0, 5
  %s11 = sld [smem:[%s10]]
  %s12 = scalar_lea.smem %s0, 6
  %s13 = sld [smem:[%s12]]
  %s14 = scalar_lea.smem %s0, 7
  %s15 = sld [smem:[%s14]]
  %s16 = scalar_lea.smem %s0, 8
  %s17 = sld [smem:[%s16]]
  %s18 = scalar_lea.smem %s0, 9
  %s19 = sld [smem:[%s18]]
  %s20 = scalar_lea.smem %s0, 10
  %s21 = sld [smem:[%s20]]
  %s22 = scalar_lea.smem %s0, 11
  %s23 = sld [smem:[%s22]]
  %s24 = scalar_lea.smem %s0, 12
  %s25 = sld [smem:[%s24]]
  %s26 = scalar_lea.smem %s0, 13
  %s27 = sld [smem:[%s26]]
  %s28 = scalar_lea.smem %s0, 14
  %s29 = sld [smem:[%s28]]
  %s30 = scalar_lea.smem %s0, 15
  %s31 = sld [smem:[%s30]]
  %s32 = scalar_lea.smem %s0, 16
  %s33 = sld [smem:[%s32]]
  %s34 = scalar_lea.smem %s0, 17
  %s35 = sld [smem:[%s34]]
  %s36 = scalar_lea.smem %s0, 18
  %s37 = sld [smem:[%s36]]
  %s38 = scalar_lea.smem %s0, 19
  %s39 = sld [smem:[%s38]]
  %s40 = scalar_lea.smem %s0, 20
  %s41 = sld [smem:[%s40]]
  %s42 = scalar_lea.smem %s0, 21
  %s43 = sld [smem:[%s42]]
  %s44 = scalar_lea.smem %s0, 22
  %s45 = sld [smem:[%s44]]
  %s46 = scalar_lea.smem %s0, 23
  %s47 = sld [smem:[%s46]]
  %s48 = scalar_lea.smem %s0, 24
  %s49 = sld [smem:[%s48]]
  %s50 = scalar_lea.smem %s0, 25
  %s51 = sld [smem:[%s50]]
  %s52 = scalar_lea.smem %s0, 26
  %s53 = sld [smem:[%s52]]
  %s54 = scalar_lea.smem %s0, 27
  %s55 = sld [smem:[%s54]]
  %s56 = scalar_lea.smem %s0, 28
  %s57 = sld [smem:[%s56]]
  %s58 = scalar_lea.smem %s0, 29
  %s59 = sld [smem:[%s58]]
  %s60 = scalar_lea.smem %s0, 30
  %s61 = sld [smem:[%s60]]
  %s62 = scalar_lea.smem %s0, 31
  %s63 = sld [smem:[%s62]]
  %s64 = scalar_lea.smem %s0, 32
  %s65 = sld [smem:[%s64]]
  %s66 = scalar_lea.smem %s0, 33
  %s67 = sld [smem:[%s66]]
  %s68 = scalar_lea.smem %s0, 34
  %s69 = sld [smem:[%s68]]
  %s70 = scalar_lea.smem %s0, 35
  %s71 = sld [smem:[%s70]]
  %s72 = scalar_lea.smem %s0, 36
  %s73 = sld [smem:[%s72]]
  %s74 = sld [smem:[#allocation0]]
  $region154: #{squeezenet_1x1lmp_forward.1} parent=0
    _
  %s76 = ssub.s32 1, %s74
  %s77 = scalar_select 0, %s76, %s74
  $region1: #{squeezenet_1x1lmp_forward.1} parent=0
    #allocation5 [shape = 'u8[1024]{0}', space=vmem, size = 0x400, scoped, tag = 'output window, operand 0, single buffered']
    #allocation6 [shape = 's32[1]{0}', space=sflag, size = 0x4, scoped, tag = 'scoped memory for squeezenet_1x1lmp_forward.1']
    %78 = vsyncpa [#allocation6], 0
    // Predicated region
    $region2: #{squeezenet_1x1lmp_forward.1} parent=1 // pred_check
      _
    $region3: #{squeezenet_1x1lmp_forward.1} parent=1 // pred_check_branch
      %80 = sbr.rel (0) target = $region5
    $region4: #{squeezenet_1x1lmp_forward.1} parent=1 // pred_region
      _
    $region5: #{squeezenet_1x1lmp_forward.1} parent=1 // pred_fallthru
      _
    // Predicated region
    $region6: #{squeezenet_1x1lmp_forward.1} parent=1 // pred_check
      _
    $region7: #{squeezenet_1x1lmp_forward.1} parent=1 // pred_check_branch
      %82 = sbr.rel (0) target = $region9
    $region8: #{squeezenet_1x1lmp_forward.1} parent=1 // pred_region
      _
    $region9: #{squeezenet_1x1lmp_forward.1} parent=1 // pred_fallthru
      _
    // Predicated region
    $region10: #{squeezenet_1x1lmp_forward.1} parent=1 // pred_check
      _
    $region11: #{squeezenet_1x1lmp_forward.1} parent=1 // pred_check_branch
      %84 = sbr.rel (0) target = $region13
    $region12: #{squeezenet_1x1lmp_forward.1} parent=1 // pred_region
      _
    $region13: #{squeezenet_1x1lmp_forward.1} parent=1 // pred_fallthru
      _
    // Predicated region
    $region14: #{squeezenet_1x1lmp_forward.1} parent=1 // pred_check
      _
    $region15: #{squeezenet_1x1lmp_forward.1} parent=1 // pred_check_branch
      %86 = sbr.rel (0) target = $region17
    $region16: #{squeezenet_1x1lmp_forward.1} parent=1 // pred_region
      _
    $region17: #{squeezenet_1x1lmp_forward.1} parent=1 // pred_fallthru
      _
    // Predicated region
    $region18: #{squeezenet_1x1lmp_forward.1} parent=1 // pred_check
      _
    $region19: #{squeezenet_1x1lmp_forward.1} parent=1 // pred_check_branch
      %88 = sbr.rel (0) target = $region21
    $region20: #{squeezenet_1x1lmp_forward.1} parent=1 // pred_region
      _
    $region21: #{squeezenet_1x1lmp_forward.1} parent=1 // pred_fallthru
      _
    // Predicated region
    $region22: #{squeezenet_1x1lmp_forward.1} parent=1 // pred_check
      _
    $region23: #{squeezenet_1x1lmp_forward.1} parent=1 // pred_check_branch
      %90 = sbr.rel (0) target = $region25
    $region24: #{squeezenet_1x1lmp_forward.1} parent=1 // pred_region
      _
    $region25: #{squeezenet_1x1lmp_forward.1} parent=1 // pred_fallthru
      _
    // Predicated region
    $region26: #{squeezenet_1x1lmp_forward.1} parent=1 // pred_check
      _
    $region27: #{squeezenet_1x1lmp_forward.1} parent=1 // pred_check_branch
      %92 = sbr.rel (0) target = $region29
    $region28: #{squeezenet_1x1lmp_forward.1} parent=1 // pred_region
      _
    $region29: #{squeezenet_1x1lmp_forward.1} parent=1 // pred_fallthru
      _
    // Predicated region
    $region30: #{squeezenet_1x1lmp_forward.1} parent=1 // pred_check
      _
    $region31: #{squeezenet_1x1lmp_forward.1} parent=1 // pred_check_branch
      %94 = sbr.rel (0) target = $region33
    $region32: #{squeezenet_1x1lmp_forward.1} parent=1 // pred_region
      _
    $region33: #{squeezenet_1x1lmp_forward.1} parent=1 // pred_fallthru
      _
    // Predicated region
    $region34: #{squeezenet_1x1lmp_forward.1} parent=1 // pred_check
      _
    $region35: #{squeezenet_1x1lmp_forward.1} parent=1 // pred_check_branch
      %96 = sbr.rel (0) target = $region37
    $region36: #{squeezenet_1x1lmp_forward.1} parent=1 // pred_region
      _
    $region37: #{squeezenet_1x1lmp_forward.1} parent=1 // pred_fallthru
      _
    // Predicated region
    $region38: #{squeezenet_1x1lmp_forward.1} parent=1 // pred_check
      _
    $region39: #{squeezenet_1x1lmp_forward.1} parent=1 // pred_check_branch
      %98 = sbr.rel (0) target = $region41
    $region40: #{squeezenet_1x1lmp_forward.1} parent=1 // pred_region
      _
    $region41: #{squeezenet_1x1lmp_forward.1} parent=1 // pred_fallthru
      _
    // Predicated region
    $region42: #{squeezenet_1x1lmp_forward.1} parent=1 // pred_check
      _
    $region43: #{squeezenet_1x1lmp_forward.1} parent=1 // pred_check_branch
      %100 = sbr.rel (0) target = $region45
    $region44: #{squeezenet_1x1lmp_forward.1} parent=1 // pred_region
      _
    $region45: #{squeezenet_1x1lmp_forward.1} parent=1 // pred_fallthru
      _
    // Predicated region
    $region46: #{squeezenet_1x1lmp_forward.1} parent=1 // pred_check
      _
    $region47: #{squeezenet_1x1lmp_forward.1} parent=1 // pred_check_branch
      %102 = sbr.rel (0) target = $region49
    $region48: #{squeezenet_1x1lmp_forward.1} parent=1 // pred_region
      _
    $region49: #{squeezenet_1x1lmp_forward.1} parent=1 // pred_fallthru
      _
    // Predicated region
    $region50: #{squeezenet_1x1lmp_forward.1} parent=1 // pred_check
      _
    $region51: #{squeezenet_1x1lmp_forward.1} parent=1 // pred_check_branch
      %104 = sbr.rel (0) target = $region53
    $region52: #{squeezenet_1x1lmp_forward.1} parent=1 // pred_region
      _
    $region53: #{squeezenet_1x1lmp_forward.1} parent=1 // pred_fallthru
      _
    // Predicated region
    $region54: #{squeezenet_1x1lmp_forward.1} parent=1 // pred_check
      _
    $region55: #{squeezenet_1x1lmp_forward.1} parent=1 // pred_check_branch
      %106 = sbr.rel (0) target = $region57
    $region56: #{squeezenet_1x1lmp_forward.1} parent=1 // pred_region
      _
    $region57: #{squeezenet_1x1lmp_forward.1} parent=1 // pred_fallthru
      _
    // Predicated region
    $region58: #{squeezenet_1x1lmp_forward.1} parent=1 // pred_check
      _
    $region59: #{squeezenet_1x1lmp_forward.1} parent=1 // pred_check_branch
      %108 = sbr.rel (0) target = $region61
    $region60: #{squeezenet_1x1lmp_forward.1} parent=1 // pred_region
      _
    $region61: #{squeezenet_1x1lmp_forward.1} parent=1 // pred_fallthru
      _
    // Predicated region
    $region62: #{squeezenet_1x1lmp_forward.1} parent=1 // pred_check
      _
    $region63: #{squeezenet_1x1lmp_forward.1} parent=1 // pred_check_branch
      %110 = sbr.rel (0) target = $region65
    $region64: #{squeezenet_1x1lmp_forward.1} parent=1 // pred_region
      _
    $region65: #{squeezenet_1x1lmp_forward.1} parent=1 // pred_fallthru
      _
    // Predicated region
    $region66: #{squeezenet_1x1lmp_forward.1} parent=1 // pred_check
      _
    $region67: #{squeezenet_1x1lmp_forward.1} parent=1 // pred_check_branch
      %112 = sbr.rel (0) target = $region69
    $region68: #{squeezenet_1x1lmp_forward.1} parent=1 // pred_region
      _
    $region69: #{squeezenet_1x1lmp_forward.1} parent=1 // pred_fallthru
      _
    // Predicated region
    $region70: #{squeezenet_1x1lmp_forward.1} parent=1 // pred_check
      _
    $region71: #{squeezenet_1x1lmp_forward.1} parent=1 // pred_check_branch
      %114 = sbr.rel (0) target = $region73
    $region72: #{squeezenet_1x1lmp_forward.1} parent=1 // pred_region
      _
    $region73: #{squeezenet_1x1lmp_forward.1} parent=1 // pred_fallthru
      _
    // Predicated region
    $region74: #{squeezenet_1x1lmp_forward.1} parent=1 // pred_check
      _
    $region75: #{squeezenet_1x1lmp_forward.1} parent=1 // pred_check_branch
      %116 = sbr.rel (0) target = $region77
    $region76: #{squeezenet_1x1lmp_forward.1} parent=1 // pred_region
      _
    $region77: #{squeezenet_1x1lmp_forward.1} parent=1 // pred_fallthru
      _
    // Predicated region
    $region78: #{squeezenet_1x1lmp_forward.1} parent=1 // pred_check
      _
    $region79: #{squeezenet_1x1lmp_forward.1} parent=1 // pred_check_branch
      %118 = sbr.rel (0) target = $region81
    $region80: #{squeezenet_1x1lmp_forward.1} parent=1 // pred_region
      _
    $region81: #{squeezenet_1x1lmp_forward.1} parent=1 // pred_fallthru
      _
    // Predicated region
    $region82: #{squeezenet_1x1lmp_forward.1} parent=1 // pred_check
      _
    $region83: #{squeezenet_1x1lmp_forward.1} parent=1 // pred_check_branch
      %120 = sbr.rel (0) target = $region85
    $region84: #{squeezenet_1x1lmp_forward.1} parent=1 // pred_region
      _
    $region85: #{squeezenet_1x1lmp_forward.1} parent=1 // pred_fallthru
      _
    // Predicated region
    $region86: #{squeezenet_1x1lmp_forward.1} parent=1 // pred_check
      _
    $region87: #{squeezenet_1x1lmp_forward.1} parent=1 // pred_check_branch
      %122 = sbr.rel (0) target = $region89
    $region88: #{squeezenet_1x1lmp_forward.1} parent=1 // pred_region
      _
    $region89: #{squeezenet_1x1lmp_forward.1} parent=1 // pred_fallthru
      _
    // Predicated region
    $region90: #{squeezenet_1x1lmp_forward.1} parent=1 // pred_check
      _
    $region91: #{squeezenet_1x1lmp_forward.1} parent=1 // pred_check_branch
      %124 = sbr.rel (0) target = $region93
    $region92: #{squeezenet_1x1lmp_forward.1} parent=1 // pred_region
      _
    $region93: #{squeezenet_1x1lmp_forward.1} parent=1 // pred_fallthru
      _
    // Predicated region
    $region94: #{squeezenet_1x1lmp_forward.1} parent=1 // pred_check
      _
    $region95: #{squeezenet_1x1lmp_forward.1} parent=1 // pred_check_branch
      %126 = sbr.rel (0) target = $region97
    $region96: #{squeezenet_1x1lmp_forward.1} parent=1 // pred_region
      _
    $region97: #{squeezenet_1x1lmp_forward.1} parent=1 // pred_fallthru
      _
    // Predicated region
    $region98: #{squeezenet_1x1lmp_forward.1} parent=1 // pred_check
      _
    $region99: #{squeezenet_1x1lmp_forward.1} parent=1 // pred_check_branch
      %128 = sbr.rel (0) target = $region101
    $region100: #{squeezenet_1x1lmp_forward.1} parent=1 // pred_region
      _
    $region101: #{squeezenet_1x1lmp_forward.1} parent=1 // pred_fallthru
      _
    // Predicated region
    $region102: #{squeezenet_1x1lmp_forward.1} parent=1 // pred_check
      _
    $region103: #{squeezenet_1x1lmp_forward.1} parent=1 // pred_check_branch
      %130 = sbr.rel (0) target = $region105
    $region104: #{squeezenet_1x1lmp_forward.1} parent=1 // pred_region
      _
    $region105: #{squeezenet_1x1lmp_forward.1} parent=1 // pred_fallthru
      _
    // Predicated region
    $region106: #{squeezenet_1x1lmp_forward.1} parent=1 // pred_check
      _
    $region107: #{squeezenet_1x1lmp_forward.1} parent=1 // pred_check_branch
      %132 = sbr.rel (0) target = $region109
    $region108: #{squeezenet_1x1lmp_forward.1} parent=1 // pred_region
      _
    $region109: #{squeezenet_1x1lmp_forward.1} parent=1 // pred_fallthru
      _
    // Predicated region
    $region110: #{squeezenet_1x1lmp_forward.1} parent=1 // pred_check
      _
    $region111: #{squeezenet_1x1lmp_forward.1} parent=1 // pred_check_branch
      %134 = sbr.rel (0) target = $region113
    $region112: #{squeezenet_1x1lmp_forward.1} parent=1 // pred_region
      _
    $region113: #{squeezenet_1x1lmp_forward.1} parent=1 // pred_fallthru
      _
    // Predicated region
    $region114: #{squeezenet_1x1lmp_forward.1} parent=1 // pred_check
      _
    $region115: #{squeezenet_1x1lmp_forward.1} parent=1 // pred_check_branch
      %136 = sbr.rel (0) target = $region117
    $region116: #{squeezenet_1x1lmp_forward.1} parent=1 // pred_region
      _
    $region117: #{squeezenet_1x1lmp_forward.1} parent=1 // pred_fallthru
      _
    // Predicated region
    $region118: #{squeezenet_1x1lmp_forward.1} parent=1 // pred_check
      _
    $region119: #{squeezenet_1x1lmp_forward.1} parent=1 // pred_check_branch
      %138 = sbr.rel (0) target = $region121
    $region120: #{squeezenet_1x1lmp_forward.1} parent=1 // pred_region
      _
    $region121: #{squeezenet_1x1lmp_forward.1} parent=1 // pred_fallthru
      _
    // Predicated region
    $region122: #{squeezenet_1x1lmp_forward.1} parent=1 // pred_check
      _
    $region123: #{squeezenet_1x1lmp_forward.1} parent=1 // pred_check_branch
      %140 = sbr.rel (0) target = $region125
    $region124: #{squeezenet_1x1lmp_forward.1} parent=1 // pred_region
      _
    $region125: #{squeezenet_1x1lmp_forward.1} parent=1 // pred_fallthru
      _
    // Predicated region
    $region126: #{squeezenet_1x1lmp_forward.1} parent=1 // pred_check
      _
    $region127: #{squeezenet_1x1lmp_forward.1} parent=1 // pred_check_branch
      %142 = sbr.rel (0) target = $region129
    $region128: #{squeezenet_1x1lmp_forward.1} parent=1 // pred_region
      _
    $region129: #{squeezenet_1x1lmp_forward.1} parent=1 // pred_fallthru
      _
    // Predicated region
    $region130: #{squeezenet_1x1lmp_forward.1} parent=1 // pred_check
      _
    $region131: #{squeezenet_1x1lmp_forward.1} parent=1 // pred_check_branch
      %144 = sbr.rel (0) target = $region133
    $region132: #{squeezenet_1x1lmp_forward.1} parent=1 // pred_region
      _
    $region133: #{squeezenet_1x1lmp_forward.1} parent=1 // pred_fallthru
      _
    // Predicated region
    $region134: #{squeezenet_1x1lmp_forward.1} parent=1 // pred_check
      _
    $region135: #{squeezenet_1x1lmp_forward.1} parent=1 // pred_check_branch
      %146 = sbr.rel (0) target = $region137
    $region136: #{squeezenet_1x1lmp_forward.1} parent=1 // pred_region
      _
    $region137: #{squeezenet_1x1lmp_forward.1} parent=1 // pred_fallthru
      _
    // Predicated region
    $region138: #{squeezenet_1x1lmp_forward.1} parent=1 // pred_check
      _
    $region139: #{squeezenet_1x1lmp_forward.1} parent=1 // pred_check_branch
      %148 = sbr.rel (0) target = $region141
    $region140: #{squeezenet_1x1lmp_forward.1} parent=1 // pred_region
      _
    $region141: #{squeezenet_1x1lmp_forward.1} parent=1 // pred_fallthru
      _
    // Predicated region
    $region142: #{squeezenet_1x1lmp_forward.1} parent=1 // pred_check
      _
    $region143: #{squeezenet_1x1lmp_forward.1} parent=1 // pred_check_branch
      %150 = sbr.rel (0) target = $region145
    $region144: #{squeezenet_1x1lmp_forward.1} parent=1 // pred_region
      _
    $region145: #{squeezenet_1x1lmp_forward.1} parent=1 // pred_fallthru
      _
    %v152 = vld [vmem:[%s1] sm:$0xff]
    %v153 = vld [vmem:[%s1 + $0x8] sm:$0xff]
    %v154 = vld [vmem:[%s1 + $0x10] sm:$0xff]
    %v155 = vld [vmem:[%s1 + $0x18] sm:$0x3]
    %v156 = vld [vmem:[%s1 + $0x1a] sm:$0xff]
    %v157 = vld [vmem:[%s1 + $0x22] sm:$0xff]
    %v158 = vld [vmem:[%s1 + $0x2a] sm:$0xff]
    %v159 = vld [vmem:[%s1 + $0x32] sm:$0x3]
    %v160 = vmax.f32 %v152, %v156
    %v161 = vmax.f32 %v153, %v157
    %v162 = vmax.f32 %v154, %v158
    %v163 = vmax.f32 %v155, %v159
    %v164 = vld [vmem:[%s1 + $0x34] sm:$0xff]
    %v165 = vld [vmem:[%s1 + $0x3c] sm:$0xff]
    %v166 = vld [vmem:[%s1 + $0x44] sm:$0xff]
    %v167 = vld [vmem:[%s1 + $0x4c] sm:$0x3]
    %v168 = vmax.f32 %v160, %v164
    %v169 = vmax.f32 %v161, %v165
    %v170 = vmax.f32 %v162, %v166
    %v171 = vmax.f32 %v163, %v167
    %v173 = vrot.slane %v168, 2
    %v175 = vmax.f32 %v168, %v173
    %v176 = vrot.slane %v168, 4
    %v178 = vmax.f32 %v175, %v176
    %179 = vst [vmem:[#allocation2] sm:$0x3] %v178
    %v181 = vrot.slane %v169, 4
    %v183 = vmax.f32 %v175, %v181
    %184 = vst [vmem:[#allocation2 - $0x2] sm:$0x30] %v183
    %v185 = vrot.slane %v169, 2
    %v187 = vmax.f32 %v169, %v185
    %v188 = vmax.f32 %v187, %v181
    %189 = vst [vmem:[#allocation2 + $0x4] sm:$0x3] %v188
    %v191 = vrot.slane %v170, 4
    %v193 = vmax.f32 %v187, %v191
    %194 = vst [vmem:[#allocation2 + $0x2] sm:$0x30] %v193
    %v195 = vrot.slane %v170, 2
    %v197 = vmax.f32 %v170, %v195
    %v198 = vmax.f32 %v197, %v191
    %199 = vst [vmem:[#allocation2 + $0x8] sm:$0x3] %v198
    %v201 = vrot.slane %v171, 4
    %v203 = vmax.f32 %v197, %v201
    %204 = vst [vmem:[#allocation2 + $0x6] sm:$0x30] %v203
    %v205 = vld [vmem:[%s1 + $0x34] sm:$0xff]
    %v206 = vld [vmem:[%s1 + $0x3c] sm:$0xff]
    %v207 = vld [vmem:[%s1 + $0x44] sm:$0xff]
    %v208 = vld [vmem:[%s1 + $0x4c] sm:$0x3]
    %v209 = vld [vmem:[%s1 + $0x4e] sm:$0xff]
    %v210 = vld [vmem:[%s1 + $0x56] sm:$0xff]
    %v211 = vld [vmem:[%s1 + $0x5e] sm:$0xff]
    %v212 = vld [vmem:[%s1 + $0x66] sm:$0x3]
    %v213 = vmax.f32 %v205, %v209
    %v214 = vmax.f32 %v206, %v210
    %v215 = vmax.f32 %v207, %v211
    %v216 = vmax.f32 %v208, %v212
    %v217 = vld [vmem:[%s1 + $0x68] sm:$0xff]
    %v218 = vld [vmem:[%s1 + $0x70] sm:$0xff]
    %v219 = vld [vmem:[%s1 + $0x78] sm:$0xff]
    %v220 = vld [vmem:[%s1 + $0x80] sm:$0x3]
    %v221 = vmax.f32 %v213, %v217
    %v222 = vmax.f32 %v214, %v218
    %v223 = vmax.f32 %v215, %v219
    %v224 = vmax.f32 %v216, %v220
    %v226 = vrot.slane %v221, 2
    %v228 = vmax.f32 %v221, %v226
    %v229 = vrot.slane %v221, 4
    %v231 = vmax.f32 %v228, %v229
    %232 = vst [vmem:[#allocation2 + $0xc] sm:$0x3] %v231
    %v234 = vrot.slane %v222, 4
    %v236 = vmax.f32 %v228, %v234
    %237 = vst [vmem:[#allocation2 + $0xa] sm:$0x30] %v236
    %v238 = vrot.slane %v222, 2
    %v240 = vmax.f32 %v222, %v238
    %v241 = vmax.f32 %v240, %v234
    %242 = vst [vmem:[#allocation2 + $0x10] sm:$0x3] %v241
    %v244 = vrot.slane %v223, 4
    %v246 = vmax.f32 %v240, %v244
    %247 = vst [vmem:[#allocation2 + $0xe] sm:$0x30] %v246
    %v248 = vrot.slane %v223, 2
    %v250 = vmax.f32 %v223, %v248
    %v251 = vmax.f32 %v250, %v244
    %252 = vst [vmem:[#allocation2 + $0x14] sm:$0x3] %v251
    %v254 = vrot.slane %v224, 4
    %v256 = vmax.f32 %v250, %v254
    %257 = vst [vmem:[#allocation2 + $0x12] sm:$0x30] %v256
    %v258 = vld [vmem:[%s1 + $0x68] sm:$0xff]
    %v259 = vld [vmem:[%s1 + $0x70] sm:$0xff]
    %v260 = vld [vmem:[%s1 + $0x78] sm:$0xff]
    %v261 = vld [vmem:[%s1 + $0x80] sm:$0x3]
    %v262 = vld [vmem:[%s1 + $0x82] sm:$0xff]
    %v263 = vld [vmem:[%s1 + $0x8a] sm:$0xff]
    %v264 = vld [vmem:[%s1 + $0x92] sm:$0xff]
    %v265 = vld [vmem:[%s1 + $0x9a] sm:$0x3]
    %v266 = vmax.f32 %v258, %v262
    %v267 = vmax.f32 %v259, %v263
    %v268 = vmax.f32 %v260, %v264
    %v269 = vmax.f32 %v261, %v265
    %v270 = vld [vmem:[%s1 + $0x9c] sm:$0xff]
    %v271 = vld [vmem:[%s1 + $0xa4] sm:$0xff]
    %v272 = vld [vmem:[%s1 + $0xac] sm:$0xff]
    %v273 = vld [vmem:[%s1 + $0xb4] sm:$0x3]
    %v274 = vmax.f32 %v266, %v270
    %v275 = vmax.f32 %v267, %v271
    %v276 = vmax.f32 %v268, %v272
    %v277 = vmax.f32 %v269, %v273
    %v279 = vrot.slane %v274, 2
    %v281 = vmax.f32 %v274, %v279
    %v282 = vrot.slane %v274, 4
    %v284 = vmax.f32 %v281, %v282
    %285 = vst [vmem:[#allocation2 + $0x18] sm:$0x3] %v284
    %v287 = vrot.slane %v275, 4
    %v289 = vmax.f32 %v281, %v287
    %290 = vst [vmem:[#allocation2 + $0x16] sm:$0x30] %v289
    %v291 = vrot.slane %v275, 2
    %v293 = vmax.f32 %v275, %v291
    %v294 = vmax.f32 %v293, %v287
    %295 = vst [vmem:[#allocation2 + $0x1c] sm:$0x3] %v294
    %v297 = vrot.slane %v276, 4
    %v299 = vmax.f32 %v293, %v297
    %300 = vst [vmem:[#allocation2 + $0x1a] sm:$0x30] %v299
    %v301 = vrot.slane %v276, 2
    %v303 = vmax.f32 %v276, %v301
    %v304 = vmax.f32 %v303, %v297
    %305 = vst [vmem:[#allocation2 + $0x20] sm:$0x3] %v304
    %v307 = vrot.slane %v277, 4
    %v309 = vmax.f32 %v303, %v307
    %310 = vst [vmem:[#allocation2 + $0x1e] sm:$0x30] %v309
    %v311 = vld [vmem:[%s1 + $0x9c] sm:$0xff]
    %v312 = vld [vmem:[%s1 + $0xa4] sm:$0xff]
    %v313 = vld [vmem:[%s1 + $0xac] sm:$0xff]
    %v314 = vld [vmem:[%s1 + $0xb4] sm:$0x3]
    %v315 = vld [vmem:[%s1 + $0xb6] sm:$0xff]
    %v316 = vld [vmem:[%s1 + $0xbe] sm:$0xff]
    %v317 = vld [vmem:[%s1 + $0xc6] sm:$0xff]
    %v318 = vld [vmem:[%s1 + $0xce] sm:$0x3]
    %v319 = vmax.f32 %v311, %v315
    %v320 = vmax.f32 %v312, %v316
    %v321 = vmax.f32 %v313, %v317
    %v322 = vmax.f32 %v314, %v318
    %v323 = vld [vmem:[%s1 + $0xd0] sm:$0xff]
    %v324 = vld [vmem:[%s1 + $0xd8] sm:$0xff]
    %v325 = vld [vmem:[%s1 + $0xe0] sm:$0xff]
    %v326 = vld [vmem:[%s1 + $0xe8] sm:$0x3]
    %v327 = vmax.f32 %v319, %v323
    %v328 = vmax.f32 %v320, %v324
    %v329 = vmax.f32 %v321, %v325
    %v330 = vmax.f32 %v322, %v326
    %v332 = vrot.slane %v327, 2
    %v334 = vmax.f32 %v327, %v332
    %v335 = vrot.slane %v327, 4
    %v337 = vmax.f32 %v334, %v335
    %338 = vst [vmem:[#allocation2 + $0x24] sm:$0x3] %v337
    %v340 = vrot.slane %v328, 4
    %v342 = vmax.f32 %v334, %v340
    %343 = vst [vmem:[#allocation2 + $0x22] sm:$0x30] %v342
    %v344 = vrot.slane %v328, 2
    %v346 = vmax.f32 %v328, %v344
    %v347 = vmax.f32 %v346, %v340
    %348 = vst [vmem:[#allocation2 + $0x28] sm:$0x3] %v347
    %v350 = vrot.slane %v329, 4
    %v352 = vmax.f32 %v346, %v350
    %353 = vst [vmem:[#allocation2 + $0x26] sm:$0x30] %v352
    %v354 = vrot.slane %v329, 2
    %v356 = vmax.f32 %v329, %v354
    %v357 = vmax.f32 %v356, %v350
    %358 = vst [vmem:[#allocation2 + $0x2c] sm:$0x3] %v357
    %v360 = vrot.slane %v330, 4
    %v362 = vmax.f32 %v356, %v360
    %363 = vst [vmem:[#allocation2 + $0x2a] sm:$0x30] %v362
    %v364 = vld [vmem:[%s1 + $0xd0] sm:$0xff]
    %v365 = vld [vmem:[%s1 + $0xd8] sm:$0xff]
    %v366 = vld [vmem:[%s1 + $0xe0] sm:$0xff]
    %v367 = vld [vmem:[%s1 + $0xe8] sm:$0x3]
    %v368 = vld [vmem:[%s1 + $0xea] sm:$0xff]
    %v369 = vld [vmem:[%s1 + $0xf2] sm:$0xff]
    %v370 = vld [vmem:[%s1 + $0xfa] sm:$0xff]
    %v371 = vld [vmem:[%s1 + $0x102] sm:$0x3]
    %v372 = vmax.f32 %v364, %v368
    %v373 = vmax.f32 %v365, %v369
    %v374 = vmax.f32 %v366, %v370
    %v375 = vmax.f32 %v367, %v371
    %v376 = vld [vmem:[%s1 + $0x104] sm:$0xff]
    %v377 = vld [vmem:[%s1 + $0x10c] sm:$0xff]
    %v378 = vld [vmem:[%s1 + $0x114] sm:$0xff]
    %v379 = vld [vmem:[%s1 + $0x11c] sm:$0x3]
    %v380 = vmax.f32 %v372, %v376
    %v381 = vmax.f32 %v373, %v377
    %v382 = vmax.f32 %v374, %v378
    %v383 = vmax.f32 %v375, %v379
    %v385 = vrot.slane %v380, 2
    %v387 = vmax.f32 %v380, %v385
    %v388 = vrot.slane %v380, 4
    %v390 = vmax.f32 %v387, %v388
    %391 = vst [vmem:[#allocation2 + $0x30] sm:$0x3] %v390
    %v393 = vrot.slane %v381, 4
    %v395 = vmax.f32 %v387, %v393
    %396 = vst [vmem:[#allocation2 + $0x2e] sm:$0x30] %v395
    %v397 = vrot.slane %v381, 2
    %v399 = vmax.f32 %v381, %v397
    %v400 = vmax.f32 %v399, %v393
    %401 = vst [vmem:[#allocation2 + $0x34] sm:$0x3] %v400
    %v403 = vrot.slane %v382, 4
    %v405 = vmax.f32 %v399, %v403
    %406 = vst [vmem:[#allocation2 + $0x32] sm:$0x30] %v405
    %v407 = vrot.slane %v382, 2
    %v409 = vmax.f32 %v382, %v407
    %v410 = vmax.f32 %v409, %v403
    %411 = vst [vmem:[#allocation2 + $0x38] sm:$0x3] %v410
    %v413 = vrot.slane %v383, 4
    %v415 = vmax.f32 %v409, %v413
    %416 = vst [vmem:[#allocation2 + $0x36] sm:$0x30] %v415
    %v417 = vld [vmem:[%s1 + $0x104] sm:$0xff]
    %v418 = vld [vmem:[%s1 + $0x10c] sm:$0xff]
    %v419 = vld [vmem:[%s1 + $0x114] sm:$0xff]
    %v420 = vld [vmem:[%s1 + $0x11c] sm:$0x3]
    %v421 = vld [vmem:[%s1 + $0x11e] sm:$0xff]
    %v422 = vld [vmem:[%s1 + $0x126] sm:$0xff]
    %v423 = vld [vmem:[%s1 + $0x12e] sm:$0xff]
    %v424 = vld [vmem:[%s1 + $0x136] sm:$0x3]
    %v425 = vmax.f32 %v417, %v421
    %v426 = vmax.f32 %v418, %v422
    %v427 = vmax.f32 %v419, %v423
    %v428 = vmax.f32 %v420, %v424
    %v429 = vld [vmem:[%s1 + $0x138] sm:$0xff]
    %v430 = vld [vmem:[%s1 + $0x140] sm:$0xff]
    %v431 = vld [vmem:[%s1 + $0x148] sm:$0xff]
    %v432 = vld [vmem:[%s1 + $0x150] sm:$0x3]
    %v433 = vmax.f32 %v425, %v429
    %v434 = vmax.f32 %v426, %v430
    %v435 = vmax.f32 %v427, %v431
    %v436 = vmax.f32 %v428, %v432
    %v438 = vrot.slane %v433, 2
    %v440 = vmax.f32 %v433, %v438
    %v441 = vrot.slane %v433, 4
    %v443 = vmax.f32 %v440, %v441
    %444 = vst [vmem:[#allocation2 + $0x3c] sm:$0x3] %v443
    %v446 = vrot.slane %v434, 4
    %v448 = vmax.f32 %v440, %v446
    %449 = vst [vmem:[#allocation2 + $0x3a] sm:$0x30] %v448
    %v450 = vrot.slane %v434, 2
    %v452 = vmax.f32 %v434, %v450
    %v453 = vmax.f32 %v452, %v446
    %454 = vst [vmem:[#allocation2 + $0x40] sm:$0x3] %v453
    %v456 = vrot.slane %v435, 4
    %v458 = vmax.f32 %v452, %v456
    %459 = vst [vmem:[#allocation2 + $0x3e] sm:$0x30] %v458
    %v460 = vrot.slane %v435, 2
    %v462 = vmax.f32 %v435, %v460
    %v463 = vmax.f32 %v462, %v456
    %464 = vst [vmem:[#allocation2 + $0x44] sm:$0x3] %v463
    %v466 = vrot.slane %v436, 4
    %v468 = vmax.f32 %v462, %v466
    %469 = vst [vmem:[#allocation2 + $0x42] sm:$0x30] %v468
    %v470 = vld [vmem:[#allocation2] sm:$0xff]
    %v471 = vld [vmem:[#allocation2 + $0x8] sm:$0xff]
    %v472 = vld [vmem:[#allocation2 + $0x10] sm:$0xff]
    %v473 = vld [vmem:[#allocation2 + $0x18] sm:$0xff]
    %v474 = vld [vmem:[#allocation2 + $0x20] sm:$0xff]
    %v475 = vld [vmem:[#allocation2 + $0x28] sm:$0xff]
    %v476 = vld [vmem:[#allocation2 + $0x30] sm:$0xff]
    %v477 = vld [vmem:[#allocation2 + $0x38] sm:$0xff]
    %v478 = vld [vmem:[#allocation2 + $0x40] sm:$0xff]
    %v479 = vld [vmem:[%s3] sm:$0x1]
    %v481 = vlaneseq
    %v482 = vshrl.u32 %v481, 7
    %v483 = vsub.s32 0, %v482
    %v484 = vrot.slane %v479, %v483
    %v486 = vadd.f32 %v470, %v484
    %v487 = vadd.f32 %v471, %v484
    %v488 = vadd.f32 %v472, %v484
    %v489 = vadd.f32 %v473, %v484
    %v490 = vadd.f32 %v474, %v484
    %v491 = vadd.f32 %v475, %v484
    %v492 = vadd.f32 %v476, %v484
    %v493 = vadd.f32 %v477, %v484
    %v494 = vadd.f32 %v478, %v484
    %v495 = vmax.f32 %v486, 0.0
    %v496 = vmax.f32 %v487, 0.0
    %v497 = vmax.f32 %v488, 0.0
    %v498 = vmax.f32 %v489, 0.0
    %v499 = vmax.f32 %v490, 0.0
    %v500 = vmax.f32 %v491, 0.0
    %v501 = vmax.f32 %v492, 0.0
    %v502 = vmax.f32 %v493, 0.0
    %v503 = vmax.f32 %v494, 0.0
    %v504 = vpack.c.bf16 %v496, %v495
    %v505 = vpack.c.bf16 %v498, %v497
    %v506 = vpack.c.bf16 %v500, %v499
    %v507 = vpack.c.bf16 %v502, %v501
    %v508 = vpack.c.bf16 %v503, %v503
    %v509 = vld [vmem:[%s5] sm:$0xf]
    %v510 = vld [vmem:[%s5 + $0x4] sm:$0xf]
    %v511 = vld [vmem:[%s5 + $0x8] sm:$0xf]
    %v512 = vld [vmem:[%s5 + $0xc] sm:$0xf]
    %v513 = vld [vmem:[%s5 + $0x10] sm:$0xf]
    %v514 = vld [vmem:[%s5 + $0x14] sm:$0xf]
    %v515 = vld [vmem:[%s5 + $0x18] sm:$0xf]
    %v516 = vld [vmem:[%s5 + $0x1c] sm:$0xf]
    %v517 = vld [vmem:[%s5 + $0x20] sm:$0xf]
    %v518 = vld [vmem:[%s5 + $0x24] sm:$0xf]
    %v519 = vld [vmem:[%s5 + $0x28] sm:$0xf]
    %v520 = vld [vmem:[%s5 + $0x2c] sm:$0xf]
    %v521 = vld [vmem:[%s5 + $0x30] sm:$0xf]
    %v522 = vld [vmem:[%s5 + $0x34] sm:$0xf]
    %v523 = vld [vmem:[%s5 + $0x38] sm:$0xf]
    %v524 = vld [vmem:[%s5 + $0x3c] sm:$0xf]
    %v525 = vld [vmem:[%s7] sm:$0x1]
    %v527 = vlaneseq
    %v528 = vshrl.u32 %v527, 7
    %v529 = vsub.s32 0, %v528
    %v530 = vrot.slane %v525, %v529
    %v548 = vunpack.c.l.b16 %v509
    %v549 = vunpack.c.l.b16 %v510
    %v550 = vunpack.c.l.b16 %v511
    %v551 = vunpack.c.l.b16 %v512
    %v552 = vunpack.c.l.b16 %v513
    %v553 = vunpack.c.l.b16 %v514
    %v554 = vunpack.c.l.b16 %v515
    %v555 = vunpack.c.l.b16 %v516
    %v556 = vunpack.c.l.b16 %v517
    %v557 = vunpack.c.l.b16 %v518
    %v558 = vunpack.c.l.b16 %v519
    %v559 = vunpack.c.l.b16 %v520
    %v560 = vunpack.c.l.b16 %v521
    %v561 = vunpack.c.l.b16 %v522
    %v562 = vunpack.c.l.b16 %v523
    %v563 = vunpack.c.l.b16 %v524
    %v564 = vpack.c.b16 %v549, %v548
    %v565 = vpack.c.b16 %v551, %v550
    %v566 = vpack.c.b16 %v553, %v552
    %v567 = vpack.c.b16 %v555, %v554
    %v568 = vpack.c.b16 %v557, %v556
    %v569 = vpack.c.b16 %v559, %v558
    %v570 = vpack.c.b16 %v561, %v560
    %v571 = vpack.c.b16 %v563, %v562
    %580 = vmatprep.subr.bf16.mxu0 0
    %581 = vmatpush1.bf16.msra.mxu0 %v571
    %582 = vmatprep.subr.bf16.mxu0 0
    %583 = vmatpush1.bf16.msra.mxu0 %v570
    %584 = vmatprep.subr.bf16.mxu0 0
    %585 = vmatpush1.bf16.msra.mxu0 %v569
    %586 = vmatprep.subr.bf16.mxu0 0
    %587 = vmatpush1.bf16.msra.mxu0 %v568
    %588 = vmatprep.subr.bf16.mxu0 0
    %589 = vmatpush1.bf16.msra.mxu0 %v567
    %590 = vmatprep.subr.bf16.mxu0 0
    %591 = vmatpush1.bf16.msra.mxu0 %v566
    %592 = vmatprep.subr.bf16.mxu0 0
    %593 = vmatpush1.bf16.msra.mxu0 %v565
    %594 = vmatprep.subr.bf16.mxu0 0
    %595 = vmatpush1.bf16.msra.mxu0 %v564
    %596 = vmatprep.subr.bf16.mxu0 0
    %597 = vmatpush2.bf16.msra.mxu0 0
    %598 = vmatprep.subr.bf16.mxu0 0
    %599 = vmatpush2.bf16.msra.mxu0 0
    %600 = vmatprep.subr.bf16.mxu0 0
    %601 = vmatpush2.bf16.msra.mxu0 0
    %602 = vmatprep.subr.bf16.mxu0 0
    %603 = vmatpush2.bf16.msra.mxu0 0
    %604 = vmatprep.subr.bf16.mxu0 0
    %605 = vmatpush2.bf16.msra.mxu0 0
    %606 = vmatprep.subr.bf16.mxu0 0
    %607 = vmatpush2.bf16.msra.mxu0 0
    %608 = vmatprep.subr.bf16.mxu0 0
    %609 = vmatpush2.bf16.msra.mxu0 0
    %610 = vmatprep.subr.bf16.mxu0 0
    %611 = vmatpush2.bf16.msra.mxu0 0
    %612 = vmatprep.mubr.bf16.mxu0 0
    %613 = vmatmul.mubr.bf16.gmra.mxu0 %v504
    %v614 = vpop.f32.mrf.mxu0
    %v615 = vadd.f32 %v530, %v614
    %v616 = vpop.f32.mrf.mxu0
    %v617 = vpop.f32.mrf.mxu0
    %v618 = vadd.f32 %v530, %v617
    %v619 = vpop.f32.mrf.mxu0
    %620 = vmatprep.mubr.bf16.mxu0 0
    %621 = vmatmul.mubr.bf16.gmra.mxu0 %v505
    %v622 = vpop.f32.mrf.mxu0
    %v623 = vadd.f32 %v530, %v622
    %v624 = vpop.f32.mrf.mxu0
    %v625 = vpop.f32.mrf.mxu0
    %v626 = vadd.f32 %v530, %v625
    %v627 = vpop.f32.mrf.mxu0
    %628 = vmatprep.mubr.bf16.mxu0 0
    %629 = vmatmul.mubr.bf16.gmra.mxu0 %v506
    %v630 = vpop.f32.mrf.mxu0
    %v631 = vadd.f32 %v530, %v630
    %v632 = vpop.f32.mrf.mxu0
    %v633 = vpop.f32.mrf.mxu0
    %v634 = vadd.f32 %v530, %v633
    %v635 = vpop.f32.mrf.mxu0
    %636 = vmatprep.mubr.bf16.mxu0 0
    %637 = vmatmul.mubr.bf16.gmra.mxu0 %v507
    %v638 = vpop.f32.mrf.mxu0
    %v639 = vadd.f32 %v530, %v638
    %v640 = vpop.f32.mrf.mxu0
    %v641 = vpop.f32.mrf.mxu0
    %v642 = vadd.f32 %v530, %v641
    %v643 = vpop.f32.mrf.mxu0
    %644 = vmatprep.mubr.bf16.mxu0 0
    %645 = vmatmul.mubr.bf16.gmra.mxu0 %v508
    %v646 = vpop.f32.mrf.mxu0
    %v647 = vadd.f32 %v530, %v646
    %v648 = vpop.f32.mrf.mxu0
    %v649 = vpop.f32.mrf.mxu0
    %v650 = vpop.f32.mrf.mxu0
    %651 = vdwg.mxu0
    %v652 = vmax.f32 %v615, 0.0
    %v653 = vmax.f32 %v618, 0.0
    %v654 = vmax.f32 %v623, 0.0
    %v655 = vmax.f32 %v626, 0.0
    %v656 = vmax.f32 %v631, 0.0
    %v657 = vmax.f32 %v634, 0.0
    %v658 = vmax.f32 %v639, 0.0
    %v659 = vmax.f32 %v642, 0.0
    %v660 = vmax.f32 %v647, 0.0
    %v661 = vpack.c.bf16 %v653, %v652
    %v662 = vpack.c.bf16 %v655, %v654
    %v663 = vpack.c.bf16 %v657, %v656
    %v664 = vpack.c.bf16 %v659, %v658
    %v665 = vpack.c.bf16 %v660, %v660
    %v666 = vld [vmem:[%s9] sm:$0xf]
    %v667 = vld [vmem:[%s9 + $0x4] sm:$0xf]
    %v668 = vld [vmem:[%s9 + $0x8] sm:$0xf]
    %v669 = vld [vmem:[%s9 + $0xc] sm:$0xf]
    %v670 = vld [vmem:[%s9 + $0x10] sm:$0xf]
    %v671 = vld [vmem:[%s9 + $0x14] sm:$0xf]
    %v672 = vld [vmem:[%s9 + $0x18] sm:$0xf]
    %v673 = vld [vmem:[%s9 + $0x1c] sm:$0xf]
    %v674 = vld [vmem:[%s9 + $0x20] sm:$0xf]
    %v675 = vld [vmem:[%s9 + $0x24] sm:$0xf]
    %v676 = vld [vmem:[%s9 + $0x28] sm:$0xf]
    %v677 = vld [vmem:[%s9 + $0x2c] sm:$0xf]
    %v678 = vld [vmem:[%s9 + $0x30] sm:$0xf]
    %v679 = vld [vmem:[%s9 + $0x34] sm:$0xf]
    %v680 = vld [vmem:[%s9 + $0x38] sm:$0xf]
    %v681 = vld [vmem:[%s9 + $0x3c] sm:$0xf]
    %v682 = vld [vmem:[%s11] sm:$0x1]
    %v684 = vlaneseq
    %v685 = vshrl.u32 %v684, 7
    %v686 = vsub.s32 0, %v685
    %v687 = vrot.slane %v682, %v686
    %v705 = vunpack.c.l.b16 %v666
    %v706 = vunpack.c.l.b16 %v667
    %v707 = vunpack.c.l.b16 %v668
    %v708 = vunpack.c.l.b16 %v669
    %v709 = vunpack.c.l.b16 %v670
    %v710 = vunpack.c.l.b16 %v671
    %v711 = vunpack.c.l.b16 %v672
    %v712 = vunpack.c.l.b16 %v673
    %v713 = vunpack.c.l.b16 %v674
    %v714 = vunpack.c.l.b16 %v675
    %v715 = vunpack.c.l.b16 %v676
    %v716 = vunpack.c.l.b16 %v677
    %v717 = vunpack.c.l.b16 %v678
    %v718 = vunpack.c.l.b16 %v679
    %v719 = vunpack.c.l.b16 %v680
    %v720 = vunpack.c.l.b16 %v681
    %v721 = vpack.c.b16 %v706, %v705
    %v722 = vpack.c.b16 %v708, %v707
    %v723 = vpack.c.b16 %v710, %v709
    %v724 = vpack.c.b16 %v712, %v711
    %v725 = vpack.c.b16 %v714, %v713
    %v726 = vpack.c.b16 %v716, %v715
    %v727 = vpack.c.b16 %v718, %v717
    %v728 = vpack.c.b16 %v720, %v719
    %737 = vmatprep.subr.bf16.mxu0 0
    %738 = vmatpush1.bf16.msra.mxu0 %v728
    %739 = vmatprep.subr.bf16.mxu0 0
    %740 = vmatpush1.bf16.msra.mxu0 %v727
    %741 = vmatprep.subr.bf16.mxu0 0
    %742 = vmatpush1.bf16.msra.mxu0 %v726
    %743 = vmatprep.subr.bf16.mxu0 0
    %744 = vmatpush1.bf16.msra.mxu0 %v725
    %745 = vmatprep.subr.bf16.mxu0 0
    %746 = vmatpush1.bf16.msra.mxu0 %v724
    %747 = vmatprep.subr.bf16.mxu0 0
    %748 = vmatpush1.bf16.msra.mxu0 %v723
    %749 = vmatprep.subr.bf16.mxu0 0
    %750 = vmatpush1.bf16.msra.mxu0 %v722
    %751 = vmatprep.subr.bf16.mxu0 0
    %752 = vmatpush1.bf16.msra.mxu0 %v721
    %753 = vmatprep.subr.bf16.mxu0 0
    %754 = vmatpush2.bf16.msra.mxu0 0
    %755 = vmatprep.subr.bf16.mxu0 0
    %756 = vmatpush2.bf16.msra.mxu0 0
    %757 = vmatprep.subr.bf16.mxu0 0
    %758 = vmatpush2.bf16.msra.mxu0 0
    %759 = vmatprep.subr.bf16.mxu0 0
    %760 = vmatpush2.bf16.msra.mxu0 0
    %761 = vmatprep.subr.bf16.mxu0 0
    %762 = vmatpush2.bf16.msra.mxu0 0
    %763 = vmatprep.subr.bf16.mxu0 0
    %764 = vmatpush2.bf16.msra.mxu0 0
    %765 = vmatprep.subr.bf16.mxu0 0
    %766 = vmatpush2.bf16.msra.mxu0 0
    %767 = vmatprep.subr.bf16.mxu0 0
    %768 = vmatpush2.bf16.msra.mxu0 0
    %769 = vmatprep.mubr.bf16.mxu0 0
    %770 = vmatmul.mubr.bf16.gmra.mxu0 %v661
    %v771 = vpop.f32.mrf.mxu0
    %v772 = vadd.f32 %v687, %v771
    %v773 = vpop.f32.mrf.mxu0
    %v774 = vpop.f32.mrf.mxu0
    %v775 = vadd.f32 %v687, %v774
    %v776 = vpop.f32.mrf.mxu0
    %777 = vmatprep.mubr.bf16.mxu0 0
    %778 = vmatmul.mubr.bf16.gmra.mxu0 %v662
    %v779 = vpop.f32.mrf.mxu0
    %v780 = vadd.f32 %v687, %v779
    %v781 = vpop.f32.mrf.mxu0
    %v782 = vpop.f32.mrf.mxu0
    %v783 = vadd.f32 %v687, %v782
    %v784 = vpop.f32.mrf.mxu0
    %785 = vmatprep.mubr.bf16.mxu0 0
    %786 = vmatmul.mubr.bf16.gmra.mxu0 %v663
    %v787 = vpop.f32.mrf.mxu0
    %v788 = vadd.f32 %v687, %v787
    %v789 = vpop.f32.mrf.mxu0
    %v790 = vpop.f32.mrf.mxu0
    %v791 = vadd.f32 %v687, %v790
    %v792 = vpop.f32.mrf.mxu0
    %793 = vmatprep.mubr.bf16.mxu0 0
    %794 = vmatmul.mubr.bf16.gmra.mxu0 %v664
    %v795 = vpop.f32.mrf.mxu0
    %v796 = vadd.f32 %v687, %v795
    %v797 = vpop.f32.mrf.mxu0
    %v798 = vpop.f32.mrf.mxu0
    %v799 = vadd.f32 %v687, %v798
    %v800 = vpop.f32.mrf.mxu0
    %801 = vmatprep.mubr.bf16.mxu0 0
    %802 = vmatmul.mubr.bf16.gmra.mxu0 %v665
    %v803 = vpop.f32.mrf.mxu0
    %v804 = vadd.f32 %v687, %v803
    %v805 = vpop.f32.mrf.mxu0
    %v806 = vpop.f32.mrf.mxu0
    %v807 = vpop.f32.mrf.mxu0
    %808 = vdwg.mxu0
    %v809 = vmax.f32 %v772, 0.0
    %v810 = vmax.f32 %v775, 0.0
    %v811 = vmax.f32 %v780, 0.0
    %v812 = vmax.f32 %v783, 0.0
    %v813 = vmax.f32 %v788, 0.0
    %v814 = vmax.f32 %v791, 0.0
    %v815 = vmax.f32 %v796, 0.0
    %v816 = vmax.f32 %v799, 0.0
    %v817 = vmax.f32 %v804, 0.0
    %v818 = vpack.c.bf16 %v810, %v809
    %v819 = vpack.c.bf16 %v812, %v811
    %v820 = vpack.c.bf16 %v814, %v813
    %v821 = vpack.c.bf16 %v816, %v815
    %v822 = vpack.c.bf16 %v817, %v817
    %v823 = vld [vmem:[%s13] sm:$0xf]
    %v824 = vld [vmem:[%s13 + $0x4] sm:$0xf]
    %v825 = vld [vmem:[%s13 + $0x8] sm:$0xf]
    %v826 = vld [vmem:[%s13 + $0xc] sm:$0xf]
    %v827 = vld [vmem:[%s13 + $0x10] sm:$0xf]
    %v828 = vld [vmem:[%s13 + $0x14] sm:$0xf]
    %v829 = vld [vmem:[%s13 + $0x18] sm:$0xf]
    %v830 = vld [vmem:[%s13 + $0x1c] sm:$0xf]
    %v831 = vld [vmem:[%s13 + $0x20] sm:$0xf]
    %v832 = vld [vmem:[%s13 + $0x24] sm:$0xf]
    %v833 = vld [vmem:[%s13 + $0x28] sm:$0xf]
    %v834 = vld [vmem:[%s13 + $0x2c] sm:$0xf]
    %v835 = vld [vmem:[%s13 + $0x30] sm:$0xf]
    %v836 = vld [vmem:[%s13 + $0x34] sm:$0xf]
    %v837 = vld [vmem:[%s13 + $0x38] sm:$0xf]
    %v838 = vld [vmem:[%s13 + $0x3c] sm:$0xf]
    %v839 = vld [vmem:[%s15] sm:$0x1]
    %v841 = vlaneseq
    %v842 = vshrl.u32 %v841, 7
    %v843 = vsub.s32 0, %v842
    %v844 = vrot.slane %v839, %v843
    %v862 = vunpack.c.l.b16 %v823
    %v863 = vunpack.c.l.b16 %v824
    %v864 = vunpack.c.l.b16 %v825
    %v865 = vunpack.c.l.b16 %v826
    %v866 = vunpack.c.l.b16 %v827
    %v867 = vunpack.c.l.b16 %v828
    %v868 = vunpack.c.l.b16 %v829
    %v869 = vunpack.c.l.b16 %v830
    %v870 = vunpack.c.l.b16 %v831
    %v871 = vunpack.c.l.b16 %v832
    %v872 = vunpack.c.l.b16 %v833
    %v873 = vunpack.c.l.b16 %v834
    %v874 = vunpack.c.l.b16 %v835
    %v875 = vunpack.c.l.b16 %v836
    %v876 = vunpack.c.l.b16 %v837
    %v877 = vunpack.c.l.b16 %v838
    %v878 = vpack.c.b16 %v863, %v862
    %v879 = vpack.c.b16 %v865, %v864
    %v880 = vpack.c.b16 %v867, %v866
    %v881 = vpack.c.b16 %v869, %v868
    %v882 = vpack.c.b16 %v871, %v870
    %v883 = vpack.c.b16 %v873, %v872
    %v884 = vpack.c.b16 %v875, %v874
    %v885 = vpack.c.b16 %v877, %v876
    %894 = vmatprep.subr.bf16.mxu0 0
    %895 = vmatpush1.bf16.msra.mxu0 %v885
    %896 = vmatprep.subr.bf16.mxu0 0
    %897 = vmatpush1.bf16.msra.mxu0 %v884
    %898 = vmatprep.subr.bf16.mxu0 0
    %899 = vmatpush1.bf16.msra.mxu0 %v883
    %900 = vmatprep.subr.bf16.mxu0 0
    %901 = vmatpush1.bf16.msra.mxu0 %v882
    %902 = vmatprep.subr.bf16.mxu0 0
    %903 = vmatpush1.bf16.msra.mxu0 %v881
    %904 = vmatprep.subr.bf16.mxu0 0
    %905 = vmatpush1.bf16.msra.mxu0 %v880
    %906 = vmatprep.subr.bf16.mxu0 0
    %907 = vmatpush1.bf16.msra.mxu0 %v879
    %908 = vmatprep.subr.bf16.mxu0 0
    %909 = vmatpush1.bf16.msra.mxu0 %v878
    %910 = vmatprep.subr.bf16.mxu0 0
    %911 = vmatpush2.bf16.msra.mxu0 0
    %912 = vmatprep.subr.bf16.mxu0 0
    %913 = vmatpush2.bf16.msra.mxu0 0
    %914 = vmatprep.subr.bf16.mxu0 0
    %915 = vmatpush2.bf16.msra.mxu0 0
    %916 = vmatprep.subr.bf16.mxu0 0
    %917 = vmatpush2.bf16.msra.mxu0 0
    %918 = vmatprep.subr.bf16.mxu0 0
    %919 = vmatpush2.bf16.msra.mxu0 0
    %920 = vmatprep.subr.bf16.mxu0 0
    %921 = vmatpush2.bf16.msra.mxu0 0
    %922 = vmatprep.subr.bf16.mxu0 0
    %923 = vmatpush2.bf16.msra.mxu0 0
    %924 = vmatprep.subr.bf16.mxu0 0
    %925 = vmatpush2.bf16.msra.mxu0 0
    %926 = vmatprep.mubr.bf16.mxu0 0
    %927 = vmatmul.mubr.bf16.gmra.mxu0 %v818
    %v928 = vpop.f32.mrf.mxu0
    %v929 = vadd.f32 %v844, %v928
    %v930 = vpop.f32.mrf.mxu0
    %v931 = vpop.f32.mrf.mxu0
    %v932 = vadd.f32 %v844, %v931
    %v933 = vpop.f32.mrf.mxu0
    %934 = vmatprep.mubr.bf16.mxu0 0
    %935 = vmatmul.mubr.bf16.gmra.mxu0 %v819
    %v936 = vpop.f32.mrf.mxu0
    %v937 = vadd.f32 %v844, %v936
    %v938 = vpop.f32.mrf.mxu0
    %v939 = vpop.f32.mrf.mxu0
    %v940 = vadd.f32 %v844, %v939
    %v941 = vpop.f32.mrf.mxu0
    %942 = vmatprep.mubr.bf16.mxu0 0
    %943 = vmatmul.mubr.bf16.gmra.mxu0 %v820
    %v944 = vpop.f32.mrf.mxu0
    %v945 = vadd.f32 %v844, %v944
    %v946 = vpop.f32.mrf.mxu0
    %v947 = vpop.f32.mrf.mxu0
    %v948 = vadd.f32 %v844, %v947
    %v949 = vpop.f32.mrf.mxu0
    %950 = vmatprep.mubr.bf16.mxu0 0
    %951 = vmatmul.mubr.bf16.gmra.mxu0 %v821
    %v952 = vpop.f32.mrf.mxu0
    %v953 = vadd.f32 %v844, %v952
    %v954 = vpop.f32.mrf.mxu0
    %v955 = vpop.f32.mrf.mxu0
    %v956 = vadd.f32 %v844, %v955
    %v957 = vpop.f32.mrf.mxu0
    %958 = vmatprep.mubr.bf16.mxu0 0
    %959 = vmatmul.mubr.bf16.gmra.mxu0 %v822
    %v960 = vpop.f32.mrf.mxu0
    %v961 = vadd.f32 %v844, %v960
    %v962 = vpop.f32.mrf.mxu0
    %v963 = vpop.f32.mrf.mxu0
    %v964 = vpop.f32.mrf.mxu0
    %965 = vdwg.mxu0
    %v966 = vmax.f32 %v929, 0.0
    %v967 = vmax.f32 %v932, 0.0
    %v968 = vmax.f32 %v937, 0.0
    %v969 = vmax.f32 %v940, 0.0
    %v970 = vmax.f32 %v945, 0.0
    %v971 = vmax.f32 %v948, 0.0
    %v972 = vmax.f32 %v953, 0.0
    %v973 = vmax.f32 %v956, 0.0
    %v974 = vmax.f32 %v961, 0.0
    %v975 = vpack.c.bf16 %v967, %v966
    %v976 = vpack.c.bf16 %v969, %v968
    %v977 = vpack.c.bf16 %v971, %v970
    %v978 = vpack.c.bf16 %v973, %v972
    %v979 = vpack.c.bf16 %v974, %v974
    %v980 = vld [vmem:[%s17] sm:$0xf]
    %v981 = vld [vmem:[%s17 + $0x4] sm:$0xf]
    %v982 = vld [vmem:[%s17 + $0x8] sm:$0xf]
    %v983 = vld [vmem:[%s17 + $0xc] sm:$0xf]
    %v984 = vld [vmem:[%s17 + $0x10] sm:$0xf]
    %v985 = vld [vmem:[%s17 + $0x14] sm:$0xf]
    %v986 = vld [vmem:[%s17 + $0x18] sm:$0xf]
    %v987 = vld [vmem:[%s17 + $0x1c] sm:$0xf]
    %v988 = vld [vmem:[%s17 + $0x20] sm:$0xf]
    %v989 = vld [vmem:[%s17 + $0x24] sm:$0xf]
    %v990 = vld [vmem:[%s17 + $0x28] sm:$0xf]
    %v991 = vld [vmem:[%s17 + $0x2c] sm:$0xf]
    %v992 = vld [vmem:[%s17 + $0x30] sm:$0xf]
    %v993 = vld [vmem:[%s17 + $0x34] sm:$0xf]
    %v994 = vld [vmem:[%s17 + $0x38] sm:$0xf]
    %v995 = vld [vmem:[%s17 + $0x3c] sm:$0xf]
    %v996 = vld [vmem:[%s19] sm:$0x1]
    %v998 = vlaneseq
    %v999 = vshrl.u32 %v998, 7
    %v1000 = vsub.s32 0, %v999
    %v1001 = vrot.slane %v996, %v1000
    %v1019 = vunpack.c.l.b16 %v980
    %v1020 = vunpack.c.l.b16 %v981
    %v1021 = vunpack.c.l.b16 %v982
    %v1022 = vunpack.c.l.b16 %v983
    %v1023 = vunpack.c.l.b16 %v984
    %v1024 = vunpack.c.l.b16 %v985
    %v1025 = vunpack.c.l.b16 %v986
    %v1026 = vunpack.c.l.b16 %v987
    %v1027 = vunpack.c.l.b16 %v988
    %v1028 = vunpack.c.l.b16 %v989
    %v1029 = vunpack.c.l.b16 %v990
    %v1030 = vunpack.c.l.b16 %v991
    %v1031 = vunpack.c.l.b16 %v992
    %v1032 = vunpack.c.l.b16 %v993
    %v1033 = vunpack.c.l.b16 %v994
    %v1034 = vunpack.c.l.b16 %v995
    %v1035 = vpack.c.b16 %v1020, %v1019
    %v1036 = vpack.c.b16 %v1022, %v1021
    %v1037 = vpack.c.b16 %v1024, %v1023
    %v1038 = vpack.c.b16 %v1026, %v1025
    %v1039 = vpack.c.b16 %v1028, %v1027
    %v1040 = vpack.c.b16 %v1030, %v1029
    %v1041 = vpack.c.b16 %v1032, %v1031
    %v1042 = vpack.c.b16 %v1034, %v1033
    %1051 = vmatprep.subr.bf16.mxu0 0
    %1052 = vmatpush1.bf16.msra.mxu0 %v1042
    %1053 = vmatprep.subr.bf16.mxu0 0
    %1054 = vmatpush1.bf16.msra.mxu0 %v1041
    %1055 = vmatprep.subr.bf16.mxu0 0
    %1056 = vmatpush1.bf16.msra.mxu0 %v1040
    %1057 = vmatprep.subr.bf16.mxu0 0
    %1058 = vmatpush1.bf16.msra.mxu0 %v1039
    %1059 = vmatprep.subr.bf16.mxu0 0
    %1060 = vmatpush1.bf16.msra.mxu0 %v1038
    %1061 = vmatprep.subr.bf16.mxu0 0
    %1062 = vmatpush1.bf16.msra.mxu0 %v1037
    %1063 = vmatprep.subr.bf16.mxu0 0
    %1064 = vmatpush1.bf16.msra.mxu0 %v1036
    %1065 = vmatprep.subr.bf16.mxu0 0
    %1066 = vmatpush1.bf16.msra.mxu0 %v1035
    %1067 = vmatprep.subr.bf16.mxu0 0
    %1068 = vmatpush2.bf16.msra.mxu0 0
    %1069 = vmatprep.subr.bf16.mxu0 0
    %1070 = vmatpush2.bf16.msra.mxu0 0
    %1071 = vmatprep.subr.bf16.mxu0 0
    %1072 = vmatpush2.bf16.msra.mxu0 0
    %1073 = vmatprep.subr.bf16.mxu0 0
    %1074 = vmatpush2.bf16.msra.mxu0 0
    %1075 = vmatprep.subr.bf16.mxu0 0
    %1076 = vmatpush2.bf16.msra.mxu0 0
    %1077 = vmatprep.subr.bf16.mxu0 0
    %1078 = vmatpush2.bf16.msra.mxu0 0
    %1079 = vmatprep.subr.bf16.mxu0 0
    %1080 = vmatpush2.bf16.msra.mxu0 0
    %1081 = vmatprep.subr.bf16.mxu0 0
    %1082 = vmatpush2.bf16.msra.mxu0 0
    %1083 = vmatprep.mubr.bf16.mxu0 0
    %1084 = vmatmul.mubr.bf16.gmra.mxu0 %v975
    %v1085 = vpop.f32.mrf.mxu0
    %v1086 = vadd.f32 %v1001, %v1085
    %v1087 = vpop.f32.mrf.mxu0
    %v1088 = vpop.f32.mrf.mxu0
    %v1089 = vadd.f32 %v1001, %v1088
    %v1090 = vpop.f32.mrf.mxu0
    %1091 = vmatprep.mubr.bf16.mxu0 0
    %1092 = vmatmul.mubr.bf16.gmra.mxu0 %v976
    %v1093 = vpop.f32.mrf.mxu0
    %v1094 = vadd.f32 %v1001, %v1093
    %v1095 = vpop.f32.mrf.mxu0
    %v1096 = vpop.f32.mrf.mxu0
    %v1097 = vadd.f32 %v1001, %v1096
    %v1098 = vpop.f32.mrf.mxu0
    %1099 = vmatprep.mubr.bf16.mxu0 0
    %1100 = vmatmul.mubr.bf16.gmra.mxu0 %v977
    %v1101 = vpop.f32.mrf.mxu0
    %v1102 = vadd.f32 %v1001, %v1101
    %v1103 = vpop.f32.mrf.mxu0
    %v1104 = vpop.f32.mrf.mxu0
    %v1105 = vadd.f32 %v1001, %v1104
    %v1106 = vpop.f32.mrf.mxu0
    %1107 = vmatprep.mubr.bf16.mxu0 0
    %1108 = vmatmul.mubr.bf16.gmra.mxu0 %v978
    %v1109 = vpop.f32.mrf.mxu0
    %v1110 = vadd.f32 %v1001, %v1109
    %v1111 = vpop.f32.mrf.mxu0
    %v1112 = vpop.f32.mrf.mxu0
    %v1113 = vadd.f32 %v1001, %v1112
    %v1114 = vpop.f32.mrf.mxu0
    %1115 = vmatprep.mubr.bf16.mxu0 0
    %1116 = vmatmul.mubr.bf16.gmra.mxu0 %v979
    %v1117 = vpop.f32.mrf.mxu0
    %v1118 = vadd.f32 %v1001, %v1117
    %v1119 = vpop.f32.mrf.mxu0
    %v1120 = vpop.f32.mrf.mxu0
    %v1121 = vpop.f32.mrf.mxu0
    %1122 = vdwg.mxu0
    %v1123 = vmax.f32 %v1086, 0.0
    %v1124 = vmax.f32 %v1089, 0.0
    %v1125 = vmax.f32 %v1094, 0.0
    %v1126 = vmax.f32 %v1097, 0.0
    %v1127 = vmax.f32 %v1102, 0.0
    %v1128 = vmax.f32 %v1105, 0.0
    %v1129 = vmax.f32 %v1110, 0.0
    %v1130 = vmax.f32 %v1113, 0.0
    %v1131 = vmax.f32 %v1118, 0.0
    %v1132 = vadd.f32 %v809, %v1123
    %v1133 = vadd.f32 %v810, %v1124
    %v1134 = vadd.f32 %v811, %v1125
    %v1135 = vadd.f32 %v812, %v1126
    %v1136 = vadd.f32 %v813, %v1127
    %v1137 = vadd.f32 %v814, %v1128
    %v1138 = vadd.f32 %v815, %v1129
    %v1139 = vadd.f32 %v816, %v1130
    %v1140 = vadd.f32 %v817, %v1131
    %v1141 = vpack.c.bf16 %v1133, %v1132
    %v1142 = vpack.c.bf16 %v1135, %v1134
    %v1143 = vpack.c.bf16 %v1137, %v1136
    %v1144 = vpack.c.bf16 %v1139, %v1138
    %v1145 = vpack.c.bf16 %v1140, %v1140
    %v1146 = vld [vmem:[%s21] sm:$0xf]
    %v1147 = vld [vmem:[%s21 + $0x4] sm:$0xf]
    %v1148 = vld [vmem:[%s21 + $0x8] sm:$0xf]
    %v1149 = vld [vmem:[%s21 + $0xc] sm:$0xf]
    %v1150 = vld [vmem:[%s21 + $0x10] sm:$0xf]
    %v1151 = vld [vmem:[%s21 + $0x14] sm:$0xf]
    %v1152 = vld [vmem:[%s21 + $0x18] sm:$0xf]
    %v1153 = vld [vmem:[%s21 + $0x1c] sm:$0xf]
    %v1154 = vld [vmem:[%s21 + $0x20] sm:$0xf]
    %v1155 = vld [vmem:[%s21 + $0x24] sm:$0xf]
    %v1156 = vld [vmem:[%s21 + $0x28] sm:$0xf]
    %v1157 = vld [vmem:[%s21 + $0x2c] sm:$0xf]
    %v1158 = vld [vmem:[%s21 + $0x30] sm:$0xf]
    %v1159 = vld [vmem:[%s21 + $0x34] sm:$0xf]
    %v1160 = vld [vmem:[%s21 + $0x38] sm:$0xf]
    %v1161 = vld [vmem:[%s21 + $0x3c] sm:$0xf]
    %v1162 = vld [vmem:[%s23] sm:$0x1]
    %v1164 = vlaneseq
    %v1165 = vshrl.u32 %v1164, 7
    %v1166 = vsub.s32 0, %v1165
    %v1167 = vrot.slane %v1162, %v1166
    %v1185 = vunpack.c.l.b16 %v1146
    %v1186 = vunpack.c.l.b16 %v1147
    %v1187 = vunpack.c.l.b16 %v1148
    %v1188 = vunpack.c.l.b16 %v1149
    %v1189 = vunpack.c.l.b16 %v1150
    %v1190 = vunpack.c.l.b16 %v1151
    %v1191 = vunpack.c.l.b16 %v1152
    %v1192 = vunpack.c.l.b16 %v1153
    %v1193 = vunpack.c.l.b16 %v1154
    %v1194 = vunpack.c.l.b16 %v1155
    %v1195 = vunpack.c.l.b16 %v1156
    %v1196 = vunpack.c.l.b16 %v1157
    %v1197 = vunpack.c.l.b16 %v1158
    %v1198 = vunpack.c.l.b16 %v1159
    %v1199 = vunpack.c.l.b16 %v1160
    %v1200 = vunpack.c.l.b16 %v1161
    %v1201 = vpack.c.b16 %v1186, %v1185
    %v1202 = vpack.c.b16 %v1188, %v1187
    %v1203 = vpack.c.b16 %v1190, %v1189
    %v1204 = vpack.c.b16 %v1192, %v1191
    %v1205 = vpack.c.b16 %v1194, %v1193
    %v1206 = vpack.c.b16 %v1196, %v1195
    %v1207 = vpack.c.b16 %v1198, %v1197
    %v1208 = vpack.c.b16 %v1200, %v1199
    %1217 = vmatprep.subr.bf16.mxu0 0
    %1218 = vmatpush1.bf16.msra.mxu0 %v1208
    %1219 = vmatprep.subr.bf16.mxu0 0
    %1220 = vmatpush1.bf16.msra.mxu0 %v1207
    %1221 = vmatprep.subr.bf16.mxu0 0
    %1222 = vmatpush1.bf16.msra.mxu0 %v1206
    %1223 = vmatprep.subr.bf16.mxu0 0
    %1224 = vmatpush1.bf16.msra.mxu0 %v1205
    %1225 = vmatprep.subr.bf16.mxu0 0
    %1226 = vmatpush1.bf16.msra.mxu0 %v1204
    %1227 = vmatprep.subr.bf16.mxu0 0
    %1228 = vmatpush1.bf16.msra.mxu0 %v1203
    %1229 = vmatprep.subr.bf16.mxu0 0
    %1230 = vmatpush1.bf16.msra.mxu0 %v1202
    %1231 = vmatprep.subr.bf16.mxu0 0
    %1232 = vmatpush1.bf16.msra.mxu0 %v1201
    %1233 = vmatprep.subr.bf16.mxu0 0
    %1234 = vmatpush2.bf16.msra.mxu0 0
    %1235 = vmatprep.subr.bf16.mxu0 0
    %1236 = vmatpush2.bf16.msra.mxu0 0
    %1237 = vmatprep.subr.bf16.mxu0 0
    %1238 = vmatpush2.bf16.msra.mxu0 0
    %1239 = vmatprep.subr.bf16.mxu0 0
    %1240 = vmatpush2.bf16.msra.mxu0 0
    %1241 = vmatprep.subr.bf16.mxu0 0
    %1242 = vmatpush2.bf16.msra.mxu0 0
    %1243 = vmatprep.subr.bf16.mxu0 0
    %1244 = vmatpush2.bf16.msra.mxu0 0
    %1245 = vmatprep.subr.bf16.mxu0 0
    %1246 = vmatpush2.bf16.msra.mxu0 0
    %1247 = vmatprep.subr.bf16.mxu0 0
    %1248 = vmatpush2.bf16.msra.mxu0 0
    %1249 = vmatprep.mubr.bf16.mxu0 0
    %1250 = vmatmul.mubr.bf16.gmra.mxu0 %v1141
    %v1251 = vpop.f32.mrf.mxu0
    %v1252 = vadd.f32 %v1167, %v1251
    %v1253 = vpop.f32.mrf.mxu0
    %v1254 = vpop.f32.mrf.mxu0
    %v1255 = vadd.f32 %v1167, %v1254
    %v1256 = vpop.f32.mrf.mxu0
    %1257 = vmatprep.mubr.bf16.mxu0 0
    %1258 = vmatmul.mubr.bf16.gmra.mxu0 %v1142
    %v1259 = vpop.f32.mrf.mxu0
    %v1260 = vadd.f32 %v1167, %v1259
    %v1261 = vpop.f32.mrf.mxu0
    %v1262 = vpop.f32.mrf.mxu0
    %v1263 = vadd.f32 %v1167, %v1262
    %v1264 = vpop.f32.mrf.mxu0
    %1265 = vmatprep.mubr.bf16.mxu0 0
    %1266 = vmatmul.mubr.bf16.gmra.mxu0 %v1143
    %v1267 = vpop.f32.mrf.mxu0
    %v1268 = vadd.f32 %v1167, %v1267
    %v1269 = vpop.f32.mrf.mxu0
    %v1270 = vpop.f32.mrf.mxu0
    %v1271 = vadd.f32 %v1167, %v1270
    %v1272 = vpop.f32.mrf.mxu0
    %1273 = vmatprep.mubr.bf16.mxu0 0
    %1274 = vmatmul.mubr.bf16.gmra.mxu0 %v1144
    %v1275 = vpop.f32.mrf.mxu0
    %v1276 = vadd.f32 %v1167, %v1275
    %v1277 = vpop.f32.mrf.mxu0
    %v1278 = vpop.f32.mrf.mxu0
    %v1279 = vadd.f32 %v1167, %v1278
    %v1280 = vpop.f32.mrf.mxu0
    %1281 = vmatprep.mubr.bf16.mxu0 0
    %1282 = vmatmul.mubr.bf16.gmra.mxu0 %v1145
    %v1283 = vpop.f32.mrf.mxu0
    %v1284 = vadd.f32 %v1167, %v1283
    %v1285 = vpop.f32.mrf.mxu0
    %v1286 = vpop.f32.mrf.mxu0
    %v1287 = vpop.f32.mrf.mxu0
    %1288 = vdwg.mxu0
    %v1289 = vmax.f32 %v1252, 0.0
    %v1290 = vmax.f32 %v1255, 0.0
    %v1291 = vmax.f32 %v1260, 0.0
    %v1292 = vmax.f32 %v1263, 0.0
    %v1293 = vmax.f32 %v1268, 0.0
    %v1294 = vmax.f32 %v1271, 0.0
    %v1295 = vmax.f32 %v1276, 0.0
    %v1296 = vmax.f32 %v1279, 0.0
    %v1297 = vmax.f32 %v1284, 0.0
    %v1298 = vpack.c.bf16 %v1290, %v1289
    %v1299 = vpack.c.bf16 %v1292, %v1291
    %v1300 = vpack.c.bf16 %v1294, %v1293
    %v1301 = vpack.c.bf16 %v1296, %v1295
    %v1302 = vpack.c.bf16 %v1297, %v1297
    %v1303 = vld [vmem:[%s25] sm:$0xff]
    %v1304 = vld [vmem:[%s25 + $0x8] sm:$0xff]
    %v1305 = vld [vmem:[%s25 + $0x10] sm:$0xff]
    %v1306 = vld [vmem:[%s25 + $0x18] sm:$0xff]
    %v1307 = vld [vmem:[%s25 + $0x20] sm:$0xff]
    %v1308 = vld [vmem:[%s25 + $0x28] sm:$0xff]
    %v1309 = vld [vmem:[%s25 + $0x30] sm:$0xff]
    %v1310 = vld [vmem:[%s25 + $0x38] sm:$0xff]
    %v1311 = vld [vmem:[%s25 + $0x40] sm:$0xff]
    %v1312 = vld [vmem:[%s25 + $0x48] sm:$0xff]
    %v1313 = vld [vmem:[%s25 + $0x50] sm:$0xff]
    %v1314 = vld [vmem:[%s25 + $0x58] sm:$0xff]
    %v1315 = vld [vmem:[%s25 + $0x60] sm:$0xff]
    %v1316 = vld [vmem:[%s25 + $0x68] sm:$0xff]
    %v1317 = vld [vmem:[%s25 + $0x70] sm:$0xff]
    %v1318 = vld [vmem:[%s25 + $0x78] sm:$0xff]
    %v1319 = vld [vmem:[%s27] sm:$0x3]
    %v1321 = vlaneseq
    %v1322 = vshrl.u32 %v1321, 7
    %v1323 = vsub.s32 0, %v1322
    %v1324 = vrot.slane %v1319, %v1323
    %v1325 = vlaneseq
    %v1326 = vshrl.u32 %v1325, 7
    %v1327 = vsub.s32 1, %v1326
    %v1328 = vrot.slane %v1319, %v1327
    %v1347 = vunpack.c.l.b16 %v1303
    %v1348 = vunpack.c.h.b16 %v1303
    %v1349 = vunpack.c.l.b16 %v1304
    %v1350 = vunpack.c.h.b16 %v1304
    %v1351 = vunpack.c.l.b16 %v1305
    %v1352 = vunpack.c.h.b16 %v1305
    %v1353 = vunpack.c.l.b16 %v1306
    %v1354 = vunpack.c.h.b16 %v1306
    %v1355 = vunpack.c.l.b16 %v1307
    %v1356 = vunpack.c.h.b16 %v1307
    %v1357 = vunpack.c.l.b16 %v1308
    %v1358 = vunpack.c.h.b16 %v1308
    %v1359 = vunpack.c.l.b16 %v1309
    %v1360 = vunpack.c.h.b16 %v1309
    %v1361 = vunpack.c.l.b16 %v1310
    %v1362 = vunpack.c.h.b16 %v1310
    %v1363 = vunpack.c.l.b16 %v1311
    %v1364 = vunpack.c.h.b16 %v1311
    %v1365 = vunpack.c.l.b16 %v1312
    %v1366 = vunpack.c.h.b16 %v1312
    %v1367 = vunpack.c.l.b16 %v1313
    %v1368 = vunpack.c.h.b16 %v1313
    %v1369 = vunpack.c.l.b16 %v1314
    %v1370 = vunpack.c.h.b16 %v1314
    %v1371 = vunpack.c.l.b16 %v1315
    %v1372 = vunpack.c.h.b16 %v1315
    %v1373 = vunpack.c.l.b16 %v1316
    %v1374 = vunpack.c.h.b16 %v1316
    %v1375 = vunpack.c.l.b16 %v1317
    %v1376 = vunpack.c.h.b16 %v1317
    %v1377 = vunpack.c.l.b16 %v1318
    %v1378 = vunpack.c.h.b16 %v1318
    %v1379 = vpack.c.b16 %v1349, %v1347
    %v1380 = vpack.c.b16 %v1350, %v1348
    %v1381 = vpack.c.b16 %v1353, %v1351
    %v1382 = vpack.c.b16 %v1354, %v1352
    %v1383 = vpack.c.b16 %v1357, %v1355
    %v1384 = vpack.c.b16 %v1358, %v1356
    %v1385 = vpack.c.b16 %v1361, %v1359
    %v1386 = vpack.c.b16 %v1362, %v1360
    %v1387 = vpack.c.b16 %v1365, %v1363
    %v1388 = vpack.c.b16 %v1366, %v1364
    %v1389 = vpack.c.b16 %v1369, %v1367
    %v1390 = vpack.c.b16 %v1370, %v1368
    %v1391 = vpack.c.b16 %v1373, %v1371
    %v1392 = vpack.c.b16 %v1374, %v1372
    %v1393 = vpack.c.b16 %v1377, %v1375
    %v1394 = vpack.c.b16 %v1378, %v1376
    %1411 = vmatprep.subr.bf16.mxu0 %v1394
    %1412 = vmatpush1.bf16.msra.mxu0 %v1393
    %1413 = vmatprep.subr.bf16.mxu0 %v1392
    %1414 = vmatpush1.bf16.msra.mxu0 %v1391
    %1415 = vmatprep.subr.bf16.mxu0 %v1390
    %1416 = vmatpush1.bf16.msra.mxu0 %v1389
    %1417 = vmatprep.subr.bf16.mxu0 %v1388
    %1418 = vmatpush1.bf16.msra.mxu0 %v1387
    %1419 = vmatprep.subr.bf16.mxu0 %v1386
    %1420 = vmatpush1.bf16.msra.mxu0 %v1385
    %1421 = vmatprep.subr.bf16.mxu0 %v1384
    %1422 = vmatpush1.bf16.msra.mxu0 %v1383
    %1423 = vmatprep.subr.bf16.mxu0 %v1382
    %1424 = vmatpush1.bf16.msra.mxu0 %v1381
    %1425 = vmatprep.subr.bf16.mxu0 %v1380
    %1426 = vmatpush1.bf16.msra.mxu0 %v1379
    %1427 = vmatprep.subr.bf16.mxu0 0
    %1428 = vmatpush2.bf16.msra.mxu0 0
    %1429 = vmatprep.subr.bf16.mxu0 0
    %1430 = vmatpush2.bf16.msra.mxu0 0
    %1431 = vmatprep.subr.bf16.mxu0 0
    %1432 = vmatpush2.bf16.msra.mxu0 0
    %1433 = vmatprep.subr.bf16.mxu0 0
    %1434 = vmatpush2.bf16.msra.mxu0 0
    %1435 = vmatprep.subr.bf16.mxu0 0
    %1436 = vmatpush2.bf16.msra.mxu0 0
    %1437 = vmatprep.subr.bf16.mxu0 0
    %1438 = vmatpush2.bf16.msra.mxu0 0
    %1439 = vmatprep.subr.bf16.mxu0 0
    %1440 = vmatpush2.bf16.msra.mxu0 0
    %1441 = vmatprep.subr.bf16.mxu0 0
    %1442 = vmatpush2.bf16.msra.mxu0 0
    %1443 = vmatprep.mubr.bf16.mxu0 0
    %1444 = vmatmul.mubr.bf16.gmra.mxu0 %v1298
    %v1445 = vpop.f32.mrf.mxu0
    %v1446 = vadd.f32 %v1324, %v1445
    %v1447 = vpop.f32.mrf.mxu0
    %v1448 = vadd.f32 %v1328, %v1447
    %v1449 = vpop.f32.mrf.mxu0
    %v1450 = vadd.f32 %v1324, %v1449
    %v1451 = vpop.f32.mrf.mxu0
    %v1452 = vadd.f32 %v1328, %v1451
    %1453 = vmatprep.mubr.bf16.mxu0 0
    %1454 = vmatmul.mubr.bf16.gmra.mxu0 %v1299
    %v1455 = vpop.f32.mrf.mxu0
    %v1456 = vadd.f32 %v1324, %v1455
    %v1457 = vpop.f32.mrf.mxu0
    %v1458 = vadd.f32 %v1328, %v1457
    %v1459 = vpop.f32.mrf.mxu0
    %v1460 = vadd.f32 %v1324, %v1459
    %v1461 = vpop.f32.mrf.mxu0
    %v1462 = vadd.f32 %v1328, %v1461
    %1463 = vmatprep.mubr.bf16.mxu0 0
    %1464 = vmatmul.mubr.bf16.gmra.mxu0 %v1300
    %v1465 = vpop.f32.mrf.mxu0
    %v1466 = vadd.f32 %v1324, %v1465
    %v1467 = vpop.f32.mrf.mxu0
    %v1468 = vadd.f32 %v1328, %v1467
    %v1469 = vpop.f32.mrf.mxu0
    %v1470 = vadd.f32 %v1324, %v1469
    %v1471 = vpop.f32.mrf.mxu0
    %v1472 = vadd.f32 %v1328, %v1471
    %1473 = vmatprep.mubr.bf16.mxu0 0
    %1474 = vmatmul.mubr.bf16.gmra.mxu0 %v1301
    %v1475 = vpop.f32.mrf.mxu0
    %v1476 = vadd.f32 %v1324, %v1475
    %v1477 = vpop.f32.mrf.mxu0
    %v1478 = vadd.f32 %v1328, %v1477
    %v1479 = vpop.f32.mrf.mxu0
    %v1480 = vadd.f32 %v1324, %v1479
    %v1481 = vpop.f32.mrf.mxu0
    %v1482 = vadd.f32 %v1328, %v1481
    %1483 = vmatprep.mubr.bf16.mxu0 0
    %1484 = vmatmul.mubr.bf16.gmra.mxu0 %v1302
    %v1485 = vpop.f32.mrf.mxu0
    %v1486 = vadd.f32 %v1324, %v1485
    %v1487 = vpop.f32.mrf.mxu0
    %v1488 = vadd.f32 %v1328, %v1487
    %v1489 = vpop.f32.mrf.mxu0
    %v1490 = vpop.f32.mrf.mxu0
    %1491 = vdwg.mxu0
    %v1492 = vmax.f32 %v1446, 0.0
    %v1493 = vmax.f32 %v1448, 0.0
    %v1494 = vmax.f32 %v1450, 0.0
    %v1495 = vmax.f32 %v1452, 0.0
    %v1496 = vmax.f32 %v1456, 0.0
    %v1497 = vmax.f32 %v1458, 0.0
    %v1498 = vmax.f32 %v1460, 0.0
    %v1499 = vmax.f32 %v1462, 0.0
    %v1500 = vmax.f32 %v1466, 0.0
    %v1501 = vmax.f32 %v1468, 0.0
    %v1502 = vmax.f32 %v1470, 0.0
    %v1503 = vmax.f32 %v1472, 0.0
    %v1504 = vmax.f32 %v1476, 0.0
    %v1505 = vmax.f32 %v1478, 0.0
    %v1506 = vmax.f32 %v1480, 0.0
    %v1507 = vmax.f32 %v1482, 0.0
    %v1508 = vmax.f32 %v1486, 0.0
    %v1509 = vmax.f32 %v1488, 0.0
    %vm1514 = vcmask 1043456
    %v1515 = vrot.slane %v1494, 4
    %v1516 = vrot.slane %v1496, 4
    %v1517 = vsel %vm1514, %v1515, %v1516
    %v1518 = vrot.slane %v1495, 4
    %v1519 = vrot.slane %v1497, 4
    %v1520 = vsel %vm1514, %v1518, %v1519
    %v1525 = vmax.f32 %v1492, %v1517
    %v1526 = vmax.f32 %v1493, %v1520
    %v1527 = vmax.f32 %v1494, %v1516
    %v1528 = vmax.f32 %v1495, %v1519
    %v1529 = vmax.f32 %v1525, %v1498
    %v1530 = vmax.f32 %v1526, %v1499
    %v1531 = vmax.f32 %v1527, %v1500
    %v1532 = vmax.f32 %v1528, %v1501
    %v1535 = vrot.slane %v1529, 2
    %v1536 = vrot.slane %v1530, 2
    %v1539 = vmax.f32 %v1529, %v1535
    %v1540 = vmax.f32 %v1530, %v1536
    %v1541 = vrot.slane %v1529, 4
    %v1542 = vrot.slane %v1530, 4
    %v1545 = vmax.f32 %v1539, %v1541
    %v1546 = vmax.f32 %v1540, %v1542
    %1547 = vst [vmem:[#allocation3] sm:$0x3] %v1545
    %1548 = vst [vmem:[#allocation3 + $0x8] sm:$0x3] %v1546
    %v1551 = vrot.slane %v1531, 4
    %v1552 = vrot.slane %v1532, 4
    %v1555 = vmax.f32 %v1539, %v1551
    %v1556 = vmax.f32 %v1540, %v1552
    %v1559 = vrot.slane %v1555, 2
    %v1560 = vrot.slane %v1556, 2
    %1563 = vst [vmem:[#allocation3] sm:$0xc] %v1559
    %1564 = vst [vmem:[#allocation3 + $0x8] sm:$0xc] %v1560
    %v1565 = vrot.slane %v1531, 2
    %v1566 = vrot.slane %v1532, 2
    %v1569 = vmax.f32 %v1531, %v1565
    %v1570 = vmax.f32 %v1532, %v1566
    %v1573 = vrot.slane %v1569, 4
    %v1574 = vrot.slane %v1570, 4
    %1577 = vst [vmem:[#allocation3] sm:$0x30] %v1573
    %1578 = vst [vmem:[#allocation3 + $0x8] sm:$0x30] %v1574
    %v1583 = vrot.slane %v1500, 4
    %v1584 = vrot.slane %v1502, 4
    %v1585 = vsel %vm1514, %v1583, %v1584
    %v1586 = vrot.slane %v1501, 4
    %v1587 = vrot.slane %v1503, 4
    %v1588 = vsel %vm1514, %v1586, %v1587
    %v1593 = vmax.f32 %v1498, %v1585
    %v1594 = vmax.f32 %v1499, %v1588
    %v1595 = vmax.f32 %v1500, %v1584
    %v1596 = vmax.f32 %v1501, %v1587
    %v1597 = vmax.f32 %v1593, %v1504
    %v1598 = vmax.f32 %v1594, %v1505
    %v1599 = vmax.f32 %v1595, %v1506
    %v1600 = vmax.f32 %v1596, %v1507
    %v1603 = vrot.slane %v1597, 2
    %v1604 = vrot.slane %v1598, 2
    %v1607 = vmax.f32 %v1597, %v1603
    %v1608 = vmax.f32 %v1598, %v1604
    %v1609 = vrot.slane %v1597, 4
    %v1610 = vrot.slane %v1598, 4
    %v1613 = vmax.f32 %v1607, %v1609
    %v1614 = vmax.f32 %v1608, %v1610
    %v1617 = vrot.slane %v1613, 2
    %v1618 = vrot.slane %v1614, 2
    %1621 = vst [vmem:[#allocation3] sm:$0xc0] %v1617
    %1622 = vst [vmem:[#allocation3 + $0x8] sm:$0xc0] %v1618
    %v1625 = vrot.slane %v1599, 4
    %v1626 = vrot.slane %v1600, 4
    %v1629 = vmax.f32 %v1607, %v1625
    %v1630 = vmax.f32 %v1608, %v1626
    %v1633 = vrot.slane %v1629, 4
    %v1634 = vrot.slane %v1630, 4
    %1637 = vst [vmem:[#allocation3 + $0x10] sm:$0x3] %v1633
    %1638 = vst [vmem:[#allocation3 + $0x18] sm:$0x3] %v1634
    %v1639 = vrot.slane %v1599, 2
    %v1640 = vrot.slane %v1600, 2
    %v1643 = vmax.f32 %v1599, %v1639
    %v1644 = vmax.f32 %v1600, %v1640
    %v1647 = vrot.slane %v1643, 6
    %v1648 = vrot.slane %v1644, 6
    %1651 = vst [vmem:[#allocation3 + $0x10] sm:$0xc] %v1647
    %1652 = vst [vmem:[#allocation3 + $0x18] sm:$0xc] %v1648
    %v1657 = vrot.slane %v1506, 4
    %v1658 = vrot.slane %v1508, 4
    %v1659 = vsel %vm1514, %v1657, %v1658
    %v1660 = vrot.slane %v1507, 4
    %v1661 = vrot.slane %v1509, 4
    %v1662 = vsel %vm1514, %v1660, %v1661
    %v1667 = vmax.f32 %v1504, %v1659
    %v1668 = vmax.f32 %v1505, %v1662
    %v1669 = vmax.f32 %v1506, %v1658
    %v1670 = vmax.f32 %v1507, %v1661
    %v1673 = vrot.slane %v1667, 2
    %v1674 = vrot.slane %v1668, 2
    %v1677 = vmax.f32 %v1667, %v1673
    %v1678 = vmax.f32 %v1668, %v1674
    %v1679 = vrot.slane %v1667, 4
    %v1680 = vrot.slane %v1668, 4
    %v1683 = vmax.f32 %v1677, %v1679
    %v1684 = vmax.f32 %v1678, %v1680
    %v1687 = vrot.slane %v1683, 4
    %v1688 = vrot.slane %v1684, 4
    %1691 = vst [vmem:[#allocation3 + $0x10] sm:$0x30] %v1687
    %1692 = vst [vmem:[#allocation3 + $0x18] sm:$0x30] %v1688
    %v1695 = vrot.slane %v1669, 4
    %v1696 = vrot.slane %v1670, 4
    %v1699 = vmax.f32 %v1677, %v1695
    %v1700 = vmax.f32 %v1678, %v1696
    %v1703 = vrot.slane %v1699, 6
    %v1704 = vrot.slane %v1700, 6
    %1707 = vst [vmem:[#allocation3 + $0x10] sm:$0xc0] %v1703
    %1708 = vst [vmem:[#allocation3 + $0x18] sm:$0xc0] %v1704
    %v1709 = vrot.slane %v1669, 2
    %v1710 = vrot.slane %v1670, 2
    %v1713 = vmax.f32 %v1669, %v1709
    %v1714 = vmax.f32 %v1670, %v1710
    %1715 = vst [vmem:[#allocation3 + $0x20] sm:$0x3] %v1713
    %1716 = vst [vmem:[#allocation3 + $0x28] sm:$0x3] %v1714
    %v1717 = vld [vmem:[#allocation3] sm:$0xff]
    %v1718 = vld [vmem:[#allocation3 + $0x8] sm:$0xff]
    %v1719 = vld [vmem:[#allocation3 + $0x10] sm:$0xff]
    %v1720 = vld [vmem:[#allocation3 + $0x18] sm:$0xff]
    %v1721 = vld [vmem:[#allocation3 + $0x20] sm:$0x3]
    %v1722 = vld [vmem:[#allocation3 + $0x28] sm:$0x3]
    %v1723 = vpack.c.bf16 %v1719, %v1717
    %v1724 = vpack.c.bf16 %v1720, %v1718
    %v1725 = vpack.c.bf16 %v1721, %v1721
    %v1726 = vpack.c.bf16 %v1722, %v1722
    %v1727 = vld [vmem:[%s29] sm:$0xf]
    %v1728 = vld [vmem:[%s29 + $0x4] sm:$0xf]
    %v1729 = vld [vmem:[%s29 + $0x8] sm:$0xf]
    %v1730 = vld [vmem:[%s29 + $0xc] sm:$0xf]
    %v1731 = vld [vmem:[%s29 + $0x10] sm:$0xf]
    %v1732 = vld [vmem:[%s29 + $0x14] sm:$0xf]
    %v1733 = vld [vmem:[%s29 + $0x18] sm:$0xf]
    %v1734 = vld [vmem:[%s29 + $0x1c] sm:$0xf]
    %v1735 = vld [vmem:[%s29 + $0x20] sm:$0xf]
    %v1736 = vld [vmem:[%s29 + $0x24] sm:$0xf]
    %v1737 = vld [vmem:[%s29 + $0x28] sm:$0xf]
    %v1738 = vld [vmem:[%s29 + $0x2c] sm:$0xf]
    %v1739 = vld [vmem:[%s29 + $0x30] sm:$0xf]
    %v1740 = vld [vmem:[%s29 + $0x34] sm:$0xf]
    %v1741 = vld [vmem:[%s29 + $0x38] sm:$0xf]
    %v1742 = vld [vmem:[%s29 + $0x3c] sm:$0xf]
    %v1743 = vld [vmem:[%s29 + $0x40] sm:$0xf]
    %v1744 = vld [vmem:[%s29 + $0x44] sm:$0xf]
    %v1745 = vld [vmem:[%s29 + $0x48] sm:$0xf]
    %v1746 = vld [vmem:[%s29 + $0x4c] sm:$0xf]
    %v1747 = vld [vmem:[%s29 + $0x50] sm:$0xf]
    %v1748 = vld [vmem:[%s29 + $0x54] sm:$0xf]
    %v1749 = vld [vmem:[%s29 + $0x58] sm:$0xf]
    %v1750 = vld [vmem:[%s29 + $0x5c] sm:$0xf]
    %v1751 = vld [vmem:[%s29 + $0x60] sm:$0xf]
    %v1752 = vld [vmem:[%s29 + $0x64] sm:$0xf]
    %v1753 = vld [vmem:[%s29 + $0x68] sm:$0xf]
    %v1754 = vld [vmem:[%s29 + $0x6c] sm:$0xf]
    %v1755 = vld [vmem:[%s29 + $0x70] sm:$0xf]
    %v1756 = vld [vmem:[%s29 + $0x74] sm:$0xf]
    %v1757 = vld [vmem:[%s29 + $0x78] sm:$0xf]
    %v1758 = vld [vmem:[%s29 + $0x7c] sm:$0xf]
    %v1759 = vld [vmem:[%s31] sm:$0x1]
    %v1761 = vlaneseq
    %v1762 = vshrl.u32 %v1761, 7
    %v1763 = vsub.s32 0, %v1762
    %v1764 = vrot.slane %v1759, %v1763
    %v1798 = vunpack.c.l.b16 %v1727
    %v1799 = vunpack.c.l.b16 %v1728
    %v1800 = vunpack.c.l.b16 %v1729
    %v1801 = vunpack.c.l.b16 %v1730
    %v1802 = vunpack.c.l.b16 %v1731
    %v1803 = vunpack.c.l.b16 %v1732
    %v1804 = vunpack.c.l.b16 %v1733
    %v1805 = vunpack.c.l.b16 %v1734
    %v1806 = vunpack.c.l.b16 %v1735
    %v1807 = vunpack.c.l.b16 %v1736
    %v1808 = vunpack.c.l.b16 %v1737
    %v1809 = vunpack.c.l.b16 %v1738
    %v1810 = vunpack.c.l.b16 %v1739
    %v1811 = vunpack.c.l.b16 %v1740
    %v1812 = vunpack.c.l.b16 %v1741
    %v1813 = vunpack.c.l.b16 %v1742
    %v1814 = vunpack.c.l.b16 %v1743
    %v1815 = vunpack.c.l.b16 %v1744
    %v1816 = vunpack.c.l.b16 %v1745
    %v1817 = vunpack.c.l.b16 %v1746
    %v1818 = vunpack.c.l.b16 %v1747
    %v1819 = vunpack.c.l.b16 %v1748
    %v1820 = vunpack.c.l.b16 %v1749
    %v1821 = vunpack.c.l.b16 %v1750
    %v1822 = vunpack.c.l.b16 %v1751
    %v1823 = vunpack.c.l.b16 %v1752
    %v1824 = vunpack.c.l.b16 %v1753
    %v1825 = vunpack.c.l.b16 %v1754
    %v1826 = vunpack.c.l.b16 %v1755
    %v1827 = vunpack.c.l.b16 %v1756
    %v1828 = vunpack.c.l.b16 %v1757
    %v1829 = vunpack.c.l.b16 %v1758
    %v1830 = vpack.c.b16 %v1799, %v1798
    %v1831 = vpack.c.b16 %v1801, %v1800
    %v1832 = vpack.c.b16 %v1803, %v1802
    %v1833 = vpack.c.b16 %v1805, %v1804
    %v1834 = vpack.c.b16 %v1807, %v1806
    %v1835 = vpack.c.b16 %v1809, %v1808
    %v1836 = vpack.c.b16 %v1811, %v1810
    %v1837 = vpack.c.b16 %v1813, %v1812
    %v1838 = vpack.c.b16 %v1815, %v1814
    %v1839 = vpack.c.b16 %v1817, %v1816
    %v1840 = vpack.c.b16 %v1819, %v1818
    %v1841 = vpack.c.b16 %v1821, %v1820
    %v1842 = vpack.c.b16 %v1823, %v1822
    %v1843 = vpack.c.b16 %v1825, %v1824
    %v1844 = vpack.c.b16 %v1827, %v1826
    %v1845 = vpack.c.b16 %v1829, %v1828
    %1862 = vmatprep.subr.bf16.mxu0 0
    %1863 = vmatpush1.bf16.msra.mxu0 %v1837
    %1864 = vmatprep.subr.bf16.mxu0 0
    %1865 = vmatpush1.bf16.msra.mxu0 %v1836
    %1866 = vmatprep.subr.bf16.mxu0 0
    %1867 = vmatpush1.bf16.msra.mxu0 %v1835
    %1868 = vmatprep.subr.bf16.mxu0 0
    %1869 = vmatpush1.bf16.msra.mxu0 %v1834
    %1870 = vmatprep.subr.bf16.mxu0 0
    %1871 = vmatpush1.bf16.msra.mxu0 %v1833
    %1872 = vmatprep.subr.bf16.mxu0 0
    %1873 = vmatpush1.bf16.msra.mxu0 %v1832
    %1874 = vmatprep.subr.bf16.mxu0 0
    %1875 = vmatpush1.bf16.msra.mxu0 %v1831
    %1876 = vmatprep.subr.bf16.mxu0 0
    %1877 = vmatpush1.bf16.msra.mxu0 %v1830
    %1878 = vmatprep.subr.bf16.mxu0 0
    %1879 = vmatpush2.bf16.msra.mxu0 %v1845
    %1880 = vmatprep.subr.bf16.mxu0 0
    %1881 = vmatpush2.bf16.msra.mxu0 %v1844
    %1882 = vmatprep.subr.bf16.mxu0 0
    %1883 = vmatpush2.bf16.msra.mxu0 %v1843
    %1884 = vmatprep.subr.bf16.mxu0 0
    %1885 = vmatpush2.bf16.msra.mxu0 %v1842
    %1886 = vmatprep.subr.bf16.mxu0 0
    %1887 = vmatpush2.bf16.msra.mxu0 %v1841
    %1888 = vmatprep.subr.bf16.mxu0 0
    %1889 = vmatpush2.bf16.msra.mxu0 %v1840
    %1890 = vmatprep.subr.bf16.mxu0 0
    %1891 = vmatpush2.bf16.msra.mxu0 %v1839
    %1892 = vmatprep.subr.bf16.mxu0 0
    %1893 = vmatpush2.bf16.msra.mxu0 %v1838
    %1894 = vmatprep.mubr.bf16.mxu0 %v1724
    %1895 = vmatmul.mubr.bf16.gmra.mxu0 %v1723
    %v1896 = vpop.f32.mrf.mxu0
    %v1897 = vadd.f32 %v1764, %v1896
    %v1898 = vpop.f32.mrf.mxu0
    %v1899 = vpop.f32.mrf.mxu0
    %v1900 = vadd.f32 %v1764, %v1899
    %v1901 = vpop.f32.mrf.mxu0
    %1902 = vmatprep.mubr.bf16.mxu0 %v1726
    %1903 = vmatmul.mubr.bf16.gmra.mxu0 %v1725
    %v1904 = vpop.f32.mrf.mxu0
    %v1905 = vadd.f32 %v1764, %v1904
    %v1906 = vpop.f32.mrf.mxu0
    %v1907 = vpop.f32.mrf.mxu0
    %v1908 = vpop.f32.mrf.mxu0
    %1909 = vdwg.mxu0
    %v1910 = vmax.f32 %v1897, 0.0
    %v1911 = vmax.f32 %v1900, 0.0
    %v1912 = vmax.f32 %v1905, 0.0
    %v1913 = vpack.c.bf16 %v1911, %v1910
    %v1914 = vpack.c.bf16 %v1912, %v1912
    %v1915 = vld [vmem:[%s33] sm:$0xff]
    %v1916 = vld [vmem:[%s33 + $0x8] sm:$0xff]
    %v1917 = vld [vmem:[%s33 + $0x10] sm:$0xff]
    %v1918 = vld [vmem:[%s33 + $0x18] sm:$0xff]
    %v1919 = vld [vmem:[%s33 + $0x20] sm:$0xff]
    %v1920 = vld [vmem:[%s33 + $0x28] sm:$0xff]
    %v1921 = vld [vmem:[%s33 + $0x30] sm:$0xff]
    %v1922 = vld [vmem:[%s33 + $0x38] sm:$0xff]
    %v1923 = vld [vmem:[%s33 + $0x40] sm:$0xff]
    %v1924 = vld [vmem:[%s33 + $0x48] sm:$0xff]
    %v1925 = vld [vmem:[%s33 + $0x50] sm:$0xff]
    %v1926 = vld [vmem:[%s33 + $0x58] sm:$0xff]
    %v1927 = vld [vmem:[%s33 + $0x60] sm:$0xff]
    %v1928 = vld [vmem:[%s33 + $0x68] sm:$0xff]
    %v1929 = vld [vmem:[%s33 + $0x70] sm:$0xff]
    %v1930 = vld [vmem:[%s33 + $0x78] sm:$0xff]
    %v1931 = vld [vmem:[%s35] sm:$0x3]
    %v1933 = vlaneseq
    %v1934 = vshrl.u32 %v1933, 7
    %v1935 = vsub.s32 0, %v1934
    %v1936 = vrot.slane %v1931, %v1935
    %v1937 = vlaneseq
    %v1938 = vshrl.u32 %v1937, 7
    %v1939 = vsub.s32 1, %v1938
    %v1940 = vrot.slane %v1931, %v1939
    %v1959 = vunpack.c.l.b16 %v1915
    %v1960 = vunpack.c.h.b16 %v1915
    %v1961 = vunpack.c.l.b16 %v1916
    %v1962 = vunpack.c.h.b16 %v1916
    %v1963 = vunpack.c.l.b16 %v1917
    %v1964 = vunpack.c.h.b16 %v1917
    %v1965 = vunpack.c.l.b16 %v1918
    %v1966 = vunpack.c.h.b16 %v1918
    %v1967 = vunpack.c.l.b16 %v1919
    %v1968 = vunpack.c.h.b16 %v1919
    %v1969 = vunpack.c.l.b16 %v1920
    %v1970 = vunpack.c.h.b16 %v1920
    %v1971 = vunpack.c.l.b16 %v1921
    %v1972 = vunpack.c.h.b16 %v1921
    %v1973 = vunpack.c.l.b16 %v1922
    %v1974 = vunpack.c.h.b16 %v1922
    %v1975 = vunpack.c.l.b16 %v1923
    %v1976 = vunpack.c.h.b16 %v1923
    %v1977 = vunpack.c.l.b16 %v1924
    %v1978 = vunpack.c.h.b16 %v1924
    %v1979 = vunpack.c.l.b16 %v1925
    %v1980 = vunpack.c.h.b16 %v1925
    %v1981 = vunpack.c.l.b16 %v1926
    %v1982 = vunpack.c.h.b16 %v1926
    %v1983 = vunpack.c.l.b16 %v1927
    %v1984 = vunpack.c.h.b16 %v1927
    %v1985 = vunpack.c.l.b16 %v1928
    %v1986 = vunpack.c.h.b16 %v1928
    %v1987 = vunpack.c.l.b16 %v1929
    %v1988 = vunpack.c.h.b16 %v1929
    %v1989 = vunpack.c.l.b16 %v1930
    %v1990 = vunpack.c.h.b16 %v1930
    %v1991 = vpack.c.b16 %v1961, %v1959
    %v1992 = vpack.c.b16 %v1962, %v1960
    %v1993 = vpack.c.b16 %v1965, %v1963
    %v1994 = vpack.c.b16 %v1966, %v1964
    %v1995 = vpack.c.b16 %v1969, %v1967
    %v1996 = vpack.c.b16 %v1970, %v1968
    %v1997 = vpack.c.b16 %v1973, %v1971
    %v1998 = vpack.c.b16 %v1974, %v1972
    %v1999 = vpack.c.b16 %v1977, %v1975
    %v2000 = vpack.c.b16 %v1978, %v1976
    %v2001 = vpack.c.b16 %v1981, %v1979
    %v2002 = vpack.c.b16 %v1982, %v1980
    %v2003 = vpack.c.b16 %v1985, %v1983
    %v2004 = vpack.c.b16 %v1986, %v1984
    %v2005 = vpack.c.b16 %v1989, %v1987
    %v2006 = vpack.c.b16 %v1990, %v1988
    %2023 = vmatprep.subr.bf16.mxu0 %v2006
    %2024 = vmatpush1.bf16.msra.mxu0 %v2005
    %2025 = vmatprep.subr.bf16.mxu0 %v2004
    %2026 = vmatpush1.bf16.msra.mxu0 %v2003
    %2027 = vmatprep.subr.bf16.mxu0 %v2002
    %2028 = vmatpush1.bf16.msra.mxu0 %v2001
    %2029 = vmatprep.subr.bf16.mxu0 %v2000
    %2030 = vmatpush1.bf16.msra.mxu0 %v1999
    %2031 = vmatprep.subr.bf16.mxu0 %v1998
    %2032 = vmatpush1.bf16.msra.mxu0 %v1997
    %2033 = vmatprep.subr.bf16.mxu0 %v1996
    %2034 = vmatpush1.bf16.msra.mxu0 %v1995
    %2035 = vmatprep.subr.bf16.mxu0 %v1994
    %2036 = vmatpush1.bf16.msra.mxu0 %v1993
    %2037 = vmatprep.subr.bf16.mxu0 %v1992
    %2038 = vmatpush1.bf16.msra.mxu0 %v1991
    %2039 = vmatprep.subr.bf16.mxu0 0
    %2040 = vmatpush2.bf16.msra.mxu0 0
    %2041 = vmatprep.subr.bf16.mxu0 0
    %2042 = vmatpush2.bf16.msra.mxu0 0
    %2043 = vmatprep.subr.bf16.mxu0 0
    %2044 = vmatpush2.bf16.msra.mxu0 0
    %2045 = vmatprep.subr.bf16.mxu0 0
    %2046 = vmatpush2.bf16.msra.mxu0 0
    %2047 = vmatprep.subr.bf16.mxu0 0
    %2048 = vmatpush2.bf16.msra.mxu0 0
    %2049 = vmatprep.subr.bf16.mxu0 0
    %2050 = vmatpush2.bf16.msra.mxu0 0
    %2051 = vmatprep.subr.bf16.mxu0 0
    %2052 = vmatpush2.bf16.msra.mxu0 0
    %2053 = vmatprep.subr.bf16.mxu0 0
    %2054 = vmatpush2.bf16.msra.mxu0 0
    %2055 = vmatprep.mubr.bf16.mxu0 0
    %2056 = vmatmul.mubr.bf16.gmra.mxu0 %v1913
    %v2057 = vpop.f32.mrf.mxu0
    %v2058 = vadd.f32 %v1936, %v2057
    %v2059 = vpop.f32.mrf.mxu0
    %v2060 = vadd.f32 %v1940, %v2059
    %v2061 = vpop.f32.mrf.mxu0
    %v2062 = vadd.f32 %v1936, %v2061
    %v2063 = vpop.f32.mrf.mxu0
    %v2064 = vadd.f32 %v1940, %v2063
    %2065 = vmatprep.mubr.bf16.mxu0 0
    %2066 = vmatmul.mubr.bf16.gmra.mxu0 %v1914
    %v2067 = vpop.f32.mrf.mxu0
    %v2068 = vadd.f32 %v1936, %v2067
    %v2069 = vpop.f32.mrf.mxu0
    %v2070 = vadd.f32 %v1940, %v2069
    %v2071 = vpop.f32.mrf.mxu0
    %v2072 = vpop.f32.mrf.mxu0
    %2073 = vdwg.mxu0
    %v2074 = vmax.f32 %v2058, 0.0
    %v2075 = vmax.f32 %v2060, 0.0
    %v2076 = vmax.f32 %v2062, 0.0
    %v2077 = vmax.f32 %v2064, 0.0
    %v2078 = vmax.f32 %v2068, 0.0
    %v2079 = vmax.f32 %v2070, 0.0
    %v2080 = vadd.f32 %v1717, %v2074
    %v2081 = vadd.f32 %v1718, %v2075
    %v2082 = vadd.f32 %v1719, %v2076
    %v2083 = vadd.f32 %v1720, %v2077
    %v2084 = vadd.f32 %v1721, %v2078
    %v2085 = vadd.f32 %v1722, %v2079
    %v2086 = vpack.c.bf16 %v2082, %v2080
    %v2087 = vpack.c.bf16 %v2083, %v2081
    %v2088 = vpack.c.bf16 %v2084, %v2084
    %v2089 = vpack.c.bf16 %v2085, %v2085
    %v2090 = vld [vmem:[%s37] sm:$0xff]
    %v2091 = vld [vmem:[%s37 + $0x8] sm:$0xff]
    %v2092 = vld [vmem:[%s37 + $0x10] sm:$0xff]
    %v2093 = vld [vmem:[%s37 + $0x18] sm:$0xff]
    %v2094 = vld [vmem:[%s37 + $0x20] sm:$0xff]
    %v2095 = vld [vmem:[%s37 + $0x28] sm:$0xff]
    %v2096 = vld [vmem:[%s37 + $0x30] sm:$0xff]
    %v2097 = vld [vmem:[%s37 + $0x38] sm:$0xff]
    %v2098 = vld [vmem:[%s37 + $0x40] sm:$0xff]
    %v2099 = vld [vmem:[%s37 + $0x48] sm:$0xff]
    %v2100 = vld [vmem:[%s37 + $0x50] sm:$0xff]
    %v2101 = vld [vmem:[%s37 + $0x58] sm:$0xff]
    %v2102 = vld [vmem:[%s37 + $0x60] sm:$0xff]
    %v2103 = vld [vmem:[%s37 + $0x68] sm:$0xff]
    %v2104 = vld [vmem:[%s37 + $0x70] sm:$0xff]
    %v2105 = vld [vmem:[%s37 + $0x78] sm:$0xff]
    %v2106 = vld [vmem:[%s37 + $0x80] sm:$0xff]
    %v2107 = vld [vmem:[%s37 + $0x88] sm:$0xff]
    %v2108 = vld [vmem:[%s37 + $0x90] sm:$0xff]
    %v2109 = vld [vmem:[%s37 + $0x98] sm:$0xff]
    %v2110 = vld [vmem:[%s37 + $0xa0] sm:$0xff]
    %v2111 = vld [vmem:[%s37 + $0xa8] sm:$0xff]
    %v2112 = vld [vmem:[%s37 + $0xb0] sm:$0xff]
    %v2113 = vld [vmem:[%s37 + $0xb8] sm:$0xff]
    %v2114 = vld [vmem:[%s37 + $0xc0] sm:$0xff]
    %v2115 = vld [vmem:[%s37 + $0xc8] sm:$0xff]
    %v2116 = vld [vmem:[%s37 + $0xd0] sm:$0xff]
    %v2117 = vld [vmem:[%s37 + $0xd8] sm:$0xff]
    %v2118 = vld [vmem:[%s37 + $0xe0] sm:$0xff]
    %v2119 = vld [vmem:[%s37 + $0xe8] sm:$0xff]
    %v2120 = vld [vmem:[%s37 + $0xf0] sm:$0xff]
    %v2121 = vld [vmem:[%s37 + $0xf8] sm:$0xff]
    %v2122 = vld [vmem:[%s39] sm:$0x3]
    %v2124 = vlaneseq
    %v2125 = vshrl.u32 %v2124, 7
    %v2126 = vsub.s32 0, %v2125
    %v2127 = vrot.slane %v2122, %v2126
    %v2128 = vlaneseq
    %v2129 = vshrl.u32 %v2128, 7
    %v2130 = vsub.s32 1, %v2129
    %v2131 = vrot.slane %v2122, %v2130
    %v2166 = vunpack.c.l.b16 %v2090
    %v2167 = vunpack.c.h.b16 %v2090
    %v2168 = vunpack.c.l.b16 %v2091
    %v2169 = vunpack.c.h.b16 %v2091
    %v2170 = vunpack.c.l.b16 %v2092
    %v2171 = vunpack.c.h.b16 %v2092
    %v2172 = vunpack.c.l.b16 %v2093
    %v2173 = vunpack.c.h.b16 %v2093
    %v2174 = vunpack.c.l.b16 %v2094
    %v2175 = vunpack.c.h.b16 %v2094
    %v2176 = vunpack.c.l.b16 %v2095
    %v2177 = vunpack.c.h.b16 %v2095
    %v2178 = vunpack.c.l.b16 %v2096
    %v2179 = vunpack.c.h.b16 %v2096
    %v2180 = vunpack.c.l.b16 %v2097
    %v2181 = vunpack.c.h.b16 %v2097
    %v2182 = vunpack.c.l.b16 %v2098
    %v2183 = vunpack.c.h.b16 %v2098
    %v2184 = vunpack.c.l.b16 %v2099
    %v2185 = vunpack.c.h.b16 %v2099
    %v2186 = vunpack.c.l.b16 %v2100
    %v2187 = vunpack.c.h.b16 %v2100
    %v2188 = vunpack.c.l.b16 %v2101
    %v2189 = vunpack.c.h.b16 %v2101
    %v2190 = vunpack.c.l.b16 %v2102
    %v2191 = vunpack.c.h.b16 %v2102
    %v2192 = vunpack.c.l.b16 %v2103
    %v2193 = vunpack.c.h.b16 %v2103
    %v2194 = vunpack.c.l.b16 %v2104
    %v2195 = vunpack.c.h.b16 %v2104
    %v2196 = vunpack.c.l.b16 %v2105
    %v2197 = vunpack.c.h.b16 %v2105
    %v2198 = vunpack.c.l.b16 %v2106
    %v2199 = vunpack.c.h.b16 %v2106
    %v2200 = vunpack.c.l.b16 %v2107
    %v2201 = vunpack.c.h.b16 %v2107
    %v2202 = vunpack.c.l.b16 %v2108
    %v2203 = vunpack.c.h.b16 %v2108
    %v2204 = vunpack.c.l.b16 %v2109
    %v2205 = vunpack.c.h.b16 %v2109
    %v2206 = vunpack.c.l.b16 %v2110
    %v2207 = vunpack.c.h.b16 %v2110
    %v2208 = vunpack.c.l.b16 %v2111
    %v2209 = vunpack.c.h.b16 %v2111
    %v2210 = vunpack.c.l.b16 %v2112
    %v2211 = vunpack.c.h.b16 %v2112
    %v2212 = vunpack.c.l.b16 %v2113
    %v2213 = vunpack.c.h.b16 %v2113
    %v2214 = vunpack.c.l.b16 %v2114
    %v2215 = vunpack.c.h.b16 %v2114
    %v2216 = vunpack.c.l.b16 %v2115
    %v2217 = vunpack.c.h.b16 %v2115
    %v2218 = vunpack.c.l.b16 %v2116
    %v2219 = vunpack.c.h.b16 %v2116
    %v2220 = vunpack.c.l.b16 %v2117
    %v2221 = vunpack.c.h.b16 %v2117
    %v2222 = vunpack.c.l.b16 %v2118
    %v2223 = vunpack.c.h.b16 %v2118
    %v2224 = vunpack.c.l.b16 %v2119
    %v2225 = vunpack.c.h.b16 %v2119
    %v2226 = vunpack.c.l.b16 %v2120
    %v2227 = vunpack.c.h.b16 %v2120
    %v2228 = vunpack.c.l.b16 %v2121
    %v2229 = vunpack.c.h.b16 %v2121
    %v2230 = vpack.c.b16 %v2168, %v2166
    %v2231 = vpack.c.b16 %v2169, %v2167
    %v2232 = vpack.c.b16 %v2172, %v2170
    %v2233 = vpack.c.b16 %v2173, %v2171
    %v2234 = vpack.c.b16 %v2176, %v2174
    %v2235 = vpack.c.b16 %v2177, %v2175
    %v2236 = vpack.c.b16 %v2180, %v2178
    %v2237 = vpack.c.b16 %v2181, %v2179
    %v2238 = vpack.c.b16 %v2184, %v2182
    %v2239 = vpack.c.b16 %v2185, %v2183
    %v2240 = vpack.c.b16 %v2188, %v2186
    %v2241 = vpack.c.b16 %v2189, %v2187
    %v2242 = vpack.c.b16 %v2192, %v2190
    %v2243 = vpack.c.b16 %v2193, %v2191
    %v2244 = vpack.c.b16 %v2196, %v2194
    %v2245 = vpack.c.b16 %v2197, %v2195
    %v2246 = vpack.c.b16 %v2200, %v2198
    %v2247 = vpack.c.b16 %v2201, %v2199
    %v2248 = vpack.c.b16 %v2204, %v2202
    %v2249 = vpack.c.b16 %v2205, %v2203
    %v2250 = vpack.c.b16 %v2208, %v2206
    %v2251 = vpack.c.b16 %v2209, %v2207
    %v2252 = vpack.c.b16 %v2212, %v2210
    %v2253 = vpack.c.b16 %v2213, %v2211
    %v2254 = vpack.c.b16 %v2216, %v2214
    %v2255 = vpack.c.b16 %v2217, %v2215
    %v2256 = vpack.c.b16 %v2220, %v2218
    %v2257 = vpack.c.b16 %v2221, %v2219
    %v2258 = vpack.c.b16 %v2224, %v2222
    %v2259 = vpack.c.b16 %v2225, %v2223
    %v2260 = vpack.c.b16 %v2228, %v2226
    %v2261 = vpack.c.b16 %v2229, %v2227
    %2294 = vmatprep.subr.bf16.mxu0 %v2245
    %2295 = vmatpush1.bf16.msra.mxu0 %v2244
    %2296 = vmatprep.subr.bf16.mxu0 %v2243
    %2297 = vmatpush1.bf16.msra.mxu0 %v2242
    %2298 = vmatprep.subr.bf16.mxu0 %v2241
    %2299 = vmatpush1.bf16.msra.mxu0 %v2240
    %2300 = vmatprep.subr.bf16.mxu0 %v2239
    %2301 = vmatpush1.bf16.msra.mxu0 %v2238
    %2302 = vmatprep.subr.bf16.mxu0 %v2237
    %2303 = vmatpush1.bf16.msra.mxu0 %v2236
    %2304 = vmatprep.subr.bf16.mxu0 %v2235
    %2305 = vmatpush1.bf16.msra.mxu0 %v2234
    %2306 = vmatprep.subr.bf16.mxu0 %v2233
    %2307 = vmatpush1.bf16.msra.mxu0 %v2232
    %2308 = vmatprep.subr.bf16.mxu0 %v2231
    %2309 = vmatpush1.bf16.msra.mxu0 %v2230
    %2310 = vmatprep.subr.bf16.mxu0 %v2261
    %2311 = vmatpush2.bf16.msra.mxu0 %v2260
    %2312 = vmatprep.subr.bf16.mxu0 %v2259
    %2313 = vmatpush2.bf16.msra.mxu0 %v2258
    %2314 = vmatprep.subr.bf16.mxu0 %v2257
    %2315 = vmatpush2.bf16.msra.mxu0 %v2256
    %2316 = vmatprep.subr.bf16.mxu0 %v2255
    %2317 = vmatpush2.bf16.msra.mxu0 %v2254
    %2318 = vmatprep.subr.bf16.mxu0 %v2253
    %2319 = vmatpush2.bf16.msra.mxu0 %v2252
    %2320 = vmatprep.subr.bf16.mxu0 %v2251
    %2321 = vmatpush2.bf16.msra.mxu0 %v2250
    %2322 = vmatprep.subr.bf16.mxu0 %v2249
    %2323 = vmatpush2.bf16.msra.mxu0 %v2248
    %2324 = vmatprep.subr.bf16.mxu0 %v2247
    %2325 = vmatpush2.bf16.msra.mxu0 %v2246
    %2326 = vmatprep.mubr.bf16.mxu0 %v2087
    %2327 = vmatmul.mubr.bf16.gmra.mxu0 %v2086
    %v2328 = vpop.f32.mrf.mxu0
    %v2329 = vadd.f32 %v2127, %v2328
    %v2330 = vpop.f32.mrf.mxu0
    %v2331 = vadd.f32 %v2131, %v2330
    %v2332 = vpop.f32.mrf.mxu0
    %v2333 = vadd.f32 %v2127, %v2332
    %v2334 = vpop.f32.mrf.mxu0
    %v2335 = vadd.f32 %v2131, %v2334
    %2336 = vmatprep.mubr.bf16.mxu0 %v2089
    %2337 = vmatmul.mubr.bf16.gmra.mxu0 %v2088
    %v2338 = vpop.f32.mrf.mxu0
    %v2339 = vadd.f32 %v2127, %v2338
    %v2340 = vpop.f32.mrf.mxu0
    %v2341 = vadd.f32 %v2131, %v2340
    %v2342 = vpop.f32.mrf.mxu0
    %v2343 = vpop.f32.mrf.mxu0
    %2344 = vdwg.mxu0
    %v2345 = vmax.f32 %v2329, 0.0
    %v2346 = vmax.f32 %v2331, 0.0
    %v2347 = vmax.f32 %v2333, 0.0
    %v2348 = vmax.f32 %v2335, 0.0
    %v2349 = vmax.f32 %v2339, 0.0
    %v2350 = vmax.f32 %v2341, 0.0
    %v2351 = vpack.c.bf16 %v2347, %v2345
    %v2352 = vpack.c.bf16 %v2348, %v2346
    %v2353 = vpack.c.bf16 %v2349, %v2349
    %v2354 = vpack.c.bf16 %v2350, %v2350
    %v2355 = vld [vmem:[%s41] sm:$0xff]
    %v2356 = vld [vmem:[%s41 + $0x8] sm:$0xf]
    %v2357 = vld [vmem:[%s41 + $0xc] sm:$0xff]
    %v2358 = vld [vmem:[%s41 + $0x14] sm:$0xf]
    %v2359 = vld [vmem:[%s41 + $0x18] sm:$0xff]
    %v2360 = vld [vmem:[%s41 + $0x20] sm:$0xf]
    %v2361 = vld [vmem:[%s41 + $0x24] sm:$0xff]
    %v2362 = vld [vmem:[%s41 + $0x2c] sm:$0xf]
    %v2363 = vld [vmem:[%s41 + $0x30] sm:$0xff]
    %v2364 = vld [vmem:[%s41 + $0x38] sm:$0xf]
    %v2365 = vld [vmem:[%s41 + $0x3c] sm:$0xff]
    %v2366 = vld [vmem:[%s41 + $0x44] sm:$0xf]
    %v2367 = vld [vmem:[%s41 + $0x48] sm:$0xff]
    %v2368 = vld [vmem:[%s41 + $0x50] sm:$0xf]
    %v2369 = vld [vmem:[%s41 + $0x54] sm:$0xff]
    %v2370 = vld [vmem:[%s41 + $0x5c] sm:$0xf]
    %v2371 = vld [vmem:[%s41 + $0x60] sm:$0xff]
    %v2372 = vld [vmem:[%s41 + $0x68] sm:$0xf]
    %v2373 = vld [vmem:[%s41 + $0x6c] sm:$0xff]
    %v2374 = vld [vmem:[%s41 + $0x74] sm:$0xf]
    %v2375 = vld [vmem:[%s41 + $0x78] sm:$0xff]
    %v2376 = vld [vmem:[%s41 + $0x80] sm:$0xf]
    %v2377 = vld [vmem:[%s41 + $0x84] sm:$0xff]
    %v2378 = vld [vmem:[%s41 + $0x8c] sm:$0xf]
    %v2379 = vld [vmem:[%s41 + $0x90] sm:$0xff]
    %v2380 = vld [vmem:[%s41 + $0x98] sm:$0xf]
    %v2381 = vld [vmem:[%s41 + $0x9c] sm:$0xff]
    %v2382 = vld [vmem:[%s41 + $0xa4] sm:$0xf]
    %v2383 = vld [vmem:[%s41 + $0xa8] sm:$0xff]
    %v2384 = vld [vmem:[%s41 + $0xb0] sm:$0xf]
    %v2385 = vld [vmem:[%s41 + $0xb4] sm:$0xff]
    %v2386 = vld [vmem:[%s41 + $0xbc] sm:$0xf]
    %v2387 = vld [vmem:[%s41 + $0xc0] sm:$0xff]
    %v2388 = vld [vmem:[%s41 + $0xc8] sm:$0xf]
    %v2389 = vld [vmem:[%s41 + $0xcc] sm:$0xff]
    %v2390 = vld [vmem:[%s41 + $0xd4] sm:$0xf]
    %v2391 = vld [vmem:[%s41 + $0xd8] sm:$0xff]
    %v2392 = vld [vmem:[%s41 + $0xe0] sm:$0xf]
    %v2393 = vld [vmem:[%s41 + $0xe4] sm:$0xff]
    %v2394 = vld [vmem:[%s41 + $0xec] sm:$0xf]
    %v2395 = vld [vmem:[%s41 + $0xf0] sm:$0xff]
    %v2396 = vld [vmem:[%s41 + $0xf8] sm:$0xf]
    %v2397 = vld [vmem:[%s41 + $0xfc] sm:$0xff]
    %v2398 = vld [vmem:[%s41 + $0x104] sm:$0xf]
    %v2399 = vld [vmem:[%s41 + $0x108] sm:$0xff]
    %v2400 = vld [vmem:[%s41 + $0x110] sm:$0xf]
    %v2401 = vld [vmem:[%s41 + $0x114] sm:$0xff]
    %v2402 = vld [vmem:[%s41 + $0x11c] sm:$0xf]
    %v2403 = vld [vmem:[%s41 + $0x120] sm:$0xff]
    %v2404 = vld [vmem:[%s41 + $0x128] sm:$0xf]
    %v2405 = vld [vmem:[%s41 + $0x12c] sm:$0xff]
    %v2406 = vld [vmem:[%s41 + $0x134] sm:$0xf]
    %v2407 = vld [vmem:[%s41 + $0x138] sm:$0xff]
    %v2408 = vld [vmem:[%s41 + $0x140] sm:$0xf]
    %v2409 = vld [vmem:[%s41 + $0x144] sm:$0xff]
    %v2410 = vld [vmem:[%s41 + $0x14c] sm:$0xf]
    %v2411 = vld [vmem:[%s41 + $0x150] sm:$0xff]
    %v2412 = vld [vmem:[%s41 + $0x158] sm:$0xf]
    %v2413 = vld [vmem:[%s41 + $0x15c] sm:$0xff]
    %v2414 = vld [vmem:[%s41 + $0x164] sm:$0xf]
    %v2415 = vld [vmem:[%s41 + $0x168] sm:$0xff]
    %v2416 = vld [vmem:[%s41 + $0x170] sm:$0xf]
    %v2417 = vld [vmem:[%s41 + $0x174] sm:$0xff]
    %v2418 = vld [vmem:[%s41 + $0x17c] sm:$0xf]
    %v2419 = vld [vmem:[%s43] sm:$0x7]
    %v2421 = vlaneseq
    %v2422 = vshrl.u32 %v2421, 7
    %v2423 = vsub.s32 0, %v2422
    %v2424 = vrot.slane %v2419, %v2423
    %v2425 = vlaneseq
    %v2426 = vshrl.u32 %v2425, 7
    %v2427 = vsub.s32 1, %v2426
    %v2428 = vrot.slane %v2419, %v2427
    %v2429 = vlaneseq
    %v2430 = vshrl.u32 %v2429, 7
    %v2431 = vsub.s32 2, %v2430
    %v2432 = vrot.slane %v2419, %v2431
    %v2500 = vunpack.c.l.b16 %v2355
    %v2501 = vunpack.c.h.b16 %v2355
    %v2502 = vunpack.c.l.b16 %v2356
    %v2503 = vunpack.c.l.b16 %v2357
    %v2504 = vunpack.c.h.b16 %v2357
    %v2505 = vunpack.c.l.b16 %v2358
    %v2506 = vunpack.c.l.b16 %v2359
    %v2507 = vunpack.c.h.b16 %v2359
    %v2508 = vunpack.c.l.b16 %v2360
    %v2509 = vunpack.c.l.b16 %v2361
    %v2510 = vunpack.c.h.b16 %v2361
    %v2511 = vunpack.c.l.b16 %v2362
    %v2512 = vunpack.c.l.b16 %v2363
    %v2513 = vunpack.c.h.b16 %v2363
    %v2514 = vunpack.c.l.b16 %v2364
    %v2515 = vunpack.c.l.b16 %v2365
    %v2516 = vunpack.c.h.b16 %v2365
    %v2517 = vunpack.c.l.b16 %v2366
    %v2518 = vunpack.c.l.b16 %v2367
    %v2519 = vunpack.c.h.b16 %v2367
    %v2520 = vunpack.c.l.b16 %v2368
    %v2521 = vunpack.c.l.b16 %v2369
    %v2522 = vunpack.c.h.b16 %v2369
    %v2523 = vunpack.c.l.b16 %v2370
    %v2524 = vunpack.c.l.b16 %v2371
    %v2525 = vunpack.c.h.b16 %v2371
    %v2526 = vunpack.c.l.b16 %v2372
    %v2527 = vunpack.c.l.b16 %v2373
    %v2528 = vunpack.c.h.b16 %v2373
    %v2529 = vunpack.c.l.b16 %v2374
    %v2530 = vunpack.c.l.b16 %v2375
    %v2531 = vunpack.c.h.b16 %v2375
    %v2532 = vunpack.c.l.b16 %v2376
    %v2533 = vunpack.c.l.b16 %v2377
    %v2534 = vunpack.c.h.b16 %v2377
    %v2535 = vunpack.c.l.b16 %v2378
    %v2536 = vunpack.c.l.b16 %v2379
    %v2537 = vunpack.c.h.b16 %v2379
    %v2538 = vunpack.c.l.b16 %v2380
    %v2539 = vunpack.c.l.b16 %v2381
    %v2540 = vunpack.c.h.b16 %v2381
    %v2541 = vunpack.c.l.b16 %v2382
    %v2542 = vunpack.c.l.b16 %v2383
    %v2543 = vunpack.c.h.b16 %v2383
    %v2544 = vunpack.c.l.b16 %v2384
    %v2545 = vunpack.c.l.b16 %v2385
    %v2546 = vunpack.c.h.b16 %v2385
    %v2547 = vunpack.c.l.b16 %v2386
    %v2548 = vunpack.c.l.b16 %v2387
    %v2549 = vunpack.c.h.b16 %v2387
    %v2550 = vunpack.c.l.b16 %v2388
    %v2551 = vunpack.c.l.b16 %v2389
    %v2552 = vunpack.c.h.b16 %v2389
    %v2553 = vunpack.c.l.b16 %v2390
    %v2554 = vunpack.c.l.b16 %v2391
    %v2555 = vunpack.c.h.b16 %v2391
    %v2556 = vunpack.c.l.b16 %v2392
    %v2557 = vunpack.c.l.b16 %v2393
    %v2558 = vunpack.c.h.b16 %v2393
    %v2559 = vunpack.c.l.b16 %v2394
    %v2560 = vunpack.c.l.b16 %v2395
    %v2561 = vunpack.c.h.b16 %v2395
    %v2562 = vunpack.c.l.b16 %v2396
    %v2563 = vunpack.c.l.b16 %v2397
    %v2564 = vunpack.c.h.b16 %v2397
    %v2565 = vunpack.c.l.b16 %v2398
    %v2566 = vunpack.c.l.b16 %v2399
    %v2567 = vunpack.c.h.b16 %v2399
    %v2568 = vunpack.c.l.b16 %v2400
    %v2569 = vunpack.c.l.b16 %v2401
    %v2570 = vunpack.c.h.b16 %v2401
    %v2571 = vunpack.c.l.b16 %v2402
    %v2572 = vunpack.c.l.b16 %v2403
    %v2573 = vunpack.c.h.b16 %v2403
    %v2574 = vunpack.c.l.b16 %v2404
    %v2575 = vunpack.c.l.b16 %v2405
    %v2576 = vunpack.c.h.b16 %v2405
    %v2577 = vunpack.c.l.b16 %v2406
    %v2578 = vunpack.c.l.b16 %v2407
    %v2579 = vunpack.c.h.b16 %v2407
    %v2580 = vunpack.c.l.b16 %v2408
    %v2581 = vunpack.c.l.b16 %v2409
    %v2582 = vunpack.c.h.b16 %v2409
    %v2583 = vunpack.c.l.b16 %v2410
    %v2584 = vunpack.c.l.b16 %v2411
    %v2585 = vunpack.c.h.b16 %v2411
    %v2586 = vunpack.c.l.b16 %v2412
    %v2587 = vunpack.c.l.b16 %v2413
    %v2588 = vunpack.c.h.b16 %v2413
    %v2589 = vunpack.c.l.b16 %v2414
    %v2590 = vunpack.c.l.b16 %v2415
    %v2591 = vunpack.c.h.b16 %v2415
    %v2592 = vunpack.c.l.b16 %v2416
    %v2593 = vunpack.c.l.b16 %v2417
    %v2594 = vunpack.c.h.b16 %v2417
    %v2595 = vunpack.c.l.b16 %v2418
    %v2596 = vpack.c.b16 %v2503, %v2500
    %v2597 = vpack.c.b16 %v2504, %v2501
    %v2598 = vpack.c.b16 %v2505, %v2502
    %v2599 = vpack.c.b16 %v2509, %v2506
    %v2600 = vpack.c.b16 %v2510, %v2507
    %v2601 = vpack.c.b16 %v2511, %v2508
    %v2602 = vpack.c.b16 %v2515, %v2512
    %v2603 = vpack.c.b16 %v2516, %v2513
    %v2604 = vpack.c.b16 %v2517, %v2514
    %v2605 = vpack.c.b16 %v2521, %v2518
    %v2606 = vpack.c.b16 %v2522, %v2519
    %v2607 = vpack.c.b16 %v2523, %v2520
    %v2608 = vpack.c.b16 %v2527, %v2524
    %v2609 = vpack.c.b16 %v2528, %v2525
    %v2610 = vpack.c.b16 %v2529, %v2526
    %v2611 = vpack.c.b16 %v2533, %v2530
    %v2612 = vpack.c.b16 %v2534, %v2531
    %v2613 = vpack.c.b16 %v2535, %v2532
    %v2614 = vpack.c.b16 %v2539, %v2536
    %v2615 = vpack.c.b16 %v2540, %v2537
    %v2616 = vpack.c.b16 %v2541, %v2538
    %v2617 = vpack.c.b16 %v2545, %v2542
    %v2618 = vpack.c.b16 %v2546, %v2543
    %v2619 = vpack.c.b16 %v2547, %v2544
    %v2620 = vpack.c.b16 %v2551, %v2548
    %v2621 = vpack.c.b16 %v2552, %v2549
    %v2622 = vpack.c.b16 %v2553, %v2550
    %v2623 = vpack.c.b16 %v2557, %v2554
    %v2624 = vpack.c.b16 %v2558, %v2555
    %v2625 = vpack.c.b16 %v2559, %v2556
    %v2626 = vpack.c.b16 %v2563, %v2560
    %v2627 = vpack.c.b16 %v2564, %v2561
    %v2628 = vpack.c.b16 %v2565, %v2562
    %v2629 = vpack.c.b16 %v2569, %v2566
    %v2630 = vpack.c.b16 %v2570, %v2567
    %v2631 = vpack.c.b16 %v2571, %v2568
    %v2632 = vpack.c.b16 %v2575, %v2572
    %v2633 = vpack.c.b16 %v2576, %v2573
    %v2634 = vpack.c.b16 %v2577, %v2574
    %v2635 = vpack.c.b16 %v2581, %v2578
    %v2636 = vpack.c.b16 %v2582, %v2579
    %v2637 = vpack.c.b16 %v2583, %v2580
    %v2638 = vpack.c.b16 %v2587, %v2584
    %v2639 = vpack.c.b16 %v2588, %v2585
    %v2640 = vpack.c.b16 %v2589, %v2586
    %v2641 = vpack.c.b16 %v2593, %v2590
    %v2642 = vpack.c.b16 %v2594, %v2591
    %v2643 = vpack.c.b16 %v2595, %v2592
    %2692 = vmatprep.subr.bf16.mxu0 %v2618
    %2693 = vmatpush1.bf16.msra.mxu0 %v2617
    %2694 = vmatprep.subr.bf16.mxu0 %v2615
    %2695 = vmatpush1.bf16.msra.mxu0 %v2614
    %2696 = vmatprep.subr.bf16.mxu0 %v2612
    %2697 = vmatpush1.bf16.msra.mxu0 %v2611
    %2698 = vmatprep.subr.bf16.mxu0 %v2609
    %2699 = vmatpush1.bf16.msra.mxu0 %v2608
    %2700 = vmatprep.subr.bf16.mxu0 %v2606
    %2701 = vmatpush1.bf16.msra.mxu0 %v2605
    %2702 = vmatprep.subr.bf16.mxu0 %v2603
    %2703 = vmatpush1.bf16.msra.mxu0 %v2602
    %2704 = vmatprep.subr.bf16.mxu0 %v2600
    %2705 = vmatpush1.bf16.msra.mxu0 %v2599
    %2706 = vmatprep.subr.bf16.mxu0 %v2597
    %2707 = vmatpush1.bf16.msra.mxu0 %v2596
    %2708 = vmatprep.subr.bf16.mxu0 %v2642
    %2709 = vmatpush2.bf16.msra.mxu0 %v2641
    %2710 = vmatprep.subr.bf16.mxu0 %v2639
    %2711 = vmatpush2.bf16.msra.mxu0 %v2638
    %2712 = vmatprep.subr.bf16.mxu0 %v2636
    %2713 = vmatpush2.bf16.msra.mxu0 %v2635
    %2714 = vmatprep.subr.bf16.mxu0 %v2633
    %2715 = vmatpush2.bf16.msra.mxu0 %v2632
    %2716 = vmatprep.subr.bf16.mxu0 %v2630
    %2717 = vmatpush2.bf16.msra.mxu0 %v2629
    %2718 = vmatprep.subr.bf16.mxu0 %v2627
    %2719 = vmatpush2.bf16.msra.mxu0 %v2626
    %2720 = vmatprep.subr.bf16.mxu0 %v2624
    %2721 = vmatpush2.bf16.msra.mxu0 %v2623
    %2722 = vmatprep.subr.bf16.mxu0 %v2621
    %2723 = vmatpush2.bf16.msra.mxu0 %v2620
    %2724 = vmatprep.mubr.bf16.mxu0 %v2352
    %2725 = vmatmul.mubr.bf16.gmra.mxu0 %v2351
    %v2726 = vpop.f32.mrf.mxu0
    %v2727 = vadd.f32 %v2424, %v2726
    %v2728 = vpop.f32.mrf.mxu0
    %v2729 = vadd.f32 %v2428, %v2728
    %v2730 = vpop.f32.mrf.mxu0
    %v2731 = vadd.f32 %v2424, %v2730
    %v2732 = vpop.f32.mrf.mxu0
    %v2733 = vadd.f32 %v2428, %v2732
    %2734 = vmatprep.mubr.bf16.mxu0 %v2354
    %2735 = vmatmul.mubr.bf16.gmra.mxu0 %v2353
    %v2736 = vpop.f32.mrf.mxu0
    %v2737 = vadd.f32 %v2424, %v2736
    %v2738 = vpop.f32.mrf.mxu0
    %v2739 = vadd.f32 %v2428, %v2738
    %v2740 = vpop.f32.mrf.mxu0
    %v2741 = vpop.f32.mrf.mxu0
    %2742 = vdwg.mxu0
    %2743 = vmatprep.subr.bf16.mxu0 0
    %2744 = vmatpush1.bf16.msra.mxu0 %v2619
    %2745 = vmatprep.subr.bf16.mxu0 0
    %2746 = vmatpush1.bf16.msra.mxu0 %v2616
    %2747 = vmatprep.subr.bf16.mxu0 0
    %2748 = vmatpush1.bf16.msra.mxu0 %v2613
    %2749 = vmatprep.subr.bf16.mxu0 0
    %2750 = vmatpush1.bf16.msra.mxu0 %v2610
    %2751 = vmatprep.subr.bf16.mxu0 0
    %2752 = vmatpush1.bf16.msra.mxu0 %v2607
    %2753 = vmatprep.subr.bf16.mxu0 0
    %2754 = vmatpush1.bf16.msra.mxu0 %v2604
    %2755 = vmatprep.subr.bf16.mxu0 0
    %2756 = vmatpush1.bf16.msra.mxu0 %v2601
    %2757 = vmatprep.subr.bf16.mxu0 0
    %2758 = vmatpush1.bf16.msra.mxu0 %v2598
    %2759 = vmatprep.subr.bf16.mxu0 0
    %2760 = vmatpush2.bf16.msra.mxu0 %v2643
    %2761 = vmatprep.subr.bf16.mxu0 0
    %2762 = vmatpush2.bf16.msra.mxu0 %v2640
    %2763 = vmatprep.subr.bf16.mxu0 0
    %2764 = vmatpush2.bf16.msra.mxu0 %v2637
    %2765 = vmatprep.subr.bf16.mxu0 0
    %2766 = vmatpush2.bf16.msra.mxu0 %v2634
    %2767 = vmatprep.subr.bf16.mxu0 0
    %2768 = vmatpush2.bf16.msra.mxu0 %v2631
    %2769 = vmatprep.subr.bf16.mxu0 0
    %2770 = vmatpush2.bf16.msra.mxu0 %v2628
    %2771 = vmatprep.subr.bf16.mxu0 0
    %2772 = vmatpush2.bf16.msra.mxu0 %v2625
    %2773 = vmatprep.subr.bf16.mxu0 0
    %2774 = vmatpush2.bf16.msra.mxu0 %v2622
    %2775 = vmatprep.mubr.bf16.mxu0 %v2352
    %2776 = vmatmul.mubr.bf16.gmra.mxu0 %v2351
    %v2777 = vpop.f32.mrf.mxu0
    %v2778 = vadd.f32 %v2432, %v2777
    %v2779 = vpop.f32.mrf.mxu0
    %v2780 = vpop.f32.mrf.mxu0
    %v2781 = vadd.f32 %v2432, %v2780
    %v2782 = vpop.f32.mrf.mxu0
    %2783 = vmatprep.mubr.bf16.mxu0 %v2354
    %2784 = vmatmul.mubr.bf16.gmra.mxu0 %v2353
    %v2785 = vpop.f32.mrf.mxu0
    %v2786 = vadd.f32 %v2432, %v2785
    %v2787 = vpop.f32.mrf.mxu0
    %v2788 = vpop.f32.mrf.mxu0
    %v2789 = vpop.f32.mrf.mxu0
    %2790 = vdwg.mxu0
    %v2791 = vmax.f32 %v2727, 0.0
    %v2792 = vmax.f32 %v2729, 0.0
    %v2793 = vmax.f32 %v2778, 0.0
    %v2794 = vmax.f32 %v2731, 0.0
    %v2795 = vmax.f32 %v2733, 0.0
    %v2796 = vmax.f32 %v2781, 0.0
    %v2797 = vmax.f32 %v2737, 0.0
    %v2798 = vmax.f32 %v2739, 0.0
    %v2799 = vmax.f32 %v2786, 0.0
    %v2800 = vpack.c.bf16 %v2794, %v2791
    %v2801 = vpack.c.bf16 %v2795, %v2792
    %v2802 = vpack.c.bf16 %v2796, %v2793
    %v2803 = vpack.c.bf16 %v2797, %v2797
    %v2804 = vpack.c.bf16 %v2798, %v2798
    %v2805 = vpack.c.bf16 %v2799, %v2799
    %v2806 = vld [vmem:[%s45] sm:$0xff]
    %v2807 = vld [vmem:[%s45 + $0x8] sm:$0xff]
    %v2808 = vld [vmem:[%s45 + $0x10] sm:$0xff]
    %v2809 = vld [vmem:[%s45 + $0x18] sm:$0xff]
    %v2810 = vld [vmem:[%s45 + $0x20] sm:$0xff]
    %v2811 = vld [vmem:[%s45 + $0x28] sm:$0xff]
    %v2812 = vld [vmem:[%s45 + $0x30] sm:$0xff]
    %v2813 = vld [vmem:[%s45 + $0x38] sm:$0xff]
    %v2814 = vld [vmem:[%s45 + $0x40] sm:$0xff]
    %v2815 = vld [vmem:[%s45 + $0x48] sm:$0xff]
    %v2816 = vld [vmem:[%s45 + $0x50] sm:$0xff]
    %v2817 = vld [vmem:[%s45 + $0x58] sm:$0xff]
    %v2818 = vld [vmem:[%s45 + $0x60] sm:$0xff]
    %v2819 = vld [vmem:[%s45 + $0x68] sm:$0xff]
    %v2820 = vld [vmem:[%s45 + $0x70] sm:$0xff]
    %v2821 = vld [vmem:[%s45 + $0x78] sm:$0xff]
    %v2822 = vld [vmem:[%s45 + $0x80] sm:$0xff]
    %v2823 = vld [vmem:[%s45 + $0x88] sm:$0xff]
    %v2824 = vld [vmem:[%s45 + $0x90] sm:$0xff]
    %v2825 = vld [vmem:[%s45 + $0x98] sm:$0xff]
    %v2826 = vld [vmem:[%s45 + $0xa0] sm:$0xff]
    %v2827 = vld [vmem:[%s45 + $0xa8] sm:$0xff]
    %v2828 = vld [vmem:[%s45 + $0xb0] sm:$0xff]
    %v2829 = vld [vmem:[%s45 + $0xb8] sm:$0xff]
    %v2830 = vld [vmem:[%s45 + $0xc0] sm:$0xff]
    %v2831 = vld [vmem:[%s45 + $0xc8] sm:$0xff]
    %v2832 = vld [vmem:[%s45 + $0xd0] sm:$0xff]
    %v2833 = vld [vmem:[%s45 + $0xd8] sm:$0xff]
    %v2834 = vld [vmem:[%s45 + $0xe0] sm:$0xff]
    %v2835 = vld [vmem:[%s45 + $0xe8] sm:$0xff]
    %v2836 = vld [vmem:[%s45 + $0xf0] sm:$0xff]
    %v2837 = vld [vmem:[%s45 + $0xf8] sm:$0xff]
    %v2838 = vld [vmem:[%s45 + $0x100] sm:$0xff]
    %v2839 = vld [vmem:[%s45 + $0x108] sm:$0xff]
    %v2840 = vld [vmem:[%s45 + $0x110] sm:$0xff]
    %v2841 = vld [vmem:[%s45 + $0x118] sm:$0xff]
    %v2842 = vld [vmem:[%s45 + $0x120] sm:$0xff]
    %v2843 = vld [vmem:[%s45 + $0x128] sm:$0xff]
    %v2844 = vld [vmem:[%s45 + $0x130] sm:$0xff]
    %v2845 = vld [vmem:[%s45 + $0x138] sm:$0xff]
    %v2846 = vld [vmem:[%s45 + $0x140] sm:$0xff]
    %v2847 = vld [vmem:[%s45 + $0x148] sm:$0xff]
    %v2848 = vld [vmem:[%s45 + $0x150] sm:$0xff]
    %v2849 = vld [vmem:[%s45 + $0x158] sm:$0xff]
    %v2850 = vld [vmem:[%s45 + $0x160] sm:$0xff]
    %v2851 = vld [vmem:[%s45 + $0x168] sm:$0xff]
    %v2852 = vld [vmem:[%s45 + $0x170] sm:$0xff]
    %v2853 = vld [vmem:[%s45 + $0x178] sm:$0xff]
    %v2854 = vld [vmem:[%s47] sm:$0x3]
    %v2856 = vlaneseq
    %v2857 = vshrl.u32 %v2856, 7
    %v2858 = vsub.s32 0, %v2857
    %v2859 = vrot.slane %v2854, %v2858
    %v2860 = vlaneseq
    %v2861 = vshrl.u32 %v2860, 7
    %v2862 = vsub.s32 1, %v2861
    %v2863 = vrot.slane %v2854, %v2862
    %v2914 = vunpack.c.l.b16 %v2806
    %v2915 = vunpack.c.h.b16 %v2806
    %v2916 = vunpack.c.l.b16 %v2807
    %v2917 = vunpack.c.h.b16 %v2807
    %v2918 = vunpack.c.l.b16 %v2808
    %v2919 = vunpack.c.h.b16 %v2808
    %v2920 = vunpack.c.l.b16 %v2809
    %v2921 = vunpack.c.h.b16 %v2809
    %v2922 = vunpack.c.l.b16 %v2810
    %v2923 = vunpack.c.h.b16 %v2810
    %v2924 = vunpack.c.l.b16 %v2811
    %v2925 = vunpack.c.h.b16 %v2811
    %v2926 = vunpack.c.l.b16 %v2812
    %v2927 = vunpack.c.h.b16 %v2812
    %v2928 = vunpack.c.l.b16 %v2813
    %v2929 = vunpack.c.h.b16 %v2813
    %v2930 = vunpack.c.l.b16 %v2814
    %v2931 = vunpack.c.h.b16 %v2814
    %v2932 = vunpack.c.l.b16 %v2815
    %v2933 = vunpack.c.h.b16 %v2815
    %v2934 = vunpack.c.l.b16 %v2816
    %v2935 = vunpack.c.h.b16 %v2816
    %v2936 = vunpack.c.l.b16 %v2817
    %v2937 = vunpack.c.h.b16 %v2817
    %v2938 = vunpack.c.l.b16 %v2818
    %v2939 = vunpack.c.h.b16 %v2818
    %v2940 = vunpack.c.l.b16 %v2819
    %v2941 = vunpack.c.h.b16 %v2819
    %v2942 = vunpack.c.l.b16 %v2820
    %v2943 = vunpack.c.h.b16 %v2820
    %v2944 = vunpack.c.l.b16 %v2821
    %v2945 = vunpack.c.h.b16 %v2821
    %v2946 = vunpack.c.l.b16 %v2822
    %v2947 = vunpack.c.h.b16 %v2822
    %v2948 = vunpack.c.l.b16 %v2823
    %v2949 = vunpack.c.h.b16 %v2823
    %v2950 = vunpack.c.l.b16 %v2824
    %v2951 = vunpack.c.h.b16 %v2824
    %v2952 = vunpack.c.l.b16 %v2825
    %v2953 = vunpack.c.h.b16 %v2825
    %v2954 = vunpack.c.l.b16 %v2826
    %v2955 = vunpack.c.h.b16 %v2826
    %v2956 = vunpack.c.l.b16 %v2827
    %v2957 = vunpack.c.h.b16 %v2827
    %v2958 = vunpack.c.l.b16 %v2828
    %v2959 = vunpack.c.h.b16 %v2828
    %v2960 = vunpack.c.l.b16 %v2829
    %v2961 = vunpack.c.h.b16 %v2829
    %v2962 = vunpack.c.l.b16 %v2830
    %v2963 = vunpack.c.h.b16 %v2830
    %v2964 = vunpack.c.l.b16 %v2831
    %v2965 = vunpack.c.h.b16 %v2831
    %v2966 = vunpack.c.l.b16 %v2832
    %v2967 = vunpack.c.h.b16 %v2832
    %v2968 = vunpack.c.l.b16 %v2833
    %v2969 = vunpack.c.h.b16 %v2833
    %v2970 = vunpack.c.l.b16 %v2834
    %v2971 = vunpack.c.h.b16 %v2834
    %v2972 = vunpack.c.l.b16 %v2835
    %v2973 = vunpack.c.h.b16 %v2835
    %v2974 = vunpack.c.l.b16 %v2836
    %v2975 = vunpack.c.h.b16 %v2836
    %v2976 = vunpack.c.l.b16 %v2837
    %v2977 = vunpack.c.h.b16 %v2837
    %v2978 = vunpack.c.l.b16 %v2838
    %v2979 = vunpack.c.h.b16 %v2838
    %v2980 = vunpack.c.l.b16 %v2839
    %v2981 = vunpack.c.h.b16 %v2839
    %v2982 = vunpack.c.l.b16 %v2840
    %v2983 = vunpack.c.h.b16 %v2840
    %v2984 = vunpack.c.l.b16 %v2841
    %v2985 = vunpack.c.h.b16 %v2841
    %v2986 = vunpack.c.l.b16 %v2842
    %v2987 = vunpack.c.h.b16 %v2842
    %v2988 = vunpack.c.l.b16 %v2843
    %v2989 = vunpack.c.h.b16 %v2843
    %v2990 = vunpack.c.l.b16 %v2844
    %v2991 = vunpack.c.h.b16 %v2844
    %v2992 = vunpack.c.l.b16 %v2845
    %v2993 = vunpack.c.h.b16 %v2845
    %v2994 = vunpack.c.l.b16 %v2846
    %v2995 = vunpack.c.h.b16 %v2846
    %v2996 = vunpack.c.l.b16 %v2847
    %v2997 = vunpack.c.h.b16 %v2847
    %v2998 = vunpack.c.l.b16 %v2848
    %v2999 = vunpack.c.h.b16 %v2848
    %v3000 = vunpack.c.l.b16 %v2849
    %v3001 = vunpack.c.h.b16 %v2849
    %v3002 = vunpack.c.l.b16 %v2850
    %v3003 = vunpack.c.h.b16 %v2850
    %v3004 = vunpack.c.l.b16 %v2851
    %v3005 = vunpack.c.h.b16 %v2851
    %v3006 = vunpack.c.l.b16 %v2852
    %v3007 = vunpack.c.h.b16 %v2852
    %v3008 = vunpack.c.l.b16 %v2853
    %v3009 = vunpack.c.h.b16 %v2853
    %v3010 = vpack.c.b16 %v2916, %v2914
    %v3011 = vpack.c.b16 %v2917, %v2915
    %v3012 = vpack.c.b16 %v2920, %v2918
    %v3013 = vpack.c.b16 %v2921, %v2919
    %v3014 = vpack.c.b16 %v2924, %v2922
    %v3015 = vpack.c.b16 %v2925, %v2923
    %v3016 = vpack.c.b16 %v2928, %v2926
    %v3017 = vpack.c.b16 %v2929, %v2927
    %v3018 = vpack.c.b16 %v2932, %v2930
    %v3019 = vpack.c.b16 %v2933, %v2931
    %v3020 = vpack.c.b16 %v2936, %v2934
    %v3021 = vpack.c.b16 %v2937, %v2935
    %v3022 = vpack.c.b16 %v2940, %v2938
    %v3023 = vpack.c.b16 %v2941, %v2939
    %v3024 = vpack.c.b16 %v2944, %v2942
    %v3025 = vpack.c.b16 %v2945, %v2943
    %v3026 = vpack.c.b16 %v2948, %v2946
    %v3027 = vpack.c.b16 %v2949, %v2947
    %v3028 = vpack.c.b16 %v2952, %v2950
    %v3029 = vpack.c.b16 %v2953, %v2951
    %v3030 = vpack.c.b16 %v2956, %v2954
    %v3031 = vpack.c.b16 %v2957, %v2955
    %v3032 = vpack.c.b16 %v2960, %v2958
    %v3033 = vpack.c.b16 %v2961, %v2959
    %v3034 = vpack.c.b16 %v2964, %v2962
    %v3035 = vpack.c.b16 %v2965, %v2963
    %v3036 = vpack.c.b16 %v2968, %v2966
    %v3037 = vpack.c.b16 %v2969, %v2967
    %v3038 = vpack.c.b16 %v2972, %v2970
    %v3039 = vpack.c.b16 %v2973, %v2971
    %v3040 = vpack.c.b16 %v2976, %v2974
    %v3041 = vpack.c.b16 %v2977, %v2975
    %v3042 = vpack.c.b16 %v2980, %v2978
    %v3043 = vpack.c.b16 %v2981, %v2979
    %v3044 = vpack.c.b16 %v2984, %v2982
    %v3045 = vpack.c.b16 %v2985, %v2983
    %v3046 = vpack.c.b16 %v2988, %v2986
    %v3047 = vpack.c.b16 %v2989, %v2987
    %v3048 = vpack.c.b16 %v2992, %v2990
    %v3049 = vpack.c.b16 %v2993, %v2991
    %v3050 = vpack.c.b16 %v2996, %v2994
    %v3051 = vpack.c.b16 %v2997, %v2995
    %v3052 = vpack.c.b16 %v3000, %v2998
    %v3053 = vpack.c.b16 %v3001, %v2999
    %v3054 = vpack.c.b16 %v3004, %v3002
    %v3055 = vpack.c.b16 %v3005, %v3003
    %v3056 = vpack.c.b16 %v3008, %v3006
    %v3057 = vpack.c.b16 %v3009, %v3007
    %3106 = vmatprep.subr.bf16.mxu0 %v3025
    %3107 = vmatpush1.bf16.msra.mxu0 %v3024
    %3108 = vmatprep.subr.bf16.mxu0 %v3023
    %3109 = vmatpush1.bf16.msra.mxu0 %v3022
    %3110 = vmatprep.subr.bf16.mxu0 %v3021
    %3111 = vmatpush1.bf16.msra.mxu0 %v3020
    %3112 = vmatprep.subr.bf16.mxu0 %v3019
    %3113 = vmatpush1.bf16.msra.mxu0 %v3018
    %3114 = vmatprep.subr.bf16.mxu0 %v3017
    %3115 = vmatpush1.bf16.msra.mxu0 %v3016
    %3116 = vmatprep.subr.bf16.mxu0 %v3015
    %3117 = vmatpush1.bf16.msra.mxu0 %v3014
    %3118 = vmatprep.subr.bf16.mxu0 %v3013
    %3119 = vmatpush1.bf16.msra.mxu0 %v3012
    %3120 = vmatprep.subr.bf16.mxu0 %v3011
    %3121 = vmatpush1.bf16.msra.mxu0 %v3010
    %3122 = vmatprep.subr.bf16.mxu0 %v3041
    %3123 = vmatpush2.bf16.msra.mxu0 %v3040
    %3124 = vmatprep.subr.bf16.mxu0 %v3039
    %3125 = vmatpush2.bf16.msra.mxu0 %v3038
    %3126 = vmatprep.subr.bf16.mxu0 %v3037
    %3127 = vmatpush2.bf16.msra.mxu0 %v3036
    %3128 = vmatprep.subr.bf16.mxu0 %v3035
    %3129 = vmatpush2.bf16.msra.mxu0 %v3034
    %3130 = vmatprep.subr.bf16.mxu0 %v3033
    %3131 = vmatpush2.bf16.msra.mxu0 %v3032
    %3132 = vmatprep.subr.bf16.mxu0 %v3031
    %3133 = vmatpush2.bf16.msra.mxu0 %v3030
    %3134 = vmatprep.subr.bf16.mxu0 %v3029
    %3135 = vmatpush2.bf16.msra.mxu0 %v3028
    %3136 = vmatprep.subr.bf16.mxu0 %v3027
    %3137 = vmatpush2.bf16.msra.mxu0 %v3026
    %3138 = vmatprep.mubr.bf16.mxu0 %v2801
    %3139 = vmatmul.mubr.bf16.gmra.mxu0 %v2800
    %v3140 = vpop.f32.mrf.mxu0
    %v3141 = vadd.f32 %v2859, %v3140
    %v3142 = vpop.f32.mrf.mxu0
    %v3143 = vadd.f32 %v2863, %v3142
    %v3144 = vpop.f32.mrf.mxu0
    %v3145 = vadd.f32 %v2859, %v3144
    %v3146 = vpop.f32.mrf.mxu0
    %v3147 = vadd.f32 %v2863, %v3146
    %3148 = vmatprep.mubr.bf16.mxu0 %v2804
    %3149 = vmatmul.mubr.bf16.gmra.mxu0 %v2803
    %v3150 = vpop.f32.mrf.mxu0
    %v3151 = vadd.f32 %v2859, %v3150
    %v3152 = vpop.f32.mrf.mxu0
    %v3153 = vadd.f32 %v2863, %v3152
    %v3154 = vpop.f32.mrf.mxu0
    %v3155 = vpop.f32.mrf.mxu0
    %3156 = vdwg.mxu0
    %3157 = vmatprep.subr.bf16.mxu0 %v3057
    %3158 = vmatpush1.bf16.msra.mxu0 %v3056
    %3159 = vmatprep.subr.bf16.mxu0 %v3055
    %3160 = vmatpush1.bf16.msra.mxu0 %v3054
    %3161 = vmatprep.subr.bf16.mxu0 %v3053
    %3162 = vmatpush1.bf16.msra.mxu0 %v3052
    %3163 = vmatprep.subr.bf16.mxu0 %v3051
    %3164 = vmatpush1.bf16.msra.mxu0 %v3050
    %3165 = vmatprep.subr.bf16.mxu0 %v3049
    %3166 = vmatpush1.bf16.msra.mxu0 %v3048
    %3167 = vmatprep.subr.bf16.mxu0 %v3047
    %3168 = vmatpush1.bf16.msra.mxu0 %v3046
    %3169 = vmatprep.subr.bf16.mxu0 %v3045
    %3170 = vmatpush1.bf16.msra.mxu0 %v3044
    %3171 = vmatprep.subr.bf16.mxu0 %v3043
    %3172 = vmatpush1.bf16.msra.mxu0 %v3042
    %3173 = vmatprep.subr.bf16.mxu0 0
    %3174 = vmatpush2.bf16.msra.mxu0 0
    %3175 = vmatprep.subr.bf16.mxu0 0
    %3176 = vmatpush2.bf16.msra.mxu0 0
    %3177 = vmatprep.subr.bf16.mxu0 0
    %3178 = vmatpush2.bf16.msra.mxu0 0
    %3179 = vmatprep.subr.bf16.mxu0 0
    %3180 = vmatpush2.bf16.msra.mxu0 0
    %3181 = vmatprep.subr.bf16.mxu0 0
    %3182 = vmatpush2.bf16.msra.mxu0 0
    %3183 = vmatprep.subr.bf16.mxu0 0
    %3184 = vmatpush2.bf16.msra.mxu0 0
    %3185 = vmatprep.subr.bf16.mxu0 0
    %3186 = vmatpush2.bf16.msra.mxu0 0
    %3187 = vmatprep.subr.bf16.mxu0 0
    %3188 = vmatpush2.bf16.msra.mxu0 0
    %3189 = vmatprep.mubr.bf16.mxu0 0
    %3190 = vmatmul.mubr.bf16.gmra.mxu0 %v2802
    %v3191 = vpop.f32.mrf.mxu0
    %v3192 = vadd.f32 %v3141, %v3191
    %v3193 = vpop.f32.mrf.mxu0
    %v3194 = vadd.f32 %v3143, %v3193
    %v3195 = vpop.f32.mrf.mxu0
    %v3196 = vadd.f32 %v3145, %v3195
    %v3197 = vpop.f32.mrf.mxu0
    %v3198 = vadd.f32 %v3147, %v3197
    %3199 = vmatprep.mubr.bf16.mxu0 0
    %3200 = vmatmul.mubr.bf16.gmra.mxu0 %v2805
    %v3201 = vpop.f32.mrf.mxu0
    %v3202 = vadd.f32 %v3151, %v3201
    %v3203 = vpop.f32.mrf.mxu0
    %v3204 = vadd.f32 %v3153, %v3203
    %v3205 = vpop.f32.mrf.mxu0
    %v3206 = vpop.f32.mrf.mxu0
    %3207 = vdwg.mxu0
    %v3208 = vmax.f32 %v3192, 0.0
    %v3209 = vmax.f32 %v3194, 0.0
    %v3210 = vmax.f32 %v3196, 0.0
    %v3211 = vmax.f32 %v3198, 0.0
    %v3212 = vmax.f32 %v3202, 0.0
    %v3213 = vmax.f32 %v3204, 0.0
    %v3214 = vpack.c.bf16 %v3210, %v3208
    %v3215 = vpack.c.bf16 %v3211, %v3209
    %v3216 = vpack.c.bf16 %v3212, %v3212
    %v3217 = vpack.c.bf16 %v3213, %v3213
    %v3218 = vld [vmem:[%s49] sm:$0xff]
    %v3219 = vld [vmem:[%s49 + $0x8] sm:$0xf]
    %v3220 = vld [vmem:[%s49 + $0xc] sm:$0xff]
    %v3221 = vld [vmem:[%s49 + $0x14] sm:$0xf]
    %v3222 = vld [vmem:[%s49 + $0x18] sm:$0xff]
    %v3223 = vld [vmem:[%s49 + $0x20] sm:$0xf]
    %v3224 = vld [vmem:[%s49 + $0x24] sm:$0xff]
    %v3225 = vld [vmem:[%s49 + $0x2c] sm:$0xf]
    %v3226 = vld [vmem:[%s49 + $0x30] sm:$0xff]
    %v3227 = vld [vmem:[%s49 + $0x38] sm:$0xf]
    %v3228 = vld [vmem:[%s49 + $0x3c] sm:$0xff]
    %v3229 = vld [vmem:[%s49 + $0x44] sm:$0xf]
    %v3230 = vld [vmem:[%s49 + $0x48] sm:$0xff]
    %v3231 = vld [vmem:[%s49 + $0x50] sm:$0xf]
    %v3232 = vld [vmem:[%s49 + $0x54] sm:$0xff]
    %v3233 = vld [vmem:[%s49 + $0x5c] sm:$0xf]
    %v3234 = vld [vmem:[%s49 + $0x60] sm:$0xff]
    %v3235 = vld [vmem:[%s49 + $0x68] sm:$0xf]
    %v3236 = vld [vmem:[%s49 + $0x6c] sm:$0xff]
    %v3237 = vld [vmem:[%s49 + $0x74] sm:$0xf]
    %v3238 = vld [vmem:[%s49 + $0x78] sm:$0xff]
    %v3239 = vld [vmem:[%s49 + $0x80] sm:$0xf]
    %v3240 = vld [vmem:[%s49 + $0x84] sm:$0xff]
    %v3241 = vld [vmem:[%s49 + $0x8c] sm:$0xf]
    %v3242 = vld [vmem:[%s49 + $0x90] sm:$0xff]
    %v3243 = vld [vmem:[%s49 + $0x98] sm:$0xf]
    %v3244 = vld [vmem:[%s49 + $0x9c] sm:$0xff]
    %v3245 = vld [vmem:[%s49 + $0xa4] sm:$0xf]
    %v3246 = vld [vmem:[%s49 + $0xa8] sm:$0xff]
    %v3247 = vld [vmem:[%s49 + $0xb0] sm:$0xf]
    %v3248 = vld [vmem:[%s49 + $0xb4] sm:$0xff]
    %v3249 = vld [vmem:[%s49 + $0xbc] sm:$0xf]
    %v3250 = vld [vmem:[%s49 + $0xc0] sm:$0xff]
    %v3251 = vld [vmem:[%s49 + $0xc8] sm:$0xf]
    %v3252 = vld [vmem:[%s49 + $0xcc] sm:$0xff]
    %v3253 = vld [vmem:[%s49 + $0xd4] sm:$0xf]
    %v3254 = vld [vmem:[%s49 + $0xd8] sm:$0xff]
    %v3255 = vld [vmem:[%s49 + $0xe0] sm:$0xf]
    %v3256 = vld [vmem:[%s49 + $0xe4] sm:$0xff]
    %v3257 = vld [vmem:[%s49 + $0xec] sm:$0xf]
    %v3258 = vld [vmem:[%s49 + $0xf0] sm:$0xff]
    %v3259 = vld [vmem:[%s49 + $0xf8] sm:$0xf]
    %v3260 = vld [vmem:[%s49 + $0xfc] sm:$0xff]
    %v3261 = vld [vmem:[%s49 + $0x104] sm:$0xf]
    %v3262 = vld [vmem:[%s49 + $0x108] sm:$0xff]
    %v3263 = vld [vmem:[%s49 + $0x110] sm:$0xf]
    %v3264 = vld [vmem:[%s49 + $0x114] sm:$0xff]
    %v3265 = vld [vmem:[%s49 + $0x11c] sm:$0xf]
    %v3266 = vld [vmem:[%s49 + $0x120] sm:$0xff]
    %v3267 = vld [vmem:[%s49 + $0x128] sm:$0xf]
    %v3268 = vld [vmem:[%s49 + $0x12c] sm:$0xff]
    %v3269 = vld [vmem:[%s49 + $0x134] sm:$0xf]
    %v3270 = vld [vmem:[%s49 + $0x138] sm:$0xff]
    %v3271 = vld [vmem:[%s49 + $0x140] sm:$0xf]
    %v3272 = vld [vmem:[%s49 + $0x144] sm:$0xff]
    %v3273 = vld [vmem:[%s49 + $0x14c] sm:$0xf]
    %v3274 = vld [vmem:[%s49 + $0x150] sm:$0xff]
    %v3275 = vld [vmem:[%s49 + $0x158] sm:$0xf]
    %v3276 = vld [vmem:[%s49 + $0x15c] sm:$0xff]
    %v3277 = vld [vmem:[%s49 + $0x164] sm:$0xf]
    %v3278 = vld [vmem:[%s49 + $0x168] sm:$0xff]
    %v3279 = vld [vmem:[%s49 + $0x170] sm:$0xf]
    %v3280 = vld [vmem:[%s49 + $0x174] sm:$0xff]
    %v3281 = vld [vmem:[%s49 + $0x17c] sm:$0xf]
    %v3282 = vld [vmem:[%s51] sm:$0x7]
    %v3284 = vlaneseq
    %v3285 = vshrl.u32 %v3284, 7
    %v3286 = vsub.s32 0, %v3285
    %v3287 = vrot.slane %v3282, %v3286
    %v3288 = vlaneseq
    %v3289 = vshrl.u32 %v3288, 7
    %v3290 = vsub.s32 1, %v3289
    %v3291 = vrot.slane %v3282, %v3290
    %v3292 = vlaneseq
    %v3293 = vshrl.u32 %v3292, 7
    %v3294 = vsub.s32 2, %v3293
    %v3295 = vrot.slane %v3282, %v3294
    %v3363 = vunpack.c.l.b16 %v3218
    %v3364 = vunpack.c.h.b16 %v3218
    %v3365 = vunpack.c.l.b16 %v3219
    %v3366 = vunpack.c.l.b16 %v3220
    %v3367 = vunpack.c.h.b16 %v3220
    %v3368 = vunpack.c.l.b16 %v3221
    %v3369 = vunpack.c.l.b16 %v3222
    %v3370 = vunpack.c.h.b16 %v3222
    %v3371 = vunpack.c.l.b16 %v3223
    %v3372 = vunpack.c.l.b16 %v3224
    %v3373 = vunpack.c.h.b16 %v3224
    %v3374 = vunpack.c.l.b16 %v3225
    %v3375 = vunpack.c.l.b16 %v3226
    %v3376 = vunpack.c.h.b16 %v3226
    %v3377 = vunpack.c.l.b16 %v3227
    %v3378 = vunpack.c.l.b16 %v3228
    %v3379 = vunpack.c.h.b16 %v3228
    %v3380 = vunpack.c.l.b16 %v3229
    %v3381 = vunpack.c.l.b16 %v3230
    %v3382 = vunpack.c.h.b16 %v3230
    %v3383 = vunpack.c.l.b16 %v3231
    %v3384 = vunpack.c.l.b16 %v3232
    %v3385 = vunpack.c.h.b16 %v3232
    %v3386 = vunpack.c.l.b16 %v3233
    %v3387 = vunpack.c.l.b16 %v3234
    %v3388 = vunpack.c.h.b16 %v3234
    %v3389 = vunpack.c.l.b16 %v3235
    %v3390 = vunpack.c.l.b16 %v3236
    %v3391 = vunpack.c.h.b16 %v3236
    %v3392 = vunpack.c.l.b16 %v3237
    %v3393 = vunpack.c.l.b16 %v3238
    %v3394 = vunpack.c.h.b16 %v3238
    %v3395 = vunpack.c.l.b16 %v3239
    %v3396 = vunpack.c.l.b16 %v3240
    %v3397 = vunpack.c.h.b16 %v3240
    %v3398 = vunpack.c.l.b16 %v3241
    %v3399 = vunpack.c.l.b16 %v3242
    %v3400 = vunpack.c.h.b16 %v3242
    %v3401 = vunpack.c.l.b16 %v3243
    %v3402 = vunpack.c.l.b16 %v3244
    %v3403 = vunpack.c.h.b16 %v3244
    %v3404 = vunpack.c.l.b16 %v3245
    %v3405 = vunpack.c.l.b16 %v3246
    %v3406 = vunpack.c.h.b16 %v3246
    %v3407 = vunpack.c.l.b16 %v3247
    %v3408 = vunpack.c.l.b16 %v3248
    %v3409 = vunpack.c.h.b16 %v3248
    %v3410 = vunpack.c.l.b16 %v3249
    %v3411 = vunpack.c.l.b16 %v3250
    %v3412 = vunpack.c.h.b16 %v3250
    %v3413 = vunpack.c.l.b16 %v3251
    %v3414 = vunpack.c.l.b16 %v3252
    %v3415 = vunpack.c.h.b16 %v3252
    %v3416 = vunpack.c.l.b16 %v3253
    %v3417 = vunpack.c.l.b16 %v3254
    %v3418 = vunpack.c.h.b16 %v3254
    %v3419 = vunpack.c.l.b16 %v3255
    %v3420 = vunpack.c.l.b16 %v3256
    %v3421 = vunpack.c.h.b16 %v3256
    %v3422 = vunpack.c.l.b16 %v3257
    %v3423 = vunpack.c.l.b16 %v3258
    %v3424 = vunpack.c.h.b16 %v3258
    %v3425 = vunpack.c.l.b16 %v3259
    %v3426 = vunpack.c.l.b16 %v3260
    %v3427 = vunpack.c.h.b16 %v3260
    %v3428 = vunpack.c.l.b16 %v3261
    %v3429 = vunpack.c.l.b16 %v3262
    %v3430 = vunpack.c.h.b16 %v3262
    %v3431 = vunpack.c.l.b16 %v3263
    %v3432 = vunpack.c.l.b16 %v3264
    %v3433 = vunpack.c.h.b16 %v3264
    %v3434 = vunpack.c.l.b16 %v3265
    %v3435 = vunpack.c.l.b16 %v3266
    %v3436 = vunpack.c.h.b16 %v3266
    %v3437 = vunpack.c.l.b16 %v3267
    %v3438 = vunpack.c.l.b16 %v3268
    %v3439 = vunpack.c.h.b16 %v3268
    %v3440 = vunpack.c.l.b16 %v3269
    %v3441 = vunpack.c.l.b16 %v3270
    %v3442 = vunpack.c.h.b16 %v3270
    %v3443 = vunpack.c.l.b16 %v3271
    %v3444 = vunpack.c.l.b16 %v3272
    %v3445 = vunpack.c.h.b16 %v3272
    %v3446 = vunpack.c.l.b16 %v3273
    %v3447 = vunpack.c.l.b16 %v3274
    %v3448 = vunpack.c.h.b16 %v3274
    %v3449 = vunpack.c.l.b16 %v3275
    %v3450 = vunpack.c.l.b16 %v3276
    %v3451 = vunpack.c.h.b16 %v3276
    %v3452 = vunpack.c.l.b16 %v3277
    %v3453 = vunpack.c.l.b16 %v3278
    %v3454 = vunpack.c.h.b16 %v3278
    %v3455 = vunpack.c.l.b16 %v3279
    %v3456 = vunpack.c.l.b16 %v3280
    %v3457 = vunpack.c.h.b16 %v3280
    %v3458 = vunpack.c.l.b16 %v3281
    %v3459 = vpack.c.b16 %v3366, %v3363
    %v3460 = vpack.c.b16 %v3367, %v3364
    %v3461 = vpack.c.b16 %v3368, %v3365
    %v3462 = vpack.c.b16 %v3372, %v3369
    %v3463 = vpack.c.b16 %v3373, %v3370
    %v3464 = vpack.c.b16 %v3374, %v3371
    %v3465 = vpack.c.b16 %v3378, %v3375
    %v3466 = vpack.c.b16 %v3379, %v3376
    %v3467 = vpack.c.b16 %v3380, %v3377
    %v3468 = vpack.c.b16 %v3384, %v3381
    %v3469 = vpack.c.b16 %v3385, %v3382
    %v3470 = vpack.c.b16 %v3386, %v3383
    %v3471 = vpack.c.b16 %v3390, %v3387
    %v3472 = vpack.c.b16 %v3391, %v3388
    %v3473 = vpack.c.b16 %v3392, %v3389
    %v3474 = vpack.c.b16 %v3396, %v3393
    %v3475 = vpack.c.b16 %v3397, %v3394
    %v3476 = vpack.c.b16 %v3398, %v3395
    %v3477 = vpack.c.b16 %v3402, %v3399
    %v3478 = vpack.c.b16 %v3403, %v3400
    %v3479 = vpack.c.b16 %v3404, %v3401
    %v3480 = vpack.c.b16 %v3408, %v3405
    %v3481 = vpack.c.b16 %v3409, %v3406
    %v3482 = vpack.c.b16 %v3410, %v3407
    %v3483 = vpack.c.b16 %v3414, %v3411
    %v3484 = vpack.c.b16 %v3415, %v3412
    %v3485 = vpack.c.b16 %v3416, %v3413
    %v3486 = vpack.c.b16 %v3420, %v3417
    %v3487 = vpack.c.b16 %v3421, %v3418
    %v3488 = vpack.c.b16 %v3422, %v3419
    %v3489 = vpack.c.b16 %v3426, %v3423
    %v3490 = vpack.c.b16 %v3427, %v3424
    %v3491 = vpack.c.b16 %v3428, %v3425
    %v3492 = vpack.c.b16 %v3432, %v3429
    %v3493 = vpack.c.b16 %v3433, %v3430
    %v3494 = vpack.c.b16 %v3434, %v3431
    %v3495 = vpack.c.b16 %v3438, %v3435
    %v3496 = vpack.c.b16 %v3439, %v3436
    %v3497 = vpack.c.b16 %v3440, %v3437
    %v3498 = vpack.c.b16 %v3444, %v3441
    %v3499 = vpack.c.b16 %v3445, %v3442
    %v3500 = vpack.c.b16 %v3446, %v3443
    %v3501 = vpack.c.b16 %v3450, %v3447
    %v3502 = vpack.c.b16 %v3451, %v3448
    %v3503 = vpack.c.b16 %v3452, %v3449
    %v3504 = vpack.c.b16 %v3456, %v3453
    %v3505 = vpack.c.b16 %v3457, %v3454
    %v3506 = vpack.c.b16 %v3458, %v3455
    %3555 = vmatprep.subr.bf16.mxu0 %v3481
    %3556 = vmatpush1.bf16.msra.mxu0 %v3480
    %3557 = vmatprep.subr.bf16.mxu0 %v3478
    %3558 = vmatpush1.bf16.msra.mxu0 %v3477
    %3559 = vmatprep.subr.bf16.mxu0 %v3475
    %3560 = vmatpush1.bf16.msra.mxu0 %v3474
    %3561 = vmatprep.subr.bf16.mxu0 %v3472
    %3562 = vmatpush1.bf16.msra.mxu0 %v3471
    %3563 = vmatprep.subr.bf16.mxu0 %v3469
    %3564 = vmatpush1.bf16.msra.mxu0 %v3468
    %3565 = vmatprep.subr.bf16.mxu0 %v3466
    %3566 = vmatpush1.bf16.msra.mxu0 %v3465
    %3567 = vmatprep.subr.bf16.mxu0 %v3463
    %3568 = vmatpush1.bf16.msra.mxu0 %v3462
    %3569 = vmatprep.subr.bf16.mxu0 %v3460
    %3570 = vmatpush1.bf16.msra.mxu0 %v3459
    %3571 = vmatprep.subr.bf16.mxu0 %v3505
    %3572 = vmatpush2.bf16.msra.mxu0 %v3504
    %3573 = vmatprep.subr.bf16.mxu0 %v3502
    %3574 = vmatpush2.bf16.msra.mxu0 %v3501
    %3575 = vmatprep.subr.bf16.mxu0 %v3499
    %3576 = vmatpush2.bf16.msra.mxu0 %v3498
    %3577 = vmatprep.subr.bf16.mxu0 %v3496
    %3578 = vmatpush2.bf16.msra.mxu0 %v3495
    %3579 = vmatprep.subr.bf16.mxu0 %v3493
    %3580 = vmatpush2.bf16.msra.mxu0 %v3492
    %3581 = vmatprep.subr.bf16.mxu0 %v3490
    %3582 = vmatpush2.bf16.msra.mxu0 %v3489
    %3583 = vmatprep.subr.bf16.mxu0 %v3487
    %3584 = vmatpush2.bf16.msra.mxu0 %v3486
    %3585 = vmatprep.subr.bf16.mxu0 %v3484
    %3586 = vmatpush2.bf16.msra.mxu0 %v3483
    %3587 = vmatprep.mubr.bf16.mxu0 %v3215
    %3588 = vmatmul.mubr.bf16.gmra.mxu0 %v3214
    %v3589 = vpop.f32.mrf.mxu0
    %v3590 = vadd.f32 %v3287, %v3589
    %v3591 = vpop.f32.mrf.mxu0
    %v3592 = vadd.f32 %v3291, %v3591
    %v3593 = vpop.f32.mrf.mxu0
    %v3594 = vadd.f32 %v3287, %v3593
    %v3595 = vpop.f32.mrf.mxu0
    %v3596 = vadd.f32 %v3291, %v3595
    %3597 = vmatprep.mubr.bf16.mxu0 %v3217
    %3598 = vmatmul.mubr.bf16.gmra.mxu0 %v3216
    %v3599 = vpop.f32.mrf.mxu0
    %v3600 = vadd.f32 %v3287, %v3599
    %v3601 = vpop.f32.mrf.mxu0
    %v3602 = vadd.f32 %v3291, %v3601
    %v3603 = vpop.f32.mrf.mxu0
    %v3604 = vpop.f32.mrf.mxu0
    %3605 = vdwg.mxu0
    %3606 = vmatprep.subr.bf16.mxu0 0
    %3607 = vmatpush1.bf16.msra.mxu0 %v3482
    %3608 = vmatprep.subr.bf16.mxu0 0
    %3609 = vmatpush1.bf16.msra.mxu0 %v3479
    %3610 = vmatprep.subr.bf16.mxu0 0
    %3611 = vmatpush1.bf16.msra.mxu0 %v3476
    %3612 = vmatprep.subr.bf16.mxu0 0
    %3613 = vmatpush1.bf16.msra.mxu0 %v3473
    %3614 = vmatprep.subr.bf16.mxu0 0
    %3615 = vmatpush1.bf16.msra.mxu0 %v3470
    %3616 = vmatprep.subr.bf16.mxu0 0
    %3617 = vmatpush1.bf16.msra.mxu0 %v3467
    %3618 = vmatprep.subr.bf16.mxu0 0
    %3619 = vmatpush1.bf16.msra.mxu0 %v3464
    %3620 = vmatprep.subr.bf16.mxu0 0
    %3621 = vmatpush1.bf16.msra.mxu0 %v3461
    %3622 = vmatprep.subr.bf16.mxu0 0
    %3623 = vmatpush2.bf16.msra.mxu0 %v3506
    %3624 = vmatprep.subr.bf16.mxu0 0
    %3625 = vmatpush2.bf16.msra.mxu0 %v3503
    %3626 = vmatprep.subr.bf16.mxu0 0
    %3627 = vmatpush2.bf16.msra.mxu0 %v3500
    %3628 = vmatprep.subr.bf16.mxu0 0
    %3629 = vmatpush2.bf16.msra.mxu0 %v3497
    %3630 = vmatprep.subr.bf16.mxu0 0
    %3631 = vmatpush2.bf16.msra.mxu0 %v3494
    %3632 = vmatprep.subr.bf16.mxu0 0
    %3633 = vmatpush2.bf16.msra.mxu0 %v3491
    %3634 = vmatprep.subr.bf16.mxu0 0
    %3635 = vmatpush2.bf16.msra.mxu0 %v3488
    %3636 = vmatprep.subr.bf16.mxu0 0
    %3637 = vmatpush2.bf16.msra.mxu0 %v3485
    %3638 = vmatprep.mubr.bf16.mxu0 %v3215
    %3639 = vmatmul.mubr.bf16.gmra.mxu0 %v3214
    %v3640 = vpop.f32.mrf.mxu0
    %v3641 = vadd.f32 %v3295, %v3640
    %v3642 = vpop.f32.mrf.mxu0
    %v3643 = vpop.f32.mrf.mxu0
    %v3644 = vadd.f32 %v3295, %v3643
    %v3645 = vpop.f32.mrf.mxu0
    %3646 = vmatprep.mubr.bf16.mxu0 %v3217
    %3647 = vmatmul.mubr.bf16.gmra.mxu0 %v3216
    %v3648 = vpop.f32.mrf.mxu0
    %v3649 = vadd.f32 %v3295, %v3648
    %v3650 = vpop.f32.mrf.mxu0
    %v3651 = vpop.f32.mrf.mxu0
    %v3652 = vpop.f32.mrf.mxu0
    %3653 = vdwg.mxu0
    %v3654 = vmax.f32 %v3590, 0.0
    %v3655 = vmax.f32 %v3592, 0.0
    %v3656 = vmax.f32 %v3641, 0.0
    %v3657 = vmax.f32 %v3594, 0.0
    %v3658 = vmax.f32 %v3596, 0.0
    %v3659 = vmax.f32 %v3644, 0.0
    %v3660 = vmax.f32 %v3600, 0.0
    %v3661 = vmax.f32 %v3602, 0.0
    %v3662 = vmax.f32 %v3649, 0.0
    %v3663 = vadd.f32 %v2791, %v3654
    %v3664 = vadd.f32 %v2792, %v3655
    %v3665 = vadd.f32 %v2793, %v3656
    %v3666 = vadd.f32 %v2794, %v3657
    %v3667 = vadd.f32 %v2795, %v3658
    %v3668 = vadd.f32 %v2796, %v3659
    %v3669 = vadd.f32 %v2797, %v3660
    %v3670 = vadd.f32 %v2798, %v3661
    %v3671 = vadd.f32 %v2799, %v3662
    %v3672 = vpack.c.bf16 %v3666, %v3663
    %v3673 = vpack.c.bf16 %v3667, %v3664
    %v3674 = vpack.c.bf16 %v3668, %v3665
    %v3675 = vpack.c.bf16 %v3669, %v3669
    %v3676 = vpack.c.bf16 %v3670, %v3670
    %v3677 = vpack.c.bf16 %v3671, %v3671
    %v3678 = vld [vmem:[%s53] sm:$0xff]
    %v3679 = vld [vmem:[%s53 + $0x8] sm:$0xff]
    %v3680 = vld [vmem:[%s53 + $0x10] sm:$0xff]
    %v3681 = vld [vmem:[%s53 + $0x18] sm:$0xff]
    %v3682 = vld [vmem:[%s53 + $0x20] sm:$0xff]
    %v3683 = vld [vmem:[%s53 + $0x28] sm:$0xff]
    %v3684 = vld [vmem:[%s53 + $0x30] sm:$0xff]
    %v3685 = vld [vmem:[%s53 + $0x38] sm:$0xff]
    %v3686 = vld [vmem:[%s53 + $0x40] sm:$0xff]
    %v3687 = vld [vmem:[%s53 + $0x48] sm:$0xff]
    %v3688 = vld [vmem:[%s53 + $0x50] sm:$0xff]
    %v3689 = vld [vmem:[%s53 + $0x58] sm:$0xff]
    %v3690 = vld [vmem:[%s53 + $0x60] sm:$0xff]
    %v3691 = vld [vmem:[%s53 + $0x68] sm:$0xff]
    %v3692 = vld [vmem:[%s53 + $0x70] sm:$0xff]
    %v3693 = vld [vmem:[%s53 + $0x78] sm:$0xff]
    %v3694 = vld [vmem:[%s53 + $0x80] sm:$0xff]
    %v3695 = vld [vmem:[%s53 + $0x88] sm:$0xff]
    %v3696 = vld [vmem:[%s53 + $0x90] sm:$0xff]
    %v3697 = vld [vmem:[%s53 + $0x98] sm:$0xff]
    %v3698 = vld [vmem:[%s53 + $0xa0] sm:$0xff]
    %v3699 = vld [vmem:[%s53 + $0xa8] sm:$0xff]
    %v3700 = vld [vmem:[%s53 + $0xb0] sm:$0xff]
    %v3701 = vld [vmem:[%s53 + $0xb8] sm:$0xff]
    %v3702 = vld [vmem:[%s53 + $0xc0] sm:$0xff]
    %v3703 = vld [vmem:[%s53 + $0xc8] sm:$0xff]
    %v3704 = vld [vmem:[%s53 + $0xd0] sm:$0xff]
    %v3705 = vld [vmem:[%s53 + $0xd8] sm:$0xff]
    %v3706 = vld [vmem:[%s53 + $0xe0] sm:$0xff]
    %v3707 = vld [vmem:[%s53 + $0xe8] sm:$0xff]
    %v3708 = vld [vmem:[%s53 + $0xf0] sm:$0xff]
    %v3709 = vld [vmem:[%s53 + $0xf8] sm:$0xff]
    %v3710 = vld [vmem:[%s53 + $0x100] sm:$0xff]
    %v3711 = vld [vmem:[%s53 + $0x108] sm:$0xff]
    %v3712 = vld [vmem:[%s53 + $0x110] sm:$0xff]
    %v3713 = vld [vmem:[%s53 + $0x118] sm:$0xff]
    %v3714 = vld [vmem:[%s53 + $0x120] sm:$0xff]
    %v3715 = vld [vmem:[%s53 + $0x128] sm:$0xff]
    %v3716 = vld [vmem:[%s53 + $0x130] sm:$0xff]
    %v3717 = vld [vmem:[%s53 + $0x138] sm:$0xff]
    %v3718 = vld [vmem:[%s53 + $0x140] sm:$0xff]
    %v3719 = vld [vmem:[%s53 + $0x148] sm:$0xff]
    %v3720 = vld [vmem:[%s53 + $0x150] sm:$0xff]
    %v3721 = vld [vmem:[%s53 + $0x158] sm:$0xff]
    %v3722 = vld [vmem:[%s53 + $0x160] sm:$0xff]
    %v3723 = vld [vmem:[%s53 + $0x168] sm:$0xff]
    %v3724 = vld [vmem:[%s53 + $0x170] sm:$0xff]
    %v3725 = vld [vmem:[%s53 + $0x178] sm:$0xff]
    %v3726 = vld [vmem:[%s55] sm:$0x3]
    %v3728 = vlaneseq
    %v3729 = vshrl.u32 %v3728, 7
    %v3730 = vsub.s32 0, %v3729
    %v3731 = vrot.slane %v3726, %v3730
    %v3732 = vlaneseq
    %v3733 = vshrl.u32 %v3732, 7
    %v3734 = vsub.s32 1, %v3733
    %v3735 = vrot.slane %v3726, %v3734
    %v3786 = vunpack.c.l.b16 %v3678
    %v3787 = vunpack.c.h.b16 %v3678
    %v3788 = vunpack.c.l.b16 %v3679
    %v3789 = vunpack.c.h.b16 %v3679
    %v3790 = vunpack.c.l.b16 %v3680
    %v3791 = vunpack.c.h.b16 %v3680
    %v3792 = vunpack.c.l.b16 %v3681
    %v3793 = vunpack.c.h.b16 %v3681
    %v3794 = vunpack.c.l.b16 %v3682
    %v3795 = vunpack.c.h.b16 %v3682
    %v3796 = vunpack.c.l.b16 %v3683
    %v3797 = vunpack.c.h.b16 %v3683
    %v3798 = vunpack.c.l.b16 %v3684
    %v3799 = vunpack.c.h.b16 %v3684
    %v3800 = vunpack.c.l.b16 %v3685
    %v3801 = vunpack.c.h.b16 %v3685
    %v3802 = vunpack.c.l.b16 %v3686
    %v3803 = vunpack.c.h.b16 %v3686
    %v3804 = vunpack.c.l.b16 %v3687
    %v3805 = vunpack.c.h.b16 %v3687
    %v3806 = vunpack.c.l.b16 %v3688
    %v3807 = vunpack.c.h.b16 %v3688
    %v3808 = vunpack.c.l.b16 %v3689
    %v3809 = vunpack.c.h.b16 %v3689
    %v3810 = vunpack.c.l.b16 %v3690
    %v3811 = vunpack.c.h.b16 %v3690
    %v3812 = vunpack.c.l.b16 %v3691
    %v3813 = vunpack.c.h.b16 %v3691
    %v3814 = vunpack.c.l.b16 %v3692
    %v3815 = vunpack.c.h.b16 %v3692
    %v3816 = vunpack.c.l.b16 %v3693
    %v3817 = vunpack.c.h.b16 %v3693
    %v3818 = vunpack.c.l.b16 %v3694
    %v3819 = vunpack.c.h.b16 %v3694
    %v3820 = vunpack.c.l.b16 %v3695
    %v3821 = vunpack.c.h.b16 %v3695
    %v3822 = vunpack.c.l.b16 %v3696
    %v3823 = vunpack.c.h.b16 %v3696
    %v3824 = vunpack.c.l.b16 %v3697
    %v3825 = vunpack.c.h.b16 %v3697
    %v3826 = vunpack.c.l.b16 %v3698
    %v3827 = vunpack.c.h.b16 %v3698
    %v3828 = vunpack.c.l.b16 %v3699
    %v3829 = vunpack.c.h.b16 %v3699
    %v3830 = vunpack.c.l.b16 %v3700
    %v3831 = vunpack.c.h.b16 %v3700
    %v3832 = vunpack.c.l.b16 %v3701
    %v3833 = vunpack.c.h.b16 %v3701
    %v3834 = vunpack.c.l.b16 %v3702
    %v3835 = vunpack.c.h.b16 %v3702
    %v3836 = vunpack.c.l.b16 %v3703
    %v3837 = vunpack.c.h.b16 %v3703
    %v3838 = vunpack.c.l.b16 %v3704
    %v3839 = vunpack.c.h.b16 %v3704
    %v3840 = vunpack.c.l.b16 %v3705
    %v3841 = vunpack.c.h.b16 %v3705
    %v3842 = vunpack.c.l.b16 %v3706
    %v3843 = vunpack.c.h.b16 %v3706
    %v3844 = vunpack.c.l.b16 %v3707
    %v3845 = vunpack.c.h.b16 %v3707
    %v3846 = vunpack.c.l.b16 %v3708
    %v3847 = vunpack.c.h.b16 %v3708
    %v3848 = vunpack.c.l.b16 %v3709
    %v3849 = vunpack.c.h.b16 %v3709
    %v3850 = vunpack.c.l.b16 %v3710
    %v3851 = vunpack.c.h.b16 %v3710
    %v3852 = vunpack.c.l.b16 %v3711
    %v3853 = vunpack.c.h.b16 %v3711
    %v3854 = vunpack.c.l.b16 %v3712
    %v3855 = vunpack.c.h.b16 %v3712
    %v3856 = vunpack.c.l.b16 %v3713
    %v3857 = vunpack.c.h.b16 %v3713
    %v3858 = vunpack.c.l.b16 %v3714
    %v3859 = vunpack.c.h.b16 %v3714
    %v3860 = vunpack.c.l.b16 %v3715
    %v3861 = vunpack.c.h.b16 %v3715
    %v3862 = vunpack.c.l.b16 %v3716
    %v3863 = vunpack.c.h.b16 %v3716
    %v3864 = vunpack.c.l.b16 %v3717
    %v3865 = vunpack.c.h.b16 %v3717
    %v3866 = vunpack.c.l.b16 %v3718
    %v3867 = vunpack.c.h.b16 %v3718
    %v3868 = vunpack.c.l.b16 %v3719
    %v3869 = vunpack.c.h.b16 %v3719
    %v3870 = vunpack.c.l.b16 %v3720
    %v3871 = vunpack.c.h.b16 %v3720
    %v3872 = vunpack.c.l.b16 %v3721
    %v3873 = vunpack.c.h.b16 %v3721
    %v3874 = vunpack.c.l.b16 %v3722
    %v3875 = vunpack.c.h.b16 %v3722
    %v3876 = vunpack.c.l.b16 %v3723
    %v3877 = vunpack.c.h.b16 %v3723
    %v3878 = vunpack.c.l.b16 %v3724
    %v3879 = vunpack.c.h.b16 %v3724
    %v3880 = vunpack.c.l.b16 %v3725
    %v3881 = vunpack.c.h.b16 %v3725
    %v3882 = vpack.c.b16 %v3788, %v3786
    %v3883 = vpack.c.b16 %v3789, %v3787
    %v3884 = vpack.c.b16 %v3792, %v3790
    %v3885 = vpack.c.b16 %v3793, %v3791
    %v3886 = vpack.c.b16 %v3796, %v3794
    %v3887 = vpack.c.b16 %v3797, %v3795
    %v3888 = vpack.c.b16 %v3800, %v3798
    %v3889 = vpack.c.b16 %v3801, %v3799
    %v3890 = vpack.c.b16 %v3804, %v3802
    %v3891 = vpack.c.b16 %v3805, %v3803
    %v3892 = vpack.c.b16 %v3808, %v3806
    %v3893 = vpack.c.b16 %v3809, %v3807
    %v3894 = vpack.c.b16 %v3812, %v3810
    %v3895 = vpack.c.b16 %v3813, %v3811
    %v3896 = vpack.c.b16 %v3816, %v3814
    %v3897 = vpack.c.b16 %v3817, %v3815
    %v3898 = vpack.c.b16 %v3820, %v3818
    %v3899 = vpack.c.b16 %v3821, %v3819
    %v3900 = vpack.c.b16 %v3824, %v3822
    %v3901 = vpack.c.b16 %v3825, %v3823
    %v3902 = vpack.c.b16 %v3828, %v3826
    %v3903 = vpack.c.b16 %v3829, %v3827
    %v3904 = vpack.c.b16 %v3832, %v3830
    %v3905 = vpack.c.b16 %v3833, %v3831
    %v3906 = vpack.c.b16 %v3836, %v3834
    %v3907 = vpack.c.b16 %v3837, %v3835
    %v3908 = vpack.c.b16 %v3840, %v3838
    %v3909 = vpack.c.b16 %v3841, %v3839
    %v3910 = vpack.c.b16 %v3844, %v3842
    %v3911 = vpack.c.b16 %v3845, %v3843
    %v3912 = vpack.c.b16 %v3848, %v3846
    %v3913 = vpack.c.b16 %v3849, %v3847
    %v3914 = vpack.c.b16 %v3852, %v3850
    %v3915 = vpack.c.b16 %v3853, %v3851
    %v3916 = vpack.c.b16 %v3856, %v3854
    %v3917 = vpack.c.b16 %v3857, %v3855
    %v3918 = vpack.c.b16 %v3860, %v3858
    %v3919 = vpack.c.b16 %v3861, %v3859
    %v3920 = vpack.c.b16 %v3864, %v3862
    %v3921 = vpack.c.b16 %v3865, %v3863
    %v3922 = vpack.c.b16 %v3868, %v3866
    %v3923 = vpack.c.b16 %v3869, %v3867
    %v3924 = vpack.c.b16 %v3872, %v3870
    %v3925 = vpack.c.b16 %v3873, %v3871
    %v3926 = vpack.c.b16 %v3876, %v3874
    %v3927 = vpack.c.b16 %v3877, %v3875
    %v3928 = vpack.c.b16 %v3880, %v3878
    %v3929 = vpack.c.b16 %v3881, %v3879
    %3978 = vmatprep.subr.bf16.mxu0 %v3897
    %3979 = vmatpush1.bf16.msra.mxu0 %v3896
    %3980 = vmatprep.subr.bf16.mxu0 %v3895
    %3981 = vmatpush1.bf16.msra.mxu0 %v3894
    %3982 = vmatprep.subr.bf16.mxu0 %v3893
    %3983 = vmatpush1.bf16.msra.mxu0 %v3892
    %3984 = vmatprep.subr.bf16.mxu0 %v3891
    %3985 = vmatpush1.bf16.msra.mxu0 %v3890
    %3986 = vmatprep.subr.bf16.mxu0 %v3889
    %3987 = vmatpush1.bf16.msra.mxu0 %v3888
    %3988 = vmatprep.subr.bf16.mxu0 %v3887
    %3989 = vmatpush1.bf16.msra.mxu0 %v3886
    %3990 = vmatprep.subr.bf16.mxu0 %v3885
    %3991 = vmatpush1.bf16.msra.mxu0 %v3884
    %3992 = vmatprep.subr.bf16.mxu0 %v3883
    %3993 = vmatpush1.bf16.msra.mxu0 %v3882
    %3994 = vmatprep.subr.bf16.mxu0 %v3913
    %3995 = vmatpush2.bf16.msra.mxu0 %v3912
    %3996 = vmatprep.subr.bf16.mxu0 %v3911
    %3997 = vmatpush2.bf16.msra.mxu0 %v3910
    %3998 = vmatprep.subr.bf16.mxu0 %v3909
    %3999 = vmatpush2.bf16.msra.mxu0 %v3908
    %4000 = vmatprep.subr.bf16.mxu0 %v3907
    %4001 = vmatpush2.bf16.msra.mxu0 %v3906
    %4002 = vmatprep.subr.bf16.mxu0 %v3905
    %4003 = vmatpush2.bf16.msra.mxu0 %v3904
    %4004 = vmatprep.subr.bf16.mxu0 %v3903
    %4005 = vmatpush2.bf16.msra.mxu0 %v3902
    %4006 = vmatprep.subr.bf16.mxu0 %v3901
    %4007 = vmatpush2.bf16.msra.mxu0 %v3900
    %4008 = vmatprep.subr.bf16.mxu0 %v3899
    %4009 = vmatpush2.bf16.msra.mxu0 %v3898
    %4010 = vmatprep.mubr.bf16.mxu0 %v3673
    %4011 = vmatmul.mubr.bf16.gmra.mxu0 %v3672
    %v4012 = vpop.f32.mrf.mxu0
    %v4013 = vadd.f32 %v3731, %v4012
    %v4014 = vpop.f32.mrf.mxu0
    %v4015 = vadd.f32 %v3735, %v4014
    %v4016 = vpop.f32.mrf.mxu0
    %v4017 = vadd.f32 %v3731, %v4016
    %v4018 = vpop.f32.mrf.mxu0
    %v4019 = vadd.f32 %v3735, %v4018
    %4020 = vmatprep.mubr.bf16.mxu0 %v3676
    %4021 = vmatmul.mubr.bf16.gmra.mxu0 %v3675
    %v4022 = vpop.f32.mrf.mxu0
    %v4023 = vadd.f32 %v3731, %v4022
    %v4024 = vpop.f32.mrf.mxu0
    %v4025 = vadd.f32 %v3735, %v4024
    %v4026 = vpop.f32.mrf.mxu0
    %v4027 = vpop.f32.mrf.mxu0
    %4028 = vdwg.mxu0
    %4029 = vmatprep.subr.bf16.mxu0 %v3929
    %4030 = vmatpush1.bf16.msra.mxu0 %v3928
    %4031 = vmatprep.subr.bf16.mxu0 %v3927
    %4032 = vmatpush1.bf16.msra.mxu0 %v3926
    %4033 = vmatprep.subr.bf16.mxu0 %v3925
    %4034 = vmatpush1.bf16.msra.mxu0 %v3924
    %4035 = vmatprep.subr.bf16.mxu0 %v3923
    %4036 = vmatpush1.bf16.msra.mxu0 %v3922
    %4037 = vmatprep.subr.bf16.mxu0 %v3921
    %4038 = vmatpush1.bf16.msra.mxu0 %v3920
    %4039 = vmatprep.subr.bf16.mxu0 %v3919
    %4040 = vmatpush1.bf16.msra.mxu0 %v3918
    %4041 = vmatprep.subr.bf16.mxu0 %v3917
    %4042 = vmatpush1.bf16.msra.mxu0 %v3916
    %4043 = vmatprep.subr.bf16.mxu0 %v3915
    %4044 = vmatpush1.bf16.msra.mxu0 %v3914
    %4045 = vmatprep.subr.bf16.mxu0 0
    %4046 = vmatpush2.bf16.msra.mxu0 0
    %4047 = vmatprep.subr.bf16.mxu0 0
    %4048 = vmatpush2.bf16.msra.mxu0 0
    %4049 = vmatprep.subr.bf16.mxu0 0
    %4050 = vmatpush2.bf16.msra.mxu0 0
    %4051 = vmatprep.subr.bf16.mxu0 0
    %4052 = vmatpush2.bf16.msra.mxu0 0
    %4053 = vmatprep.subr.bf16.mxu0 0
    %4054 = vmatpush2.bf16.msra.mxu0 0
    %4055 = vmatprep.subr.bf16.mxu0 0
    %4056 = vmatpush2.bf16.msra.mxu0 0
    %4057 = vmatprep.subr.bf16.mxu0 0
    %4058 = vmatpush2.bf16.msra.mxu0 0
    %4059 = vmatprep.subr.bf16.mxu0 0
    %4060 = vmatpush2.bf16.msra.mxu0 0
    %4061 = vmatprep.mubr.bf16.mxu0 0
    %4062 = vmatmul.mubr.bf16.gmra.mxu0 %v3674
    %v4063 = vpop.f32.mrf.mxu0
    %v4064 = vadd.f32 %v4013, %v4063
    %v4065 = vpop.f32.mrf.mxu0
    %v4066 = vadd.f32 %v4015, %v4065
    %v4067 = vpop.f32.mrf.mxu0
    %v4068 = vadd.f32 %v4017, %v4067
    %v4069 = vpop.f32.mrf.mxu0
    %v4070 = vadd.f32 %v4019, %v4069
    %4071 = vmatprep.mubr.bf16.mxu0 0
    %4072 = vmatmul.mubr.bf16.gmra.mxu0 %v3677
    %v4073 = vpop.f32.mrf.mxu0
    %v4074 = vadd.f32 %v4023, %v4073
    %v4075 = vpop.f32.mrf.mxu0
    %v4076 = vadd.f32 %v4025, %v4075
    %v4077 = vpop.f32.mrf.mxu0
    %v4078 = vpop.f32.mrf.mxu0
    %4079 = vdwg.mxu0
    %v4080 = vmax.f32 %v4064, 0.0
    %v4081 = vmax.f32 %v4066, 0.0
    %v4082 = vmax.f32 %v4068, 0.0
    %v4083 = vmax.f32 %v4070, 0.0
    %v4084 = vmax.f32 %v4074, 0.0
    %v4085 = vmax.f32 %v4076, 0.0
    %v4086 = vpack.c.bf16 %v4082, %v4080
    %v4087 = vpack.c.bf16 %v4083, %v4081
    %v4088 = vpack.c.bf16 %v4084, %v4084
    %v4089 = vpack.c.bf16 %v4085, %v4085
    %v4090 = vld [vmem:[%s57] sm:$0xff]
    %v4091 = vld [vmem:[%s57 + $0x8] sm:$0xff]
    %v4092 = vld [vmem:[%s57 + $0x10] sm:$0xff]
    %v4093 = vld [vmem:[%s57 + $0x18] sm:$0xff]
    %v4094 = vld [vmem:[%s57 + $0x20] sm:$0xff]
    %v4095 = vld [vmem:[%s57 + $0x28] sm:$0xff]
    %v4096 = vld [vmem:[%s57 + $0x30] sm:$0xff]
    %v4097 = vld [vmem:[%s57 + $0x38] sm:$0xff]
    %v4098 = vld [vmem:[%s57 + $0x40] sm:$0xff]
    %v4099 = vld [vmem:[%s57 + $0x48] sm:$0xff]
    %v4100 = vld [vmem:[%s57 + $0x50] sm:$0xff]
    %v4101 = vld [vmem:[%s57 + $0x58] sm:$0xff]
    %v4102 = vld [vmem:[%s57 + $0x60] sm:$0xff]
    %v4103 = vld [vmem:[%s57 + $0x68] sm:$0xff]
    %v4104 = vld [vmem:[%s57 + $0x70] sm:$0xff]
    %v4105 = vld [vmem:[%s57 + $0x78] sm:$0xff]
    %v4106 = vld [vmem:[%s57 + $0x80] sm:$0xff]
    %v4107 = vld [vmem:[%s57 + $0x88] sm:$0xff]
    %v4108 = vld [vmem:[%s57 + $0x90] sm:$0xff]
    %v4109 = vld [vmem:[%s57 + $0x98] sm:$0xff]
    %v4110 = vld [vmem:[%s57 + $0xa0] sm:$0xff]
    %v4111 = vld [vmem:[%s57 + $0xa8] sm:$0xff]
    %v4112 = vld [vmem:[%s57 + $0xb0] sm:$0xff]
    %v4113 = vld [vmem:[%s57 + $0xb8] sm:$0xff]
    %v4114 = vld [vmem:[%s57 + $0xc0] sm:$0xff]
    %v4115 = vld [vmem:[%s57 + $0xc8] sm:$0xff]
    %v4116 = vld [vmem:[%s57 + $0xd0] sm:$0xff]
    %v4117 = vld [vmem:[%s57 + $0xd8] sm:$0xff]
    %v4118 = vld [vmem:[%s57 + $0xe0] sm:$0xff]
    %v4119 = vld [vmem:[%s57 + $0xe8] sm:$0xff]
    %v4120 = vld [vmem:[%s57 + $0xf0] sm:$0xff]
    %v4121 = vld [vmem:[%s57 + $0xf8] sm:$0xff]
    %v4122 = vld [vmem:[%s57 + $0x100] sm:$0xff]
    %v4123 = vld [vmem:[%s57 + $0x108] sm:$0xff]
    %v4124 = vld [vmem:[%s57 + $0x110] sm:$0xff]
    %v4125 = vld [vmem:[%s57 + $0x118] sm:$0xff]
    %v4126 = vld [vmem:[%s57 + $0x120] sm:$0xff]
    %v4127 = vld [vmem:[%s57 + $0x128] sm:$0xff]
    %v4128 = vld [vmem:[%s57 + $0x130] sm:$0xff]
    %v4129 = vld [vmem:[%s57 + $0x138] sm:$0xff]
    %v4130 = vld [vmem:[%s57 + $0x140] sm:$0xff]
    %v4131 = vld [vmem:[%s57 + $0x148] sm:$0xff]
    %v4132 = vld [vmem:[%s57 + $0x150] sm:$0xff]
    %v4133 = vld [vmem:[%s57 + $0x158] sm:$0xff]
    %v4134 = vld [vmem:[%s57 + $0x160] sm:$0xff]
    %v4135 = vld [vmem:[%s57 + $0x168] sm:$0xff]
    %v4136 = vld [vmem:[%s57 + $0x170] sm:$0xff]
    %v4137 = vld [vmem:[%s57 + $0x178] sm:$0xff]
    %v4138 = vld [vmem:[%s57 + $0x180] sm:$0xff]
    %v4139 = vld [vmem:[%s57 + $0x188] sm:$0xff]
    %v4140 = vld [vmem:[%s57 + $0x190] sm:$0xff]
    %v4141 = vld [vmem:[%s57 + $0x198] sm:$0xff]
    %v4142 = vld [vmem:[%s57 + $0x1a0] sm:$0xff]
    %v4143 = vld [vmem:[%s57 + $0x1a8] sm:$0xff]
    %v4144 = vld [vmem:[%s57 + $0x1b0] sm:$0xff]
    %v4145 = vld [vmem:[%s57 + $0x1b8] sm:$0xff]
    %v4146 = vld [vmem:[%s57 + $0x1c0] sm:$0xff]
    %v4147 = vld [vmem:[%s57 + $0x1c8] sm:$0xff]
    %v4148 = vld [vmem:[%s57 + $0x1d0] sm:$0xff]
    %v4149 = vld [vmem:[%s57 + $0x1d8] sm:$0xff]
    %v4150 = vld [vmem:[%s57 + $0x1e0] sm:$0xff]
    %v4151 = vld [vmem:[%s57 + $0x1e8] sm:$0xff]
    %v4152 = vld [vmem:[%s57 + $0x1f0] sm:$0xff]
    %v4153 = vld [vmem:[%s57 + $0x1f8] sm:$0xff]
    %v4154 = vld [vmem:[%s59] sm:$0xf]
    %v4156 = vlaneseq
    %v4157 = vshrl.u32 %v4156, 7
    %v4158 = vsub.s32 0, %v4157
    %v4159 = vrot.slane %v4154, %v4158
    %v4160 = vlaneseq
    %v4161 = vshrl.u32 %v4160, 7
    %v4162 = vsub.s32 1, %v4161
    %v4163 = vrot.slane %v4154, %v4162
    %v4164 = vlaneseq
    %v4165 = vshrl.u32 %v4164, 7
    %v4166 = vsub.s32 2, %v4165
    %v4167 = vrot.slane %v4154, %v4166
    %v4168 = vlaneseq
    %v4169 = vshrl.u32 %v4168, 7
    %v4170 = vsub.s32 3, %v4169
    %v4171 = vrot.slane %v4154, %v4170
    %v4240 = vunpack.c.l.b16 %v4090
    %v4241 = vunpack.c.h.b16 %v4090
    %v4242 = vunpack.c.l.b16 %v4091
    %v4243 = vunpack.c.h.b16 %v4091
    %v4244 = vunpack.c.l.b16 %v4092
    %v4245 = vunpack.c.h.b16 %v4092
    %v4246 = vunpack.c.l.b16 %v4093
    %v4247 = vunpack.c.h.b16 %v4093
    %v4248 = vunpack.c.l.b16 %v4094
    %v4249 = vunpack.c.h.b16 %v4094
    %v4250 = vunpack.c.l.b16 %v4095
    %v4251 = vunpack.c.h.b16 %v4095
    %v4252 = vunpack.c.l.b16 %v4096
    %v4253 = vunpack.c.h.b16 %v4096
    %v4254 = vunpack.c.l.b16 %v4097
    %v4255 = vunpack.c.h.b16 %v4097
    %v4256 = vunpack.c.l.b16 %v4098
    %v4257 = vunpack.c.h.b16 %v4098
    %v4258 = vunpack.c.l.b16 %v4099
    %v4259 = vunpack.c.h.b16 %v4099
    %v4260 = vunpack.c.l.b16 %v4100
    %v4261 = vunpack.c.h.b16 %v4100
    %v4262 = vunpack.c.l.b16 %v4101
    %v4263 = vunpack.c.h.b16 %v4101
    %v4264 = vunpack.c.l.b16 %v4102
    %v4265 = vunpack.c.h.b16 %v4102
    %v4266 = vunpack.c.l.b16 %v4103
    %v4267 = vunpack.c.h.b16 %v4103
    %v4268 = vunpack.c.l.b16 %v4104
    %v4269 = vunpack.c.h.b16 %v4104
    %v4270 = vunpack.c.l.b16 %v4105
    %v4271 = vunpack.c.h.b16 %v4105
    %v4272 = vunpack.c.l.b16 %v4106
    %v4273 = vunpack.c.h.b16 %v4106
    %v4274 = vunpack.c.l.b16 %v4107
    %v4275 = vunpack.c.h.b16 %v4107
    %v4276 = vunpack.c.l.b16 %v4108
    %v4277 = vunpack.c.h.b16 %v4108
    %v4278 = vunpack.c.l.b16 %v4109
    %v4279 = vunpack.c.h.b16 %v4109
    %v4280 = vunpack.c.l.b16 %v4110
    %v4281 = vunpack.c.h.b16 %v4110
    %v4282 = vunpack.c.l.b16 %v4111
    %v4283 = vunpack.c.h.b16 %v4111
    %v4284 = vunpack.c.l.b16 %v4112
    %v4285 = vunpack.c.h.b16 %v4112
    %v4286 = vunpack.c.l.b16 %v4113
    %v4287 = vunpack.c.h.b16 %v4113
    %v4288 = vunpack.c.l.b16 %v4114
    %v4289 = vunpack.c.h.b16 %v4114
    %v4290 = vunpack.c.l.b16 %v4115
    %v4291 = vunpack.c.h.b16 %v4115
    %v4292 = vunpack.c.l.b16 %v4116
    %v4293 = vunpack.c.h.b16 %v4116
    %v4294 = vunpack.c.l.b16 %v4117
    %v4295 = vunpack.c.h.b16 %v4117
    %v4296 = vunpack.c.l.b16 %v4118
    %v4297 = vunpack.c.h.b16 %v4118
    %v4298 = vunpack.c.l.b16 %v4119
    %v4299 = vunpack.c.h.b16 %v4119
    %v4300 = vunpack.c.l.b16 %v4120
    %v4301 = vunpack.c.h.b16 %v4120
    %v4302 = vunpack.c.l.b16 %v4121
    %v4303 = vunpack.c.h.b16 %v4121
    %v4304 = vunpack.c.l.b16 %v4122
    %v4305 = vunpack.c.h.b16 %v4122
    %v4306 = vunpack.c.l.b16 %v4123
    %v4307 = vunpack.c.h.b16 %v4123
    %v4308 = vunpack.c.l.b16 %v4124
    %v4309 = vunpack.c.h.b16 %v4124
    %v4310 = vunpack.c.l.b16 %v4125
    %v4311 = vunpack.c.h.b16 %v4125
    %v4312 = vunpack.c.l.b16 %v4126
    %v4313 = vunpack.c.h.b16 %v4126
    %v4314 = vunpack.c.l.b16 %v4127
    %v4315 = vunpack.c.h.b16 %v4127
    %v4316 = vunpack.c.l.b16 %v4128
    %v4317 = vunpack.c.h.b16 %v4128
    %v4318 = vunpack.c.l.b16 %v4129
    %v4319 = vunpack.c.h.b16 %v4129
    %v4320 = vunpack.c.l.b16 %v4130
    %v4321 = vunpack.c.h.b16 %v4130
    %v4322 = vunpack.c.l.b16 %v4131
    %v4323 = vunpack.c.h.b16 %v4131
    %v4324 = vunpack.c.l.b16 %v4132
    %v4325 = vunpack.c.h.b16 %v4132
    %v4326 = vunpack.c.l.b16 %v4133
    %v4327 = vunpack.c.h.b16 %v4133
    %v4328 = vunpack.c.l.b16 %v4134
    %v4329 = vunpack.c.h.b16 %v4134
    %v4330 = vunpack.c.l.b16 %v4135
    %v4331 = vunpack.c.h.b16 %v4135
    %v4332 = vunpack.c.l.b16 %v4136
    %v4333 = vunpack.c.h.b16 %v4136
    %v4334 = vunpack.c.l.b16 %v4137
    %v4335 = vunpack.c.h.b16 %v4137
    %v4336 = vunpack.c.l.b16 %v4138
    %v4337 = vunpack.c.h.b16 %v4138
    %v4338 = vunpack.c.l.b16 %v4139
    %v4339 = vunpack.c.h.b16 %v4139
    %v4340 = vunpack.c.l.b16 %v4140
    %v4341 = vunpack.c.h.b16 %v4140
    %v4342 = vunpack.c.l.b16 %v4141
    %v4343 = vunpack.c.h.b16 %v4141
    %v4344 = vunpack.c.l.b16 %v4142
    %v4345 = vunpack.c.h.b16 %v4142
    %v4346 = vunpack.c.l.b16 %v4143
    %v4347 = vunpack.c.h.b16 %v4143
    %v4348 = vunpack.c.l.b16 %v4144
    %v4349 = vunpack.c.h.b16 %v4144
    %v4350 = vunpack.c.l.b16 %v4145
    %v4351 = vunpack.c.h.b16 %v4145
    %v4352 = vunpack.c.l.b16 %v4146
    %v4353 = vunpack.c.h.b16 %v4146
    %v4354 = vunpack.c.l.b16 %v4147
    %v4355 = vunpack.c.h.b16 %v4147
    %v4356 = vunpack.c.l.b16 %v4148
    %v4357 = vunpack.c.h.b16 %v4148
    %v4358 = vunpack.c.l.b16 %v4149
    %v4359 = vunpack.c.h.b16 %v4149
    %v4360 = vunpack.c.l.b16 %v4150
    %v4361 = vunpack.c.h.b16 %v4150
    %v4362 = vunpack.c.l.b16 %v4151
    %v4363 = vunpack.c.h.b16 %v4151
    %v4364 = vunpack.c.l.b16 %v4152
    %v4365 = vunpack.c.h.b16 %v4152
    %v4366 = vunpack.c.l.b16 %v4153
    %v4367 = vunpack.c.h.b16 %v4153
    %v4368 = vpack.c.b16 %v4244, %v4240
    %v4369 = vpack.c.b16 %v4245, %v4241
    %v4370 = vpack.c.b16 %v4246, %v4242
    %v4371 = vpack.c.b16 %v4247, %v4243
    %v4372 = vpack.c.b16 %v4252, %v4248
    %v4373 = vpack.c.b16 %v4253, %v4249
    %v4374 = vpack.c.b16 %v4254, %v4250
    %v4375 = vpack.c.b16 %v4255, %v4251
    %v4376 = vpack.c.b16 %v4260, %v4256
    %v4377 = vpack.c.b16 %v4261, %v4257
    %v4378 = vpack.c.b16 %v4262, %v4258
    %v4379 = vpack.c.b16 %v4263, %v4259
    %v4380 = vpack.c.b16 %v4268, %v4264
    %v4381 = vpack.c.b16 %v4269, %v4265
    %v4382 = vpack.c.b16 %v4270, %v4266
    %v4383 = vpack.c.b16 %v4271, %v4267
    %v4384 = vpack.c.b16 %v4276, %v4272
    %v4385 = vpack.c.b16 %v4277, %v4273
    %v4386 = vpack.c.b16 %v4278, %v4274
    %v4387 = vpack.c.b16 %v4279, %v4275
    %v4388 = vpack.c.b16 %v4284, %v4280
    %v4389 = vpack.c.b16 %v4285, %v4281
    %v4390 = vpack.c.b16 %v4286, %v4282
    %v4391 = vpack.c.b16 %v4287, %v4283
    %v4392 = vpack.c.b16 %v4292, %v4288
    %v4393 = vpack.c.b16 %v4293, %v4289
    %v4394 = vpack.c.b16 %v4294, %v4290
    %v4395 = vpack.c.b16 %v4295, %v4291
    %v4396 = vpack.c.b16 %v4300, %v4296
    %v4397 = vpack.c.b16 %v4301, %v4297
    %v4398 = vpack.c.b16 %v4302, %v4298
    %v4399 = vpack.c.b16 %v4303, %v4299
    %v4400 = vpack.c.b16 %v4308, %v4304
    %v4401 = vpack.c.b16 %v4309, %v4305
    %v4402 = vpack.c.b16 %v4310, %v4306
    %v4403 = vpack.c.b16 %v4311, %v4307
    %v4404 = vpack.c.b16 %v4316, %v4312
    %v4405 = vpack.c.b16 %v4317, %v4313
    %v4406 = vpack.c.b16 %v4318, %v4314
    %v4407 = vpack.c.b16 %v4319, %v4315
    %v4408 = vpack.c.b16 %v4324, %v4320
    %v4409 = vpack.c.b16 %v4325, %v4321
    %v4410 = vpack.c.b16 %v4326, %v4322
    %v4411 = vpack.c.b16 %v4327, %v4323
    %v4412 = vpack.c.b16 %v4332, %v4328
    %v4413 = vpack.c.b16 %v4333, %v4329
    %v4414 = vpack.c.b16 %v4334, %v4330
    %v4415 = vpack.c.b16 %v4335, %v4331
    %v4416 = vpack.c.b16 %v4340, %v4336
    %v4417 = vpack.c.b16 %v4341, %v4337
    %v4418 = vpack.c.b16 %v4342, %v4338
    %v4419 = vpack.c.b16 %v4343, %v4339
    %v4420 = vpack.c.b16 %v4348, %v4344
    %v4421 = vpack.c.b16 %v4349, %v4345
    %v4422 = vpack.c.b16 %v4350, %v4346
    %v4423 = vpack.c.b16 %v4351, %v4347
    %v4424 = vpack.c.b16 %v4356, %v4352
    %v4425 = vpack.c.b16 %v4357, %v4353
    %v4426 = vpack.c.b16 %v4358, %v4354
    %v4427 = vpack.c.b16 %v4359, %v4355
    %v4428 = vpack.c.b16 %v4364, %v4360
    %v4429 = vpack.c.b16 %v4365, %v4361
    %v4430 = vpack.c.b16 %v4366, %v4362
    %v4431 = vpack.c.b16 %v4367, %v4363
    %4496 = vmatprep.subr.bf16.mxu0 %v4397
    %4497 = vmatpush1.bf16.msra.mxu0 %v4396
    %4498 = vmatprep.subr.bf16.mxu0 %v4393
    %4499 = vmatpush1.bf16.msra.mxu0 %v4392
    %4500 = vmatprep.subr.bf16.mxu0 %v4389
    %4501 = vmatpush1.bf16.msra.mxu0 %v4388
    %4502 = vmatprep.subr.bf16.mxu0 %v4385
    %4503 = vmatpush1.bf16.msra.mxu0 %v4384
    %4504 = vmatprep.subr.bf16.mxu0 %v4381
    %4505 = vmatpush1.bf16.msra.mxu0 %v4380
    %4506 = vmatprep.subr.bf16.mxu0 %v4377
    %4507 = vmatpush1.bf16.msra.mxu0 %v4376
    %4508 = vmatprep.subr.bf16.mxu0 %v4373
    %4509 = vmatpush1.bf16.msra.mxu0 %v4372
    %4510 = vmatprep.subr.bf16.mxu0 %v4369
    %4511 = vmatpush1.bf16.msra.mxu0 %v4368
    %4512 = vmatprep.subr.bf16.mxu0 %v4429
    %4513 = vmatpush2.bf16.msra.mxu0 %v4428
    %4514 = vmatprep.subr.bf16.mxu0 %v4425
    %4515 = vmatpush2.bf16.msra.mxu0 %v4424
    %4516 = vmatprep.subr.bf16.mxu0 %v4421
    %4517 = vmatpush2.bf16.msra.mxu0 %v4420
    %4518 = vmatprep.subr.bf16.mxu0 %v4417
    %4519 = vmatpush2.bf16.msra.mxu0 %v4416
    %4520 = vmatprep.subr.bf16.mxu0 %v4413
    %4521 = vmatpush2.bf16.msra.mxu0 %v4412
    %4522 = vmatprep.subr.bf16.mxu0 %v4409
    %4523 = vmatpush2.bf16.msra.mxu0 %v4408
    %4524 = vmatprep.subr.bf16.mxu0 %v4405
    %4525 = vmatpush2.bf16.msra.mxu0 %v4404
    %4526 = vmatprep.subr.bf16.mxu0 %v4401
    %4527 = vmatpush2.bf16.msra.mxu0 %v4400
    %4528 = vmatprep.mubr.bf16.mxu0 %v4087
    %4529 = vmatmul.mubr.bf16.gmra.mxu0 %v4086
    %v4530 = vpop.f32.mrf.mxu0
    %v4531 = vadd.f32 %v4159, %v4530
    %v4532 = vpop.f32.mrf.mxu0
    %v4533 = vadd.f32 %v4163, %v4532
    %v4534 = vpop.f32.mrf.mxu0
    %v4535 = vadd.f32 %v4159, %v4534
    %v4536 = vpop.f32.mrf.mxu0
    %v4537 = vadd.f32 %v4163, %v4536
    %4538 = vmatprep.mubr.bf16.mxu0 %v4089
    %4539 = vmatmul.mubr.bf16.gmra.mxu0 %v4088
    %v4540 = vpop.f32.mrf.mxu0
    %v4541 = vadd.f32 %v4159, %v4540
    %v4542 = vpop.f32.mrf.mxu0
    %v4543 = vadd.f32 %v4163, %v4542
    %v4544 = vpop.f32.mrf.mxu0
    %v4545 = vpop.f32.mrf.mxu0
    %4546 = vdwg.mxu0
    %4547 = vmatprep.subr.bf16.mxu0 %v4399
    %4548 = vmatpush1.bf16.msra.mxu0 %v4398
    %4549 = vmatprep.subr.bf16.mxu0 %v4395
    %4550 = vmatpush1.bf16.msra.mxu0 %v4394
    %4551 = vmatprep.subr.bf16.mxu0 %v4391
    %4552 = vmatpush1.bf16.msra.mxu0 %v4390
    %4553 = vmatprep.subr.bf16.mxu0 %v4387
    %4554 = vmatpush1.bf16.msra.mxu0 %v4386
    %4555 = vmatprep.subr.bf16.mxu0 %v4383
    %4556 = vmatpush1.bf16.msra.mxu0 %v4382
    %4557 = vmatprep.subr.bf16.mxu0 %v4379
    %4558 = vmatpush1.bf16.msra.mxu0 %v4378
    %4559 = vmatprep.subr.bf16.mxu0 %v4375
    %4560 = vmatpush1.bf16.msra.mxu0 %v4374
    %4561 = vmatprep.subr.bf16.mxu0 %v4371
    %4562 = vmatpush1.bf16.msra.mxu0 %v4370
    %4563 = vmatprep.subr.bf16.mxu0 %v4431
    %4564 = vmatpush2.bf16.msra.mxu0 %v4430
    %4565 = vmatprep.subr.bf16.mxu0 %v4427
    %4566 = vmatpush2.bf16.msra.mxu0 %v4426
    %4567 = vmatprep.subr.bf16.mxu0 %v4423
    %4568 = vmatpush2.bf16.msra.mxu0 %v4422
    %4569 = vmatprep.subr.bf16.mxu0 %v4419
    %4570 = vmatpush2.bf16.msra.mxu0 %v4418
    %4571 = vmatprep.subr.bf16.mxu0 %v4415
    %4572 = vmatpush2.bf16.msra.mxu0 %v4414
    %4573 = vmatprep.subr.bf16.mxu0 %v4411
    %4574 = vmatpush2.bf16.msra.mxu0 %v4410
    %4575 = vmatprep.subr.bf16.mxu0 %v4407
    %4576 = vmatpush2.bf16.msra.mxu0 %v4406
    %4577 = vmatprep.subr.bf16.mxu0 %v4403
    %4578 = vmatpush2.bf16.msra.mxu0 %v4402
    %4579 = vmatprep.mubr.bf16.mxu0 %v4087
    %4580 = vmatmul.mubr.bf16.gmra.mxu0 %v4086
    %v4581 = vpop.f32.mrf.mxu0
    %v4582 = vadd.f32 %v4167, %v4581
    %v4583 = vpop.f32.mrf.mxu0
    %v4584 = vadd.f32 %v4171, %v4583
    %v4585 = vpop.f32.mrf.mxu0
    %v4586 = vadd.f32 %v4167, %v4585
    %v4587 = vpop.f32.mrf.mxu0
    %v4588 = vadd.f32 %v4171, %v4587
    %4589 = vmatprep.mubr.bf16.mxu0 %v4089
    %4590 = vmatmul.mubr.bf16.gmra.mxu0 %v4088
    %v4591 = vpop.f32.mrf.mxu0
    %v4592 = vadd.f32 %v4167, %v4591
    %v4593 = vpop.f32.mrf.mxu0
    %v4594 = vadd.f32 %v4171, %v4593
    %v4595 = vpop.f32.mrf.mxu0
    %v4596 = vpop.f32.mrf.mxu0
    %4597 = vdwg.mxu0
    %v4598 = vmax.f32 %v4531, 0.0
    %v4599 = vmax.f32 %v4533, 0.0
    %v4600 = vmax.f32 %v4582, 0.0
    %v4601 = vmax.f32 %v4584, 0.0
    %v4602 = vmax.f32 %v4535, 0.0
    %v4603 = vmax.f32 %v4537, 0.0
    %v4604 = vmax.f32 %v4586, 0.0
    %v4605 = vmax.f32 %v4588, 0.0
    %v4606 = vmax.f32 %v4541, 0.0
    %v4607 = vmax.f32 %v4543, 0.0
    %v4608 = vmax.f32 %v4592, 0.0
    %v4609 = vmax.f32 %v4594, 0.0
    %vm4618 = vcmask 1041408
    %v4619 = vrot.slane %v4598, 6
    %v4620 = vrot.slane %v4602, 6
    %v4621 = vsel %vm4618, %v4619, %v4620
    %v4622 = vrot.slane %v4599, 6
    %v4623 = vrot.slane %v4603, 6
    %v4624 = vsel %vm4618, %v4622, %v4623
    %v4625 = vrot.slane %v4600, 6
    %v4626 = vrot.slane %v4604, 6
    %v4627 = vsel %vm4618, %v4625, %v4626
    %v4628 = vrot.slane %v4601, 6
    %v4629 = vrot.slane %v4605, 6
    %v4630 = vsel %vm4618, %v4628, %v4629
    %v4635 = vmax.f32 %v4598, %v4621
    %v4636 = vmax.f32 %v4599, %v4624
    %v4637 = vmax.f32 %v4600, %v4627
    %v4638 = vmax.f32 %v4601, %v4630
    %v4643 = vrot.slane %v4602, 4
    %v4644 = vrot.slane %v4606, 4
    %v4645 = vsel %vm1514, %v4643, %v4644
    %v4646 = vrot.slane %v4603, 4
    %v4647 = vrot.slane %v4607, 4
    %v4648 = vsel %vm1514, %v4646, %v4647
    %v4649 = vrot.slane %v4604, 4
    %v4650 = vrot.slane %v4608, 4
    %v4651 = vsel %vm1514, %v4649, %v4650
    %v4652 = vrot.slane %v4605, 4
    %v4653 = vrot.slane %v4609, 4
    %v4654 = vsel %vm1514, %v4652, %v4653
    %v4659 = vmax.f32 %v4635, %v4645
    %v4660 = vmax.f32 %v4636, %v4648
    %v4661 = vmax.f32 %v4637, %v4651
    %v4662 = vmax.f32 %v4638, %v4654
    %v4667 = vrot.slane %v4659, 2
    %v4668 = vrot.slane %v4660, 2
    %v4669 = vrot.slane %v4661, 2
    %v4670 = vrot.slane %v4662, 2
    %v4675 = vmax.f32 %v4659, %v4667
    %v4676 = vmax.f32 %v4660, %v4668
    %v4677 = vmax.f32 %v4661, %v4669
    %v4678 = vmax.f32 %v4662, %v4670
    %v4679 = vrot.slane %v4659, 4
    %v4680 = vrot.slane %v4660, 4
    %v4681 = vrot.slane %v4661, 4
    %v4682 = vrot.slane %v4662, 4
    %v4687 = vmax.f32 %v4675, %v4679
    %v4688 = vmax.f32 %v4676, %v4680
    %v4689 = vmax.f32 %v4677, %v4681
    %v4690 = vmax.f32 %v4678, %v4682
    %v4695 = vcombine.low %v4687, %v4688
    %v4696 = vcombine.low %v4689, %v4690
    %v4698 = vunpack.c.l.s4 1983009808
    %v4699 = vunpack.c.0.s8 %v4698
    %v4700 = vlaneseq
    %v4701 = vshrl.u32 %v4700, 7
    %v4702 = vsub.s32 %v4699, %v4701
    %v4703 = vrot.slane %v4695, %v4702
    %v4705 = vunpack.c.l.s4 1983009808
    %v4706 = vunpack.c.0.s8 %v4705
    %v4707 = vlaneseq
    %v4708 = vshrl.u32 %v4707, 7
    %v4709 = vsub.s32 %v4706, %v4708
    %v4710 = vrot.slane %v4696, %v4709
    %v4711 = vcombine.low %v4703, %v4710
    %4713 = vst [vmem:[#allocation4] sm:$0xff] %v4711
    %v4714 = vld [vmem:[#allocation4] sm:$0xff]
    %v4716 = vcombine.high %v4714, %v4714
    %v4718 = vunpack.c.l.s4 1983009808
    %v4719 = vunpack.c.0.s8 %v4718
    %v4720 = vlaneseq
    %v4721 = vshrl.u32 %v4720, 7
    %v4722 = vsub.s32 %v4719, %v4721
    %v4723 = vrot.slane %v4714, %v4722
    %v4725 = vunpack.c.l.s4 1983009808
    %v4726 = vunpack.c.0.s8 %v4725
    %v4727 = vlaneseq
    %v4728 = vshrl.u32 %v4727, 7
    %v4729 = vsub.s32 %v4726, %v4728
    %v4730 = vrot.slane %v4716, %v4729
    %v4731 = vcombine.high %v4723, %v4723
    %v4732 = vcombine.high %v4730, %v4730
    %v4737 = vpack.c.bf16 %v4723, %v4723
    %v4738 = vpack.c.bf16 %v4731, %v4731
    %v4739 = vpack.c.bf16 %v4730, %v4730
    %v4740 = vpack.c.bf16 %v4732, %v4732
    %v4741 = vld [vmem:[%s61] sm:$0xff]
    %v4742 = vld [vmem:[%s61 + $0x8] sm:$0xff]
    %v4743 = vld [vmem:[%s61 + $0x10] sm:$0xff]
    %v4744 = vld [vmem:[%s61 + $0x18] sm:$0xff]
    %v4745 = vld [vmem:[%s61 + $0x20] sm:$0xff]
    %v4746 = vld [vmem:[%s61 + $0x28] sm:$0xff]
    %v4747 = vld [vmem:[%s61 + $0x30] sm:$0xff]
    %v4748 = vld [vmem:[%s61 + $0x38] sm:$0xff]
    %v4749 = vld [vmem:[%s61 + $0x40] sm:$0xff]
    %v4750 = vld [vmem:[%s61 + $0x48] sm:$0xff]
    %v4751 = vld [vmem:[%s61 + $0x50] sm:$0xff]
    %v4752 = vld [vmem:[%s61 + $0x58] sm:$0xff]
    %v4753 = vld [vmem:[%s61 + $0x60] sm:$0xff]
    %v4754 = vld [vmem:[%s61 + $0x68] sm:$0xff]
    %v4755 = vld [vmem:[%s61 + $0x70] sm:$0xff]
    %v4756 = vld [vmem:[%s61 + $0x78] sm:$0xff]
    %v4757 = vld [vmem:[%s61 + $0x80] sm:$0xff]
    %v4758 = vld [vmem:[%s61 + $0x88] sm:$0xff]
    %v4759 = vld [vmem:[%s61 + $0x90] sm:$0xff]
    %v4760 = vld [vmem:[%s61 + $0x98] sm:$0xff]
    %v4761 = vld [vmem:[%s61 + $0xa0] sm:$0xff]
    %v4762 = vld [vmem:[%s61 + $0xa8] sm:$0xff]
    %v4763 = vld [vmem:[%s61 + $0xb0] sm:$0xff]
    %v4764 = vld [vmem:[%s61 + $0xb8] sm:$0xff]
    %v4765 = vld [vmem:[%s61 + $0xc0] sm:$0xff]
    %v4766 = vld [vmem:[%s61 + $0xc8] sm:$0xff]
    %v4767 = vld [vmem:[%s61 + $0xd0] sm:$0xff]
    %v4768 = vld [vmem:[%s61 + $0xd8] sm:$0xff]
    %v4769 = vld [vmem:[%s61 + $0xe0] sm:$0xff]
    %v4770 = vld [vmem:[%s61 + $0xe8] sm:$0xff]
    %v4771 = vld [vmem:[%s61 + $0xf0] sm:$0xff]
    %v4772 = vld [vmem:[%s61 + $0xf8] sm:$0xff]
    %v4773 = vld [vmem:[%s61 + $0x100] sm:$0xff]
    %v4774 = vld [vmem:[%s61 + $0x108] sm:$0xff]
    %v4775 = vld [vmem:[%s61 + $0x110] sm:$0xff]
    %v4776 = vld [vmem:[%s61 + $0x118] sm:$0xff]
    %v4777 = vld [vmem:[%s61 + $0x120] sm:$0xff]
    %v4778 = vld [vmem:[%s61 + $0x128] sm:$0xff]
    %v4779 = vld [vmem:[%s61 + $0x130] sm:$0xff]
    %v4780 = vld [vmem:[%s61 + $0x138] sm:$0xff]
    %v4781 = vld [vmem:[%s61 + $0x140] sm:$0xff]
    %v4782 = vld [vmem:[%s61 + $0x148] sm:$0xff]
    %v4783 = vld [vmem:[%s61 + $0x150] sm:$0xff]
    %v4784 = vld [vmem:[%s61 + $0x158] sm:$0xff]
    %v4785 = vld [vmem:[%s61 + $0x160] sm:$0xff]
    %v4786 = vld [vmem:[%s61 + $0x168] sm:$0xff]
    %v4787 = vld [vmem:[%s61 + $0x170] sm:$0xff]
    %v4788 = vld [vmem:[%s61 + $0x178] sm:$0xff]
    %v4789 = vld [vmem:[%s61 + $0x180] sm:$0xff]
    %v4790 = vld [vmem:[%s61 + $0x188] sm:$0xff]
    %v4791 = vld [vmem:[%s61 + $0x190] sm:$0xff]
    %v4792 = vld [vmem:[%s61 + $0x198] sm:$0xff]
    %v4793 = vld [vmem:[%s61 + $0x1a0] sm:$0xff]
    %v4794 = vld [vmem:[%s61 + $0x1a8] sm:$0xff]
    %v4795 = vld [vmem:[%s61 + $0x1b0] sm:$0xff]
    %v4796 = vld [vmem:[%s61 + $0x1b8] sm:$0xff]
    %v4797 = vld [vmem:[%s61 + $0x1c0] sm:$0xff]
    %v4798 = vld [vmem:[%s61 + $0x1c8] sm:$0xff]
    %v4799 = vld [vmem:[%s61 + $0x1d0] sm:$0xff]
    %v4800 = vld [vmem:[%s61 + $0x1d8] sm:$0xff]
    %v4801 = vld [vmem:[%s61 + $0x1e0] sm:$0xff]
    %v4802 = vld [vmem:[%s61 + $0x1e8] sm:$0xff]
    %v4803 = vld [vmem:[%s61 + $0x1f0] sm:$0xff]
    %v4804 = vld [vmem:[%s61 + $0x1f8] sm:$0xff]
    %v4805 = vld [vmem:[%s63] sm:$0x3]
    %v4807 = vlaneseq
    %v4808 = vshrl.u32 %v4807, 7
    %v4809 = vsub.s32 0, %v4808
    %v4810 = vrot.slane %v4805, %v4809
    %v4811 = vlaneseq
    %v4812 = vshrl.u32 %v4811, 7
    %v4813 = vsub.s32 1, %v4812
    %v4814 = vrot.slane %v4805, %v4813
    %v4881 = vunpack.c.l.b16 %v4741
    %v4882 = vunpack.c.h.b16 %v4741
    %v4883 = vunpack.c.l.b16 %v4742
    %v4884 = vunpack.c.h.b16 %v4742
    %v4885 = vunpack.c.l.b16 %v4743
    %v4886 = vunpack.c.h.b16 %v4743
    %v4887 = vunpack.c.l.b16 %v4744
    %v4888 = vunpack.c.h.b16 %v4744
    %v4889 = vunpack.c.l.b16 %v4745
    %v4890 = vunpack.c.h.b16 %v4745
    %v4891 = vunpack.c.l.b16 %v4746
    %v4892 = vunpack.c.h.b16 %v4746
    %v4893 = vunpack.c.l.b16 %v4747
    %v4894 = vunpack.c.h.b16 %v4747
    %v4895 = vunpack.c.l.b16 %v4748
    %v4896 = vunpack.c.h.b16 %v4748
    %v4897 = vunpack.c.l.b16 %v4749
    %v4898 = vunpack.c.h.b16 %v4749
    %v4899 = vunpack.c.l.b16 %v4750
    %v4900 = vunpack.c.h.b16 %v4750
    %v4901 = vunpack.c.l.b16 %v4751
    %v4902 = vunpack.c.h.b16 %v4751
    %v4903 = vunpack.c.l.b16 %v4752
    %v4904 = vunpack.c.h.b16 %v4752
    %v4905 = vunpack.c.l.b16 %v4753
    %v4906 = vunpack.c.h.b16 %v4753
    %v4907 = vunpack.c.l.b16 %v4754
    %v4908 = vunpack.c.h.b16 %v4754
    %v4909 = vunpack.c.l.b16 %v4755
    %v4910 = vunpack.c.h.b16 %v4755
    %v4911 = vunpack.c.l.b16 %v4756
    %v4912 = vunpack.c.h.b16 %v4756
    %v4913 = vunpack.c.l.b16 %v4757
    %v4914 = vunpack.c.h.b16 %v4757
    %v4915 = vunpack.c.l.b16 %v4758
    %v4916 = vunpack.c.h.b16 %v4758
    %v4917 = vunpack.c.l.b16 %v4759
    %v4918 = vunpack.c.h.b16 %v4759
    %v4919 = vunpack.c.l.b16 %v4760
    %v4920 = vunpack.c.h.b16 %v4760
    %v4921 = vunpack.c.l.b16 %v4761
    %v4922 = vunpack.c.h.b16 %v4761
    %v4923 = vunpack.c.l.b16 %v4762
    %v4924 = vunpack.c.h.b16 %v4762
    %v4925 = vunpack.c.l.b16 %v4763
    %v4926 = vunpack.c.h.b16 %v4763
    %v4927 = vunpack.c.l.b16 %v4764
    %v4928 = vunpack.c.h.b16 %v4764
    %v4929 = vunpack.c.l.b16 %v4765
    %v4930 = vunpack.c.h.b16 %v4765
    %v4931 = vunpack.c.l.b16 %v4766
    %v4932 = vunpack.c.h.b16 %v4766
    %v4933 = vunpack.c.l.b16 %v4767
    %v4934 = vunpack.c.h.b16 %v4767
    %v4935 = vunpack.c.l.b16 %v4768
    %v4936 = vunpack.c.h.b16 %v4768
    %v4937 = vunpack.c.l.b16 %v4769
    %v4938 = vunpack.c.h.b16 %v4769
    %v4939 = vunpack.c.l.b16 %v4770
    %v4940 = vunpack.c.h.b16 %v4770
    %v4941 = vunpack.c.l.b16 %v4771
    %v4942 = vunpack.c.h.b16 %v4771
    %v4943 = vunpack.c.l.b16 %v4772
    %v4944 = vunpack.c.h.b16 %v4772
    %v4945 = vunpack.c.l.b16 %v4773
    %v4946 = vunpack.c.h.b16 %v4773
    %v4947 = vunpack.c.l.b16 %v4774
    %v4948 = vunpack.c.h.b16 %v4774
    %v4949 = vunpack.c.l.b16 %v4775
    %v4950 = vunpack.c.h.b16 %v4775
    %v4951 = vunpack.c.l.b16 %v4776
    %v4952 = vunpack.c.h.b16 %v4776
    %v4953 = vunpack.c.l.b16 %v4777
    %v4954 = vunpack.c.h.b16 %v4777
    %v4955 = vunpack.c.l.b16 %v4778
    %v4956 = vunpack.c.h.b16 %v4778
    %v4957 = vunpack.c.l.b16 %v4779
    %v4958 = vunpack.c.h.b16 %v4779
    %v4959 = vunpack.c.l.b16 %v4780
    %v4960 = vunpack.c.h.b16 %v4780
    %v4961 = vunpack.c.l.b16 %v4781
    %v4962 = vunpack.c.h.b16 %v4781
    %v4963 = vunpack.c.l.b16 %v4782
    %v4964 = vunpack.c.h.b16 %v4782
    %v4965 = vunpack.c.l.b16 %v4783
    %v4966 = vunpack.c.h.b16 %v4783
    %v4967 = vunpack.c.l.b16 %v4784
    %v4968 = vunpack.c.h.b16 %v4784
    %v4969 = vunpack.c.l.b16 %v4785
    %v4970 = vunpack.c.h.b16 %v4785
    %v4971 = vunpack.c.l.b16 %v4786
    %v4972 = vunpack.c.h.b16 %v4786
    %v4973 = vunpack.c.l.b16 %v4787
    %v4974 = vunpack.c.h.b16 %v4787
    %v4975 = vunpack.c.l.b16 %v4788
    %v4976 = vunpack.c.h.b16 %v4788
    %v4977 = vunpack.c.l.b16 %v4789
    %v4978 = vunpack.c.h.b16 %v4789
    %v4979 = vunpack.c.l.b16 %v4790
    %v4980 = vunpack.c.h.b16 %v4790
    %v4981 = vunpack.c.l.b16 %v4791
    %v4982 = vunpack.c.h.b16 %v4791
    %v4983 = vunpack.c.l.b16 %v4792
    %v4984 = vunpack.c.h.b16 %v4792
    %v4985 = vunpack.c.l.b16 %v4793
    %v4986 = vunpack.c.h.b16 %v4793
    %v4987 = vunpack.c.l.b16 %v4794
    %v4988 = vunpack.c.h.b16 %v4794
    %v4989 = vunpack.c.l.b16 %v4795
    %v4990 = vunpack.c.h.b16 %v4795
    %v4991 = vunpack.c.l.b16 %v4796
    %v4992 = vunpack.c.h.b16 %v4796
    %v4993 = vunpack.c.l.b16 %v4797
    %v4994 = vunpack.c.h.b16 %v4797
    %v4995 = vunpack.c.l.b16 %v4798
    %v4996 = vunpack.c.h.b16 %v4798
    %v4997 = vunpack.c.l.b16 %v4799
    %v4998 = vunpack.c.h.b16 %v4799
    %v4999 = vunpack.c.l.b16 %v4800
    %v5000 = vunpack.c.h.b16 %v4800
    %v5001 = vunpack.c.l.b16 %v4801
    %v5002 = vunpack.c.h.b16 %v4801
    %v5003 = vunpack.c.l.b16 %v4802
    %v5004 = vunpack.c.h.b16 %v4802
    %v5005 = vunpack.c.l.b16 %v4803
    %v5006 = vunpack.c.h.b16 %v4803
    %v5007 = vunpack.c.l.b16 %v4804
    %v5008 = vunpack.c.h.b16 %v4804
    %v5009 = vpack.c.b16 %v4883, %v4881
    %v5010 = vpack.c.b16 %v4884, %v4882
    %v5011 = vpack.c.b16 %v4887, %v4885
    %v5012 = vpack.c.b16 %v4888, %v4886
    %v5013 = vpack.c.b16 %v4891, %v4889
    %v5014 = vpack.c.b16 %v4892, %v4890
    %v5015 = vpack.c.b16 %v4895, %v4893
    %v5016 = vpack.c.b16 %v4896, %v4894
    %v5017 = vpack.c.b16 %v4899, %v4897
    %v5018 = vpack.c.b16 %v4900, %v4898
    %v5019 = vpack.c.b16 %v4903, %v4901
    %v5020 = vpack.c.b16 %v4904, %v4902
    %v5021 = vpack.c.b16 %v4907, %v4905
    %v5022 = vpack.c.b16 %v4908, %v4906
    %v5023 = vpack.c.b16 %v4911, %v4909
    %v5024 = vpack.c.b16 %v4912, %v4910
    %v5025 = vpack.c.b16 %v4915, %v4913
    %v5026 = vpack.c.b16 %v4916, %v4914
    %v5027 = vpack.c.b16 %v4919, %v4917
    %v5028 = vpack.c.b16 %v4920, %v4918
    %v5029 = vpack.c.b16 %v4923, %v4921
    %v5030 = vpack.c.b16 %v4924, %v4922
    %v5031 = vpack.c.b16 %v4927, %v4925
    %v5032 = vpack.c.b16 %v4928, %v4926
    %v5033 = vpack.c.b16 %v4931, %v4929
    %v5034 = vpack.c.b16 %v4932, %v4930
    %v5035 = vpack.c.b16 %v4935, %v4933
    %v5036 = vpack.c.b16 %v4936, %v4934
    %v5037 = vpack.c.b16 %v4939, %v4937
    %v5038 = vpack.c.b16 %v4940, %v4938
    %v5039 = vpack.c.b16 %v4943, %v4941
    %v5040 = vpack.c.b16 %v4944, %v4942
    %v5041 = vpack.c.b16 %v4947, %v4945
    %v5042 = vpack.c.b16 %v4948, %v4946
    %v5043 = vpack.c.b16 %v4951, %v4949
    %v5044 = vpack.c.b16 %v4952, %v4950
    %v5045 = vpack.c.b16 %v4955, %v4953
    %v5046 = vpack.c.b16 %v4956, %v4954
    %v5047 = vpack.c.b16 %v4959, %v4957
    %v5048 = vpack.c.b16 %v4960, %v4958
    %v5049 = vpack.c.b16 %v4963, %v4961
    %v5050 = vpack.c.b16 %v4964, %v4962
    %v5051 = vpack.c.b16 %v4967, %v4965
    %v5052 = vpack.c.b16 %v4968, %v4966
    %v5053 = vpack.c.b16 %v4971, %v4969
    %v5054 = vpack.c.b16 %v4972, %v4970
    %v5055 = vpack.c.b16 %v4975, %v4973
    %v5056 = vpack.c.b16 %v4976, %v4974
    %v5057 = vpack.c.b16 %v4979, %v4977
    %v5058 = vpack.c.b16 %v4980, %v4978
    %v5059 = vpack.c.b16 %v4983, %v4981
    %v5060 = vpack.c.b16 %v4984, %v4982
    %v5061 = vpack.c.b16 %v4987, %v4985
    %v5062 = vpack.c.b16 %v4988, %v4986
    %v5063 = vpack.c.b16 %v4991, %v4989
    %v5064 = vpack.c.b16 %v4992, %v4990
    %v5065 = vpack.c.b16 %v4995, %v4993
    %v5066 = vpack.c.b16 %v4996, %v4994
    %v5067 = vpack.c.b16 %v4999, %v4997
    %v5068 = vpack.c.b16 %v5000, %v4998
    %v5069 = vpack.c.b16 %v5003, %v5001
    %v5070 = vpack.c.b16 %v5004, %v5002
    %v5071 = vpack.c.b16 %v5007, %v5005
    %v5072 = vpack.c.b16 %v5008, %v5006
    %5137 = vmatprep.subr.bf16.mxu0 %v5024
    %5138 = vmatpush1.bf16.msra.mxu0 %v5023
    %5139 = vmatprep.subr.bf16.mxu0 %v5022
    %5140 = vmatpush1.bf16.msra.mxu0 %v5021
    %5141 = vmatprep.subr.bf16.mxu0 %v5020
    %5142 = vmatpush1.bf16.msra.mxu0 %v5019
    %5143 = vmatprep.subr.bf16.mxu0 %v5018
    %5144 = vmatpush1.bf16.msra.mxu0 %v5017
    %5145 = vmatprep.subr.bf16.mxu0 %v5016
    %5146 = vmatpush1.bf16.msra.mxu0 %v5015
    %5147 = vmatprep.subr.bf16.mxu0 %v5014
    %5148 = vmatpush1.bf16.msra.mxu0 %v5013
    %5149 = vmatprep.subr.bf16.mxu0 %v5012
    %5150 = vmatpush1.bf16.msra.mxu0 %v5011
    %5151 = vmatprep.subr.bf16.mxu0 %v5010
    %5152 = vmatpush1.bf16.msra.mxu0 %v5009
    %5153 = vmatprep.subr.bf16.mxu0 %v5040
    %5154 = vmatpush2.bf16.msra.mxu0 %v5039
    %5155 = vmatprep.subr.bf16.mxu0 %v5038
    %5156 = vmatpush2.bf16.msra.mxu0 %v5037
    %5157 = vmatprep.subr.bf16.mxu0 %v5036
    %5158 = vmatpush2.bf16.msra.mxu0 %v5035
    %5159 = vmatprep.subr.bf16.mxu0 %v5034
    %5160 = vmatpush2.bf16.msra.mxu0 %v5033
    %5161 = vmatprep.subr.bf16.mxu0 %v5032
    %5162 = vmatpush2.bf16.msra.mxu0 %v5031
    %5163 = vmatprep.subr.bf16.mxu0 %v5030
    %5164 = vmatpush2.bf16.msra.mxu0 %v5029
    %5165 = vmatprep.subr.bf16.mxu0 %v5028
    %5166 = vmatpush2.bf16.msra.mxu0 %v5027
    %5167 = vmatprep.subr.bf16.mxu0 %v5026
    %5168 = vmatpush2.bf16.msra.mxu0 %v5025
    %5169 = vmatprep.mubr.bf16.mxu0 %v4738
    %5170 = vmatmul.mubr.bf16.gmra.mxu0 %v4737
    %v5171 = vpop.f32.mrf.mxu0
    %v5172 = vadd.f32 %v4810, %v5171
    %v5173 = vpop.f32.mrf.mxu0
    %v5174 = vadd.f32 %v4814, %v5173
    %v5175 = vpop.f32.mrf.mxu0
    %v5176 = vpop.f32.mrf.mxu0
    %5177 = vdwg.mxu0
    %5178 = vmatprep.subr.bf16.mxu0 %v5056
    %5179 = vmatpush1.bf16.msra.mxu0 %v5055
    %5180 = vmatprep.subr.bf16.mxu0 %v5054
    %5181 = vmatpush1.bf16.msra.mxu0 %v5053
    %5182 = vmatprep.subr.bf16.mxu0 %v5052
    %5183 = vmatpush1.bf16.msra.mxu0 %v5051
    %5184 = vmatprep.subr.bf16.mxu0 %v5050
    %5185 = vmatpush1.bf16.msra.mxu0 %v5049
    %5186 = vmatprep.subr.bf16.mxu0 %v5048
    %5187 = vmatpush1.bf16.msra.mxu0 %v5047
    %5188 = vmatprep.subr.bf16.mxu0 %v5046
    %5189 = vmatpush1.bf16.msra.mxu0 %v5045
    %5190 = vmatprep.subr.bf16.mxu0 %v5044
    %5191 = vmatpush1.bf16.msra.mxu0 %v5043
    %5192 = vmatprep.subr.bf16.mxu0 %v5042
    %5193 = vmatpush1.bf16.msra.mxu0 %v5041
    %5194 = vmatprep.subr.bf16.mxu0 %v5072
    %5195 = vmatpush2.bf16.msra.mxu0 %v5071
    %5196 = vmatprep.subr.bf16.mxu0 %v5070
    %5197 = vmatpush2.bf16.msra.mxu0 %v5069
    %5198 = vmatprep.subr.bf16.mxu0 %v5068
    %5199 = vmatpush2.bf16.msra.mxu0 %v5067
    %5200 = vmatprep.subr.bf16.mxu0 %v5066
    %5201 = vmatpush2.bf16.msra.mxu0 %v5065
    %5202 = vmatprep.subr.bf16.mxu0 %v5064
    %5203 = vmatpush2.bf16.msra.mxu0 %v5063
    %5204 = vmatprep.subr.bf16.mxu0 %v5062
    %5205 = vmatpush2.bf16.msra.mxu0 %v5061
    %5206 = vmatprep.subr.bf16.mxu0 %v5060
    %5207 = vmatpush2.bf16.msra.mxu0 %v5059
    %5208 = vmatprep.subr.bf16.mxu0 %v5058
    %5209 = vmatpush2.bf16.msra.mxu0 %v5057
    %5210 = vmatprep.mubr.bf16.mxu0 %v4740
    %5211 = vmatmul.mubr.bf16.gmra.mxu0 %v4739
    %v5212 = vpop.f32.mrf.mxu0
    %v5213 = vadd.f32 %v5172, %v5212
    %v5214 = vpop.f32.mrf.mxu0
    %v5215 = vadd.f32 %v5174, %v5214
    %v5216 = vpop.f32.mrf.mxu0
    %v5217 = vpop.f32.mrf.mxu0
    %5218 = vdwg.mxu0
    %v5219 = vmax.f32 %v5213, 0.0
    %v5220 = vmax.f32 %v5215, 0.0
    %v5221 = vpack.c.bf16 %v5219, %v5219
    %v5222 = vpack.c.bf16 %v5220, %v5220
    %v5223 = vld [vmem:[%s65] sm:$0xff]
    %v5224 = vld [vmem:[%s65 + $0x8] sm:$0xff]
    %v5225 = vld [vmem:[%s65 + $0x10] sm:$0xff]
    %v5226 = vld [vmem:[%s65 + $0x18] sm:$0xff]
    %v5227 = vld [vmem:[%s65 + $0x20] sm:$0xff]
    %v5228 = vld [vmem:[%s65 + $0x28] sm:$0xff]
    %v5229 = vld [vmem:[%s65 + $0x30] sm:$0xff]
    %v5230 = vld [vmem:[%s65 + $0x38] sm:$0xff]
    %v5231 = vld [vmem:[%s65 + $0x40] sm:$0xff]
    %v5232 = vld [vmem:[%s65 + $0x48] sm:$0xff]
    %v5233 = vld [vmem:[%s65 + $0x50] sm:$0xff]
    %v5234 = vld [vmem:[%s65 + $0x58] sm:$0xff]
    %v5235 = vld [vmem:[%s65 + $0x60] sm:$0xff]
    %v5236 = vld [vmem:[%s65 + $0x68] sm:$0xff]
    %v5237 = vld [vmem:[%s65 + $0x70] sm:$0xff]
    %v5238 = vld [vmem:[%s65 + $0x78] sm:$0xff]
    %v5239 = vld [vmem:[%s65 + $0x80] sm:$0xff]
    %v5240 = vld [vmem:[%s65 + $0x88] sm:$0xff]
    %v5241 = vld [vmem:[%s65 + $0x90] sm:$0xff]
    %v5242 = vld [vmem:[%s65 + $0x98] sm:$0xff]
    %v5243 = vld [vmem:[%s65 + $0xa0] sm:$0xff]
    %v5244 = vld [vmem:[%s65 + $0xa8] sm:$0xff]
    %v5245 = vld [vmem:[%s65 + $0xb0] sm:$0xff]
    %v5246 = vld [vmem:[%s65 + $0xb8] sm:$0xff]
    %v5247 = vld [vmem:[%s65 + $0xc0] sm:$0xff]
    %v5248 = vld [vmem:[%s65 + $0xc8] sm:$0xff]
    %v5249 = vld [vmem:[%s65 + $0xd0] sm:$0xff]
    %v5250 = vld [vmem:[%s65 + $0xd8] sm:$0xff]
    %v5251 = vld [vmem:[%s65 + $0xe0] sm:$0xff]
    %v5252 = vld [vmem:[%s65 + $0xe8] sm:$0xff]
    %v5253 = vld [vmem:[%s65 + $0xf0] sm:$0xff]
    %v5254 = vld [vmem:[%s65 + $0xf8] sm:$0xff]
    %v5255 = vld [vmem:[%s65 + $0x100] sm:$0xff]
    %v5256 = vld [vmem:[%s65 + $0x108] sm:$0xff]
    %v5257 = vld [vmem:[%s65 + $0x110] sm:$0xff]
    %v5258 = vld [vmem:[%s65 + $0x118] sm:$0xff]
    %v5259 = vld [vmem:[%s65 + $0x120] sm:$0xff]
    %v5260 = vld [vmem:[%s65 + $0x128] sm:$0xff]
    %v5261 = vld [vmem:[%s65 + $0x130] sm:$0xff]
    %v5262 = vld [vmem:[%s65 + $0x138] sm:$0xff]
    %v5263 = vld [vmem:[%s65 + $0x140] sm:$0xff]
    %v5264 = vld [vmem:[%s65 + $0x148] sm:$0xff]
    %v5265 = vld [vmem:[%s65 + $0x150] sm:$0xff]
    %v5266 = vld [vmem:[%s65 + $0x158] sm:$0xff]
    %v5267 = vld [vmem:[%s65 + $0x160] sm:$0xff]
    %v5268 = vld [vmem:[%s65 + $0x168] sm:$0xff]
    %v5269 = vld [vmem:[%s65 + $0x170] sm:$0xff]
    %v5270 = vld [vmem:[%s65 + $0x178] sm:$0xff]
    %v5271 = vld [vmem:[%s65 + $0x180] sm:$0xff]
    %v5272 = vld [vmem:[%s65 + $0x188] sm:$0xff]
    %v5273 = vld [vmem:[%s65 + $0x190] sm:$0xff]
    %v5274 = vld [vmem:[%s65 + $0x198] sm:$0xff]
    %v5275 = vld [vmem:[%s65 + $0x1a0] sm:$0xff]
    %v5276 = vld [vmem:[%s65 + $0x1a8] sm:$0xff]
    %v5277 = vld [vmem:[%s65 + $0x1b0] sm:$0xff]
    %v5278 = vld [vmem:[%s65 + $0x1b8] sm:$0xff]
    %v5279 = vld [vmem:[%s65 + $0x1c0] sm:$0xff]
    %v5280 = vld [vmem:[%s65 + $0x1c8] sm:$0xff]
    %v5281 = vld [vmem:[%s65 + $0x1d0] sm:$0xff]
    %v5282 = vld [vmem:[%s65 + $0x1d8] sm:$0xff]
    %v5283 = vld [vmem:[%s65 + $0x1e0] sm:$0xff]
    %v5284 = vld [vmem:[%s65 + $0x1e8] sm:$0xff]
    %v5285 = vld [vmem:[%s65 + $0x1f0] sm:$0xff]
    %v5286 = vld [vmem:[%s65 + $0x1f8] sm:$0xff]
    %v5287 = vld [vmem:[%s67] sm:$0xf]
    %v5289 = vlaneseq
    %v5290 = vshrl.u32 %v5289, 7
    %v5291 = vsub.s32 0, %v5290
    %v5292 = vrot.slane %v5287, %v5291
    %v5293 = vlaneseq
    %v5294 = vshrl.u32 %v5293, 7
    %v5295 = vsub.s32 1, %v5294
    %v5296 = vrot.slane %v5287, %v5295
    %v5297 = vlaneseq
    %v5298 = vshrl.u32 %v5297, 7
    %v5299 = vsub.s32 2, %v5298
    %v5300 = vrot.slane %v5287, %v5299
    %v5301 = vlaneseq
    %v5302 = vshrl.u32 %v5301, 7
    %v5303 = vsub.s32 3, %v5302
    %v5304 = vrot.slane %v5287, %v5303
    %v5373 = vunpack.c.l.b16 %v5223
    %v5374 = vunpack.c.h.b16 %v5223
    %v5375 = vunpack.c.l.b16 %v5224
    %v5376 = vunpack.c.h.b16 %v5224
    %v5377 = vunpack.c.l.b16 %v5225
    %v5378 = vunpack.c.h.b16 %v5225
    %v5379 = vunpack.c.l.b16 %v5226
    %v5380 = vunpack.c.h.b16 %v5226
    %v5381 = vunpack.c.l.b16 %v5227
    %v5382 = vunpack.c.h.b16 %v5227
    %v5383 = vunpack.c.l.b16 %v5228
    %v5384 = vunpack.c.h.b16 %v5228
    %v5385 = vunpack.c.l.b16 %v5229
    %v5386 = vunpack.c.h.b16 %v5229
    %v5387 = vunpack.c.l.b16 %v5230
    %v5388 = vunpack.c.h.b16 %v5230
    %v5389 = vunpack.c.l.b16 %v5231
    %v5390 = vunpack.c.h.b16 %v5231
    %v5391 = vunpack.c.l.b16 %v5232
    %v5392 = vunpack.c.h.b16 %v5232
    %v5393 = vunpack.c.l.b16 %v5233
    %v5394 = vunpack.c.h.b16 %v5233
    %v5395 = vunpack.c.l.b16 %v5234
    %v5396 = vunpack.c.h.b16 %v5234
    %v5397 = vunpack.c.l.b16 %v5235
    %v5398 = vunpack.c.h.b16 %v5235
    %v5399 = vunpack.c.l.b16 %v5236
    %v5400 = vunpack.c.h.b16 %v5236
    %v5401 = vunpack.c.l.b16 %v5237
    %v5402 = vunpack.c.h.b16 %v5237
    %v5403 = vunpack.c.l.b16 %v5238
    %v5404 = vunpack.c.h.b16 %v5238
    %v5405 = vunpack.c.l.b16 %v5239
    %v5406 = vunpack.c.h.b16 %v5239
    %v5407 = vunpack.c.l.b16 %v5240
    %v5408 = vunpack.c.h.b16 %v5240
    %v5409 = vunpack.c.l.b16 %v5241
    %v5410 = vunpack.c.h.b16 %v5241
    %v5411 = vunpack.c.l.b16 %v5242
    %v5412 = vunpack.c.h.b16 %v5242
    %v5413 = vunpack.c.l.b16 %v5243
    %v5414 = vunpack.c.h.b16 %v5243
    %v5415 = vunpack.c.l.b16 %v5244
    %v5416 = vunpack.c.h.b16 %v5244
    %v5417 = vunpack.c.l.b16 %v5245
    %v5418 = vunpack.c.h.b16 %v5245
    %v5419 = vunpack.c.l.b16 %v5246
    %v5420 = vunpack.c.h.b16 %v5246
    %v5421 = vunpack.c.l.b16 %v5247
    %v5422 = vunpack.c.h.b16 %v5247
    %v5423 = vunpack.c.l.b16 %v5248
    %v5424 = vunpack.c.h.b16 %v5248
    %v5425 = vunpack.c.l.b16 %v5249
    %v5426 = vunpack.c.h.b16 %v5249
    %v5427 = vunpack.c.l.b16 %v5250
    %v5428 = vunpack.c.h.b16 %v5250
    %v5429 = vunpack.c.l.b16 %v5251
    %v5430 = vunpack.c.h.b16 %v5251
    %v5431 = vunpack.c.l.b16 %v5252
    %v5432 = vunpack.c.h.b16 %v5252
    %v5433 = vunpack.c.l.b16 %v5253
    %v5434 = vunpack.c.h.b16 %v5253
    %v5435 = vunpack.c.l.b16 %v5254
    %v5436 = vunpack.c.h.b16 %v5254
    %v5437 = vunpack.c.l.b16 %v5255
    %v5438 = vunpack.c.h.b16 %v5255
    %v5439 = vunpack.c.l.b16 %v5256
    %v5440 = vunpack.c.h.b16 %v5256
    %v5441 = vunpack.c.l.b16 %v5257
    %v5442 = vunpack.c.h.b16 %v5257
    %v5443 = vunpack.c.l.b16 %v5258
    %v5444 = vunpack.c.h.b16 %v5258
    %v5445 = vunpack.c.l.b16 %v5259
    %v5446 = vunpack.c.h.b16 %v5259
    %v5447 = vunpack.c.l.b16 %v5260
    %v5448 = vunpack.c.h.b16 %v5260
    %v5449 = vunpack.c.l.b16 %v5261
    %v5450 = vunpack.c.h.b16 %v5261
    %v5451 = vunpack.c.l.b16 %v5262
    %v5452 = vunpack.c.h.b16 %v5262
    %v5453 = vunpack.c.l.b16 %v5263
    %v5454 = vunpack.c.h.b16 %v5263
    %v5455 = vunpack.c.l.b16 %v5264
    %v5456 = vunpack.c.h.b16 %v5264
    %v5457 = vunpack.c.l.b16 %v5265
    %v5458 = vunpack.c.h.b16 %v5265
    %v5459 = vunpack.c.l.b16 %v5266
    %v5460 = vunpack.c.h.b16 %v5266
    %v5461 = vunpack.c.l.b16 %v5267
    %v5462 = vunpack.c.h.b16 %v5267
    %v5463 = vunpack.c.l.b16 %v5268
    %v5464 = vunpack.c.h.b16 %v5268
    %v5465 = vunpack.c.l.b16 %v5269
    %v5466 = vunpack.c.h.b16 %v5269
    %v5467 = vunpack.c.l.b16 %v5270
    %v5468 = vunpack.c.h.b16 %v5270
    %v5469 = vunpack.c.l.b16 %v5271
    %v5470 = vunpack.c.h.b16 %v5271
    %v5471 = vunpack.c.l.b16 %v5272
    %v5472 = vunpack.c.h.b16 %v5272
    %v5473 = vunpack.c.l.b16 %v5273
    %v5474 = vunpack.c.h.b16 %v5273
    %v5475 = vunpack.c.l.b16 %v5274
    %v5476 = vunpack.c.h.b16 %v5274
    %v5477 = vunpack.c.l.b16 %v5275
    %v5478 = vunpack.c.h.b16 %v5275
    %v5479 = vunpack.c.l.b16 %v5276
    %v5480 = vunpack.c.h.b16 %v5276
    %v5481 = vunpack.c.l.b16 %v5277
    %v5482 = vunpack.c.h.b16 %v5277
    %v5483 = vunpack.c.l.b16 %v5278
    %v5484 = vunpack.c.h.b16 %v5278
    %v5485 = vunpack.c.l.b16 %v5279
    %v5486 = vunpack.c.h.b16 %v5279
    %v5487 = vunpack.c.l.b16 %v5280
    %v5488 = vunpack.c.h.b16 %v5280
    %v5489 = vunpack.c.l.b16 %v5281
    %v5490 = vunpack.c.h.b16 %v5281
    %v5491 = vunpack.c.l.b16 %v5282
    %v5492 = vunpack.c.h.b16 %v5282
    %v5493 = vunpack.c.l.b16 %v5283
    %v5494 = vunpack.c.h.b16 %v5283
    %v5495 = vunpack.c.l.b16 %v5284
    %v5496 = vunpack.c.h.b16 %v5284
    %v5497 = vunpack.c.l.b16 %v5285
    %v5498 = vunpack.c.h.b16 %v5285
    %v5499 = vunpack.c.l.b16 %v5286
    %v5500 = vunpack.c.h.b16 %v5286
    %v5501 = vpack.c.b16 %v5377, %v5373
    %v5502 = vpack.c.b16 %v5378, %v5374
    %v5503 = vpack.c.b16 %v5379, %v5375
    %v5504 = vpack.c.b16 %v5380, %v5376
    %v5505 = vpack.c.b16 %v5385, %v5381
    %v5506 = vpack.c.b16 %v5386, %v5382
    %v5507 = vpack.c.b16 %v5387, %v5383
    %v5508 = vpack.c.b16 %v5388, %v5384
    %v5509 = vpack.c.b16 %v5393, %v5389
    %v5510 = vpack.c.b16 %v5394, %v5390
    %v5511 = vpack.c.b16 %v5395, %v5391
    %v5512 = vpack.c.b16 %v5396, %v5392
    %v5513 = vpack.c.b16 %v5401, %v5397
    %v5514 = vpack.c.b16 %v5402, %v5398
    %v5515 = vpack.c.b16 %v5403, %v5399
    %v5516 = vpack.c.b16 %v5404, %v5400
    %v5517 = vpack.c.b16 %v5409, %v5405
    %v5518 = vpack.c.b16 %v5410, %v5406
    %v5519 = vpack.c.b16 %v5411, %v5407
    %v5520 = vpack.c.b16 %v5412, %v5408
    %v5521 = vpack.c.b16 %v5417, %v5413
    %v5522 = vpack.c.b16 %v5418, %v5414
    %v5523 = vpack.c.b16 %v5419, %v5415
    %v5524 = vpack.c.b16 %v5420, %v5416
    %v5525 = vpack.c.b16 %v5425, %v5421
    %v5526 = vpack.c.b16 %v5426, %v5422
    %v5527 = vpack.c.b16 %v5427, %v5423
    %v5528 = vpack.c.b16 %v5428, %v5424
    %v5529 = vpack.c.b16 %v5433, %v5429
    %v5530 = vpack.c.b16 %v5434, %v5430
    %v5531 = vpack.c.b16 %v5435, %v5431
    %v5532 = vpack.c.b16 %v5436, %v5432
    %v5533 = vpack.c.b16 %v5441, %v5437
    %v5534 = vpack.c.b16 %v5442, %v5438
    %v5535 = vpack.c.b16 %v5443, %v5439
    %v5536 = vpack.c.b16 %v5444, %v5440
    %v5537 = vpack.c.b16 %v5449, %v5445
    %v5538 = vpack.c.b16 %v5450, %v5446
    %v5539 = vpack.c.b16 %v5451, %v5447
    %v5540 = vpack.c.b16 %v5452, %v5448
    %v5541 = vpack.c.b16 %v5457, %v5453
    %v5542 = vpack.c.b16 %v5458, %v5454
    %v5543 = vpack.c.b16 %v5459, %v5455
    %v5544 = vpack.c.b16 %v5460, %v5456
    %v5545 = vpack.c.b16 %v5465, %v5461
    %v5546 = vpack.c.b16 %v5466, %v5462
    %v5547 = vpack.c.b16 %v5467, %v5463
    %v5548 = vpack.c.b16 %v5468, %v5464
    %v5549 = vpack.c.b16 %v5473, %v5469
    %v5550 = vpack.c.b16 %v5474, %v5470
    %v5551 = vpack.c.b16 %v5475, %v5471
    %v5552 = vpack.c.b16 %v5476, %v5472
    %v5553 = vpack.c.b16 %v5481, %v5477
    %v5554 = vpack.c.b16 %v5482, %v5478
    %v5555 = vpack.c.b16 %v5483, %v5479
    %v5556 = vpack.c.b16 %v5484, %v5480
    %v5557 = vpack.c.b16 %v5489, %v5485
    %v5558 = vpack.c.b16 %v5490, %v5486
    %v5559 = vpack.c.b16 %v5491, %v5487
    %v5560 = vpack.c.b16 %v5492, %v5488
    %v5561 = vpack.c.b16 %v5497, %v5493
    %v5562 = vpack.c.b16 %v5498, %v5494
    %v5563 = vpack.c.b16 %v5499, %v5495
    %v5564 = vpack.c.b16 %v5500, %v5496
    %5629 = vmatprep.subr.bf16.mxu0 %v5530
    %5630 = vmatpush1.bf16.msra.mxu0 %v5529
    %5631 = vmatprep.subr.bf16.mxu0 %v5526
    %5632 = vmatpush1.bf16.msra.mxu0 %v5525
    %5633 = vmatprep.subr.bf16.mxu0 %v5522
    %5634 = vmatpush1.bf16.msra.mxu0 %v5521
    %5635 = vmatprep.subr.bf16.mxu0 %v5518
    %5636 = vmatpush1.bf16.msra.mxu0 %v5517
    %5637 = vmatprep.subr.bf16.mxu0 %v5514
    %5638 = vmatpush1.bf16.msra.mxu0 %v5513
    %5639 = vmatprep.subr.bf16.mxu0 %v5510
    %5640 = vmatpush1.bf16.msra.mxu0 %v5509
    %5641 = vmatprep.subr.bf16.mxu0 %v5506
    %5642 = vmatpush1.bf16.msra.mxu0 %v5505
    %5643 = vmatprep.subr.bf16.mxu0 %v5502
    %5644 = vmatpush1.bf16.msra.mxu0 %v5501
    %5645 = vmatprep.subr.bf16.mxu0 %v5562
    %5646 = vmatpush2.bf16.msra.mxu0 %v5561
    %5647 = vmatprep.subr.bf16.mxu0 %v5558
    %5648 = vmatpush2.bf16.msra.mxu0 %v5557
    %5649 = vmatprep.subr.bf16.mxu0 %v5554
    %5650 = vmatpush2.bf16.msra.mxu0 %v5553
    %5651 = vmatprep.subr.bf16.mxu0 %v5550
    %5652 = vmatpush2.bf16.msra.mxu0 %v5549
    %5653 = vmatprep.subr.bf16.mxu0 %v5546
    %5654 = vmatpush2.bf16.msra.mxu0 %v5545
    %5655 = vmatprep.subr.bf16.mxu0 %v5542
    %5656 = vmatpush2.bf16.msra.mxu0 %v5541
    %5657 = vmatprep.subr.bf16.mxu0 %v5538
    %5658 = vmatpush2.bf16.msra.mxu0 %v5537
    %5659 = vmatprep.subr.bf16.mxu0 %v5534
    %5660 = vmatpush2.bf16.msra.mxu0 %v5533
    %5661 = vmatprep.mubr.bf16.mxu0 %v5222
    %5662 = vmatmul.mubr.bf16.gmra.mxu0 %v5221
    %v5663 = vpop.f32.mrf.mxu0
    %v5664 = vadd.f32 %v5292, %v5663
    %v5665 = vpop.f32.mrf.mxu0
    %v5666 = vadd.f32 %v5296, %v5665
    %v5667 = vpop.f32.mrf.mxu0
    %v5668 = vpop.f32.mrf.mxu0
    %5669 = vdwg.mxu0
    %5670 = vmatprep.subr.bf16.mxu0 %v5532
    %5671 = vmatpush1.bf16.msra.mxu0 %v5531
    %5672 = vmatprep.subr.bf16.mxu0 %v5528
    %5673 = vmatpush1.bf16.msra.mxu0 %v5527
    %5674 = vmatprep.subr.bf16.mxu0 %v5524
    %5675 = vmatpush1.bf16.msra.mxu0 %v5523
    %5676 = vmatprep.subr.bf16.mxu0 %v5520
    %5677 = vmatpush1.bf16.msra.mxu0 %v5519
    %5678 = vmatprep.subr.bf16.mxu0 %v5516
    %5679 = vmatpush1.bf16.msra.mxu0 %v5515
    %5680 = vmatprep.subr.bf16.mxu0 %v5512
    %5681 = vmatpush1.bf16.msra.mxu0 %v5511
    %5682 = vmatprep.subr.bf16.mxu0 %v5508
    %5683 = vmatpush1.bf16.msra.mxu0 %v5507
    %5684 = vmatprep.subr.bf16.mxu0 %v5504
    %5685 = vmatpush1.bf16.msra.mxu0 %v5503
    %5686 = vmatprep.subr.bf16.mxu0 %v5564
    %5687 = vmatpush2.bf16.msra.mxu0 %v5563
    %5688 = vmatprep.subr.bf16.mxu0 %v5560
    %5689 = vmatpush2.bf16.msra.mxu0 %v5559
    %5690 = vmatprep.subr.bf16.mxu0 %v5556
    %5691 = vmatpush2.bf16.msra.mxu0 %v5555
    %5692 = vmatprep.subr.bf16.mxu0 %v5552
    %5693 = vmatpush2.bf16.msra.mxu0 %v5551
    %5694 = vmatprep.subr.bf16.mxu0 %v5548
    %5695 = vmatpush2.bf16.msra.mxu0 %v5547
    %5696 = vmatprep.subr.bf16.mxu0 %v5544
    %5697 = vmatpush2.bf16.msra.mxu0 %v5543
    %5698 = vmatprep.subr.bf16.mxu0 %v5540
    %5699 = vmatpush2.bf16.msra.mxu0 %v5539
    %5700 = vmatprep.subr.bf16.mxu0 %v5536
    %5701 = vmatpush2.bf16.msra.mxu0 %v5535
    %5702 = vmatprep.mubr.bf16.mxu0 %v5222
    %5703 = vmatmul.mubr.bf16.gmra.mxu0 %v5221
    %v5704 = vpop.f32.mrf.mxu0
    %v5705 = vadd.f32 %v5300, %v5704
    %v5706 = vpop.f32.mrf.mxu0
    %v5707 = vadd.f32 %v5304, %v5706
    %v5708 = vpop.f32.mrf.mxu0
    %v5709 = vpop.f32.mrf.mxu0
    %5710 = vdwg.mxu0
    %v5711 = vmax.f32 %v5664, 0.0
    %v5712 = vmax.f32 %v5666, 0.0
    %v5713 = vmax.f32 %v5705, 0.0
    %v5714 = vmax.f32 %v5707, 0.0
    %v5719 = vcombine.low %v5711, %v5712
    %v5720 = vcombine.low %v5713, %v5714
    %v5722 = vunpack.c.l.s4 1983009808
    %v5723 = vunpack.c.0.s8 %v5722
    %v5724 = vlaneseq
    %v5725 = vshrl.u32 %v5724, 7
    %v5726 = vsub.s32 %v5723, %v5725
    %v5727 = vrot.slane %v5719, %v5726
    %v5729 = vunpack.c.l.s4 1983009808
    %v5730 = vunpack.c.0.s8 %v5729
    %v5731 = vlaneseq
    %v5732 = vshrl.u32 %v5731, 7
    %v5733 = vsub.s32 %v5730, %v5732
    %v5734 = vrot.slane %v5720, %v5733
    %v5735 = vcombine.low %v5727, %v5734
    %v5737 = vadd.f32 %v4714, %v5735
    %v5739 = vcombine.high %v5737, %v5737
    %v5741 = vunpack.c.l.s4 1983009808
    %v5742 = vunpack.c.0.s8 %v5741
    %v5743 = vlaneseq
    %v5744 = vshrl.u32 %v5743, 7
    %v5745 = vsub.s32 %v5742, %v5744
    %v5746 = vrot.slane %v5737, %v5745
    %v5748 = vunpack.c.l.s4 1983009808
    %v5749 = vunpack.c.0.s8 %v5748
    %v5750 = vlaneseq
    %v5751 = vshrl.u32 %v5750, 7
    %v5752 = vsub.s32 %v5749, %v5751
    %v5753 = vrot.slane %v5739, %v5752
    %v5754 = vcombine.high %v5746, %v5746
    %v5755 = vcombine.high %v5753, %v5753
    %v5760 = vpack.c.bf16 %v5746, %v5746
    %v5761 = vpack.c.bf16 %v5754, %v5754
    %v5762 = vpack.c.bf16 %v5753, %v5753
    %v5763 = vpack.c.bf16 %v5755, %v5755
    %v5764 = vld [vmem:[%s69] sm:$0xf]
    %v5765 = vld [vmem:[%s69 + $0x4] sm:$0xf]
    %v5766 = vld [vmem:[%s69 + $0x8] sm:$0xf]
    %v5767 = vld [vmem:[%s69 + $0xc] sm:$0xf]
    %v5768 = vld [vmem:[%s69 + $0x10] sm:$0xf]
    %v5769 = vld [vmem:[%s69 + $0x14] sm:$0xf]
    %v5770 = vld [vmem:[%s69 + $0x18] sm:$0xf]
    %v5771 = vld [vmem:[%s69 + $0x1c] sm:$0xf]
    %v5772 = vld [vmem:[%s69 + $0x20] sm:$0xf]
    %v5773 = vld [vmem:[%s69 + $0x24] sm:$0xf]
    %v5774 = vld [vmem:[%s69 + $0x28] sm:$0xf]
    %v5775 = vld [vmem:[%s69 + $0x2c] sm:$0xf]
    %v5776 = vld [vmem:[%s69 + $0x30] sm:$0xf]
    %v5777 = vld [vmem:[%s69 + $0x34] sm:$0xf]
    %v5778 = vld [vmem:[%s69 + $0x38] sm:$0xf]
    %v5779 = vld [vmem:[%s69 + $0x3c] sm:$0xf]
    %v5780 = vld [vmem:[%s69 + $0x40] sm:$0xf]
    %v5781 = vld [vmem:[%s69 + $0x44] sm:$0xf]
    %v5782 = vld [vmem:[%s69 + $0x48] sm:$0xf]
    %v5783 = vld [vmem:[%s69 + $0x4c] sm:$0xf]
    %v5784 = vld [vmem:[%s69 + $0x50] sm:$0xf]
    %v5785 = vld [vmem:[%s69 + $0x54] sm:$0xf]
    %v5786 = vld [vmem:[%s69 + $0x58] sm:$0xf]
    %v5787 = vld [vmem:[%s69 + $0x5c] sm:$0xf]
    %v5788 = vld [vmem:[%s69 + $0x60] sm:$0xf]
    %v5789 = vld [vmem:[%s69 + $0x64] sm:$0xf]
    %v5790 = vld [vmem:[%s69 + $0x68] sm:$0xf]
    %v5791 = vld [vmem:[%s69 + $0x6c] sm:$0xf]
    %v5792 = vld [vmem:[%s69 + $0x70] sm:$0xf]
    %v5793 = vld [vmem:[%s69 + $0x74] sm:$0xf]
    %v5794 = vld [vmem:[%s69 + $0x78] sm:$0xf]
    %v5795 = vld [vmem:[%s69 + $0x7c] sm:$0xf]
    %v5796 = vld [vmem:[%s69 + $0x80] sm:$0xf]
    %v5797 = vld [vmem:[%s69 + $0x84] sm:$0xf]
    %v5798 = vld [vmem:[%s69 + $0x88] sm:$0xf]
    %v5799 = vld [vmem:[%s69 + $0x8c] sm:$0xf]
    %v5800 = vld [vmem:[%s69 + $0x90] sm:$0xf]
    %v5801 = vld [vmem:[%s69 + $0x94] sm:$0xf]
    %v5802 = vld [vmem:[%s69 + $0x98] sm:$0xf]
    %v5803 = vld [vmem:[%s69 + $0x9c] sm:$0xf]
    %v5804 = vld [vmem:[%s69 + $0xa0] sm:$0xf]
    %v5805 = vld [vmem:[%s69 + $0xa4] sm:$0xf]
    %v5806 = vld [vmem:[%s69 + $0xa8] sm:$0xf]
    %v5807 = vld [vmem:[%s69 + $0xac] sm:$0xf]
    %v5808 = vld [vmem:[%s69 + $0xb0] sm:$0xf]
    %v5809 = vld [vmem:[%s69 + $0xb4] sm:$0xf]
    %v5810 = vld [vmem:[%s69 + $0xb8] sm:$0xf]
    %v5811 = vld [vmem:[%s69 + $0xbc] sm:$0xf]
    %v5812 = vld [vmem:[%s69 + $0xc0] sm:$0xf]
    %v5813 = vld [vmem:[%s69 + $0xc4] sm:$0xf]
    %v5814 = vld [vmem:[%s69 + $0xc8] sm:$0xf]
    %v5815 = vld [vmem:[%s69 + $0xcc] sm:$0xf]
    %v5816 = vld [vmem:[%s69 + $0xd0] sm:$0xf]
    %v5817 = vld [vmem:[%s69 + $0xd4] sm:$0xf]
    %v5818 = vld [vmem:[%s69 + $0xd8] sm:$0xf]
    %v5819 = vld [vmem:[%s69 + $0xdc] sm:$0xf]
    %v5820 = vld [vmem:[%s69 + $0xe0] sm:$0xf]
    %v5821 = vld [vmem:[%s69 + $0xe4] sm:$0xf]
    %v5822 = vld [vmem:[%s69 + $0xe8] sm:$0xf]
    %v5823 = vld [vmem:[%s69 + $0xec] sm:$0xf]
    %v5824 = vld [vmem:[%s69 + $0xf0] sm:$0xf]
    %v5825 = vld [vmem:[%s69 + $0xf4] sm:$0xf]
    %v5826 = vld [vmem:[%s69 + $0xf8] sm:$0xf]
    %v5827 = vld [vmem:[%s69 + $0xfc] sm:$0xf]
    %v5828 = vld [vmem:[%s71] sm:$0x1]
    %v5830 = vlaneseq
    %v5831 = vshrl.u32 %v5830, 7
    %v5832 = vsub.s32 0, %v5831
    %v5833 = vrot.slane %v5828, %v5832
    %v5899 = vunpack.c.l.b16 %v5764
    %v5900 = vunpack.c.l.b16 %v5765
    %v5901 = vunpack.c.l.b16 %v5766
    %v5902 = vunpack.c.l.b16 %v5767
    %v5903 = vunpack.c.l.b16 %v5768
    %v5904 = vunpack.c.l.b16 %v5769
    %v5905 = vunpack.c.l.b16 %v5770
    %v5906 = vunpack.c.l.b16 %v5771
    %v5907 = vunpack.c.l.b16 %v5772
    %v5908 = vunpack.c.l.b16 %v5773
    %v5909 = vunpack.c.l.b16 %v5774
    %v5910 = vunpack.c.l.b16 %v5775
    %v5911 = vunpack.c.l.b16 %v5776
    %v5912 = vunpack.c.l.b16 %v5777
    %v5913 = vunpack.c.l.b16 %v5778
    %v5914 = vunpack.c.l.b16 %v5779
    %v5915 = vunpack.c.l.b16 %v5780
    %v5916 = vunpack.c.l.b16 %v5781
    %v5917 = vunpack.c.l.b16 %v5782
    %v5918 = vunpack.c.l.b16 %v5783
    %v5919 = vunpack.c.l.b16 %v5784
    %v5920 = vunpack.c.l.b16 %v5785
    %v5921 = vunpack.c.l.b16 %v5786
    %v5922 = vunpack.c.l.b16 %v5787
    %v5923 = vunpack.c.l.b16 %v5788
    %v5924 = vunpack.c.l.b16 %v5789
    %v5925 = vunpack.c.l.b16 %v5790
    %v5926 = vunpack.c.l.b16 %v5791
    %v5927 = vunpack.c.l.b16 %v5792
    %v5928 = vunpack.c.l.b16 %v5793
    %v5929 = vunpack.c.l.b16 %v5794
    %v5930 = vunpack.c.l.b16 %v5795
    %v5931 = vunpack.c.l.b16 %v5796
    %v5932 = vunpack.c.l.b16 %v5797
    %v5933 = vunpack.c.l.b16 %v5798
    %v5934 = vunpack.c.l.b16 %v5799
    %v5935 = vunpack.c.l.b16 %v5800
    %v5936 = vunpack.c.l.b16 %v5801
    %v5937 = vunpack.c.l.b16 %v5802
    %v5938 = vunpack.c.l.b16 %v5803
    %v5939 = vunpack.c.l.b16 %v5804
    %v5940 = vunpack.c.l.b16 %v5805
    %v5941 = vunpack.c.l.b16 %v5806
    %v5942 = vunpack.c.l.b16 %v5807
    %v5943 = vunpack.c.l.b16 %v5808
    %v5944 = vunpack.c.l.b16 %v5809
    %v5945 = vunpack.c.l.b16 %v5810
    %v5946 = vunpack.c.l.b16 %v5811
    %v5947 = vunpack.c.l.b16 %v5812
    %v5948 = vunpack.c.l.b16 %v5813
    %v5949 = vunpack.c.l.b16 %v5814
    %v5950 = vunpack.c.l.b16 %v5815
    %v5951 = vunpack.c.l.b16 %v5816
    %v5952 = vunpack.c.l.b16 %v5817
    %v5953 = vunpack.c.l.b16 %v5818
    %v5954 = vunpack.c.l.b16 %v5819
    %v5955 = vunpack.c.l.b16 %v5820
    %v5956 = vunpack.c.l.b16 %v5821
    %v5957 = vunpack.c.l.b16 %v5822
    %v5958 = vunpack.c.l.b16 %v5823
    %v5959 = vunpack.c.l.b16 %v5824
    %v5960 = vunpack.c.l.b16 %v5825
    %v5961 = vunpack.c.l.b16 %v5826
    %v5962 = vunpack.c.l.b16 %v5827
    %v5963 = vpack.c.b16 %v5900, %v5899
    %v5964 = vpack.c.b16 %v5902, %v5901
    %v5965 = vpack.c.b16 %v5904, %v5903
    %v5966 = vpack.c.b16 %v5906, %v5905
    %v5967 = vpack.c.b16 %v5908, %v5907
    %v5968 = vpack.c.b16 %v5910, %v5909
    %v5969 = vpack.c.b16 %v5912, %v5911
    %v5970 = vpack.c.b16 %v5914, %v5913
    %v5971 = vpack.c.b16 %v5916, %v5915
    %v5972 = vpack.c.b16 %v5918, %v5917
    %v5973 = vpack.c.b16 %v5920, %v5919
    %v5974 = vpack.c.b16 %v5922, %v5921
    %v5975 = vpack.c.b16 %v5924, %v5923
    %v5976 = vpack.c.b16 %v5926, %v5925
    %v5977 = vpack.c.b16 %v5928, %v5927
    %v5978 = vpack.c.b16 %v5930, %v5929
    %v5979 = vpack.c.b16 %v5932, %v5931
    %v5980 = vpack.c.b16 %v5934, %v5933
    %v5981 = vpack.c.b16 %v5936, %v5935
    %v5982 = vpack.c.b16 %v5938, %v5937
    %v5983 = vpack.c.b16 %v5940, %v5939
    %v5984 = vpack.c.b16 %v5942, %v5941
    %v5985 = vpack.c.b16 %v5944, %v5943
    %v5986 = vpack.c.b16 %v5946, %v5945
    %v5987 = vpack.c.b16 %v5948, %v5947
    %v5988 = vpack.c.b16 %v5950, %v5949
    %v5989 = vpack.c.b16 %v5952, %v5951
    %v5990 = vpack.c.b16 %v5954, %v5953
    %v5991 = vpack.c.b16 %v5956, %v5955
    %v5992 = vpack.c.b16 %v5958, %v5957
    %v5993 = vpack.c.b16 %v5960, %v5959
    %v5994 = vpack.c.b16 %v5962, %v5961
    %6027 = vmatprep.subr.bf16.mxu0 0
    %6028 = vmatpush1.bf16.msra.mxu0 %v5970
    %6029 = vmatprep.subr.bf16.mxu0 0
    %6030 = vmatpush1.bf16.msra.mxu0 %v5969
    %6031 = vmatprep.subr.bf16.mxu0 0
    %6032 = vmatpush1.bf16.msra.mxu0 %v5968
    %6033 = vmatprep.subr.bf16.mxu0 0
    %6034 = vmatpush1.bf16.msra.mxu0 %v5967
    %6035 = vmatprep.subr.bf16.mxu0 0
    %6036 = vmatpush1.bf16.msra.mxu0 %v5966
    %6037 = vmatprep.subr.bf16.mxu0 0
    %6038 = vmatpush1.bf16.msra.mxu0 %v5965
    %6039 = vmatprep.subr.bf16.mxu0 0
    %6040 = vmatpush1.bf16.msra.mxu0 %v5964
    %6041 = vmatprep.subr.bf16.mxu0 0
    %6042 = vmatpush1.bf16.msra.mxu0 %v5963
    %6043 = vmatprep.subr.bf16.mxu0 0
    %6044 = vmatpush2.bf16.msra.mxu0 %v5978
    %6045 = vmatprep.subr.bf16.mxu0 0
    %6046 = vmatpush2.bf16.msra.mxu0 %v5977
    %6047 = vmatprep.subr.bf16.mxu0 0
    %6048 = vmatpush2.bf16.msra.mxu0 %v5976
    %6049 = vmatprep.subr.bf16.mxu0 0
    %6050 = vmatpush2.bf16.msra.mxu0 %v5975
    %6051 = vmatprep.subr.bf16.mxu0 0
    %6052 = vmatpush2.bf16.msra.mxu0 %v5974
    %6053 = vmatprep.subr.bf16.mxu0 0
    %6054 = vmatpush2.bf16.msra.mxu0 %v5973
    %6055 = vmatprep.subr.bf16.mxu0 0
    %6056 = vmatpush2.bf16.msra.mxu0 %v5972
    %6057 = vmatprep.subr.bf16.mxu0 0
    %6058 = vmatpush2.bf16.msra.mxu0 %v5971
    %6059 = vmatprep.mubr.bf16.mxu0 %v5761
    %6060 = vmatmul.mubr.bf16.gmra.mxu0 %v5760
    %v6061 = vpop.f32.mrf.mxu0
    %v6062 = vadd.f32 %v5833, %v6061
    %v6063 = vpop.f32.mrf.mxu0
    %v6064 = vpop.f32.mrf.mxu0
    %v6065 = vpop.f32.mrf.mxu0
    %6066 = vdwg.mxu0
    %6067 = vmatprep.subr.bf16.mxu0 0
    %6068 = vmatpush1.bf16.msra.mxu0 %v5986
    %6069 = vmatprep.subr.bf16.mxu0 0
    %6070 = vmatpush1.bf16.msra.mxu0 %v5985
    %6071 = vmatprep.subr.bf16.mxu0 0
    %6072 = vmatpush1.bf16.msra.mxu0 %v5984
    %6073 = vmatprep.subr.bf16.mxu0 0
    %6074 = vmatpush1.bf16.msra.mxu0 %v5983
    %6075 = vmatprep.subr.bf16.mxu0 0
    %6076 = vmatpush1.bf16.msra.mxu0 %v5982
    %6077 = vmatprep.subr.bf16.mxu0 0
    %6078 = vmatpush1.bf16.msra.mxu0 %v5981
    %6079 = vmatprep.subr.bf16.mxu0 0
    %6080 = vmatpush1.bf16.msra.mxu0 %v5980
    %6081 = vmatprep.subr.bf16.mxu0 0
    %6082 = vmatpush1.bf16.msra.mxu0 %v5979
    %6083 = vmatprep.subr.bf16.mxu0 0
    %6084 = vmatpush2.bf16.msra.mxu0 %v5994
    %6085 = vmatprep.subr.bf16.mxu0 0
    %6086 = vmatpush2.bf16.msra.mxu0 %v5993
    %6087 = vmatprep.subr.bf16.mxu0 0
    %6088 = vmatpush2.bf16.msra.mxu0 %v5992
    %6089 = vmatprep.subr.bf16.mxu0 0
    %6090 = vmatpush2.bf16.msra.mxu0 %v5991
    %6091 = vmatprep.subr.bf16.mxu0 0
    %6092 = vmatpush2.bf16.msra.mxu0 %v5990
    %6093 = vmatprep.subr.bf16.mxu0 0
    %6094 = vmatpush2.bf16.msra.mxu0 %v5989
    %6095 = vmatprep.subr.bf16.mxu0 0
    %6096 = vmatpush2.bf16.msra.mxu0 %v5988
    %6097 = vmatprep.subr.bf16.mxu0 0
    %6098 = vmatpush2.bf16.msra.mxu0 %v5987
    %6099 = vmatprep.mubr.bf16.mxu0 %v5763
    %6100 = vmatmul.mubr.bf16.gmra.mxu0 %v5762
    %v6101 = vpop.f32.mrf.mxu0
    %v6102 = vadd.f32 %v6062, %v6101
    %v6103 = vpop.f32.mrf.mxu0
    %v6104 = vpop.f32.mrf.mxu0
    %v6105 = vpop.f32.mrf.mxu0
    %6106 = vdwg.mxu0
    %v6107 = vmax.f32 %v6102, 0.0
    %6108 = vst [vmem:[#allocation5] sm:$0x3] %v6107
    // Predicated region
    $region146: #{squeezenet_1x1lmp_forward.1} parent=1 // pred_check
      _
    $region147: #{squeezenet_1x1lmp_forward.1} parent=1 // pred_check_branch
      %6110 = sbr.rel (0) target = $region149
    $region148: #{squeezenet_1x1lmp_forward.1} parent=1 // pred_region
      %s6112 = ssub.s32 32, 32
      %6113 = vsyncadd [#allocation6], %s6112
      %s6115 = sshll.u32 [#allocation5], 4
      %s6116 = int_to_ptr.vmem [resolvable:$true] %s6115
      %6118 = dma.vmem_to_hbm [thread:$0]  %s6116, 32, %s73, [#allocation6]
    $region149: #{squeezenet_1x1lmp_forward.1} parent=1 // pred_fallthru
      _
    // Predicated region
    $region150: #{squeezenet_1x1lmp_forward.1} parent=1 // pred_check
      _
    $region151: #{squeezenet_1x1lmp_forward.1} parent=1 // pred_check_branch
      %6120 = sbr.rel (0) target = $region153
    $region152: #{squeezenet_1x1lmp_forward.1} parent=1 // pred_region
      %6121 = dma.done [#allocation6], 32
    $region153: #{squeezenet_1x1lmp_forward.1} parent=1 // pred_fallthru
      _
    %6122 = vsyncpa [#allocation6], 1

</llo_original>
